<compile_context>
chip_gen: v7x
topology: tpu7x:2x2x1
jax: 0.10.0
libtpu: 0.0.40
codegen_flags: <defaults>
</compile_context>

<pallas_src>
import numpy as np
import jax
import jax.numpy as jnp
from jax import lax
from jax.experimental import pallas as pl
from jax.experimental.pallas import tpu as pltpu


# ------------------------------ Pallas kernels ------------------------------

def _gemm_bias_lrelu_kernel(x_ref, w_ref, b_ref, o_ref):
    """o = LeakyReLU(x @ w + b, 0.2); bf16 operands, f32 accumulation."""
    acc = jnp.dot(x_ref[...], w_ref[...], preferred_element_type=jnp.float32)
    acc = acc + b_ref[...]
    o_ref[...] = jnp.where(acc >= 0, acc, 0.2 * acc)


def gemm_bias_lrelu(x, w, b, *, tm=128):
    """x: (M, K) bf16 with M % tm == 0, w: (K, N) bf16, b: (1, N) f32 -> (M, N) f32."""
    M, K = x.shape
    _, N = w.shape
    assert M % tm == 0
    return pl.pallas_call(
        _gemm_bias_lrelu_kernel,
        out_shape=jax.ShapeDtypeStruct((M, N), jnp.float32),
        grid=(M // tm,),
        in_specs=[pl.BlockSpec((tm, K), lambda i: (i, 0)),
                  pl.BlockSpec((K, N), lambda i: (0, 0)),
                  pl.BlockSpec((1, N), lambda i: (0, 0))],
        out_specs=pl.BlockSpec((tm, N), lambda i: (i, 0)),
        compiler_params=pltpu.CompilerParams(
            dimension_semantics=("parallel",)),     # shards M across TCs on v7x
    )(x, w, b)


def _gemm_instnorm_lrelu_kernel(x_ref, w_ref, b_ref, o_ref):
    """Per-sample fused Conv-GEMM + InstanceNorm3d(affine=False, eps=1e-5) + LeakyReLU.

    x_ref: (P, K) bf16 (one sample's im2col patches), w_ref: (K, C) bf16,
    b_ref: (1, C) f32. Normalization reduces over the spatial axis P (sublanes,
    XLU work that overlaps with the MXU epilogue).
    """
    acc = jnp.dot(x_ref[...], w_ref[...], preferred_element_type=jnp.float32)
    acc = acc + b_ref[...]
    mean = jnp.mean(acc, axis=0, keepdims=True)
    var = jnp.mean((acc - mean) ** 2, axis=0, keepdims=True)
    y = (acc - mean) * lax.rsqrt(var + 1e-5)
    o_ref[...] = jnp.where(y >= 0, y, 0.2 * y)


def gemm_instnorm_lrelu(x, w, b):
    """x: (N, P, K) bf16, w: (K, C) bf16, b: (1, C) f32 -> (N, P, C) f32."""
    N, P, K = x.shape
    _, C = w.shape
    return pl.pallas_call(
        _gemm_instnorm_lrelu_kernel,
        out_shape=jax.ShapeDtypeStruct((N, P, C), jnp.float32),
        grid=(N,),
        in_specs=[pl.BlockSpec((None, P, K), lambda n: (n, 0, 0)),
                  pl.BlockSpec((K, C), lambda n: (0, 0)),
                  pl.BlockSpec((1, C), lambda n: (0, 0))],
        out_specs=pl.BlockSpec((None, P, C), lambda n: (n, 0, 0)),
        compiler_params=pltpu.CompilerParams(
            dimension_semantics=("parallel",)),
    )(x, w, b)


def _head_reduce_sigmoid_kernel(x_ref, w_ref, o_ref):
    """o = sigmoid(sum(x * w, axis=-1)). K sits on lanes (dense DMA + dense reduce);
    sigmoid via exp (EUP) + approx reciprocal (EUP) to keep VALU slots free."""
    prod = x_ref[...] * w_ref[...]                       # (M, K) * (1, K) broadcast
    acc = jnp.sum(prod, axis=1, keepdims=True)           # (M, 1)
    o_ref[...] = pl.reciprocal(1.0 + jnp.exp(-acc), approx=True)


def head_reduce_sigmoid(x, w):
    """x: (M, K) f32, w: (1, K) f32 -> (M, 1) f32."""
    M, K = x.shape
    return pl.pallas_call(
        _head_reduce_sigmoid_kernel,
        out_shape=jax.ShapeDtypeStruct((M, 1), jnp.float32),
        grid=(1,),
        in_specs=[pl.BlockSpec((M, K), lambda i: (0, 0)),
                  pl.BlockSpec((1, K), lambda i: (0, 0))],
        out_specs=pl.BlockSpec((M, 1), lambda i: (0, 0)),
        compiler_params=pltpu.CompilerParams(
            dimension_semantics=("arbitrary",)),
    )(x, w)


# ------------------------------- JAX glue -----------------------------------

def im2col_3d_cl(x, kernel_size, stride, padding):
    """Channel-last im2col.

    x: (N, D, H, W, C) -> (N, P, K) with K ordered (kd, kh, kw, Cin) so it matches
    weights reordered to (kd, kh, kw, Cin, Cout).reshape(K, Cout). With C in the
    lane (last) dim every tap is a contiguous lane-dense slice; no transposes.
    """
    N, D, H, W, C = x.shape
    kd, kh, kw = kernel_size
    sd, sh, sw = stride
    pd, ph, pw = padding
    xp = jnp.pad(x, ((0, 0), (pd, pd), (ph, ph), (pw, pw), (0, 0)))
    Do = (D + 2 * pd - kd) // sd + 1
    Ho = (H + 2 * ph - kh) // sh + 1
    Wo = (W + 2 * pw - kw) // sw + 1
    taps = []
    for dz in range(kd):
        for dy in range(kh):
            for dx in range(kw):
                taps.append(xp[:, dz:dz + sd * (Do - 1) + 1:sd,
                               dy:dy + sh * (Ho - 1) + 1:sh,
                               dx:dx + sw * (Wo - 1) + 1:sw, :])
    p = jnp.stack(taps, axis=4)                      # (N, Do, Ho, Wo, T, C)
    return p.reshape(N, Do * Ho * Wo, kd * kh * kw * C), (Do, Ho, Wo)
    # TODO(synk): for large volumes, move im2col into the kernel (per-tap DMA loop
    # over an HBM-resident input) instead of materializing the patch matrix.


def _round_up(x, m):
    return (x + m - 1) // m * m


# --------------------------- Discriminator model ----------------------------

def init_params(key):
    """PyTorch-layout (OIDHW) parameters, matching nn.Conv3d default init."""
    def conv_init(k, cout, cin, kd, kh, kw, bias=True):
        fan_in = cin * kd * kh * kw
        bound = 1.0 / np.sqrt(fan_in)
        k1, k2 = jax.random.split(k)
        w = jax.random.uniform(k1, (cout, cin, kd, kh, kw), jnp.float32,
                               -bound, bound)
        b = (jax.random.uniform(k2, (cout,), jnp.float32, -bound, bound)
             if bias else None)
        return w, b

    k1, k2, k3 = jax.random.split(key, 3)
    w1, b1 = conv_init(k1, 64, 2, 5, 5, 5)
    w2, b2 = conv_init(k2, 128, 64, 5, 5, 5)
    w3, _ = conv_init(k3, 1, 128, 4, 5, 6, bias=False)
    return dict(w1=w1, b1=b1, w2=w2, b2=b2, w3=w3)


def prepare_params(params):
    """One-time reorder OIDHW -> (kd*kh*kw*Cin, Cout); bf16 for MXU operands."""
    def reorder(w):
        cout = w.shape[0]
        return jnp.transpose(w, (2, 3, 4, 1, 0)).reshape(-1, cout)

    return dict(
        w1=reorder(params["w1"]).astype(jnp.bfloat16),          # (250, 64)
        b1=params["b1"].reshape(1, -1).astype(jnp.float32),
        w2=reorder(params["w2"]).astype(jnp.bfloat16),          # (8000, 128)
        b2=params["b2"].reshape(1, -1).astype(jnp.float32),
        w3=reorder(params["w3"]).reshape(1, -1),                 # (1, 15360) f32
    )


@jax.jit
def discriminator_forward(prep, img_PD, img_CT):
    # TODO(synk): trilinear `F.interpolate` branch (mismatched sizes) not implemented;
    # inputs here always share spatial dims, matching the equal-size path.
    assert img_PD.shape == img_CT.shape
    # NCDHW inputs -> channel-last once at the boundary; stay channel-last after.
    x = jnp.concatenate(
        [jnp.transpose(img_PD, (0, 2, 3, 4, 1)),
         jnp.transpose(img_CT, (0, 2, 3, 4, 1))], axis=-1)       # (N, D, H, W, 2)
    N = x.shape[0]

    # Block 1: Conv3d(2, 64, k=5, s=2, p=1) + LeakyReLU(0.2)
    patches, (Do, Ho, Wo) = im2col_3d_cl(x, (5, 5, 5), (2, 2, 2), (1, 1, 1))
    M = N * Do * Ho * Wo
    Mp = _round_up(M, 128)                                       # aligned M tiles
    xm = patches.reshape(M, -1).astype(jnp.bfloat16)
    xm = jnp.pad(xm, ((0, Mp - M), (0, 0)))
    y = gemm_bias_lrelu(xm, prep["w1"], prep["b1"], tm=128)
    x = y[:M].reshape(N, Do, Ho, Wo, 64)

    # Block 2: Conv3d(64, 128, k=5, s=2, p=1) + InstanceNorm3d + LeakyReLU(0.2)
    patches, (Do, Ho, Wo) = im2col_3d_cl(x, (5, 5, 5), (2, 2, 2), (1, 1, 1))
    y = gemm_instnorm_lrelu(patches.astype(jnp.bfloat16), prep["w2"], prep["b2"])
    x = y.reshape(N, Do, Ho, Wo, 128)

    # Head: Conv3d(128, 1, k=(4,5,6), p=(3,1,2), s=3, bias=False) + Sigmoid
    patches, (Do, Ho, Wo) = im2col_3d_cl(x, (4, 5, 6), (3, 3, 3), (3, 1, 2))
    xm = patches.reshape(N * Do * Ho * Wo, -1)                   # (4, 15360) f32
    y = head_reduce_sigmoid(xm, prep["w3"])                      # (4, 1)
    y = y.reshape(N, Do, Ho, Wo, 1)
    return jnp.transpose(y, (0, 4, 1, 2, 3))                     # NCDHW output


# ------------------------- pure-JAX reference check --------------------------

def reference_forward(params, img_PD, img_CT):
    x = jnp.concatenate([img_PD, img_CT], axis=1)
    dn = ('NCDHW', 'OIDHW', 'NCDHW')

    def conv(x, w, b, stride, padding):
        y = lax.conv_general_dilated(x, w, stride, padding,
                                     dimension_numbers=dn)
        if b is not None:
            y = y + b.reshape(1, -1, 1, 1, 1)
        return y

    y = conv(x, params["w1"], params["b1"], (2, 2, 2),
             ((1, 1), (1, 1), (1, 1)))
    y = jnp.where(y >= 0, y, 0.2 * y)
    y = conv(y, params["w2"], params["b2"], (2, 2, 2),
             ((1, 1), (1, 1), (1, 1)))
    mean = jnp.mean(y, axis=(2, 3, 4), keepdims=True)
    var = jnp.mean((y - mean) ** 2, axis=(2, 3, 4), keepdims=True)
    y = (y - mean) * lax.rsqrt(var + 1e-5)
    y = jnp.where(y >= 0, y, 0.2 * y)
    y = conv(y, params["w3"], None, (3, 3, 3),
             ((3, 3), (1, 1), (2, 2)))
    return 1.0 / (1.0 + jnp.exp(-y))


# ----------------------------------- main ------------------------------------

if __name__ == "__main__":
    key = jax.random.PRNGKey(0)
    k_pd, k_ct, k_w = jax.random.split(key, 3)
    img_PD = jax.random.normal(k_pd, (2, 1, 16, 16, 16), jnp.float32)
    img_CT = jax.random.normal(k_ct, (2, 1, 16, 16, 16), jnp.float32)
    params = init_params(k_w)
    prep = prepare_params(params)

    out = jax.block_until_ready(discriminator_forward(prep, img_PD, img_CT))
    assert out.shape == (2, 1, 2, 1, 1), out.shape

    ref = jax.block_until_ready(reference_forward(params, img_PD, img_CT))
    np.testing.assert_allclose(np.asarray(out), np.asarray(ref),
                               rtol=2e-2, atol=2e-2)
    print("KERNEL_OK")
</pallas_src>

<mosaic_0001>
module attributes {stable_mosaic.version = 11 : i64} {
  func.func @_gemm_bias_lrelu_kernel(%arg0: i32, %arg1: memref<128x250xbf16, #tpu.memory_space<vmem>>, %arg2: memref<250x64xbf16, #tpu.memory_space<vmem>>, %arg3: memref<1x64xf32, #tpu.memory_space<vmem>>, %arg4: memref<128x64xf32, #tpu.memory_space<vmem>>) attributes {dimension_semantics = [#tpu.dimension_semantics<parallel>], iteration_bounds = array<i64: 6>, scalar_prefetch = 0 : i64, scratch_operands = 0 : i64, tpu.core_type = #tpu.core_type<tc>, window_params = [{transform_indices = @transform_0, window_bounds = array<i64: 128, 250>}, {pipeline_mode = #tpu.pipeline_mode<synchronous>, transform_indices = @transform_1, window_bounds = array<i64: 250, 64>}, {pipeline_mode = #tpu.pipeline_mode<synchronous>, transform_indices = @transform_2, window_bounds = array<i64: 1, 64>}, {transform_indices = @transform_3, window_bounds = array<i64: 128, 64>}]} {
    %c0 = arith.constant 0 : index
    %c0_0 = arith.constant 0 : index
    %0 = vector.load %arg1[%c0, %c0_0] : memref<128x250xbf16, #tpu.memory_space<vmem>>, vector<128x250xbf16>
    %c0_1 = arith.constant 0 : index
    %c0_2 = arith.constant 0 : index
    %1 = vector.load %arg2[%c0_1, %c0_2] : memref<250x64xbf16, #tpu.memory_space<vmem>>, vector<250x64xbf16>
    %cst = arith.constant dense<0.000000e+00> : vector<128x64xf32>
    %2 = tpu.matmul %0, %1, %cst {dimension_numbers = #tpu.dot_dimension_numbers<[1], [0], [0], [1], [0, 0, 1, 1], [], []>} : vector<128x250xbf16>, vector<250x64xbf16>, vector<128x64xf32> -> vector<128x64xf32>
    %c0_3 = arith.constant 0 : index
    %c0_4 = arith.constant 0 : index
    %3 = vector.load %arg3[%c0_3, %c0_4] : memref<1x64xf32, #tpu.memory_space<vmem>>, vector<1x64xf32>
    %4 = vector.broadcast %3 : vector<1x64xf32> to vector<128x64xf32>
    %5 = arith.addf %2, %4 : vector<128x64xf32>
    %cst_5 = arith.constant 0.000000e+00 : f32
    %6 = vector.broadcast %cst_5 : f32 to vector<128x64xf32>
    %7 = arith.cmpf oge, %5, %6 : vector<128x64xf32>
    %cst_6 = arith.constant 2.000000e-01 : f32
    %8 = vector.broadcast %cst_6 : f32 to vector<128x64xf32>
    %9 = arith.mulf %8, %5 : vector<128x64xf32>
    %10 = arith.select %7, %5, %9 : vector<128x64xi1>, vector<128x64xf32>
    %c0_7 = arith.constant 0 : index
    %c0_8 = arith.constant 0 : index
    %11 = vector.load %arg4[%c0_7, %c0_8] : memref<128x64xf32, #tpu.memory_space<vmem>>, vector<128x64xf32>
    tpu.vector_store %arg4[%c0_7, %c0_8], %10 {strides = array<i32>} : memref<128x64xf32, #tpu.memory_space<vmem>>, vector<128x64xf32>,
    return
  }
  func.func @transform_0(%arg0: i32) -> (i32, i32) {
    %c0_i32 = arith.constant 0 : i32
    %c0_i32_0 = arith.constant 0 : i32
    return %arg0, %c0_i32 : i32, i32
  }
  func.func @transform_1(%arg0: i32) -> (i32, i32) {
    %c0_i32 = arith.constant 0 : i32
    %c0_i32_0 = arith.constant 0 : i32
    %c0_i32_1 = arith.constant 0 : i32
    return %c0_i32, %c0_i32_0 : i32, i32
  }
  func.func @transform_2(%arg0: i32) -> (i32, i32) {
    %c0_i32 = arith.constant 0 : i32
    %c0_i32_0 = arith.constant 0 : i32
    %c0_i32_1 = arith.constant 0 : i32
    return %c0_i32, %c0_i32_0 : i32, i32
  }
  func.func @transform_3(%arg0: i32) -> (i32, i32) {
    %c0_i32 = arith.constant 0 : i32
    %c0_i32_0 = arith.constant 0 : i32
    return %arg0, %c0_i32 : i32, i32
  }
}

module attributes {stable_mosaic.version = 11 : i64} {
  func.func @_gemm_instnorm_lrelu_kernel(%arg0: i32, %arg1: memref<1x27x8000xbf16, #tpu.memory_space<vmem>>, %arg2: memref<8000x128xbf16, #tpu.memory_space<vmem>>, %arg3: memref<1x128xf32, #tpu.memory_space<vmem>>, %arg4: memref<1x27x128xf32, #tpu.memory_space<vmem>>) attributes {dimension_semantics = [#tpu.dimension_semantics<parallel>], iteration_bounds = array<i64: 2>, scalar_prefetch = 0 : i64, scratch_operands = 0 : i64, tpu.core_type = #tpu.core_type<tc>, window_params = [{transform_indices = @transform_0, window_bounds = array<i64: 1, 27, 8000>}, {pipeline_mode = #tpu.pipeline_mode<synchronous>, transform_indices = @transform_1, window_bounds = array<i64: 8000, 128>}, {pipeline_mode = #tpu.pipeline_mode<synchronous>, transform_indices = @transform_2, window_bounds = array<i64: 1, 128>}, {transform_indices = @transform_3, window_bounds = array<i64: 1, 27, 128>}]} {
    %c0 = arith.constant 0 : index
    %c0_0 = arith.constant 0 : index
    %c0_1 = arith.constant 0 : index
    %0 = vector.load %arg1[%c0, %c0_0, %c0_1] : memref<1x27x8000xbf16, #tpu.memory_space<vmem>>, vector<1x27x8000xbf16>
    %1 = vector.shape_cast %0 : vector<1x27x8000xbf16> to vector<27x8000xbf16>
    %c0_2 = arith.constant 0 : index
    %c0_3 = arith.constant 0 : index
    %2 = vector.load %arg2[%c0_2, %c0_3] : memref<8000x128xbf16, #tpu.memory_space<vmem>>, vector<8000x128xbf16>
    %cst = arith.constant dense<0.000000e+00> : vector<27x128xf32>
    %3 = tpu.matmul %1, %2, %cst {dimension_numbers = #tpu.dot_dimension_numbers<[1], [0], [0], [1], [0, 0, 1, 1], [], []>} : vector<27x8000xbf16>, vector<8000x128xbf16>, vector<27x128xf32> -> vector<27x128xf32>
    %c0_4 = arith.constant 0 : index
    %c0_5 = arith.constant 0 : index
    %4 = vector.load %arg3[%c0_4, %c0_5] : memref<1x128xf32, #tpu.memory_space<vmem>>, vector<1x128xf32>
    %5 = vector.broadcast %4 : vector<1x128xf32> to vector<27x128xf32>
    %6 = arith.addf %3, %5 : vector<27x128xf32>
    %cst_6 = arith.constant dense<0.000000e+00> : vector<128xf32>
    %7 = vector.multi_reduction <add>, %6, %cst_6 [0] : vector<27x128xf32> to vector<128xf32>
    %8 = vector.shape_cast %7 : vector<128xf32> to vector<1x128xf32>
    %cst_7 = arith.constant 2.700000e+01 : f32
    %9 = vector.broadcast %cst_7 : f32 to vector<1x128xf32>
    %10 = arith.divf %8, %9 : vector<1x128xf32>
    %11 = vector.broadcast %10 : vector<1x128xf32> to vector<27x128xf32>
    %12 = arith.subf %6, %11 : vector<27x128xf32>
    %13 = arith.mulf %12, %12 : vector<27x128xf32>
    %cst_8 = arith.constant dense<0.000000e+00> : vector<128xf32>
    %14 = vector.multi_reduction <add>, %13, %cst_8 [0] : vector<27x128xf32> to vector<128xf32>
    %15 = vector.shape_cast %14 : vector<128xf32> to vector<1x128xf32>
    %cst_9 = arith.constant 2.700000e+01 : f32
    %16 = vector.broadcast %cst_9 : f32 to vector<1x128xf32>
    %17 = arith.divf %15, %16 : vector<1x128xf32>
    %18 = vector.broadcast %10 : vector<1x128xf32> to vector<27x128xf32>
    %19 = arith.subf %6, %18 : vector<27x128xf32>
    %cst_10 = arith.constant 9.99999974E-6 : f32
    %20 = vector.broadcast %cst_10 : f32 to vector<1x128xf32>
    %21 = arith.addf %17, %20 : vector<1x128xf32>
    %22 = math.rsqrt %21 : vector<1x128xf32>
    %23 = vector.broadcast %22 : vector<1x128xf32> to vector<27x128xf32>
    %24 = arith.mulf %19, %23 : vector<27x128xf32>
    %cst_11 = arith.constant 0.000000e+00 : f32
    %25 = vector.broadcast %cst_11 : f32 to vector<27x128xf32>
    %26 = arith.cmpf oge, %24, %25 : vector<27x128xf32>
    %cst_12 = arith.constant 2.000000e-01 : f32
    %27 = vector.broadcast %cst_12 : f32 to vector<27x128xf32>
    %28 = arith.mulf %27, %24 : vector<27x128xf32>
    %29 = arith.select %26, %24, %28 : vector<27x128xi1>, vector<27x128xf32>
    %c0_13 = arith.constant 0 : index
    %c0_14 = arith.constant 0 : index
    %c0_15 = arith.constant 0 : index
    %30 = vector.load %arg4[%c0_13, %c0_14, %c0_15] : memref<1x27x128xf32, #tpu.memory_space<vmem>>, vector<1x27x128xf32>
    %31 = vector.shape_cast %30 : vector<1x27x128xf32> to vector<27x128xf32>
    %32 = vector.shape_cast %29 : vector<27x128xf32> to vector<1x27x128xf32>
    tpu.vector_store %arg4[%c0_13, %c0_14, %c0_15], %32 {strides = array<i32>} : memref<1x27x128xf32, #tpu.memory_space<vmem>>, vector<1x27x128xf32>,
    return
  }
  func.func @transform_0(%arg0: i32) -> (i32, i32, i32) {
    %c0_i32 = arith.constant 0 : i32
    %c0_i32_0 = arith.constant 0 : i32
    %c0_i32_1 = arith.constant 0 : i32
    return %arg0, %c0_i32, %c0_i32_0 : i32, i32, i32
  }
  func.func @transform_1(%arg0: i32) -> (i32, i32) {
    %c0_i32 = arith.constant 0 : i32
    %c0_i32_0 = arith.constant 0 : i32
    %c0_i32_1 = arith.constant 0 : i32
    return %c0_i32, %c0_i32_0 : i32, i32
  }
  func.func @transform_2(%arg0: i32) -> (i32, i32) {
    %c0_i32 = arith.constant 0 : i32
    %c0_i32_0 = arith.constant 0 : i32
    %c0_i32_1 = arith.constant 0 : i32
    return %c0_i32, %c0_i32_0 : i32, i32
  }
  func.func @transform_3(%arg0: i32) -> (i32, i32, i32) {
    %c0_i32 = arith.constant 0 : i32
    %c0_i32_0 = arith.constant 0 : i32
    %c0_i32_1 = arith.constant 0 : i32
    return %arg0, %c0_i32, %c0_i32_0 : i32, i32, i32
  }
}

module attributes {stable_mosaic.version = 11 : i64} {
  func.func @_head_reduce_sigmoid_kernel(%arg0: i32, %arg1: memref<4x15360xf32, #tpu.memory_space<vmem>>, %arg2: memref<1x15360xf32, #tpu.memory_space<vmem>>, %arg3: memref<4x1xf32, #tpu.memory_space<vmem>>) attributes {dimension_semantics = [#tpu.dimension_semantics<arbitrary>], iteration_bounds = array<i64: 1>, scalar_prefetch = 0 : i64, scratch_operands = 0 : i64, tpu.core_type = #tpu.core_type<tc>, window_params = [{pipeline_mode = #tpu.pipeline_mode<synchronous>, transform_indices = @transform_0, window_bounds = array<i64: 4, 15360>}, {pipeline_mode = #tpu.pipeline_mode<synchronous>, transform_indices = @transform_1, window_bounds = array<i64: 1, 15360>}, {pipeline_mode = #tpu.pipeline_mode<synchronous>, transform_indices = @transform_2, window_bounds = array<i64: 4, 1>}]} {
    %c0 = arith.constant 0 : index
    %c0_0 = arith.constant 0 : index
    %0 = vector.load %arg1[%c0, %c0_0] : memref<4x15360xf32, #tpu.memory_space<vmem>>, vector<4x15360xf32>
    %c0_1 = arith.constant 0 : index
    %c0_2 = arith.constant 0 : index
    %1 = vector.load %arg2[%c0_1, %c0_2] : memref<1x15360xf32, #tpu.memory_space<vmem>>, vector<1x15360xf32>
    %2 = vector.broadcast %1 : vector<1x15360xf32> to vector<4x15360xf32>
    %3 = arith.mulf %0, %2 : vector<4x15360xf32>
    %cst = arith.constant dense<0.000000e+00> : vector<4xf32>
    %4 = vector.multi_reduction <add>, %3, %cst [1] : vector<4x15360xf32> to vector<4xf32>
    %5 = vector.shape_cast %4 : vector<4xf32> to vector<4x1xf32>
    %cst_3 = arith.constant 0.000000e+00 : f32
    %6 = vector.broadcast %cst_3 : f32 to vector<4x1xf32>
    %7 = arith.subf %6, %5 : vector<4x1xf32>
    %8 = math.exp %7 : vector<4x1xf32>
    %cst_4 = arith.constant 1.000000e+00 : f32
    %9 = vector.broadcast %cst_4 : f32 to vector<4x1xf32>
    %10 = arith.addf %9, %8 : vector<4x1xf32>
    %11 = tpu.reciprocal %10 {approx = true} : vector<4x1xf32> -> vector<4x1xf32>
    %c0_5 = arith.constant 0 : index
    %c0_6 = arith.constant 0 : index
    %12 = vector.load %arg3[%c0_5, %c0_6] : memref<4x1xf32, #tpu.memory_space<vmem>>, vector<4x1xf32>
    tpu.vector_store %arg3[%c0_5, %c0_6], %11 {strides = array<i32>} : memref<4x1xf32, #tpu.memory_space<vmem>>, vector<4x1xf32>,
    return
  }
  func.func @transform_0(%arg0: i32) -> (i32, i32) {
    %c0_i32 = arith.constant 0 : i32
    %c0_i32_0 = arith.constant 0 : i32
    %c0_i32_1 = arith.constant 0 : i32
    return %c0_i32, %c0_i32_0 : i32, i32
  }
  func.func @transform_1(%arg0: i32) -> (i32, i32) {
    %c0_i32 = arith.constant 0 : i32
    %c0_i32_0 = arith.constant 0 : i32
    %c0_i32_1 = arith.constant 0 : i32
    return %c0_i32, %c0_i32_0 : i32, i32
  }
  func.func @transform_2(%arg0: i32) -> (i32, i32) {
    %c0_i32 = arith.constant 0 : i32
    %c0_i32_0 = arith.constant 0 : i32
    %c0_i32_1 = arith.constant 0 : i32
    return %c0_i32, %c0_i32_0 : i32, i32
  }
}

</mosaic_0001>

<llo_original>
// kernel: discriminator_forward.3
$region0: #{discriminator_forward.3}
  #allocation0 [shape = 'u32[]', space=smem, size = 0x4, offset = 0x4, fixed_abs, tag = 'smem constant byte address 0x4 - core index']
  #allocation1 [shape = 'u32[144,128]{1,0:T(1,128)}', space=vmem, size = 0x12000, scoped, tag = 'internal scratch']
  %s0 = inlined_call_operand.vmem [shape: bf16[768,250], index: 0, kind: input, shape index: {}]
  %s1 = inlined_call_operand.vmem [shape: bf16[250,64], index: 1, kind: input, shape index: {}]
  %s2 = inlined_call_operand.vmem [shape: f32[1,64], index: 2, kind: input, shape index: {}]
  %s3 = inlined_call_operand.vmem [shape: f32[768,64], index: 3, kind: output, shape index: {}]
  %s4 = sld [smem:[#allocation0]]
  $region45: #{discriminator_forward.3} parent=0
    _
  %s6 = ssub.s32 1, %s4
  %s7 = scalar_select 0, %s6, %s4
  loop: start=0, step=1, limit=8
  $region2: #{discriminator_forward.3} parent=0 // loop_pre_header
    _
  $region3: #{discriminator_forward.3} parent=0 // loop_header
    %s9 = sphi 0, %s13
    %p10 = scmp.ge.s32.totalorder %s9, 8
    %s19 = sphi 0, %s21
    %s22 = sphi 0, %s19
    %s23 = sphi 0, %s22
    %s39 = sphi 0, %s23
    %s43 = sphi 0, %s43
    %s45 = sphi 0, %s43
    %s46 = sphi 0, %s45
    %s60 = sphi 0, %s46
    %s64 = sphi 0, %s64
    %s66 = sphi 0, %s64
    %s67 = sphi 0, %s66
    %s81 = sphi 0, %s67
    %s87 = sphi 0, %s89
    %s90 = sphi 0, %s87
    %s91 = sphi 0, %s90
    %s107 = sphi 0, %s91
  $region4: #{discriminator_forward.3} parent=0 // loop_header_branch
    %12 = sbr.rel (%p10) target = $region8
  $region5: #{discriminator_forward.3} parent=0 // loop_body
    %s14 = ssub.s32 %s9, 1
    %s15 = ssub.s32 %s9, 2
    %s16 = sadd.s32 %s9, 1
    %s17 = ssub.s32 %s9, %s16
    %p18 = scmp.eq.s32.totalorder %s17, 0
    %s20 = sadd.s32 %s19, 1
    %s21 = scalar_select %p18, %s19, %s20
    %p24 = pneg %p18
    %p25 = scmp.eq.s32.totalorder %s9, 5
    %p26 = por %p24, %p25
    %p27 = scmp.ne.s32.totalorder %s19, %s22
    %p28 = scmp.eq.s32.totalorder %s9, 0
    %p29 = por %p27, %p28
    %p30 = scmp.ne.s32.totalorder %s19, %s22
    %p31 = scmp.eq.s32.totalorder %s14, 5
    %p32 = por %p30, %p31
    %p33 = scmp.ne.s32.totalorder %s22, %s23
    %p34 = scmp.eq.s32.totalorder %s14, 0
    %p35 = por %p33, %p34
    %p36 = scmp.ne.s32.totalorder %s22, %s23
    %p37 = scmp.eq.s32.totalorder %s15, 5
    %p38 = por %p36, %p37
    %p40 = scmp.ne.s32.totalorder %s23, %s39
    %p41 = scmp.eq.s32.totalorder %s15, 0
    %p42 = por %p40, %p41
    %s44 = sadd.s32 %s43, 1
    %p47 = scmp.eq.s32.totalorder %s9, 5
    %p48 = scmp.ne.s32.totalorder %s43, %s45
    %p49 = scmp.eq.s32.totalorder %s9, 0
    %p50 = por %p48, %p49
    %p51 = scmp.ne.s32.totalorder %s43, %s45
    %p52 = scmp.eq.s32.totalorder %s14, 5
    %p53 = por %p51, %p52
    %p54 = scmp.ne.s32.totalorder %s45, %s46
    %p55 = scmp.eq.s32.totalorder %s14, 0
    %p56 = por %p54, %p55
    %p57 = scmp.ne.s32.totalorder %s45, %s46
    %p58 = scmp.eq.s32.totalorder %s15, 5
    %p59 = por %p57, %p58
    %p61 = scmp.ne.s32.totalorder %s46, %s60
    %p62 = scmp.eq.s32.totalorder %s15, 0
    %p63 = por %p61, %p62
    %s65 = sadd.s32 %s64, 1
    %p68 = scmp.eq.s32.totalorder %s9, 5
    %p69 = scmp.ne.s32.totalorder %s64, %s66
    %p70 = scmp.eq.s32.totalorder %s9, 0
    %p71 = por %p69, %p70
    %p72 = scmp.ne.s32.totalorder %s64, %s66
    %p73 = scmp.eq.s32.totalorder %s14, 5
    %p74 = por %p72, %p73
    %p75 = scmp.ne.s32.totalorder %s66, %s67
    %p76 = scmp.eq.s32.totalorder %s14, 0
    %p77 = por %p75, %p76
    %p78 = scmp.ne.s32.totalorder %s66, %s67
    %p79 = scmp.eq.s32.totalorder %s15, 5
    %p80 = por %p78, %p79
    %p82 = scmp.ne.s32.totalorder %s67, %s81
    %p83 = scmp.eq.s32.totalorder %s15, 0
    %p84 = por %p82, %p83
    %s85 = ssub.s32 %s9, %s16
    %p86 = scmp.eq.s32.totalorder %s85, 0
    %s88 = sadd.s32 %s87, 1
    %s89 = scalar_select %p86, %s87, %s88
    %p92 = pneg %p86
    %p93 = scmp.eq.s32.totalorder %s9, 5
    %p94 = por %p92, %p93
    %p95 = scmp.ne.s32.totalorder %s87, %s90
    %p96 = scmp.eq.s32.totalorder %s9, 0
    %p97 = por %p95, %p96
    %p98 = scmp.ne.s32.totalorder %s87, %s90
    %p99 = scmp.eq.s32.totalorder %s14, 5
    %p100 = por %p98, %p99
    %p101 = scmp.ne.s32.totalorder %s90, %s91
    %p102 = scmp.eq.s32.totalorder %s14, 0
    %p103 = por %p101, %p102
    %p104 = scmp.ne.s32.totalorder %s90, %s91
    %p105 = scmp.eq.s32.totalorder %s15, 5
    %p106 = por %p104, %p105
    %p108 = scmp.ne.s32.totalorder %s91, %s107
    %p109 = scmp.eq.s32.totalorder %s15, 0
    %p110 = por %p108, %p109
    %p111 = scmp.le.s32.totalorder 1, %s9
    %p112 = scmp.lt.s32.totalorder %s9, 7
    %p113 = pnand %p111, %p112
    %p114 = pneg %p113
    // Predicated region
    $region9: #{discriminator_forward.3} parent=5 // pred_check
      _
    $region10: #{discriminator_forward.3} parent=5 // pred_check_branch
      %116 = sbr.rel (%p113) target = $region12
    $region11: #{discriminator_forward.3} parent=5 // pred_region
      %s117 = ssub.s32 %s9, 1
      // Predicated region
      $region13: #{discriminator_forward.3} parent=11 // pred_check
        %p118 = pneg %p56
      $region14: #{discriminator_forward.3} parent=11 // pred_check_branch
        %120 = sbr.rel (%p118) target = $region16
      $region15: #{discriminator_forward.3} parent=11 // pred_region
        _
      $region16: #{discriminator_forward.3} parent=11 // pred_fallthru
        _
      // Predicated region
      $region17: #{discriminator_forward.3} parent=11 // pred_check
        %p121 = pneg %p77
      $region18: #{discriminator_forward.3} parent=11 // pred_check_branch
        %123 = sbr.rel (%p121) target = $region20
      $region19: #{discriminator_forward.3} parent=11 // pred_region
        _
      $region20: #{discriminator_forward.3} parent=11 // pred_fallthru
        _
    $region12: #{discriminator_forward.3} parent=5 // pred_fallthru
      _
    %p124 = scmp.lt.s32.totalorder %s9, 6
    // Predicated region
    $region21: #{discriminator_forward.3} parent=5 // pred_check
      %p125 = pneg %p124
    $region22: #{discriminator_forward.3} parent=5 // pred_check_branch
      %127 = sbr.rel (%p125) target = $region24
    $region23: #{discriminator_forward.3} parent=5 // pred_region
      // Predicated region
      $region25: #{discriminator_forward.3} parent=23 // pred_check
        %p128 = pneg %p29
      $region26: #{discriminator_forward.3} parent=23 // pred_check_branch
        %130 = sbr.rel (%p128) target = $region28
      $region27: #{discriminator_forward.3} parent=23 // pred_region
        %s131 = smul.u32 16, %s9
        %p132 = scmp.lt.s32.totalorder %s131, 95
        %s133 = scalar_select %p132, %s131, 95
        %s134 = smul.addr %s133, 2
        %s135 = smul.addr %s134, 4
        %s136 = scalar_lea.vmem %s0, %s135
        %s137 = smul.u32 16, %s9
      $region28: #{discriminator_forward.3} parent=23 // pred_fallthru
        _
    $region24: #{discriminator_forward.3} parent=5 // pred_fallthru
      _
    %p138 = scmp.le.s32.totalorder 1, %s9
    %p139 = scmp.lt.s32.totalorder %s9, 7
    %p140 = pnand %p138, %p139
    %p141 = pneg %p140
    // Predicated region
    $region29: #{discriminator_forward.3} parent=5 // pred_check
      _
    $region30: #{discriminator_forward.3} parent=5 // pred_check_branch
      %143 = sbr.rel (%p140) target = $region32
    $region31: #{discriminator_forward.3} parent=5 // pred_region
      %s144 = ssub.s32 %s9, 1
      %s145 = smul.u32 16, %s14
      %p146 = scmp.lt.s32.totalorder %s145, 95
      %s147 = scalar_select %p146, %s145, 95
      %s148 = smul.addr %s147, 2
      %s149 = smul.addr %s148, 4
      %s150 = scalar_lea.vmem %s0, %s149
      %p151 = pneg %p35
      %p152 = pneg %p32
      %p153 = pneg %p56
      %p154 = pneg %p53
      %p155 = pneg %p77
      %p156 = pneg %p74
      %p157 = pneg %p103
      %p158 = pneg %p100
      %s159 = smul.u32 16, %s14
      %p160 = scmp.lt.s32.totalorder %s159, 95
      %s161 = scalar_select %p160, %s159, 95
      %s162 = smul.addr %s161, 8
      %s163 = scalar_lea.vmem %s3, %s162
      %s164 = smul.u32 16, %s14
      %p165 = scmp.lt.s32.totalorder %s164, 95
      %s166 = scalar_select %p165, %s164, 95
      %s167 = smul.addr %s166, 2
      %s168 = smul.addr %s167, 4
      %s169 = scalar_lea.vmem %s0, %s168
      %s170 = smul.u32 16, %s14
      %s171 = smul.u32 16, %s14
      %p172 = scmp.lt.s32.totalorder %s171, 95
      %s173 = scalar_select %p172, %s171, 95
      %s174 = smul.addr %s173, 8
      %s175 = scalar_lea.vmem %s3, %s174
      %s176 = smul.u32 16, %s14
      %v178 = vld [vmem:[%s169] sm:$0xff]
      %v179 = vld [vmem:[%s169 + $0x8] sm:$0xff]
      %v180 = vld [vmem:[%s169 + $0x10] sm:$0xff]
      %v181 = vld [vmem:[%s169 + $0x18] sm:$0xff]
      %v182 = vld [vmem:[%s169 + $0x20] sm:$0xff]
      %v183 = vld [vmem:[%s169 + $0x28] sm:$0xff]
      %v184 = vld [vmem:[%s169 + $0x30] sm:$0xff]
      %v185 = vld [vmem:[%s169 + $0x38] sm:$0xff]
      %v186 = vld [vmem:[%s169 + $0x40] sm:$0xff]
      %v187 = vld [vmem:[%s169 + $0x48] sm:$0xff]
      %v188 = vld [vmem:[%s169 + $0x50] sm:$0xff]
      %v189 = vld [vmem:[%s169 + $0x58] sm:$0xff]
      %v190 = vld [vmem:[%s169 + $0x60] sm:$0xff]
      %v191 = vld [vmem:[%s169 + $0x68] sm:$0xff]
      %v192 = vld [vmem:[%s169 + $0x70] sm:$0xff]
      %v193 = vld [vmem:[%s169 + $0x78] sm:$0xff]
      %v194 = vld [vmem:[%s1] sm:$0xf]
      %v195 = vld [vmem:[%s1 + $0x4] sm:$0xf]
      %v196 = vld [vmem:[%s1 + $0x8] sm:$0xf]
      %v197 = vld [vmem:[%s1 + $0xc] sm:$0xf]
      %v198 = vld [vmem:[%s1 + $0x10] sm:$0xf]
      %v199 = vld [vmem:[%s1 + $0x14] sm:$0xf]
      %v200 = vld [vmem:[%s1 + $0x18] sm:$0xf]
      %v201 = vld [vmem:[%s1 + $0x1c] sm:$0xf]
      %v202 = vld [vmem:[%s1 + $0x20] sm:$0xf]
      %v203 = vld [vmem:[%s1 + $0x24] sm:$0xf]
      %v204 = vld [vmem:[%s1 + $0x28] sm:$0xf]
      %v205 = vld [vmem:[%s1 + $0x2c] sm:$0xf]
      %v206 = vld [vmem:[%s1 + $0x30] sm:$0xf]
      %v207 = vld [vmem:[%s1 + $0x34] sm:$0xf]
      %v208 = vld [vmem:[%s1 + $0x38] sm:$0xf]
      %v209 = vld [vmem:[%s1 + $0x3c] sm:$0xf]
      %v210 = vld [vmem:[%s1 + $0x40] sm:$0xf]
      %v211 = vld [vmem:[%s1 + $0x44] sm:$0xf]
      %v212 = vld [vmem:[%s1 + $0x48] sm:$0xf]
      %v213 = vld [vmem:[%s1 + $0x4c] sm:$0xf]
      %v214 = vld [vmem:[%s1 + $0x50] sm:$0xf]
      %v215 = vld [vmem:[%s1 + $0x54] sm:$0xf]
      %v216 = vld [vmem:[%s1 + $0x58] sm:$0xf]
      %v217 = vld [vmem:[%s1 + $0x5c] sm:$0xf]
      %v218 = vld [vmem:[%s1 + $0x60] sm:$0xf]
      %v219 = vld [vmem:[%s1 + $0x64] sm:$0xf]
      %v220 = vld [vmem:[%s1 + $0x68] sm:$0xf]
      %v221 = vld [vmem:[%s1 + $0x6c] sm:$0xf]
      %v222 = vld [vmem:[%s1 + $0x70] sm:$0xf]
      %v223 = vld [vmem:[%s1 + $0x74] sm:$0xf]
      %v224 = vld [vmem:[%s1 + $0x78] sm:$0xf]
      %v225 = vld [vmem:[%s1 + $0x7c] sm:$0x1]
      %v226 = vld [vmem:[%s2] sm:$0x1]
      %v228 = vlaneseq
      %v229 = vshrl.u32 %v228, 7
      %v230 = vsub.s32 0, %v229
      %v231 = vrot.slane %v226, %v230
      %v249 = vunpack.c.l.b16 %v178
      %v250 = vunpack.c.h.b16 %v178
      %v251 = vunpack.c.l.b16 %v179
      %v252 = vunpack.c.h.b16 %v179
      %v253 = vunpack.c.l.b16 %v180
      %v254 = vunpack.c.h.b16 %v180
      %v255 = vunpack.c.l.b16 %v181
      %v256 = vunpack.c.h.b16 %v181
      %v257 = vunpack.c.l.b16 %v182
      %v258 = vunpack.c.h.b16 %v182
      %v259 = vunpack.c.l.b16 %v183
      %v260 = vunpack.c.h.b16 %v183
      %v261 = vunpack.c.l.b16 %v184
      %v262 = vunpack.c.h.b16 %v184
      %v263 = vunpack.c.l.b16 %v185
      %v264 = vunpack.c.h.b16 %v185
      %v265 = vunpack.c.l.b16 %v186
      %v266 = vunpack.c.h.b16 %v186
      %v267 = vunpack.c.l.b16 %v187
      %v268 = vunpack.c.h.b16 %v187
      %v269 = vunpack.c.l.b16 %v188
      %v270 = vunpack.c.h.b16 %v188
      %v271 = vunpack.c.l.b16 %v189
      %v272 = vunpack.c.h.b16 %v189
      %v273 = vunpack.c.l.b16 %v190
      %v274 = vunpack.c.h.b16 %v190
      %v275 = vunpack.c.l.b16 %v191
      %v276 = vunpack.c.h.b16 %v191
      %v277 = vunpack.c.l.b16 %v192
      %v278 = vunpack.c.h.b16 %v192
      %v279 = vunpack.c.l.b16 %v193
      %v280 = vunpack.c.h.b16 %v193
      %v281 = vpack.c.b16 %v251, %v249
      %v282 = vpack.c.b16 %v252, %v250
      %v283 = vpack.c.b16 %v255, %v253
      %v284 = vpack.c.b16 %v256, %v254
      %v285 = vpack.c.b16 %v259, %v257
      %v286 = vpack.c.b16 %v260, %v258
      %v287 = vpack.c.b16 %v263, %v261
      %v288 = vpack.c.b16 %v264, %v262
      %v289 = vpack.c.b16 %v267, %v265
      %v290 = vpack.c.b16 %v268, %v266
      %v291 = vpack.c.b16 %v271, %v269
      %v292 = vpack.c.b16 %v272, %v270
      %v293 = vpack.c.b16 %v275, %v273
      %v294 = vpack.c.b16 %v276, %v274
      %v295 = vpack.c.b16 %v279, %v277
      %v296 = vpack.c.b16 %v280, %v278
      %v337 = vunpack.c.l.b16 %v194
      %v338 = vunpack.c.l.b16 %v195
      %v339 = vunpack.c.l.b16 %v196
      %v340 = vunpack.c.l.b16 %v197
      %v341 = vunpack.c.l.b16 %v198
      %v342 = vunpack.c.l.b16 %v199
      %v343 = vunpack.c.l.b16 %v200
      %v344 = vunpack.c.l.b16 %v201
      %v345 = vunpack.c.l.b16 %v202
      %v346 = vunpack.c.l.b16 %v203
      %v347 = vunpack.c.l.b16 %v204
      %v348 = vunpack.c.l.b16 %v205
      %v349 = vunpack.c.l.b16 %v206
      %v350 = vunpack.c.l.b16 %v207
      %v351 = vunpack.c.l.b16 %v208
      %v352 = vunpack.c.l.b16 %v209
      %v353 = vunpack.c.l.b16 %v210
      %v354 = vunpack.c.l.b16 %v211
      %v355 = vunpack.c.l.b16 %v212
      %v356 = vunpack.c.l.b16 %v213
      %v357 = vunpack.c.l.b16 %v214
      %v358 = vunpack.c.l.b16 %v215
      %v359 = vunpack.c.l.b16 %v216
      %v360 = vunpack.c.l.b16 %v217
      %v361 = vunpack.c.l.b16 %v218
      %v362 = vunpack.c.l.b16 %v219
      %v363 = vunpack.c.l.b16 %v220
      %v364 = vunpack.c.l.b16 %v221
      %v365 = vunpack.c.l.b16 %v222
      %v366 = vunpack.c.l.b16 %v223
      %v367 = vunpack.c.l.b16 %v224
      %v368 = vunpack.c.l.b16 %v225
      %v369 = vpack.c.b16 %v338, %v337
      %v370 = vpack.c.b16 %v340, %v339
      %v371 = vpack.c.b16 %v342, %v341
      %v372 = vpack.c.b16 %v344, %v343
      %v373 = vpack.c.b16 %v346, %v345
      %v374 = vpack.c.b16 %v348, %v347
      %v375 = vpack.c.b16 %v350, %v349
      %v376 = vpack.c.b16 %v352, %v351
      %v377 = vpack.c.b16 %v354, %v353
      %v378 = vpack.c.b16 %v356, %v355
      %v379 = vpack.c.b16 %v358, %v357
      %v380 = vpack.c.b16 %v360, %v359
      %v381 = vpack.c.b16 %v362, %v361
      %v382 = vpack.c.b16 %v364, %v363
      %v383 = vpack.c.b16 %v366, %v365
      %v384 = vpack.c.b16 %v368, %v367
      %vm400 = vcmask 998400
      %v402 = vsel %vm400, %v282, 0
      %v405 = vsel %vm400, %v284, 0
      %v408 = vsel %vm400, %v286, 0
      %v411 = vsel %vm400, %v288, 0
      %v414 = vsel %vm400, %v290, 0
      %v417 = vsel %vm400, %v292, 0
      %v420 = vsel %vm400, %v294, 0
      %v423 = vsel %vm400, %v296, 0
      %vm425 = vcmask 1044480
      %v427 = vsel %vm425, %v384, 0
      %429 = vmatprep.subr.bf16.mxu0 0
      %430 = vmatpush1.bf16.msra.mxu0 %v369
      %431 = vmatprep.subr.bf16.mxu0 0
      %432 = vmatpush1.bf16.msra.mxu0 %v370
      %433 = vmatprep.subr.bf16.mxu0 0
      %434 = vmatpush1.bf16.msra.mxu0 %v371
      %435 = vmatprep.subr.bf16.mxu0 0
      %436 = vmatpush1.bf16.msra.mxu0 %v372
      %437 = vmatprep.subr.bf16.mxu0 0
      %438 = vmatpush1.bf16.msra.mxu0 %v373
      %439 = vmatprep.subr.bf16.mxu0 0
      %440 = vmatpush1.bf16.msra.mxu0 %v374
      %441 = vmatprep.subr.bf16.mxu0 0
      %442 = vmatpush1.bf16.msra.mxu0 %v375
      %443 = vmatprep.subr.bf16.mxu0 0
      %444 = vmatpush1.bf16.msra.mxu0 %v376
      %445 = vmatprep.subr.bf16.mxu0 0
      %446 = vmatpush1.bf16.msra.mxu0 %v377
      %447 = vmatprep.subr.bf16.mxu0 0
      %448 = vmatpush1.bf16.msra.mxu0 %v378
      %449 = vmatprep.subr.bf16.mxu0 0
      %450 = vmatpush1.bf16.msra.mxu0 %v379
      %451 = vmatprep.subr.bf16.mxu0 0
      %452 = vmatpush1.bf16.msra.mxu0 %v380
      %453 = vmatprep.subr.bf16.mxu0 0
      %454 = vmatpush1.bf16.msra.mxu0 %v381
      %455 = vmatprep.subr.bf16.mxu0 0
      %456 = vmatpush1.bf16.msra.mxu0 %v382
      %457 = vmatprep.subr.bf16.mxu0 0
      %458 = vmatpush1.bf16.msra.mxu0 %v383
      %459 = vmatprep.subr.bf16.mxu0 0
      %460 = vmatpush1.bf16.msra.mxu0 %v427
      %461 = vmatprep.mubr.bf16.mxu0 %v402
      %462 = vmatmul.mubr.bf16.gmra.mrb[0].mxu0 %v281
      %v463 = vpop.f32.mrb[0].mxu0
      %v464 = vadd.f32 %v231, %v463
      %v465 = vpop.f32.mrb[0].mxu0
      %v466 = vpop.f32.mrb[0].mxu0
      %v467 = vadd.f32 %v231, %v466
      %v468 = vpop.f32.mrb[0].mxu0
      %469 = vmatprep.mubr.bf16.mxu0 %v405
      %470 = vmatmul.mubr.bf16.gmra.mrb[0].mxu0 %v283
      %v471 = vpop.f32.mrb[0].mxu0
      %v472 = vadd.f32 %v231, %v471
      %v473 = vpop.f32.mrb[0].mxu0
      %v474 = vpop.f32.mrb[0].mxu0
      %v475 = vadd.f32 %v231, %v474
      %v476 = vpop.f32.mrb[0].mxu0
      %477 = vmatprep.mubr.bf16.mxu0 %v408
      %478 = vmatmul.mubr.bf16.gmra.mrb[0].mxu0 %v285
      %v479 = vpop.f32.mrb[0].mxu0
      %v480 = vadd.f32 %v231, %v479
      %v481 = vpop.f32.mrb[0].mxu0
      %v482 = vpop.f32.mrb[0].mxu0
      %v483 = vadd.f32 %v231, %v482
      %v484 = vpop.f32.mrb[0].mxu0
      %485 = vmatprep.mubr.bf16.mxu0 %v411
      %486 = vmatmul.mubr.bf16.gmra.mrb[0].mxu0 %v287
      %v487 = vpop.f32.mrb[0].mxu0
      %v488 = vadd.f32 %v231, %v487
      %v489 = vpop.f32.mrb[0].mxu0
      %v490 = vpop.f32.mrb[0].mxu0
      %v491 = vadd.f32 %v231, %v490
      %v492 = vpop.f32.mrb[0].mxu0
      %493 = vmatprep.mubr.bf16.mxu0 %v414
      %494 = vmatmul.mubr.bf16.gmra.mrb[0].mxu0 %v289
      %v495 = vpop.f32.mrb[0].mxu0
      %v496 = vadd.f32 %v231, %v495
      %v497 = vpop.f32.mrb[0].mxu0
      %v498 = vpop.f32.mrb[0].mxu0
      %v499 = vadd.f32 %v231, %v498
      %v500 = vpop.f32.mrb[0].mxu0
      %501 = vmatprep.mubr.bf16.mxu0 %v417
      %502 = vmatmul.mubr.bf16.gmra.mrb[0].mxu0 %v291
      %v503 = vpop.f32.mrb[0].mxu0
      %v504 = vadd.f32 %v231, %v503
      %v505 = vpop.f32.mrb[0].mxu0
      %v506 = vpop.f32.mrb[0].mxu0
      %v507 = vadd.f32 %v231, %v506
      %v508 = vpop.f32.mrb[0].mxu0
      %509 = vmatprep.mubr.bf16.mxu0 %v420
      %510 = vmatmul.mubr.bf16.gmra.mrb[0].mxu0 %v293
      %v511 = vpop.f32.mrb[0].mxu0
      %v512 = vadd.f32 %v231, %v511
      %v513 = vpop.f32.mrb[0].mxu0
      %v514 = vpop.f32.mrb[0].mxu0
      %v515 = vadd.f32 %v231, %v514
      %v516 = vpop.f32.mrb[0].mxu0
      %517 = vmatprep.mubr.bf16.mxu0 %v423
      %518 = vmatmul.mubr.bf16.gmra.mrb[0].mxu0 %v295
      %v519 = vpop.f32.mrb[0].mxu0
      %v520 = vadd.f32 %v231, %v519
      %v521 = vpop.f32.mrb[0].mxu0
      %v522 = vpop.f32.mrb[0].mxu0
      %v523 = vadd.f32 %v231, %v522
      %v524 = vpop.f32.mrb[0].mxu0
      %525 = vdwg.mxu0
      %vm526 = vcmp.ge.f32.partialorder %v464, 0.0
      %vm527 = vcmp.ge.f32.partialorder %v467, 0.0
      %vm528 = vcmp.ge.f32.partialorder %v472, 0.0
      %vm529 = vcmp.ge.f32.partialorder %v475, 0.0
      %vm530 = vcmp.ge.f32.partialorder %v480, 0.0
      %vm531 = vcmp.ge.f32.partialorder %v483, 0.0
      %vm532 = vcmp.ge.f32.partialorder %v488, 0.0
      %vm533 = vcmp.ge.f32.partialorder %v491, 0.0
      %vm534 = vcmp.ge.f32.partialorder %v496, 0.0
      %vm535 = vcmp.ge.f32.partialorder %v499, 0.0
      %vm536 = vcmp.ge.f32.partialorder %v504, 0.0
      %vm537 = vcmp.ge.f32.partialorder %v507, 0.0
      %vm538 = vcmp.ge.f32.partialorder %v512, 0.0
      %vm539 = vcmp.ge.f32.partialorder %v515, 0.0
      %vm540 = vcmp.ge.f32.partialorder %v520, 0.0
      %vm541 = vcmp.ge.f32.partialorder %v523, 0.0
      %v542 = vmul.f32 %v464, 0.2
      %v543 = vmul.f32 %v467, 0.2
      %v544 = vmul.f32 %v472, 0.2
      %v545 = vmul.f32 %v475, 0.2
      %v546 = vmul.f32 %v480, 0.2
      %v547 = vmul.f32 %v483, 0.2
      %v548 = vmul.f32 %v488, 0.2
      %v549 = vmul.f32 %v491, 0.2
      %v550 = vmul.f32 %v496, 0.2
      %v551 = vmul.f32 %v499, 0.2
      %v552 = vmul.f32 %v504, 0.2
      %v553 = vmul.f32 %v507, 0.2
      %v554 = vmul.f32 %v512, 0.2
      %v555 = vmul.f32 %v515, 0.2
      %v556 = vmul.f32 %v520, 0.2
      %v557 = vmul.f32 %v523, 0.2
      %v558 = vsel %vm526, %v464, %v542
      %v559 = vsel %vm527, %v467, %v543
      %v560 = vsel %vm528, %v472, %v544
      %v561 = vsel %vm529, %v475, %v545
      %v562 = vsel %vm530, %v480, %v546
      %v563 = vsel %vm531, %v483, %v547
      %v564 = vsel %vm532, %v488, %v548
      %v565 = vsel %vm533, %v491, %v549
      %v566 = vsel %vm534, %v496, %v550
      %v567 = vsel %vm535, %v499, %v551
      %v568 = vsel %vm536, %v504, %v552
      %v569 = vsel %vm537, %v507, %v553
      %v570 = vsel %vm538, %v512, %v554
      %v571 = vsel %vm539, %v515, %v555
      %v572 = vsel %vm540, %v520, %v556
      %v573 = vsel %vm541, %v523, %v557
      %vm574 = vcmask 523264
      %575 = vst.msk [vmem:[%s175] sm:$0xff] %vm574, %v558
      %576 = vst.msk [vmem:[%s175 + $0x8] sm:$0xff] %vm574, %v559
      %577 = vst.msk [vmem:[%s175 + $0x10] sm:$0xff] %vm574, %v560
      %578 = vst.msk [vmem:[%s175 + $0x18] sm:$0xff] %vm574, %v561
      %579 = vst.msk [vmem:[%s175 + $0x20] sm:$0xff] %vm574, %v562
      %580 = vst.msk [vmem:[%s175 + $0x28] sm:$0xff] %vm574, %v563
      %581 = vst.msk [vmem:[%s175 + $0x30] sm:$0xff] %vm574, %v564
      %582 = vst.msk [vmem:[%s175 + $0x38] sm:$0xff] %vm574, %v565
      %583 = vst.msk [vmem:[%s175 + $0x40] sm:$0xff] %vm574, %v566
      %584 = vst.msk [vmem:[%s175 + $0x48] sm:$0xff] %vm574, %v567
      %585 = vst.msk [vmem:[%s175 + $0x50] sm:$0xff] %vm574, %v568
      %586 = vst.msk [vmem:[%s175 + $0x58] sm:$0xff] %vm574, %v569
      %587 = vst.msk [vmem:[%s175 + $0x60] sm:$0xff] %vm574, %v570
      %588 = vst.msk [vmem:[%s175 + $0x68] sm:$0xff] %vm574, %v571
      %589 = vst.msk [vmem:[%s175 + $0x70] sm:$0xff] %vm574, %v572
      %590 = vst.msk [vmem:[%s175 + $0x78] sm:$0xff] %vm574, %v573
      %s591 = smul.u32 16, %s14
      %p592 = scmp.lt.s32.totalorder %s591, 95
      %s593 = scalar_select %p592, %s591, 95
      %s594 = smul.addr %s593, 8
      %s595 = scalar_lea.vmem %s3, %s594
      // Predicated region
      $region33: #{discriminator_forward.3} parent=31 // pred_check
        %p596 = pneg %p100
      $region34: #{discriminator_forward.3} parent=31 // pred_check_branch
        %598 = sbr.rel (%p596) target = $region36
      $region35: #{discriminator_forward.3} parent=31 // pred_region
        %s599 = smul.u32 16, %s14
      $region36: #{discriminator_forward.3} parent=31 // pred_fallthru
        _
    $region32: #{discriminator_forward.3} parent=5 // pred_fallthru
      _
    %p600 = scmp.le.s32.totalorder 2, %s9
    // Predicated region
    $region37: #{discriminator_forward.3} parent=5 // pred_check
      %p601 = pneg %p600
    $region38: #{discriminator_forward.3} parent=5 // pred_check_branch
      %603 = sbr.rel (%p601) target = $region40
    $region39: #{discriminator_forward.3} parent=5 // pred_region
      %s604 = ssub.s32 %s9, 2
      // Predicated region
      $region41: #{discriminator_forward.3} parent=39 // pred_check
        %p605 = pneg %p106
      $region42: #{discriminator_forward.3} parent=39 // pred_check_branch
        %607 = sbr.rel (%p605) target = $region44
      $region43: #{discriminator_forward.3} parent=39 // pred_region
        %s608 = smul.u32 16, %s15
        %p609 = scmp.lt.s32.totalorder %s608, 95
        %s610 = scalar_select %p609, %s608, 95
        %s611 = smul.addr %s610, 8
        %s612 = scalar_lea.vmem %s3, %s611
      $region44: #{discriminator_forward.3} parent=39 // pred_fallthru
        _
    $region40: #{discriminator_forward.3} parent=5 // pred_fallthru
      _
  $region6: #{discriminator_forward.3} parent=0 // loop_footer
    %s13 = sadd.s32 1, %s9
  $region7: #{discriminator_forward.3} parent=0 // loop_footer_branch
    %8 = sbr.rel target = $region3
  $region8: #{discriminator_forward.3} parent=0 // loop_exit
    _

// kernel: discriminator_forward.4
$region0: #{discriminator_forward.4}
  #allocation0 [shape = 'u32[]', space=smem, size = 0x4, offset = 0x4, fixed_abs, tag = 'smem constant byte address 0x4 - core index']
  #allocation1 [shape = 'u32[144,128]{1,0:T(1,128)}', space=vmem, size = 0x12000, scoped, tag = 'internal scratch']
  %s0 = inlined_call_operand.vmem [shape: bf16[2,27,8000], index: 0, kind: input, shape index: {}]
  %s1 = inlined_call_operand.vmem [shape: bf16[8000,128], index: 1, kind: input, shape index: {}]
  %s2 = inlined_call_operand.vmem [shape: f32[1,128], index: 2, kind: input, shape index: {}]
  %s3 = inlined_call_operand.vmem [shape: f32[2,27,128], index: 3, kind: output, shape index: {}]
  %s4 = sld [smem:[#allocation0]]
  $region45: #{discriminator_forward.4} parent=0
    _
  %s6 = ssub.s32 1, %s4
  %s7 = scalar_select 0, %s6, %s4
  loop: start=0, step=1, limit=4
  $region2: #{discriminator_forward.4} parent=0 // loop_pre_header
    _
  $region3: #{discriminator_forward.4} parent=0 // loop_header
    %s9 = sphi 0, %s13
    %p10 = scmp.ge.s32.totalorder %s9, 4
    %s19 = sphi 0, %s21
    %s22 = sphi 0, %s19
    %s23 = sphi 0, %s22
    %s39 = sphi 0, %s23
    %s43 = sphi 0, %s43
    %s45 = sphi 0, %s43
    %s46 = sphi 0, %s45
    %s60 = sphi 0, %s46
    %s64 = sphi 0, %s64
    %s66 = sphi 0, %s64
    %s67 = sphi 0, %s66
    %s81 = sphi 0, %s67
    %s87 = sphi 0, %s89
    %s90 = sphi 0, %s87
    %s91 = sphi 0, %s90
    %s107 = sphi 0, %s91
  $region4: #{discriminator_forward.4} parent=0 // loop_header_branch
    %12 = sbr.rel (%p10) target = $region8
  $region5: #{discriminator_forward.4} parent=0 // loop_body
    %s14 = ssub.s32 %s9, 1
    %s15 = ssub.s32 %s9, 2
    %s16 = sadd.s32 %s9, 1
    %s17 = ssub.s32 %s9, %s16
    %p18 = scmp.eq.s32.totalorder %s17, 0
    %s20 = sadd.s32 %s19, 1
    %s21 = scalar_select %p18, %s19, %s20
    %p24 = pneg %p18
    %p25 = scmp.eq.s32.totalorder %s9, 1
    %p26 = por %p24, %p25
    %p27 = scmp.ne.s32.totalorder %s19, %s22
    %p28 = scmp.eq.s32.totalorder %s9, 0
    %p29 = por %p27, %p28
    %p30 = scmp.ne.s32.totalorder %s19, %s22
    %p31 = scmp.eq.s32.totalorder %s14, 1
    %p32 = por %p30, %p31
    %p33 = scmp.ne.s32.totalorder %s22, %s23
    %p34 = scmp.eq.s32.totalorder %s14, 0
    %p35 = por %p33, %p34
    %p36 = scmp.ne.s32.totalorder %s22, %s23
    %p37 = scmp.eq.s32.totalorder %s15, 1
    %p38 = por %p36, %p37
    %p40 = scmp.ne.s32.totalorder %s23, %s39
    %p41 = scmp.eq.s32.totalorder %s15, 0
    %p42 = por %p40, %p41
    %s44 = sadd.s32 %s43, 1
    %p47 = scmp.eq.s32.totalorder %s9, 1
    %p48 = scmp.ne.s32.totalorder %s43, %s45
    %p49 = scmp.eq.s32.totalorder %s9, 0
    %p50 = por %p48, %p49
    %p51 = scmp.ne.s32.totalorder %s43, %s45
    %p52 = scmp.eq.s32.totalorder %s14, 1
    %p53 = por %p51, %p52
    %p54 = scmp.ne.s32.totalorder %s45, %s46
    %p55 = scmp.eq.s32.totalorder %s14, 0
    %p56 = por %p54, %p55
    %p57 = scmp.ne.s32.totalorder %s45, %s46
    %p58 = scmp.eq.s32.totalorder %s15, 1
    %p59 = por %p57, %p58
    %p61 = scmp.ne.s32.totalorder %s46, %s60
    %p62 = scmp.eq.s32.totalorder %s15, 0
    %p63 = por %p61, %p62
    %s65 = sadd.s32 %s64, 1
    %p68 = scmp.eq.s32.totalorder %s9, 1
    %p69 = scmp.ne.s32.totalorder %s64, %s66
    %p70 = scmp.eq.s32.totalorder %s9, 0
    %p71 = por %p69, %p70
    %p72 = scmp.ne.s32.totalorder %s64, %s66
    %p73 = scmp.eq.s32.totalorder %s14, 1
    %p74 = por %p72, %p73
    %p75 = scmp.ne.s32.totalorder %s66, %s67
    %p76 = scmp.eq.s32.totalorder %s14, 0
    %p77 = por %p75, %p76
    %p78 = scmp.ne.s32.totalorder %s66, %s67
    %p79 = scmp.eq.s32.totalorder %s15, 1
    %p80 = por %p78, %p79
    %p82 = scmp.ne.s32.totalorder %s67, %s81
    %p83 = scmp.eq.s32.totalorder %s15, 0
    %p84 = por %p82, %p83
    %s85 = ssub.s32 %s9, %s16
    %p86 = scmp.eq.s32.totalorder %s85, 0
    %s88 = sadd.s32 %s87, 1
    %s89 = scalar_select %p86, %s87, %s88
    %p92 = pneg %p86
    %p93 = scmp.eq.s32.totalorder %s9, 1
    %p94 = por %p92, %p93
    %p95 = scmp.ne.s32.totalorder %s87, %s90
    %p96 = scmp.eq.s32.totalorder %s9, 0
    %p97 = por %p95, %p96
    %p98 = scmp.ne.s32.totalorder %s87, %s90
    %p99 = scmp.eq.s32.totalorder %s14, 1
    %p100 = por %p98, %p99
    %p101 = scmp.ne.s32.totalorder %s90, %s91
    %p102 = scmp.eq.s32.totalorder %s14, 0
    %p103 = por %p101, %p102
    %p104 = scmp.ne.s32.totalorder %s90, %s91
    %p105 = scmp.eq.s32.totalorder %s15, 1
    %p106 = por %p104, %p105
    %p108 = scmp.ne.s32.totalorder %s91, %s107
    %p109 = scmp.eq.s32.totalorder %s15, 0
    %p110 = por %p108, %p109
    %p111 = scmp.le.s32.totalorder 1, %s9
    %p112 = scmp.lt.s32.totalorder %s9, 3
    %p113 = pnand %p111, %p112
    %p114 = pneg %p113
    // Predicated region
    $region9: #{discriminator_forward.4} parent=5 // pred_check
      _
    $region10: #{discriminator_forward.4} parent=5 // pred_check_branch
      %116 = sbr.rel (%p113) target = $region12
    $region11: #{discriminator_forward.4} parent=5 // pred_region
      %s117 = ssub.s32 %s9, 1
      // Predicated region
      $region13: #{discriminator_forward.4} parent=11 // pred_check
        %p118 = pneg %p56
      $region14: #{discriminator_forward.4} parent=11 // pred_check_branch
        %120 = sbr.rel (%p118) target = $region16
      $region15: #{discriminator_forward.4} parent=11 // pred_region
        _
      $region16: #{discriminator_forward.4} parent=11 // pred_fallthru
        _
      // Predicated region
      $region17: #{discriminator_forward.4} parent=11 // pred_check
        %p121 = pneg %p77
      $region18: #{discriminator_forward.4} parent=11 // pred_check_branch
        %123 = sbr.rel (%p121) target = $region20
      $region19: #{discriminator_forward.4} parent=11 // pred_region
        _
      $region20: #{discriminator_forward.4} parent=11 // pred_fallthru
        _
    $region12: #{discriminator_forward.4} parent=5 // pred_fallthru
      _
    %p124 = scmp.lt.s32.totalorder %s9, 2
    // Predicated region
    $region21: #{discriminator_forward.4} parent=5 // pred_check
      %p125 = pneg %p124
    $region22: #{discriminator_forward.4} parent=5 // pred_check_branch
      %127 = sbr.rel (%p125) target = $region24
    $region23: #{discriminator_forward.4} parent=5 // pred_region
      // Predicated region
      $region25: #{discriminator_forward.4} parent=23 // pred_check
        %p128 = pneg %p29
      $region26: #{discriminator_forward.4} parent=23 // pred_check_branch
        %130 = sbr.rel (%p128) target = $region28
      $region27: #{discriminator_forward.4} parent=23 // pred_region
        %p131 = scmp.lt.s32.totalorder %s9, 1
        %s132 = scalar_select %p131, %s9, 1
        %s133 = smul.addr %s132, 252
        %s134 = smul.addr %s133, 4
        %s135 = scalar_lea.vmem %s0, %s134
      $region28: #{discriminator_forward.4} parent=23 // pred_fallthru
        _
    $region24: #{discriminator_forward.4} parent=5 // pred_fallthru
      _
    %p136 = scmp.le.s32.totalorder 1, %s9
    %p137 = scmp.lt.s32.totalorder %s9, 3
    %p138 = pnand %p136, %p137
    %p139 = pneg %p138
    // Predicated region
    $region29: #{discriminator_forward.4} parent=5 // pred_check
      _
    $region30: #{discriminator_forward.4} parent=5 // pred_check_branch
      %141 = sbr.rel (%p138) target = $region32
    $region31: #{discriminator_forward.4} parent=5 // pred_region
      %s142 = ssub.s32 %s9, 1
      %p143 = scmp.lt.s32.totalorder %s14, 1
      %s144 = scalar_select %p143, %s14, 1
      %s145 = smul.addr %s144, 252
      %s146 = smul.addr %s145, 4
      %s147 = scalar_lea.vmem %s0, %s146
      %p148 = pneg %p35
      %p149 = pneg %p32
      %p150 = pneg %p56
      %p151 = pneg %p53
      %p152 = pneg %p77
      %p153 = pneg %p74
      %p154 = pneg %p103
      %p155 = pneg %p100
      %p156 = scmp.lt.s32.totalorder %s14, 1
      %s157 = scalar_select %p156, %s14, 1
      %s158 = smul.addr %s157, 4
      %s159 = smul.addr %s158, 8
      %s160 = scalar_lea.vmem %s3, %s159
      %p161 = scmp.lt.s32.totalorder %s14, 1
      %s162 = scalar_select %p161, %s14, 1
      %s163 = smul.addr %s162, 252
      %s164 = smul.addr %s163, 4
      %s165 = scalar_lea.vmem %s0, %s164
      %p166 = scmp.lt.s32.totalorder %s14, 1
      %s167 = scalar_select %p166, %s14, 1
      %s168 = smul.addr %s167, 4
      %s169 = smul.addr %s168, 8
      %s170 = scalar_lea.vmem %s3, %s169
      %v172 = vld [vmem:[%s165] sm:$0xff]
      %v173 = vld [vmem:[%s165 + $0x8] sm:$0xff]
      %v174 = vld [vmem:[%s165 + $0x10] sm:$0xff]
      %v175 = vld [vmem:[%s165 + $0x18] sm:$0xff]
      %v176 = vld [vmem:[%s165 + $0x20] sm:$0xff]
      %v177 = vld [vmem:[%s165 + $0x28] sm:$0xff]
      %v178 = vld [vmem:[%s165 + $0x30] sm:$0xff]
      %v179 = vld [vmem:[%s165 + $0x38] sm:$0xff]
      %v180 = vld [vmem:[%s165 + $0x40] sm:$0xff]
      %v181 = vld [vmem:[%s165 + $0x48] sm:$0xff]
      %v182 = vld [vmem:[%s165 + $0x50] sm:$0xff]
      %v183 = vld [vmem:[%s165 + $0x58] sm:$0xff]
      %v184 = vld [vmem:[%s165 + $0x60] sm:$0xff]
      %v185 = vld [vmem:[%s165 + $0x68] sm:$0xff]
      %v186 = vld [vmem:[%s165 + $0x70] sm:$0xff]
      %v187 = vld [vmem:[%s165 + $0x78] sm:$0xff]
      %v188 = vld [vmem:[%s165 + $0x80] sm:$0xff]
      %v189 = vld [vmem:[%s165 + $0x88] sm:$0xff]
      %v190 = vld [vmem:[%s165 + $0x90] sm:$0xff]
      %v191 = vld [vmem:[%s165 + $0x98] sm:$0xff]
      %v192 = vld [vmem:[%s165 + $0xa0] sm:$0xff]
      %v193 = vld [vmem:[%s165 + $0xa8] sm:$0xff]
      %v194 = vld [vmem:[%s165 + $0xb0] sm:$0xff]
      %v195 = vld [vmem:[%s165 + $0xb8] sm:$0xff]
      %v196 = vld [vmem:[%s165 + $0xc0] sm:$0xff]
      %v197 = vld [vmem:[%s165 + $0xc8] sm:$0xff]
      %v198 = vld [vmem:[%s165 + $0xd0] sm:$0xff]
      %v199 = vld [vmem:[%s165 + $0xd8] sm:$0xff]
      %v200 = vld [vmem:[%s165 + $0xe0] sm:$0xff]
      %v201 = vld [vmem:[%s165 + $0xe8] sm:$0xff]
      %v202 = vld [vmem:[%s165 + $0xf0] sm:$0xff]
      %v203 = vld [vmem:[%s165 + $0xf8] sm:$0xf]
      %v204 = vld [vmem:[%s165 + $0xfc] sm:$0xff]
      %v205 = vld [vmem:[%s165 + $0x104] sm:$0xff]
      %v206 = vld [vmem:[%s165 + $0x10c] sm:$0xff]
      %v207 = vld [vmem:[%s165 + $0x114] sm:$0xff]
      %v208 = vld [vmem:[%s165 + $0x11c] sm:$0xff]
      %v209 = vld [vmem:[%s165 + $0x124] sm:$0xff]
      %v210 = vld [vmem:[%s165 + $0x12c] sm:$0xff]
      %v211 = vld [vmem:[%s165 + $0x134] sm:$0xff]
      %v212 = vld [vmem:[%s165 + $0x13c] sm:$0xff]
      %v213 = vld [vmem:[%s165 + $0x144] sm:$0xff]
      %v214 = vld [vmem:[%s165 + $0x14c] sm:$0xff]
      %v215 = vld [vmem:[%s165 + $0x154] sm:$0xff]
      %v216 = vld [vmem:[%s165 + $0x15c] sm:$0xff]
      %v217 = vld [vmem:[%s165 + $0x164] sm:$0xff]
      %v218 = vld [vmem:[%s165 + $0x16c] sm:$0xff]
      %v219 = vld [vmem:[%s165 + $0x174] sm:$0xff]
      %v220 = vld [vmem:[%s165 + $0x17c] sm:$0xff]
      %v221 = vld [vmem:[%s165 + $0x184] sm:$0xff]
      %v222 = vld [vmem:[%s165 + $0x18c] sm:$0xff]
      %v223 = vld [vmem:[%s165 + $0x194] sm:$0xff]
      %v224 = vld [vmem:[%s165 + $0x19c] sm:$0xff]
      %v225 = vld [vmem:[%s165 + $0x1a4] sm:$0xff]
      %v226 = vld [vmem:[%s165 + $0x1ac] sm:$0xff]
      %v227 = vld [vmem:[%s165 + $0x1b4] sm:$0xff]
      %v228 = vld [vmem:[%s165 + $0x1bc] sm:$0xff]
      %v229 = vld [vmem:[%s165 + $0x1c4] sm:$0xff]
      %v230 = vld [vmem:[%s165 + $0x1cc] sm:$0xff]
      %v231 = vld [vmem:[%s165 + $0x1d4] sm:$0xff]
      %v232 = vld [vmem:[%s165 + $0x1dc] sm:$0xff]
      %v233 = vld [vmem:[%s165 + $0x1e4] sm:$0xff]
      %v234 = vld [vmem:[%s165 + $0x1ec] sm:$0xff]
      %v235 = vld [vmem:[%s165 + $0x1f4] sm:$0xf]
      %v236 = vld [vmem:[%s165 + $0x1f8] sm:$0xff]
      %v237 = vld [vmem:[%s165 + $0x200] sm:$0xff]
      %v238 = vld [vmem:[%s165 + $0x208] sm:$0xff]
      %v239 = vld [vmem:[%s165 + $0x210] sm:$0xff]
      %v240 = vld [vmem:[%s165 + $0x218] sm:$0xff]
      %v241 = vld [vmem:[%s165 + $0x220] sm:$0xff]
      %v242 = vld [vmem:[%s165 + $0x228] sm:$0xff]
      %v243 = vld [vmem:[%s165 + $0x230] sm:$0xff]
      %v244 = vld [vmem:[%s165 + $0x238] sm:$0xff]
      %v245 = vld [vmem:[%s165 + $0x240] sm:$0xff]
      %v246 = vld [vmem:[%s165 + $0x248] sm:$0xff]
      %v247 = vld [vmem:[%s165 + $0x250] sm:$0xff]
      %v248 = vld [vmem:[%s165 + $0x258] sm:$0xff]
      %v249 = vld [vmem:[%s165 + $0x260] sm:$0xff]
      %v250 = vld [vmem:[%s165 + $0x268] sm:$0xff]
      %v251 = vld [vmem:[%s165 + $0x270] sm:$0xff]
      %v252 = vld [vmem:[%s165 + $0x278] sm:$0xff]
      %v253 = vld [vmem:[%s165 + $0x280] sm:$0xff]
      %v254 = vld [vmem:[%s165 + $0x288] sm:$0xff]
      %v255 = vld [vmem:[%s165 + $0x290] sm:$0xff]
      %v256 = vld [vmem:[%s165 + $0x298] sm:$0xff]
      %v257 = vld [vmem:[%s165 + $0x2a0] sm:$0xff]
      %v258 = vld [vmem:[%s165 + $0x2a8] sm:$0xff]
      %v259 = vld [vmem:[%s165 + $0x2b0] sm:$0xff]
      %v260 = vld [vmem:[%s165 + $0x2b8] sm:$0xff]
      %v261 = vld [vmem:[%s165 + $0x2c0] sm:$0xff]
      %v262 = vld [vmem:[%s165 + $0x2c8] sm:$0xff]
      %v263 = vld [vmem:[%s165 + $0x2d0] sm:$0xff]
      %v264 = vld [vmem:[%s165 + $0x2d8] sm:$0xff]
      %v265 = vld [vmem:[%s165 + $0x2e0] sm:$0xff]
      %v266 = vld [vmem:[%s165 + $0x2e8] sm:$0xff]
      %v267 = vld [vmem:[%s165 + $0x2f0] sm:$0xf]
      %v268 = vld [vmem:[%s165 + $0x2f4] sm:$0x33]
      %v269 = vld [vmem:[%s165 + $0x2fc] sm:$0x33]
      %v270 = vld [vmem:[%s165 + $0x304] sm:$0x33]
      %v271 = vld [vmem:[%s165 + $0x30c] sm:$0x33]
      %v272 = vld [vmem:[%s165 + $0x314] sm:$0x33]
      %v273 = vld [vmem:[%s165 + $0x31c] sm:$0x33]
      %v274 = vld [vmem:[%s165 + $0x324] sm:$0x33]
      %v275 = vld [vmem:[%s165 + $0x32c] sm:$0x33]
      %v276 = vld [vmem:[%s165 + $0x334] sm:$0x33]
      %v277 = vld [vmem:[%s165 + $0x33c] sm:$0x33]
      %v278 = vld [vmem:[%s165 + $0x344] sm:$0x33]
      %v279 = vld [vmem:[%s165 + $0x34c] sm:$0x33]
      %v280 = vld [vmem:[%s165 + $0x354] sm:$0x33]
      %v281 = vld [vmem:[%s165 + $0x35c] sm:$0x33]
      %v282 = vld [vmem:[%s165 + $0x364] sm:$0x33]
      %v283 = vld [vmem:[%s165 + $0x36c] sm:$0x33]
      %v284 = vld [vmem:[%s165 + $0x374] sm:$0x33]
      %v285 = vld [vmem:[%s165 + $0x37c] sm:$0x33]
      %v286 = vld [vmem:[%s165 + $0x384] sm:$0x33]
      %v287 = vld [vmem:[%s165 + $0x38c] sm:$0x33]
      %v288 = vld [vmem:[%s165 + $0x394] sm:$0x33]
      %v289 = vld [vmem:[%s165 + $0x39c] sm:$0x33]
      %v290 = vld [vmem:[%s165 + $0x3a4] sm:$0x33]
      %v291 = vld [vmem:[%s165 + $0x3ac] sm:$0x33]
      %v292 = vld [vmem:[%s165 + $0x3b4] sm:$0x33]
      %v293 = vld [vmem:[%s165 + $0x3bc] sm:$0x33]
      %v294 = vld [vmem:[%s165 + $0x3c4] sm:$0x33]
      %v295 = vld [vmem:[%s165 + $0x3cc] sm:$0x33]
      %v296 = vld [vmem:[%s165 + $0x3d4] sm:$0x33]
      %v297 = vld [vmem:[%s165 + $0x3dc] sm:$0x33]
      %v298 = vld [vmem:[%s165 + $0x3e4] sm:$0x33]
      %v299 = vld [vmem:[%s165 + $0x3ec] sm:$0x3]
      %v300 = vld [vmem:[%s1] sm:$0xf]
      %v301 = vld [vmem:[%s1 + $0x4] sm:$0xf]
      %v302 = vld [vmem:[%s1 + $0x8] sm:$0xf]
      %v303 = vld [vmem:[%s1 + $0xc] sm:$0xf]
      %v304 = vld [vmem:[%s1 + $0x10] sm:$0xf]
      %v305 = vld [vmem:[%s1 + $0x14] sm:$0xf]
      %v306 = vld [vmem:[%s1 + $0x18] sm:$0xf]
      %v307 = vld [vmem:[%s1 + $0x1c] sm:$0xf]
      %v308 = vld [vmem:[%s1 + $0x20] sm:$0xf]
      %v309 = vld [vmem:[%s1 + $0x24] sm:$0xf]
      %v310 = vld [vmem:[%s1 + $0x28] sm:$0xf]
      %v311 = vld [vmem:[%s1 + $0x2c] sm:$0xf]
      %v312 = vld [vmem:[%s1 + $0x30] sm:$0xf]
      %v313 = vld [vmem:[%s1 + $0x34] sm:$0xf]
      %v314 = vld [vmem:[%s1 + $0x38] sm:$0xf]
      %v315 = vld [vmem:[%s1 + $0x3c] sm:$0xf]
      %v316 = vld [vmem:[%s1 + $0x40] sm:$0xf]
      %v317 = vld [vmem:[%s1 + $0x44] sm:$0xf]
      %v318 = vld [vmem:[%s1 + $0x48] sm:$0xf]
      %v319 = vld [vmem:[%s1 + $0x4c] sm:$0xf]
      %v320 = vld [vmem:[%s1 + $0x50] sm:$0xf]
      %v321 = vld [vmem:[%s1 + $0x54] sm:$0xf]
      %v322 = vld [vmem:[%s1 + $0x58] sm:$0xf]
      %v323 = vld [vmem:[%s1 + $0x5c] sm:$0xf]
      %v324 = vld [vmem:[%s1 + $0x60] sm:$0xf]
      %v325 = vld [vmem:[%s1 + $0x64] sm:$0xf]
      %v326 = vld [vmem:[%s1 + $0x68] sm:$0xf]
      %v327 = vld [vmem:[%s1 + $0x6c] sm:$0xf]
      %v328 = vld [vmem:[%s1 + $0x70] sm:$0xf]
      %v329 = vld [vmem:[%s1 + $0x74] sm:$0xf]
      %v330 = vld [vmem:[%s1 + $0x78] sm:$0xf]
      %v331 = vld [vmem:[%s1 + $0x7c] sm:$0xf]
      %v332 = vld [vmem:[%s1 + $0x80] sm:$0xf]
      %v333 = vld [vmem:[%s1 + $0x84] sm:$0xf]
      %v334 = vld [vmem:[%s1 + $0x88] sm:$0xf]
      %v335 = vld [vmem:[%s1 + $0x8c] sm:$0xf]
      %v336 = vld [vmem:[%s1 + $0x90] sm:$0xf]
      %v337 = vld [vmem:[%s1 + $0x94] sm:$0xf]
      %v338 = vld [vmem:[%s1 + $0x98] sm:$0xf]
      %v339 = vld [vmem:[%s1 + $0x9c] sm:$0xf]
      %v340 = vld [vmem:[%s1 + $0xa0] sm:$0xf]
      %v341 = vld [vmem:[%s1 + $0xa4] sm:$0xf]
      %v342 = vld [vmem:[%s1 + $0xa8] sm:$0xf]
      %v343 = vld [vmem:[%s1 + $0xac] sm:$0xf]
      %v344 = vld [vmem:[%s1 + $0xb0] sm:$0xf]
      %v345 = vld [vmem:[%s1 + $0xb4] sm:$0xf]
      %v346 = vld [vmem:[%s1 + $0xb8] sm:$0xf]
      %v347 = vld [vmem:[%s1 + $0xbc] sm:$0xf]
      %v348 = vld [vmem:[%s1 + $0xc0] sm:$0xf]
      %v349 = vld [vmem:[%s1 + $0xc4] sm:$0xf]
      %v350 = vld [vmem:[%s1 + $0xc8] sm:$0xf]
      %v351 = vld [vmem:[%s1 + $0xcc] sm:$0xf]
      %v352 = vld [vmem:[%s1 + $0xd0] sm:$0xf]
      %v353 = vld [vmem:[%s1 + $0xd4] sm:$0xf]
      %v354 = vld [vmem:[%s1 + $0xd8] sm:$0xf]
      %v355 = vld [vmem:[%s1 + $0xdc] sm:$0xf]
      %v356 = vld [vmem:[%s1 + $0xe0] sm:$0xf]
      %v357 = vld [vmem:[%s1 + $0xe4] sm:$0xf]
      %v358 = vld [vmem:[%s1 + $0xe8] sm:$0xf]
      %v359 = vld [vmem:[%s1 + $0xec] sm:$0xf]
      %v360 = vld [vmem:[%s1 + $0xf0] sm:$0xf]
      %v361 = vld [vmem:[%s1 + $0xf4] sm:$0xf]
      %v362 = vld [vmem:[%s1 + $0xf8] sm:$0xf]
      %v363 = vld [vmem:[%s1 + $0xfc] sm:$0xf]
      %v364 = vld [vmem:[%s1 + $0x100] sm:$0xf]
      %v365 = vld [vmem:[%s1 + $0x104] sm:$0xf]
      %v366 = vld [vmem:[%s1 + $0x108] sm:$0xf]
      %v367 = vld [vmem:[%s1 + $0x10c] sm:$0xf]
      %v368 = vld [vmem:[%s1 + $0x110] sm:$0xf]
      %v369 = vld [vmem:[%s1 + $0x114] sm:$0xf]
      %v370 = vld [vmem:[%s1 + $0x118] sm:$0xf]
      %v371 = vld [vmem:[%s1 + $0x11c] sm:$0xf]
      %v372 = vld [vmem:[%s1 + $0x120] sm:$0xf]
      %v373 = vld [vmem:[%s1 + $0x124] sm:$0xf]
      %v374 = vld [vmem:[%s1 + $0x128] sm:$0xf]
      %v375 = vld [vmem:[%s1 + $0x12c] sm:$0xf]
      %v376 = vld [vmem:[%s1 + $0x130] sm:$0xf]
      %v377 = vld [vmem:[%s1 + $0x134] sm:$0xf]
      %v378 = vld [vmem:[%s1 + $0x138] sm:$0xf]
      %v379 = vld [vmem:[%s1 + $0x13c] sm:$0xf]
      %v380 = vld [vmem:[%s1 + $0x140] sm:$0xf]
      %v381 = vld [vmem:[%s1 + $0x144] sm:$0xf]
      %v382 = vld [vmem:[%s1 + $0x148] sm:$0xf]
      %v383 = vld [vmem:[%s1 + $0x14c] sm:$0xf]
      %v384 = vld [vmem:[%s1 + $0x150] sm:$0xf]
      %v385 = vld [vmem:[%s1 + $0x154] sm:$0xf]
      %v386 = vld [vmem:[%s1 + $0x158] sm:$0xf]
      %v387 = vld [vmem:[%s1 + $0x15c] sm:$0xf]
      %v388 = vld [vmem:[%s1 + $0x160] sm:$0xf]
      %v389 = vld [vmem:[%s1 + $0x164] sm:$0xf]
      %v390 = vld [vmem:[%s1 + $0x168] sm:$0xf]
      %v391 = vld [vmem:[%s1 + $0x16c] sm:$0xf]
      %v392 = vld [vmem:[%s1 + $0x170] sm:$0xf]
      %v393 = vld [vmem:[%s1 + $0x174] sm:$0xf]
      %v394 = vld [vmem:[%s1 + $0x178] sm:$0xf]
      %v395 = vld [vmem:[%s1 + $0x17c] sm:$0xf]
      %v396 = vld [vmem:[%s1 + $0x180] sm:$0xf]
      %v397 = vld [vmem:[%s1 + $0x184] sm:$0xf]
      %v398 = vld [vmem:[%s1 + $0x188] sm:$0xf]
      %v399 = vld [vmem:[%s1 + $0x18c] sm:$0xf]
      %v400 = vld [vmem:[%s1 + $0x190] sm:$0xf]
      %v401 = vld [vmem:[%s1 + $0x194] sm:$0xf]
      %v402 = vld [vmem:[%s1 + $0x198] sm:$0xf]
      %v403 = vld [vmem:[%s1 + $0x19c] sm:$0xf]
      %v404 = vld [vmem:[%s1 + $0x1a0] sm:$0xf]
      %v405 = vld [vmem:[%s1 + $0x1a4] sm:$0xf]
      %v406 = vld [vmem:[%s1 + $0x1a8] sm:$0xf]
      %v407 = vld [vmem:[%s1 + $0x1ac] sm:$0xf]
      %v408 = vld [vmem:[%s1 + $0x1b0] sm:$0xf]
      %v409 = vld [vmem:[%s1 + $0x1b4] sm:$0xf]
      %v410 = vld [vmem:[%s1 + $0x1b8] sm:$0xf]
      %v411 = vld [vmem:[%s1 + $0x1bc] sm:$0xf]
      %v412 = vld [vmem:[%s1 + $0x1c0] sm:$0xf]
      %v413 = vld [vmem:[%s1 + $0x1c4] sm:$0xf]
      %v414 = vld [vmem:[%s1 + $0x1c8] sm:$0xf]
      %v415 = vld [vmem:[%s1 + $0x1cc] sm:$0xf]
      %v416 = vld [vmem:[%s1 + $0x1d0] sm:$0xf]
      %v417 = vld [vmem:[%s1 + $0x1d4] sm:$0xf]
      %v418 = vld [vmem:[%s1 + $0x1d8] sm:$0xf]
      %v419 = vld [vmem:[%s1 + $0x1dc] sm:$0xf]
      %v420 = vld [vmem:[%s1 + $0x1e0] sm:$0xf]
      %v421 = vld [vmem:[%s1 + $0x1e4] sm:$0xf]
      %v422 = vld [vmem:[%s1 + $0x1e8] sm:$0xf]
      %v423 = vld [vmem:[%s1 + $0x1ec] sm:$0xf]
      %v424 = vld [vmem:[%s1 + $0x1f0] sm:$0xf]
      %v425 = vld [vmem:[%s1 + $0x1f4] sm:$0xf]
      %v426 = vld [vmem:[%s1 + $0x1f8] sm:$0xf]
      %v427 = vld [vmem:[%s1 + $0x1fc] sm:$0xf]
      %v428 = vld [vmem:[%s1 + $0x200] sm:$0xf]
      %v429 = vld [vmem:[%s1 + $0x204] sm:$0xf]
      %v430 = vld [vmem:[%s1 + $0x208] sm:$0xf]
      %v431 = vld [vmem:[%s1 + $0x20c] sm:$0xf]
      %v432 = vld [vmem:[%s1 + $0x210] sm:$0xf]
      %v433 = vld [vmem:[%s1 + $0x214] sm:$0xf]
      %v434 = vld [vmem:[%s1 + $0x218] sm:$0xf]
      %v435 = vld [vmem:[%s1 + $0x21c] sm:$0xf]
      %v436 = vld [vmem:[%s1 + $0x220] sm:$0xf]
      %v437 = vld [vmem:[%s1 + $0x224] sm:$0xf]
      %v438 = vld [vmem:[%s1 + $0x228] sm:$0xf]
      %v439 = vld [vmem:[%s1 + $0x22c] sm:$0xf]
      %v440 = vld [vmem:[%s1 + $0x230] sm:$0xf]
      %v441 = vld [vmem:[%s1 + $0x234] sm:$0xf]
      %v442 = vld [vmem:[%s1 + $0x238] sm:$0xf]
      %v443 = vld [vmem:[%s1 + $0x23c] sm:$0xf]
      %v444 = vld [vmem:[%s1 + $0x240] sm:$0xf]
      %v445 = vld [vmem:[%s1 + $0x244] sm:$0xf]
      %v446 = vld [vmem:[%s1 + $0x248] sm:$0xf]
      %v447 = vld [vmem:[%s1 + $0x24c] sm:$0xf]
      %v448 = vld [vmem:[%s1 + $0x250] sm:$0xf]
      %v449 = vld [vmem:[%s1 + $0x254] sm:$0xf]
      %v450 = vld [vmem:[%s1 + $0x258] sm:$0xf]
      %v451 = vld [vmem:[%s1 + $0x25c] sm:$0xf]
      %v452 = vld [vmem:[%s1 + $0x260] sm:$0xf]
      %v453 = vld [vmem:[%s1 + $0x264] sm:$0xf]
      %v454 = vld [vmem:[%s1 + $0x268] sm:$0xf]
      %v455 = vld [vmem:[%s1 + $0x26c] sm:$0xf]
      %v456 = vld [vmem:[%s1 + $0x270] sm:$0xf]
      %v457 = vld [vmem:[%s1 + $0x274] sm:$0xf]
      %v458 = vld [vmem:[%s1 + $0x278] sm:$0xf]
      %v459 = vld [vmem:[%s1 + $0x27c] sm:$0xf]
      %v460 = vld [vmem:[%s1 + $0x280] sm:$0xf]
      %v461 = vld [vmem:[%s1 + $0x284] sm:$0xf]
      %v462 = vld [vmem:[%s1 + $0x288] sm:$0xf]
      %v463 = vld [vmem:[%s1 + $0x28c] sm:$0xf]
      %v464 = vld [vmem:[%s1 + $0x290] sm:$0xf]
      %v465 = vld [vmem:[%s1 + $0x294] sm:$0xf]
      %v466 = vld [vmem:[%s1 + $0x298] sm:$0xf]
      %v467 = vld [vmem:[%s1 + $0x29c] sm:$0xf]
      %v468 = vld [vmem:[%s1 + $0x2a0] sm:$0xf]
      %v469 = vld [vmem:[%s1 + $0x2a4] sm:$0xf]
      %v470 = vld [vmem:[%s1 + $0x2a8] sm:$0xf]
      %v471 = vld [vmem:[%s1 + $0x2ac] sm:$0xf]
      %v472 = vld [vmem:[%s1 + $0x2b0] sm:$0xf]
      %v473 = vld [vmem:[%s1 + $0x2b4] sm:$0xf]
      %v474 = vld [vmem:[%s1 + $0x2b8] sm:$0xf]
      %v475 = vld [vmem:[%s1 + $0x2bc] sm:$0xf]
      %v476 = vld [vmem:[%s1 + $0x2c0] sm:$0xf]
      %v477 = vld [vmem:[%s1 + $0x2c4] sm:$0xf]
      %v478 = vld [vmem:[%s1 + $0x2c8] sm:$0xf]
      %v479 = vld [vmem:[%s1 + $0x2cc] sm:$0xf]
      %v480 = vld [vmem:[%s1 + $0x2d0] sm:$0xf]
      %v481 = vld [vmem:[%s1 + $0x2d4] sm:$0xf]
      %v482 = vld [vmem:[%s1 + $0x2d8] sm:$0xf]
      %v483 = vld [vmem:[%s1 + $0x2dc] sm:$0xf]
      %v484 = vld [vmem:[%s1 + $0x2e0] sm:$0xf]
      %v485 = vld [vmem:[%s1 + $0x2e4] sm:$0xf]
      %v486 = vld [vmem:[%s1 + $0x2e8] sm:$0xf]
      %v487 = vld [vmem:[%s1 + $0x2ec] sm:$0xf]
      %v488 = vld [vmem:[%s1 + $0x2f0] sm:$0xf]
      %v489 = vld [vmem:[%s1 + $0x2f4] sm:$0xf]
      %v490 = vld [vmem:[%s1 + $0x2f8] sm:$0xf]
      %v491 = vld [vmem:[%s1 + $0x2fc] sm:$0xf]
      %v492 = vld [vmem:[%s1 + $0x300] sm:$0xf]
      %v493 = vld [vmem:[%s1 + $0x304] sm:$0xf]
      %v494 = vld [vmem:[%s1 + $0x308] sm:$0xf]
      %v495 = vld [vmem:[%s1 + $0x30c] sm:$0xf]
      %v496 = vld [vmem:[%s1 + $0x310] sm:$0xf]
      %v497 = vld [vmem:[%s1 + $0x314] sm:$0xf]
      %v498 = vld [vmem:[%s1 + $0x318] sm:$0xf]
      %v499 = vld [vmem:[%s1 + $0x31c] sm:$0xf]
      %v500 = vld [vmem:[%s1 + $0x320] sm:$0xf]
      %v501 = vld [vmem:[%s1 + $0x324] sm:$0xf]
      %v502 = vld [vmem:[%s1 + $0x328] sm:$0xf]
      %v503 = vld [vmem:[%s1 + $0x32c] sm:$0xf]
      %v504 = vld [vmem:[%s1 + $0x330] sm:$0xf]
      %v505 = vld [vmem:[%s1 + $0x334] sm:$0xf]
      %v506 = vld [vmem:[%s1 + $0x338] sm:$0xf]
      %v507 = vld [vmem:[%s1 + $0x33c] sm:$0xf]
      %v508 = vld [vmem:[%s1 + $0x340] sm:$0xf]
      %v509 = vld [vmem:[%s1 + $0x344] sm:$0xf]
      %v510 = vld [vmem:[%s1 + $0x348] sm:$0xf]
      %v511 = vld [vmem:[%s1 + $0x34c] sm:$0xf]
      %v512 = vld [vmem:[%s1 + $0x350] sm:$0xf]
      %v513 = vld [vmem:[%s1 + $0x354] sm:$0xf]
      %v514 = vld [vmem:[%s1 + $0x358] sm:$0xf]
      %v515 = vld [vmem:[%s1 + $0x35c] sm:$0xf]
      %v516 = vld [vmem:[%s1 + $0x360] sm:$0xf]
      %v517 = vld [vmem:[%s1 + $0x364] sm:$0xf]
      %v518 = vld [vmem:[%s1 + $0x368] sm:$0xf]
      %v519 = vld [vmem:[%s1 + $0x36c] sm:$0xf]
      %v520 = vld [vmem:[%s1 + $0x370] sm:$0xf]
      %v521 = vld [vmem:[%s1 + $0x374] sm:$0xf]
      %v522 = vld [vmem:[%s1 + $0x378] sm:$0xf]
      %v523 = vld [vmem:[%s1 + $0x37c] sm:$0xf]
      %v524 = vld [vmem:[%s1 + $0x380] sm:$0xf]
      %v525 = vld [vmem:[%s1 + $0x384] sm:$0xf]
      %v526 = vld [vmem:[%s1 + $0x388] sm:$0xf]
      %v527 = vld [vmem:[%s1 + $0x38c] sm:$0xf]
      %v528 = vld [vmem:[%s1 + $0x390] sm:$0xf]
      %v529 = vld [vmem:[%s1 + $0x394] sm:$0xf]
      %v530 = vld [vmem:[%s1 + $0x398] sm:$0xf]
      %v531 = vld [vmem:[%s1 + $0x39c] sm:$0xf]
      %v532 = vld [vmem:[%s1 + $0x3a0] sm:$0xf]
      %v533 = vld [vmem:[%s1 + $0x3a4] sm:$0xf]
      %v534 = vld [vmem:[%s1 + $0x3a8] sm:$0xf]
      %v535 = vld [vmem:[%s1 + $0x3ac] sm:$0xf]
      %v536 = vld [vmem:[%s1 + $0x3b0] sm:$0xf]
      %v537 = vld [vmem:[%s1 + $0x3b4] sm:$0xf]
      %v538 = vld [vmem:[%s1 + $0x3b8] sm:$0xf]
      %v539 = vld [vmem:[%s1 + $0x3bc] sm:$0xf]
      %v540 = vld [vmem:[%s1 + $0x3c0] sm:$0xf]
      %v541 = vld [vmem:[%s1 + $0x3c4] sm:$0xf]
      %v542 = vld [vmem:[%s1 + $0x3c8] sm:$0xf]
      %v543 = vld [vmem:[%s1 + $0x3cc] sm:$0xf]
      %v544 = vld [vmem:[%s1 + $0x3d0] sm:$0xf]
      %v545 = vld [vmem:[%s1 + $0x3d4] sm:$0xf]
      %v546 = vld [vmem:[%s1 + $0x3d8] sm:$0xf]
      %v547 = vld [vmem:[%s1 + $0x3dc] sm:$0xf]
      %v548 = vld [vmem:[%s1 + $0x3e0] sm:$0xf]
      %v549 = vld [vmem:[%s1 + $0x3e4] sm:$0xf]
      %v550 = vld [vmem:[%s1 + $0x3e8] sm:$0xf]
      %v551 = vld [vmem:[%s1 + $0x3ec] sm:$0xf]
      %v552 = vld [vmem:[%s1 + $0x3f0] sm:$0xf]
      %v553 = vld [vmem:[%s1 + $0x3f4] sm:$0xf]
      %v554 = vld [vmem:[%s1 + $0x3f8] sm:$0xf]
      %v555 = vld [vmem:[%s1 + $0x3fc] sm:$0xf]
      %v556 = vld [vmem:[%s1 + $0x400] sm:$0xf]
      %v557 = vld [vmem:[%s1 + $0x404] sm:$0xf]
      %v558 = vld [vmem:[%s1 + $0x408] sm:$0xf]
      %v559 = vld [vmem:[%s1 + $0x40c] sm:$0xf]
      %v560 = vld [vmem:[%s1 + $0x410] sm:$0xf]
      %v561 = vld [vmem:[%s1 + $0x414] sm:$0xf]
      %v562 = vld [vmem:[%s1 + $0x418] sm:$0xf]
      %v563 = vld [vmem:[%s1 + $0x41c] sm:$0xf]
      %v564 = vld [vmem:[%s1 + $0x420] sm:$0xf]
      %v565 = vld [vmem:[%s1 + $0x424] sm:$0xf]
      %v566 = vld [vmem:[%s1 + $0x428] sm:$0xf]
      %v567 = vld [vmem:[%s1 + $0x42c] sm:$0xf]
      %v568 = vld [vmem:[%s1 + $0x430] sm:$0xf]
      %v569 = vld [vmem:[%s1 + $0x434] sm:$0xf]
      %v570 = vld [vmem:[%s1 + $0x438] sm:$0xf]
      %v571 = vld [vmem:[%s1 + $0x43c] sm:$0xf]
      %v572 = vld [vmem:[%s1 + $0x440] sm:$0xf]
      %v573 = vld [vmem:[%s1 + $0x444] sm:$0xf]
      %v574 = vld [vmem:[%s1 + $0x448] sm:$0xf]
      %v575 = vld [vmem:[%s1 + $0x44c] sm:$0xf]
      %v576 = vld [vmem:[%s1 + $0x450] sm:$0xf]
      %v577 = vld [vmem:[%s1 + $0x454] sm:$0xf]
      %v578 = vld [vmem:[%s1 + $0x458] sm:$0xf]
      %v579 = vld [vmem:[%s1 + $0x45c] sm:$0xf]
      %v580 = vld [vmem:[%s1 + $0x460] sm:$0xf]
      %v581 = vld [vmem:[%s1 + $0x464] sm:$0xf]
      %v582 = vld [vmem:[%s1 + $0x468] sm:$0xf]
      %v583 = vld [vmem:[%s1 + $0x46c] sm:$0xf]
      %v584 = vld [vmem:[%s1 + $0x470] sm:$0xf]
      %v585 = vld [vmem:[%s1 + $0x474] sm:$0xf]
      %v586 = vld [vmem:[%s1 + $0x478] sm:$0xf]
      %v587 = vld [vmem:[%s1 + $0x47c] sm:$0xf]
      %v588 = vld [vmem:[%s1 + $0x480] sm:$0xf]
      %v589 = vld [vmem:[%s1 + $0x484] sm:$0xf]
      %v590 = vld [vmem:[%s1 + $0x488] sm:$0xf]
      %v591 = vld [vmem:[%s1 + $0x48c] sm:$0xf]
      %v592 = vld [vmem:[%s1 + $0x490] sm:$0xf]
      %v593 = vld [vmem:[%s1 + $0x494] sm:$0xf]
      %v594 = vld [vmem:[%s1 + $0x498] sm:$0xf]
      %v595 = vld [vmem:[%s1 + $0x49c] sm:$0xf]
      %v596 = vld [vmem:[%s1 + $0x4a0] sm:$0xf]
      %v597 = vld [vmem:[%s1 + $0x4a4] sm:$0xf]
      %v598 = vld [vmem:[%s1 + $0x4a8] sm:$0xf]
      %v599 = vld [vmem:[%s1 + $0x4ac] sm:$0xf]
      %v600 = vld [vmem:[%s1 + $0x4b0] sm:$0xf]
      %v601 = vld [vmem:[%s1 + $0x4b4] sm:$0xf]
      %v602 = vld [vmem:[%s1 + $0x4b8] sm:$0xf]
      %v603 = vld [vmem:[%s1 + $0x4bc] sm:$0xf]
      %v604 = vld [vmem:[%s1 + $0x4c0] sm:$0xf]
      %v605 = vld [vmem:[%s1 + $0x4c4] sm:$0xf]
      %v606 = vld [vmem:[%s1 + $0x4c8] sm:$0xf]
      %v607 = vld [vmem:[%s1 + $0x4cc] sm:$0xf]
      %v608 = vld [vmem:[%s1 + $0x4d0] sm:$0xf]
      %v609 = vld [vmem:[%s1 + $0x4d4] sm:$0xf]
      %v610 = vld [vmem:[%s1 + $0x4d8] sm:$0xf]
      %v611 = vld [vmem:[%s1 + $0x4dc] sm:$0xf]
      %v612 = vld [vmem:[%s1 + $0x4e0] sm:$0xf]
      %v613 = vld [vmem:[%s1 + $0x4e4] sm:$0xf]
      %v614 = vld [vmem:[%s1 + $0x4e8] sm:$0xf]
      %v615 = vld [vmem:[%s1 + $0x4ec] sm:$0xf]
      %v616 = vld [vmem:[%s1 + $0x4f0] sm:$0xf]
      %v617 = vld [vmem:[%s1 + $0x4f4] sm:$0xf]
      %v618 = vld [vmem:[%s1 + $0x4f8] sm:$0xf]
      %v619 = vld [vmem:[%s1 + $0x4fc] sm:$0xf]
      %v620 = vld [vmem:[%s1 + $0x500] sm:$0xf]
      %v621 = vld [vmem:[%s1 + $0x504] sm:$0xf]
      %v622 = vld [vmem:[%s1 + $0x508] sm:$0xf]
      %v623 = vld [vmem:[%s1 + $0x50c] sm:$0xf]
      %v624 = vld [vmem:[%s1 + $0x510] sm:$0xf]
      %v625 = vld [vmem:[%s1 + $0x514] sm:$0xf]
      %v626 = vld [vmem:[%s1 + $0x518] sm:$0xf]
      %v627 = vld [vmem:[%s1 + $0x51c] sm:$0xf]
      %v628 = vld [vmem:[%s1 + $0x520] sm:$0xf]
      %v629 = vld [vmem:[%s1 + $0x524] sm:$0xf]
      %v630 = vld [vmem:[%s1 + $0x528] sm:$0xf]
      %v631 = vld [vmem:[%s1 + $0x52c] sm:$0xf]
      %v632 = vld [vmem:[%s1 + $0x530] sm:$0xf]
      %v633 = vld [vmem:[%s1 + $0x534] sm:$0xf]
      %v634 = vld [vmem:[%s1 + $0x538] sm:$0xf]
      %v635 = vld [vmem:[%s1 + $0x53c] sm:$0xf]
      %v636 = vld [vmem:[%s1 + $0x540] sm:$0xf]
      %v637 = vld [vmem:[%s1 + $0x544] sm:$0xf]
      %v638 = vld [vmem:[%s1 + $0x548] sm:$0xf]
      %v639 = vld [vmem:[%s1 + $0x54c] sm:$0xf]
      %v640 = vld [vmem:[%s1 + $0x550] sm:$0xf]
      %v641 = vld [vmem:[%s1 + $0x554] sm:$0xf]
      %v642 = vld [vmem:[%s1 + $0x558] sm:$0xf]
      %v643 = vld [vmem:[%s1 + $0x55c] sm:$0xf]
      %v644 = vld [vmem:[%s1 + $0x560] sm:$0xf]
      %v645 = vld [vmem:[%s1 + $0x564] sm:$0xf]
      %v646 = vld [vmem:[%s1 + $0x568] sm:$0xf]
      %v647 = vld [vmem:[%s1 + $0x56c] sm:$0xf]
      %v648 = vld [vmem:[%s1 + $0x570] sm:$0xf]
      %v649 = vld [vmem:[%s1 + $0x574] sm:$0xf]
      %v650 = vld [vmem:[%s1 + $0x578] sm:$0xf]
      %v651 = vld [vmem:[%s1 + $0x57c] sm:$0xf]
      %v652 = vld [vmem:[%s1 + $0x580] sm:$0xf]
      %v653 = vld [vmem:[%s1 + $0x584] sm:$0xf]
      %v654 = vld [vmem:[%s1 + $0x588] sm:$0xf]
      %v655 = vld [vmem:[%s1 + $0x58c] sm:$0xf]
      %v656 = vld [vmem:[%s1 + $0x590] sm:$0xf]
      %v657 = vld [vmem:[%s1 + $0x594] sm:$0xf]
      %v658 = vld [vmem:[%s1 + $0x598] sm:$0xf]
      %v659 = vld [vmem:[%s1 + $0x59c] sm:$0xf]
      %v660 = vld [vmem:[%s1 + $0x5a0] sm:$0xf]
      %v661 = vld [vmem:[%s1 + $0x5a4] sm:$0xf]
      %v662 = vld [vmem:[%s1 + $0x5a8] sm:$0xf]
      %v663 = vld [vmem:[%s1 + $0x5ac] sm:$0xf]
      %v664 = vld [vmem:[%s1 + $0x5b0] sm:$0xf]
      %v665 = vld [vmem:[%s1 + $0x5b4] sm:$0xf]
      %v666 = vld [vmem:[%s1 + $0x5b8] sm:$0xf]
      %v667 = vld [vmem:[%s1 + $0x5bc] sm:$0xf]
      %v668 = vld [vmem:[%s1 + $0x5c0] sm:$0xf]
      %v669 = vld [vmem:[%s1 + $0x5c4] sm:$0xf]
      %v670 = vld [vmem:[%s1 + $0x5c8] sm:$0xf]
      %v671 = vld [vmem:[%s1 + $0x5cc] sm:$0xf]
      %v672 = vld [vmem:[%s1 + $0x5d0] sm:$0xf]
      %v673 = vld [vmem:[%s1 + $0x5d4] sm:$0xf]
      %v674 = vld [vmem:[%s1 + $0x5d8] sm:$0xf]
      %v675 = vld [vmem:[%s1 + $0x5dc] sm:$0xf]
      %v676 = vld [vmem:[%s1 + $0x5e0] sm:$0xf]
      %v677 = vld [vmem:[%s1 + $0x5e4] sm:$0xf]
      %v678 = vld [vmem:[%s1 + $0x5e8] sm:$0xf]
      %v679 = vld [vmem:[%s1 + $0x5ec] sm:$0xf]
      %v680 = vld [vmem:[%s1 + $0x5f0] sm:$0xf]
      %v681 = vld [vmem:[%s1 + $0x5f4] sm:$0xf]
      %v682 = vld [vmem:[%s1 + $0x5f8] sm:$0xf]
      %v683 = vld [vmem:[%s1 + $0x5fc] sm:$0xf]
      %v684 = vld [vmem:[%s1 + $0x600] sm:$0xf]
      %v685 = vld [vmem:[%s1 + $0x604] sm:$0xf]
      %v686 = vld [vmem:[%s1 + $0x608] sm:$0xf]
      %v687 = vld [vmem:[%s1 + $0x60c] sm:$0xf]
      %v688 = vld [vmem:[%s1 + $0x610] sm:$0xf]
      %v689 = vld [vmem:[%s1 + $0x614] sm:$0xf]
      %v690 = vld [vmem:[%s1 + $0x618] sm:$0xf]
      %v691 = vld [vmem:[%s1 + $0x61c] sm:$0xf]
      %v692 = vld [vmem:[%s1 + $0x620] sm:$0xf]
      %v693 = vld [vmem:[%s1 + $0x624] sm:$0xf]
      %v694 = vld [vmem:[%s1 + $0x628] sm:$0xf]
      %v695 = vld [vmem:[%s1 + $0x62c] sm:$0xf]
      %v696 = vld [vmem:[%s1 + $0x630] sm:$0xf]
      %v697 = vld [vmem:[%s1 + $0x634] sm:$0xf]
      %v698 = vld [vmem:[%s1 + $0x638] sm:$0xf]
      %v699 = vld [vmem:[%s1 + $0x63c] sm:$0xf]
      %v700 = vld [vmem:[%s1 + $0x640] sm:$0xf]
      %v701 = vld [vmem:[%s1 + $0x644] sm:$0xf]
      %v702 = vld [vmem:[%s1 + $0x648] sm:$0xf]
      %v703 = vld [vmem:[%s1 + $0x64c] sm:$0xf]
      %v704 = vld [vmem:[%s1 + $0x650] sm:$0xf]
      %v705 = vld [vmem:[%s1 + $0x654] sm:$0xf]
      %v706 = vld [vmem:[%s1 + $0x658] sm:$0xf]
      %v707 = vld [vmem:[%s1 + $0x65c] sm:$0xf]
      %v708 = vld [vmem:[%s1 + $0x660] sm:$0xf]
      %v709 = vld [vmem:[%s1 + $0x664] sm:$0xf]
      %v710 = vld [vmem:[%s1 + $0x668] sm:$0xf]
      %v711 = vld [vmem:[%s1 + $0x66c] sm:$0xf]
      %v712 = vld [vmem:[%s1 + $0x670] sm:$0xf]
      %v713 = vld [vmem:[%s1 + $0x674] sm:$0xf]
      %v714 = vld [vmem:[%s1 + $0x678] sm:$0xf]
      %v715 = vld [vmem:[%s1 + $0x67c] sm:$0xf]
      %v716 = vld [vmem:[%s1 + $0x680] sm:$0xf]
      %v717 = vld [vmem:[%s1 + $0x684] sm:$0xf]
      %v718 = vld [vmem:[%s1 + $0x688] sm:$0xf]
      %v719 = vld [vmem:[%s1 + $0x68c] sm:$0xf]
      %v720 = vld [vmem:[%s1 + $0x690] sm:$0xf]
      %v721 = vld [vmem:[%s1 + $0x694] sm:$0xf]
      %v722 = vld [vmem:[%s1 + $0x698] sm:$0xf]
      %v723 = vld [vmem:[%s1 + $0x69c] sm:$0xf]
      %v724 = vld [vmem:[%s1 + $0x6a0] sm:$0xf]
      %v725 = vld [vmem:[%s1 + $0x6a4] sm:$0xf]
      %v726 = vld [vmem:[%s1 + $0x6a8] sm:$0xf]
      %v727 = vld [vmem:[%s1 + $0x6ac] sm:$0xf]
      %v728 = vld [vmem:[%s1 + $0x6b0] sm:$0xf]
      %v729 = vld [vmem:[%s1 + $0x6b4] sm:$0xf]
      %v730 = vld [vmem:[%s1 + $0x6b8] sm:$0xf]
      %v731 = vld [vmem:[%s1 + $0x6bc] sm:$0xf]
      %v732 = vld [vmem:[%s1 + $0x6c0] sm:$0xf]
      %v733 = vld [vmem:[%s1 + $0x6c4] sm:$0xf]
      %v734 = vld [vmem:[%s1 + $0x6c8] sm:$0xf]
      %v735 = vld [vmem:[%s1 + $0x6cc] sm:$0xf]
      %v736 = vld [vmem:[%s1 + $0x6d0] sm:$0xf]
      %v737 = vld [vmem:[%s1 + $0x6d4] sm:$0xf]
      %v738 = vld [vmem:[%s1 + $0x6d8] sm:$0xf]
      %v739 = vld [vmem:[%s1 + $0x6dc] sm:$0xf]
      %v740 = vld [vmem:[%s1 + $0x6e0] sm:$0xf]
      %v741 = vld [vmem:[%s1 + $0x6e4] sm:$0xf]
      %v742 = vld [vmem:[%s1 + $0x6e8] sm:$0xf]
      %v743 = vld [vmem:[%s1 + $0x6ec] sm:$0xf]
      %v744 = vld [vmem:[%s1 + $0x6f0] sm:$0xf]
      %v745 = vld [vmem:[%s1 + $0x6f4] sm:$0xf]
      %v746 = vld [vmem:[%s1 + $0x6f8] sm:$0xf]
      %v747 = vld [vmem:[%s1 + $0x6fc] sm:$0xf]
      %v748 = vld [vmem:[%s1 + $0x700] sm:$0xf]
      %v749 = vld [vmem:[%s1 + $0x704] sm:$0xf]
      %v750 = vld [vmem:[%s1 + $0x708] sm:$0xf]
      %v751 = vld [vmem:[%s1 + $0x70c] sm:$0xf]
      %v752 = vld [vmem:[%s1 + $0x710] sm:$0xf]
      %v753 = vld [vmem:[%s1 + $0x714] sm:$0xf]
      %v754 = vld [vmem:[%s1 + $0x718] sm:$0xf]
      %v755 = vld [vmem:[%s1 + $0x71c] sm:$0xf]
      %v756 = vld [vmem:[%s1 + $0x720] sm:$0xf]
      %v757 = vld [vmem:[%s1 + $0x724] sm:$0xf]
      %v758 = vld [vmem:[%s1 + $0x728] sm:$0xf]
      %v759 = vld [vmem:[%s1 + $0x72c] sm:$0xf]
      %v760 = vld [vmem:[%s1 + $0x730] sm:$0xf]
      %v761 = vld [vmem:[%s1 + $0x734] sm:$0xf]
      %v762 = vld [vmem:[%s1 + $0x738] sm:$0xf]
      %v763 = vld [vmem:[%s1 + $0x73c] sm:$0xf]
      %v764 = vld [vmem:[%s1 + $0x740] sm:$0xf]
      %v765 = vld [vmem:[%s1 + $0x744] sm:$0xf]
      %v766 = vld [vmem:[%s1 + $0x748] sm:$0xf]
      %v767 = vld [vmem:[%s1 + $0x74c] sm:$0xf]
      %v768 = vld [vmem:[%s1 + $0x750] sm:$0xf]
      %v769 = vld [vmem:[%s1 + $0x754] sm:$0xf]
      %v770 = vld [vmem:[%s1 + $0x758] sm:$0xf]
      %v771 = vld [vmem:[%s1 + $0x75c] sm:$0xf]
      %v772 = vld [vmem:[%s1 + $0x760] sm:$0xf]
      %v773 = vld [vmem:[%s1 + $0x764] sm:$0xf]
      %v774 = vld [vmem:[%s1 + $0x768] sm:$0xf]
      %v775 = vld [vmem:[%s1 + $0x76c] sm:$0xf]
      %v776 = vld [vmem:[%s1 + $0x770] sm:$0xf]
      %v777 = vld [vmem:[%s1 + $0x774] sm:$0xf]
      %v778 = vld [vmem:[%s1 + $0x778] sm:$0xf]
      %v779 = vld [vmem:[%s1 + $0x77c] sm:$0xf]
      %v780 = vld [vmem:[%s1 + $0x780] sm:$0xf]
      %v781 = vld [vmem:[%s1 + $0x784] sm:$0xf]
      %v782 = vld [vmem:[%s1 + $0x788] sm:$0xf]
      %v783 = vld [vmem:[%s1 + $0x78c] sm:$0xf]
      %v784 = vld [vmem:[%s1 + $0x790] sm:$0xf]
      %v785 = vld [vmem:[%s1 + $0x794] sm:$0xf]
      %v786 = vld [vmem:[%s1 + $0x798] sm:$0xf]
      %v787 = vld [vmem:[%s1 + $0x79c] sm:$0xf]
      %v788 = vld [vmem:[%s1 + $0x7a0] sm:$0xf]
      %v789 = vld [vmem:[%s1 + $0x7a4] sm:$0xf]
      %v790 = vld [vmem:[%s1 + $0x7a8] sm:$0xf]
      %v791 = vld [vmem:[%s1 + $0x7ac] sm:$0xf]
      %v792 = vld [vmem:[%s1 + $0x7b0] sm:$0xf]
      %v793 = vld [vmem:[%s1 + $0x7b4] sm:$0xf]
      %v794 = vld [vmem:[%s1 + $0x7b8] sm:$0xf]
      %v795 = vld [vmem:[%s1 + $0x7bc] sm:$0xf]
      %v796 = vld [vmem:[%s1 + $0x7c0] sm:$0xf]
      %v797 = vld [vmem:[%s1 + $0x7c4] sm:$0xf]
      %v798 = vld [vmem:[%s1 + $0x7c8] sm:$0xf]
      %v799 = vld [vmem:[%s1 + $0x7cc] sm:$0xf]
      %v800 = vld [vmem:[%s1 + $0x7d0] sm:$0xf]
      %v801 = vld [vmem:[%s1 + $0x7d4] sm:$0xf]
      %v802 = vld [vmem:[%s1 + $0x7d8] sm:$0xf]
      %v803 = vld [vmem:[%s1 + $0x7dc] sm:$0xf]
      %v804 = vld [vmem:[%s1 + $0x7e0] sm:$0xf]
      %v805 = vld [vmem:[%s1 + $0x7e4] sm:$0xf]
      %v806 = vld [vmem:[%s1 + $0x7e8] sm:$0xf]
      %v807 = vld [vmem:[%s1 + $0x7ec] sm:$0xf]
      %v808 = vld [vmem:[%s1 + $0x7f0] sm:$0xf]
      %v809 = vld [vmem:[%s1 + $0x7f4] sm:$0xf]
      %v810 = vld [vmem:[%s1 + $0x7f8] sm:$0xf]
      %v811 = vld [vmem:[%s1 + $0x7fc] sm:$0xf]
      %v812 = vld [vmem:[%s1 + $0x800] sm:$0xf]
      %v813 = vld [vmem:[%s1 + $0x804] sm:$0xf]
      %v814 = vld [vmem:[%s1 + $0x808] sm:$0xf]
      %v815 = vld [vmem:[%s1 + $0x80c] sm:$0xf]
      %v816 = vld [vmem:[%s1 + $0x810] sm:$0xf]
      %v817 = vld [vmem:[%s1 + $0x814] sm:$0xf]
      %v818 = vld [vmem:[%s1 + $0x818] sm:$0xf]
      %v819 = vld [vmem:[%s1 + $0x81c] sm:$0xf]
      %v820 = vld [vmem:[%s1 + $0x820] sm:$0xf]
      %v821 = vld [vmem:[%s1 + $0x824] sm:$0xf]
      %v822 = vld [vmem:[%s1 + $0x828] sm:$0xf]
      %v823 = vld [vmem:[%s1 + $0x82c] sm:$0xf]
      %v824 = vld [vmem:[%s1 + $0x830] sm:$0xf]
      %v825 = vld [vmem:[%s1 + $0x834] sm:$0xf]
      %v826 = vld [vmem:[%s1 + $0x838] sm:$0xf]
      %v827 = vld [vmem:[%s1 + $0x83c] sm:$0xf]
      %v828 = vld [vmem:[%s1 + $0x840] sm:$0xf]
      %v829 = vld [vmem:[%s1 + $0x844] sm:$0xf]
      %v830 = vld [vmem:[%s1 + $0x848] sm:$0xf]
      %v831 = vld [vmem:[%s1 + $0x84c] sm:$0xf]
      %v832 = vld [vmem:[%s1 + $0x850] sm:$0xf]
      %v833 = vld [vmem:[%s1 + $0x854] sm:$0xf]
      %v834 = vld [vmem:[%s1 + $0x858] sm:$0xf]
      %v835 = vld [vmem:[%s1 + $0x85c] sm:$0xf]
      %v836 = vld [vmem:[%s1 + $0x860] sm:$0xf]
      %v837 = vld [vmem:[%s1 + $0x864] sm:$0xf]
      %v838 = vld [vmem:[%s1 + $0x868] sm:$0xf]
      %v839 = vld [vmem:[%s1 + $0x86c] sm:$0xf]
      %v840 = vld [vmem:[%s1 + $0x870] sm:$0xf]
      %v841 = vld [vmem:[%s1 + $0x874] sm:$0xf]
      %v842 = vld [vmem:[%s1 + $0x878] sm:$0xf]
      %v843 = vld [vmem:[%s1 + $0x87c] sm:$0xf]
      %v844 = vld [vmem:[%s1 + $0x880] sm:$0xf]
      %v845 = vld [vmem:[%s1 + $0x884] sm:$0xf]
      %v846 = vld [vmem:[%s1 + $0x888] sm:$0xf]
      %v847 = vld [vmem:[%s1 + $0x88c] sm:$0xf]
      %v848 = vld [vmem:[%s1 + $0x890] sm:$0xf]
      %v849 = vld [vmem:[%s1 + $0x894] sm:$0xf]
      %v850 = vld [vmem:[%s1 + $0x898] sm:$0xf]
      %v851 = vld [vmem:[%s1 + $0x89c] sm:$0xf]
      %v852 = vld [vmem:[%s1 + $0x8a0] sm:$0xf]
      %v853 = vld [vmem:[%s1 + $0x8a4] sm:$0xf]
      %v854 = vld [vmem:[%s1 + $0x8a8] sm:$0xf]
      %v855 = vld [vmem:[%s1 + $0x8ac] sm:$0xf]
      %v856 = vld [vmem:[%s1 + $0x8b0] sm:$0xf]
      %v857 = vld [vmem:[%s1 + $0x8b4] sm:$0xf]
      %v858 = vld [vmem:[%s1 + $0x8b8] sm:$0xf]
      %v859 = vld [vmem:[%s1 + $0x8bc] sm:$0xf]
      %v860 = vld [vmem:[%s1 + $0x8c0] sm:$0xf]
      %v861 = vld [vmem:[%s1 + $0x8c4] sm:$0xf]
      %v862 = vld [vmem:[%s1 + $0x8c8] sm:$0xf]
      %v863 = vld [vmem:[%s1 + $0x8cc] sm:$0xf]
      %v864 = vld [vmem:[%s1 + $0x8d0] sm:$0xf]
      %v865 = vld [vmem:[%s1 + $0x8d4] sm:$0xf]
      %v866 = vld [vmem:[%s1 + $0x8d8] sm:$0xf]
      %v867 = vld [vmem:[%s1 + $0x8dc] sm:$0xf]
      %v868 = vld [vmem:[%s1 + $0x8e0] sm:$0xf]
      %v869 = vld [vmem:[%s1 + $0x8e4] sm:$0xf]
      %v870 = vld [vmem:[%s1 + $0x8e8] sm:$0xf]
      %v871 = vld [vmem:[%s1 + $0x8ec] sm:$0xf]
      %v872 = vld [vmem:[%s1 + $0x8f0] sm:$0xf]
      %v873 = vld [vmem:[%s1 + $0x8f4] sm:$0xf]
      %v874 = vld [vmem:[%s1 + $0x8f8] sm:$0xf]
      %v875 = vld [vmem:[%s1 + $0x8fc] sm:$0xf]
      %v876 = vld [vmem:[%s1 + $0x900] sm:$0xf]
      %v877 = vld [vmem:[%s1 + $0x904] sm:$0xf]
      %v878 = vld [vmem:[%s1 + $0x908] sm:$0xf]
      %v879 = vld [vmem:[%s1 + $0x90c] sm:$0xf]
      %v880 = vld [vmem:[%s1 + $0x910] sm:$0xf]
      %v881 = vld [vmem:[%s1 + $0x914] sm:$0xf]
      %v882 = vld [vmem:[%s1 + $0x918] sm:$0xf]
      %v883 = vld [vmem:[%s1 + $0x91c] sm:$0xf]
      %v884 = vld [vmem:[%s1 + $0x920] sm:$0xf]
      %v885 = vld [vmem:[%s1 + $0x924] sm:$0xf]
      %v886 = vld [vmem:[%s1 + $0x928] sm:$0xf]
      %v887 = vld [vmem:[%s1 + $0x92c] sm:$0xf]
      %v888 = vld [vmem:[%s1 + $0x930] sm:$0xf]
      %v889 = vld [vmem:[%s1 + $0x934] sm:$0xf]
      %v890 = vld [vmem:[%s1 + $0x938] sm:$0xf]
      %v891 = vld [vmem:[%s1 + $0x93c] sm:$0xf]
      %v892 = vld [vmem:[%s1 + $0x940] sm:$0xf]
      %v893 = vld [vmem:[%s1 + $0x944] sm:$0xf]
      %v894 = vld [vmem:[%s1 + $0x948] sm:$0xf]
      %v895 = vld [vmem:[%s1 + $0x94c] sm:$0xf]
      %v896 = vld [vmem:[%s1 + $0x950] sm:$0xf]
      %v897 = vld [vmem:[%s1 + $0x954] sm:$0xf]
      %v898 = vld [vmem:[%s1 + $0x958] sm:$0xf]
      %v899 = vld [vmem:[%s1 + $0x95c] sm:$0xf]
      %v900 = vld [vmem:[%s1 + $0x960] sm:$0xf]
      %v901 = vld [vmem:[%s1 + $0x964] sm:$0xf]
      %v902 = vld [vmem:[%s1 + $0x968] sm:$0xf]
      %v903 = vld [vmem:[%s1 + $0x96c] sm:$0xf]
      %v904 = vld [vmem:[%s1 + $0x970] sm:$0xf]
      %v905 = vld [vmem:[%s1 + $0x974] sm:$0xf]
      %v906 = vld [vmem:[%s1 + $0x978] sm:$0xf]
      %v907 = vld [vmem:[%s1 + $0x97c] sm:$0xf]
      %v908 = vld [vmem:[%s1 + $0x980] sm:$0xf]
      %v909 = vld [vmem:[%s1 + $0x984] sm:$0xf]
      %v910 = vld [vmem:[%s1 + $0x988] sm:$0xf]
      %v911 = vld [vmem:[%s1 + $0x98c] sm:$0xf]
      %v912 = vld [vmem:[%s1 + $0x990] sm:$0xf]
      %v913 = vld [vmem:[%s1 + $0x994] sm:$0xf]
      %v914 = vld [vmem:[%s1 + $0x998] sm:$0xf]
      %v915 = vld [vmem:[%s1 + $0x99c] sm:$0xf]
      %v916 = vld [vmem:[%s1 + $0x9a0] sm:$0xf]
      %v917 = vld [vmem:[%s1 + $0x9a4] sm:$0xf]
      %v918 = vld [vmem:[%s1 + $0x9a8] sm:$0xf]
      %v919 = vld [vmem:[%s1 + $0x9ac] sm:$0xf]
      %v920 = vld [vmem:[%s1 + $0x9b0] sm:$0xf]
      %v921 = vld [vmem:[%s1 + $0x9b4] sm:$0xf]
      %v922 = vld [vmem:[%s1 + $0x9b8] sm:$0xf]
      %v923 = vld [vmem:[%s1 + $0x9bc] sm:$0xf]
      %v924 = vld [vmem:[%s1 + $0x9c0] sm:$0xf]
      %v925 = vld [vmem:[%s1 + $0x9c4] sm:$0xf]
      %v926 = vld [vmem:[%s1 + $0x9c8] sm:$0xf]
      %v927 = vld [vmem:[%s1 + $0x9cc] sm:$0xf]
      %v928 = vld [vmem:[%s1 + $0x9d0] sm:$0xf]
      %v929 = vld [vmem:[%s1 + $0x9d4] sm:$0xf]
      %v930 = vld [vmem:[%s1 + $0x9d8] sm:$0xf]
      %v931 = vld [vmem:[%s1 + $0x9dc] sm:$0xf]
      %v932 = vld [vmem:[%s1 + $0x9e0] sm:$0xf]
      %v933 = vld [vmem:[%s1 + $0x9e4] sm:$0xf]
      %v934 = vld [vmem:[%s1 + $0x9e8] sm:$0xf]
      %v935 = vld [vmem:[%s1 + $0x9ec] sm:$0xf]
      %v936 = vld [vmem:[%s1 + $0x9f0] sm:$0xf]
      %v937 = vld [vmem:[%s1 + $0x9f4] sm:$0xf]
      %v938 = vld [vmem:[%s1 + $0x9f8] sm:$0xf]
      %v939 = vld [vmem:[%s1 + $0x9fc] sm:$0xf]
      %v940 = vld [vmem:[%s1 + $0xa00] sm:$0xf]
      %v941 = vld [vmem:[%s1 + $0xa04] sm:$0xf]
      %v942 = vld [vmem:[%s1 + $0xa08] sm:$0xf]
      %v943 = vld [vmem:[%s1 + $0xa0c] sm:$0xf]
      %v944 = vld [vmem:[%s1 + $0xa10] sm:$0xf]
      %v945 = vld [vmem:[%s1 + $0xa14] sm:$0xf]
      %v946 = vld [vmem:[%s1 + $0xa18] sm:$0xf]
      %v947 = vld [vmem:[%s1 + $0xa1c] sm:$0xf]
      %v948 = vld [vmem:[%s1 + $0xa20] sm:$0xf]
      %v949 = vld [vmem:[%s1 + $0xa24] sm:$0xf]
      %v950 = vld [vmem:[%s1 + $0xa28] sm:$0xf]
      %v951 = vld [vmem:[%s1 + $0xa2c] sm:$0xf]
      %v952 = vld [vmem:[%s1 + $0xa30] sm:$0xf]
      %v953 = vld [vmem:[%s1 + $0xa34] sm:$0xf]
      %v954 = vld [vmem:[%s1 + $0xa38] sm:$0xf]
      %v955 = vld [vmem:[%s1 + $0xa3c] sm:$0xf]
      %v956 = vld [vmem:[%s1 + $0xa40] sm:$0xf]
      %v957 = vld [vmem:[%s1 + $0xa44] sm:$0xf]
      %v958 = vld [vmem:[%s1 + $0xa48] sm:$0xf]
      %v959 = vld [vmem:[%s1 + $0xa4c] sm:$0xf]
      %v960 = vld [vmem:[%s1 + $0xa50] sm:$0xf]
      %v961 = vld [vmem:[%s1 + $0xa54] sm:$0xf]
      %v962 = vld [vmem:[%s1 + $0xa58] sm:$0xf]
      %v963 = vld [vmem:[%s1 + $0xa5c] sm:$0xf]
      %v964 = vld [vmem:[%s1 + $0xa60] sm:$0xf]
      %v965 = vld [vmem:[%s1 + $0xa64] sm:$0xf]
      %v966 = vld [vmem:[%s1 + $0xa68] sm:$0xf]
      %v967 = vld [vmem:[%s1 + $0xa6c] sm:$0xf]
      %v968 = vld [vmem:[%s1 + $0xa70] sm:$0xf]
      %v969 = vld [vmem:[%s1 + $0xa74] sm:$0xf]
      %v970 = vld [vmem:[%s1 + $0xa78] sm:$0xf]
      %v971 = vld [vmem:[%s1 + $0xa7c] sm:$0xf]
      %v972 = vld [vmem:[%s1 + $0xa80] sm:$0xf]
      %v973 = vld [vmem:[%s1 + $0xa84] sm:$0xf]
      %v974 = vld [vmem:[%s1 + $0xa88] sm:$0xf]
      %v975 = vld [vmem:[%s1 + $0xa8c] sm:$0xf]
      %v976 = vld [vmem:[%s1 + $0xa90] sm:$0xf]
      %v977 = vld [vmem:[%s1 + $0xa94] sm:$0xf]
      %v978 = vld [vmem:[%s1 + $0xa98] sm:$0xf]
      %v979 = vld [vmem:[%s1 + $0xa9c] sm:$0xf]
      %v980 = vld [vmem:[%s1 + $0xaa0] sm:$0xf]
      %v981 = vld [vmem:[%s1 + $0xaa4] sm:$0xf]
      %v982 = vld [vmem:[%s1 + $0xaa8] sm:$0xf]
      %v983 = vld [vmem:[%s1 + $0xaac] sm:$0xf]
      %v984 = vld [vmem:[%s1 + $0xab0] sm:$0xf]
      %v985 = vld [vmem:[%s1 + $0xab4] sm:$0xf]
      %v986 = vld [vmem:[%s1 + $0xab8] sm:$0xf]
      %v987 = vld [vmem:[%s1 + $0xabc] sm:$0xf]
      %v988 = vld [vmem:[%s1 + $0xac0] sm:$0xf]
      %v989 = vld [vmem:[%s1 + $0xac4] sm:$0xf]
      %v990 = vld [vmem:[%s1 + $0xac8] sm:$0xf]
      %v991 = vld [vmem:[%s1 + $0xacc] sm:$0xf]
      %v992 = vld [vmem:[%s1 + $0xad0] sm:$0xf]
      %v993 = vld [vmem:[%s1 + $0xad4] sm:$0xf]
      %v994 = vld [vmem:[%s1 + $0xad8] sm:$0xf]
      %v995 = vld [vmem:[%s1 + $0xadc] sm:$0xf]
      %v996 = vld [vmem:[%s1 + $0xae0] sm:$0xf]
      %v997 = vld [vmem:[%s1 + $0xae4] sm:$0xf]
      %v998 = vld [vmem:[%s1 + $0xae8] sm:$0xf]
      %v999 = vld [vmem:[%s1 + $0xaec] sm:$0xf]
      %v1000 = vld [vmem:[%s1 + $0xaf0] sm:$0xf]
      %v1001 = vld [vmem:[%s1 + $0xaf4] sm:$0xf]
      %v1002 = vld [vmem:[%s1 + $0xaf8] sm:$0xf]
      %v1003 = vld [vmem:[%s1 + $0xafc] sm:$0xf]
      %v1004 = vld [vmem:[%s1 + $0xb00] sm:$0xf]
      %v1005 = vld [vmem:[%s1 + $0xb04] sm:$0xf]
      %v1006 = vld [vmem:[%s1 + $0xb08] sm:$0xf]
      %v1007 = vld [vmem:[%s1 + $0xb0c] sm:$0xf]
      %v1008 = vld [vmem:[%s1 + $0xb10] sm:$0xf]
      %v1009 = vld [vmem:[%s1 + $0xb14] sm:$0xf]
      %v1010 = vld [vmem:[%s1 + $0xb18] sm:$0xf]
      %v1011 = vld [vmem:[%s1 + $0xb1c] sm:$0xf]
      %v1012 = vld [vmem:[%s1 + $0xb20] sm:$0xf]
      %v1013 = vld [vmem:[%s1 + $0xb24] sm:$0xf]
      %v1014 = vld [vmem:[%s1 + $0xb28] sm:$0xf]
      %v1015 = vld [vmem:[%s1 + $0xb2c] sm:$0xf]
      %v1016 = vld [vmem:[%s1 + $0xb30] sm:$0xf]
      %v1017 = vld [vmem:[%s1 + $0xb34] sm:$0xf]
      %v1018 = vld [vmem:[%s1 + $0xb38] sm:$0xf]
      %v1019 = vld [vmem:[%s1 + $0xb3c] sm:$0xf]
      %v1020 = vld [vmem:[%s1 + $0xb40] sm:$0xf]
      %v1021 = vld [vmem:[%s1 + $0xb44] sm:$0xf]
      %v1022 = vld [vmem:[%s1 + $0xb48] sm:$0xf]
      %v1023 = vld [vmem:[%s1 + $0xb4c] sm:$0xf]
      %v1024 = vld [vmem:[%s1 + $0xb50] sm:$0xf]
      %v1025 = vld [vmem:[%s1 + $0xb54] sm:$0xf]
      %v1026 = vld [vmem:[%s1 + $0xb58] sm:$0xf]
      %v1027 = vld [vmem:[%s1 + $0xb5c] sm:$0xf]
      %v1028 = vld [vmem:[%s1 + $0xb60] sm:$0xf]
      %v1029 = vld [vmem:[%s1 + $0xb64] sm:$0xf]
      %v1030 = vld [vmem:[%s1 + $0xb68] sm:$0xf]
      %v1031 = vld [vmem:[%s1 + $0xb6c] sm:$0xf]
      %v1032 = vld [vmem:[%s1 + $0xb70] sm:$0xf]
      %v1033 = vld [vmem:[%s1 + $0xb74] sm:$0xf]
      %v1034 = vld [vmem:[%s1 + $0xb78] sm:$0xf]
      %v1035 = vld [vmem:[%s1 + $0xb7c] sm:$0xf]
      %v1036 = vld [vmem:[%s1 + $0xb80] sm:$0xf]
      %v1037 = vld [vmem:[%s1 + $0xb84] sm:$0xf]
      %v1038 = vld [vmem:[%s1 + $0xb88] sm:$0xf]
      %v1039 = vld [vmem:[%s1 + $0xb8c] sm:$0xf]
      %v1040 = vld [vmem:[%s1 + $0xb90] sm:$0xf]
      %v1041 = vld [vmem:[%s1 + $0xb94] sm:$0xf]
      %v1042 = vld [vmem:[%s1 + $0xb98] sm:$0xf]
      %v1043 = vld [vmem:[%s1 + $0xb9c] sm:$0xf]
      %v1044 = vld [vmem:[%s1 + $0xba0] sm:$0xf]
      %v1045 = vld [vmem:[%s1 + $0xba4] sm:$0xf]
      %v1046 = vld [vmem:[%s1 + $0xba8] sm:$0xf]
      %v1047 = vld [vmem:[%s1 + $0xbac] sm:$0xf]
      %v1048 = vld [vmem:[%s1 + $0xbb0] sm:$0xf]
      %v1049 = vld [vmem:[%s1 + $0xbb4] sm:$0xf]
      %v1050 = vld [vmem:[%s1 + $0xbb8] sm:$0xf]
      %v1051 = vld [vmem:[%s1 + $0xbbc] sm:$0xf]
      %v1052 = vld [vmem:[%s1 + $0xbc0] sm:$0xf]
      %v1053 = vld [vmem:[%s1 + $0xbc4] sm:$0xf]
      %v1054 = vld [vmem:[%s1 + $0xbc8] sm:$0xf]
      %v1055 = vld [vmem:[%s1 + $0xbcc] sm:$0xf]
      %v1056 = vld [vmem:[%s1 + $0xbd0] sm:$0xf]
      %v1057 = vld [vmem:[%s1 + $0xbd4] sm:$0xf]
      %v1058 = vld [vmem:[%s1 + $0xbd8] sm:$0xf]
      %v1059 = vld [vmem:[%s1 + $0xbdc] sm:$0xf]
      %v1060 = vld [vmem:[%s1 + $0xbe0] sm:$0xf]
      %v1061 = vld [vmem:[%s1 + $0xbe4] sm:$0xf]
      %v1062 = vld [vmem:[%s1 + $0xbe8] sm:$0xf]
      %v1063 = vld [vmem:[%s1 + $0xbec] sm:$0xf]
      %v1064 = vld [vmem:[%s1 + $0xbf0] sm:$0xf]
      %v1065 = vld [vmem:[%s1 + $0xbf4] sm:$0xf]
      %v1066 = vld [vmem:[%s1 + $0xbf8] sm:$0xf]
      %v1067 = vld [vmem:[%s1 + $0xbfc] sm:$0xf]
      %v1068 = vld [vmem:[%s1 + $0xc00] sm:$0xf]
      %v1069 = vld [vmem:[%s1 + $0xc04] sm:$0xf]
      %v1070 = vld [vmem:[%s1 + $0xc08] sm:$0xf]
      %v1071 = vld [vmem:[%s1 + $0xc0c] sm:$0xf]
      %v1072 = vld [vmem:[%s1 + $0xc10] sm:$0xf]
      %v1073 = vld [vmem:[%s1 + $0xc14] sm:$0xf]
      %v1074 = vld [vmem:[%s1 + $0xc18] sm:$0xf]
      %v1075 = vld [vmem:[%s1 + $0xc1c] sm:$0xf]
      %v1076 = vld [vmem:[%s1 + $0xc20] sm:$0xf]
      %v1077 = vld [vmem:[%s1 + $0xc24] sm:$0xf]
      %v1078 = vld [vmem:[%s1 + $0xc28] sm:$0xf]
      %v1079 = vld [vmem:[%s1 + $0xc2c] sm:$0xf]
      %v1080 = vld [vmem:[%s1 + $0xc30] sm:$0xf]
      %v1081 = vld [vmem:[%s1 + $0xc34] sm:$0xf]
      %v1082 = vld [vmem:[%s1 + $0xc38] sm:$0xf]
      %v1083 = vld [vmem:[%s1 + $0xc3c] sm:$0xf]
      %v1084 = vld [vmem:[%s1 + $0xc40] sm:$0xf]
      %v1085 = vld [vmem:[%s1 + $0xc44] sm:$0xf]
      %v1086 = vld [vmem:[%s1 + $0xc48] sm:$0xf]
      %v1087 = vld [vmem:[%s1 + $0xc4c] sm:$0xf]
      %v1088 = vld [vmem:[%s1 + $0xc50] sm:$0xf]
      %v1089 = vld [vmem:[%s1 + $0xc54] sm:$0xf]
      %v1090 = vld [vmem:[%s1 + $0xc58] sm:$0xf]
      %v1091 = vld [vmem:[%s1 + $0xc5c] sm:$0xf]
      %v1092 = vld [vmem:[%s1 + $0xc60] sm:$0xf]
      %v1093 = vld [vmem:[%s1 + $0xc64] sm:$0xf]
      %v1094 = vld [vmem:[%s1 + $0xc68] sm:$0xf]
      %v1095 = vld [vmem:[%s1 + $0xc6c] sm:$0xf]
      %v1096 = vld [vmem:[%s1 + $0xc70] sm:$0xf]
      %v1097 = vld [vmem:[%s1 + $0xc74] sm:$0xf]
      %v1098 = vld [vmem:[%s1 + $0xc78] sm:$0xf]
      %v1099 = vld [vmem:[%s1 + $0xc7c] sm:$0xf]
      %v1100 = vld [vmem:[%s1 + $0xc80] sm:$0xf]
      %v1101 = vld [vmem:[%s1 + $0xc84] sm:$0xf]
      %v1102 = vld [vmem:[%s1 + $0xc88] sm:$0xf]
      %v1103 = vld [vmem:[%s1 + $0xc8c] sm:$0xf]
      %v1104 = vld [vmem:[%s1 + $0xc90] sm:$0xf]
      %v1105 = vld [vmem:[%s1 + $0xc94] sm:$0xf]
      %v1106 = vld [vmem:[%s1 + $0xc98] sm:$0xf]
      %v1107 = vld [vmem:[%s1 + $0xc9c] sm:$0xf]
      %v1108 = vld [vmem:[%s1 + $0xca0] sm:$0xf]
      %v1109 = vld [vmem:[%s1 + $0xca4] sm:$0xf]
      %v1110 = vld [vmem:[%s1 + $0xca8] sm:$0xf]
      %v1111 = vld [vmem:[%s1 + $0xcac] sm:$0xf]
      %v1112 = vld [vmem:[%s1 + $0xcb0] sm:$0xf]
      %v1113 = vld [vmem:[%s1 + $0xcb4] sm:$0xf]
      %v1114 = vld [vmem:[%s1 + $0xcb8] sm:$0xf]
      %v1115 = vld [vmem:[%s1 + $0xcbc] sm:$0xf]
      %v1116 = vld [vmem:[%s1 + $0xcc0] sm:$0xf]
      %v1117 = vld [vmem:[%s1 + $0xcc4] sm:$0xf]
      %v1118 = vld [vmem:[%s1 + $0xcc8] sm:$0xf]
      %v1119 = vld [vmem:[%s1 + $0xccc] sm:$0xf]
      %v1120 = vld [vmem:[%s1 + $0xcd0] sm:$0xf]
      %v1121 = vld [vmem:[%s1 + $0xcd4] sm:$0xf]
      %v1122 = vld [vmem:[%s1 + $0xcd8] sm:$0xf]
      %v1123 = vld [vmem:[%s1 + $0xcdc] sm:$0xf]
      %v1124 = vld [vmem:[%s1 + $0xce0] sm:$0xf]
      %v1125 = vld [vmem:[%s1 + $0xce4] sm:$0xf]
      %v1126 = vld [vmem:[%s1 + $0xce8] sm:$0xf]
      %v1127 = vld [vmem:[%s1 + $0xcec] sm:$0xf]
      %v1128 = vld [vmem:[%s1 + $0xcf0] sm:$0xf]
      %v1129 = vld [vmem:[%s1 + $0xcf4] sm:$0xf]
      %v1130 = vld [vmem:[%s1 + $0xcf8] sm:$0xf]
      %v1131 = vld [vmem:[%s1 + $0xcfc] sm:$0xf]
      %v1132 = vld [vmem:[%s1 + $0xd00] sm:$0xf]
      %v1133 = vld [vmem:[%s1 + $0xd04] sm:$0xf]
      %v1134 = vld [vmem:[%s1 + $0xd08] sm:$0xf]
      %v1135 = vld [vmem:[%s1 + $0xd0c] sm:$0xf]
      %v1136 = vld [vmem:[%s1 + $0xd10] sm:$0xf]
      %v1137 = vld [vmem:[%s1 + $0xd14] sm:$0xf]
      %v1138 = vld [vmem:[%s1 + $0xd18] sm:$0xf]
      %v1139 = vld [vmem:[%s1 + $0xd1c] sm:$0xf]
      %v1140 = vld [vmem:[%s1 + $0xd20] sm:$0xf]
      %v1141 = vld [vmem:[%s1 + $0xd24] sm:$0xf]
      %v1142 = vld [vmem:[%s1 + $0xd28] sm:$0xf]
      %v1143 = vld [vmem:[%s1 + $0xd2c] sm:$0xf]
      %v1144 = vld [vmem:[%s1 + $0xd30] sm:$0xf]
      %v1145 = vld [vmem:[%s1 + $0xd34] sm:$0xf]
      %v1146 = vld [vmem:[%s1 + $0xd38] sm:$0xf]
      %v1147 = vld [vmem:[%s1 + $0xd3c] sm:$0xf]
      %v1148 = vld [vmem:[%s1 + $0xd40] sm:$0xf]
      %v1149 = vld [vmem:[%s1 + $0xd44] sm:$0xf]
      %v1150 = vld [vmem:[%s1 + $0xd48] sm:$0xf]
      %v1151 = vld [vmem:[%s1 + $0xd4c] sm:$0xf]
      %v1152 = vld [vmem:[%s1 + $0xd50] sm:$0xf]
      %v1153 = vld [vmem:[%s1 + $0xd54] sm:$0xf]
      %v1154 = vld [vmem:[%s1 + $0xd58] sm:$0xf]
      %v1155 = vld [vmem:[%s1 + $0xd5c] sm:$0xf]
      %v1156 = vld [vmem:[%s1 + $0xd60] sm:$0xf]
      %v1157 = vld [vmem:[%s1 + $0xd64] sm:$0xf]
      %v1158 = vld [vmem:[%s1 + $0xd68] sm:$0xf]
      %v1159 = vld [vmem:[%s1 + $0xd6c] sm:$0xf]
      %v1160 = vld [vmem:[%s1 + $0xd70] sm:$0xf]
      %v1161 = vld [vmem:[%s1 + $0xd74] sm:$0xf]
      %v1162 = vld [vmem:[%s1 + $0xd78] sm:$0xf]
      %v1163 = vld [vmem:[%s1 + $0xd7c] sm:$0xf]
      %v1164 = vld [vmem:[%s1 + $0xd80] sm:$0xf]
      %v1165 = vld [vmem:[%s1 + $0xd84] sm:$0xf]
      %v1166 = vld [vmem:[%s1 + $0xd88] sm:$0xf]
      %v1167 = vld [vmem:[%s1 + $0xd8c] sm:$0xf]
      %v1168 = vld [vmem:[%s1 + $0xd90] sm:$0xf]
      %v1169 = vld [vmem:[%s1 + $0xd94] sm:$0xf]
      %v1170 = vld [vmem:[%s1 + $0xd98] sm:$0xf]
      %v1171 = vld [vmem:[%s1 + $0xd9c] sm:$0xf]
      %v1172 = vld [vmem:[%s1 + $0xda0] sm:$0xf]
      %v1173 = vld [vmem:[%s1 + $0xda4] sm:$0xf]
      %v1174 = vld [vmem:[%s1 + $0xda8] sm:$0xf]
      %v1175 = vld [vmem:[%s1 + $0xdac] sm:$0xf]
      %v1176 = vld [vmem:[%s1 + $0xdb0] sm:$0xf]
      %v1177 = vld [vmem:[%s1 + $0xdb4] sm:$0xf]
      %v1178 = vld [vmem:[%s1 + $0xdb8] sm:$0xf]
      %v1179 = vld [vmem:[%s1 + $0xdbc] sm:$0xf]
      %v1180 = vld [vmem:[%s1 + $0xdc0] sm:$0xf]
      %v1181 = vld [vmem:[%s1 + $0xdc4] sm:$0xf]
      %v1182 = vld [vmem:[%s1 + $0xdc8] sm:$0xf]
      %v1183 = vld [vmem:[%s1 + $0xdcc] sm:$0xf]
      %v1184 = vld [vmem:[%s1 + $0xdd0] sm:$0xf]
      %v1185 = vld [vmem:[%s1 + $0xdd4] sm:$0xf]
      %v1186 = vld [vmem:[%s1 + $0xdd8] sm:$0xf]
      %v1187 = vld [vmem:[%s1 + $0xddc] sm:$0xf]
      %v1188 = vld [vmem:[%s1 + $0xde0] sm:$0xf]
      %v1189 = vld [vmem:[%s1 + $0xde4] sm:$0xf]
      %v1190 = vld [vmem:[%s1 + $0xde8] sm:$0xf]
      %v1191 = vld [vmem:[%s1 + $0xdec] sm:$0xf]
      %v1192 = vld [vmem:[%s1 + $0xdf0] sm:$0xf]
      %v1193 = vld [vmem:[%s1 + $0xdf4] sm:$0xf]
      %v1194 = vld [vmem:[%s1 + $0xdf8] sm:$0xf]
      %v1195 = vld [vmem:[%s1 + $0xdfc] sm:$0xf]
      %v1196 = vld [vmem:[%s1 + $0xe00] sm:$0xf]
      %v1197 = vld [vmem:[%s1 + $0xe04] sm:$0xf]
      %v1198 = vld [vmem:[%s1 + $0xe08] sm:$0xf]
      %v1199 = vld [vmem:[%s1 + $0xe0c] sm:$0xf]
      %v1200 = vld [vmem:[%s1 + $0xe10] sm:$0xf]
      %v1201 = vld [vmem:[%s1 + $0xe14] sm:$0xf]
      %v1202 = vld [vmem:[%s1 + $0xe18] sm:$0xf]
      %v1203 = vld [vmem:[%s1 + $0xe1c] sm:$0xf]
      %v1204 = vld [vmem:[%s1 + $0xe20] sm:$0xf]
      %v1205 = vld [vmem:[%s1 + $0xe24] sm:$0xf]
      %v1206 = vld [vmem:[%s1 + $0xe28] sm:$0xf]
      %v1207 = vld [vmem:[%s1 + $0xe2c] sm:$0xf]
      %v1208 = vld [vmem:[%s1 + $0xe30] sm:$0xf]
      %v1209 = vld [vmem:[%s1 + $0xe34] sm:$0xf]
      %v1210 = vld [vmem:[%s1 + $0xe38] sm:$0xf]
      %v1211 = vld [vmem:[%s1 + $0xe3c] sm:$0xf]
      %v1212 = vld [vmem:[%s1 + $0xe40] sm:$0xf]
      %v1213 = vld [vmem:[%s1 + $0xe44] sm:$0xf]
      %v1214 = vld [vmem:[%s1 + $0xe48] sm:$0xf]
      %v1215 = vld [vmem:[%s1 + $0xe4c] sm:$0xf]
      %v1216 = vld [vmem:[%s1 + $0xe50] sm:$0xf]
      %v1217 = vld [vmem:[%s1 + $0xe54] sm:$0xf]
      %v1218 = vld [vmem:[%s1 + $0xe58] sm:$0xf]
      %v1219 = vld [vmem:[%s1 + $0xe5c] sm:$0xf]
      %v1220 = vld [vmem:[%s1 + $0xe60] sm:$0xf]
      %v1221 = vld [vmem:[%s1 + $0xe64] sm:$0xf]
      %v1222 = vld [vmem:[%s1 + $0xe68] sm:$0xf]
      %v1223 = vld [vmem:[%s1 + $0xe6c] sm:$0xf]
      %v1224 = vld [vmem:[%s1 + $0xe70] sm:$0xf]
      %v1225 = vld [vmem:[%s1 + $0xe74] sm:$0xf]
      %v1226 = vld [vmem:[%s1 + $0xe78] sm:$0xf]
      %v1227 = vld [vmem:[%s1 + $0xe7c] sm:$0xf]
      %v1228 = vld [vmem:[%s1 + $0xe80] sm:$0xf]
      %v1229 = vld [vmem:[%s1 + $0xe84] sm:$0xf]
      %v1230 = vld [vmem:[%s1 + $0xe88] sm:$0xf]
      %v1231 = vld [vmem:[%s1 + $0xe8c] sm:$0xf]
      %v1232 = vld [vmem:[%s1 + $0xe90] sm:$0xf]
      %v1233 = vld [vmem:[%s1 + $0xe94] sm:$0xf]
      %v1234 = vld [vmem:[%s1 + $0xe98] sm:$0xf]
      %v1235 = vld [vmem:[%s1 + $0xe9c] sm:$0xf]
      %v1236 = vld [vmem:[%s1 + $0xea0] sm:$0xf]
      %v1237 = vld [vmem:[%s1 + $0xea4] sm:$0xf]
      %v1238 = vld [vmem:[%s1 + $0xea8] sm:$0xf]
      %v1239 = vld [vmem:[%s1 + $0xeac] sm:$0xf]
      %v1240 = vld [vmem:[%s1 + $0xeb0] sm:$0xf]
      %v1241 = vld [vmem:[%s1 + $0xeb4] sm:$0xf]
      %v1242 = vld [vmem:[%s1 + $0xeb8] sm:$0xf]
      %v1243 = vld [vmem:[%s1 + $0xebc] sm:$0xf]
      %v1244 = vld [vmem:[%s1 + $0xec0] sm:$0xf]
      %v1245 = vld [vmem:[%s1 + $0xec4] sm:$0xf]
      %v1246 = vld [vmem:[%s1 + $0xec8] sm:$0xf]
      %v1247 = vld [vmem:[%s1 + $0xecc] sm:$0xf]
      %v1248 = vld [vmem:[%s1 + $0xed0] sm:$0xf]
      %v1249 = vld [vmem:[%s1 + $0xed4] sm:$0xf]
      %v1250 = vld [vmem:[%s1 + $0xed8] sm:$0xf]
      %v1251 = vld [vmem:[%s1 + $0xedc] sm:$0xf]
      %v1252 = vld [vmem:[%s1 + $0xee0] sm:$0xf]
      %v1253 = vld [vmem:[%s1 + $0xee4] sm:$0xf]
      %v1254 = vld [vmem:[%s1 + $0xee8] sm:$0xf]
      %v1255 = vld [vmem:[%s1 + $0xeec] sm:$0xf]
      %v1256 = vld [vmem:[%s1 + $0xef0] sm:$0xf]
      %v1257 = vld [vmem:[%s1 + $0xef4] sm:$0xf]
      %v1258 = vld [vmem:[%s1 + $0xef8] sm:$0xf]
      %v1259 = vld [vmem:[%s1 + $0xefc] sm:$0xf]
      %v1260 = vld [vmem:[%s1 + $0xf00] sm:$0xf]
      %v1261 = vld [vmem:[%s1 + $0xf04] sm:$0xf]
      %v1262 = vld [vmem:[%s1 + $0xf08] sm:$0xf]
      %v1263 = vld [vmem:[%s1 + $0xf0c] sm:$0xf]
      %v1264 = vld [vmem:[%s1 + $0xf10] sm:$0xf]
      %v1265 = vld [vmem:[%s1 + $0xf14] sm:$0xf]
      %v1266 = vld [vmem:[%s1 + $0xf18] sm:$0xf]
      %v1267 = vld [vmem:[%s1 + $0xf1c] sm:$0xf]
      %v1268 = vld [vmem:[%s1 + $0xf20] sm:$0xf]
      %v1269 = vld [vmem:[%s1 + $0xf24] sm:$0xf]
      %v1270 = vld [vmem:[%s1 + $0xf28] sm:$0xf]
      %v1271 = vld [vmem:[%s1 + $0xf2c] sm:$0xf]
      %v1272 = vld [vmem:[%s1 + $0xf30] sm:$0xf]
      %v1273 = vld [vmem:[%s1 + $0xf34] sm:$0xf]
      %v1274 = vld [vmem:[%s1 + $0xf38] sm:$0xf]
      %v1275 = vld [vmem:[%s1 + $0xf3c] sm:$0xf]
      %v1276 = vld [vmem:[%s1 + $0xf40] sm:$0xf]
      %v1277 = vld [vmem:[%s1 + $0xf44] sm:$0xf]
      %v1278 = vld [vmem:[%s1 + $0xf48] sm:$0xf]
      %v1279 = vld [vmem:[%s1 + $0xf4c] sm:$0xf]
      %v1280 = vld [vmem:[%s1 + $0xf50] sm:$0xf]
      %v1281 = vld [vmem:[%s1 + $0xf54] sm:$0xf]
      %v1282 = vld [vmem:[%s1 + $0xf58] sm:$0xf]
      %v1283 = vld [vmem:[%s1 + $0xf5c] sm:$0xf]
      %v1284 = vld [vmem:[%s1 + $0xf60] sm:$0xf]
      %v1285 = vld [vmem:[%s1 + $0xf64] sm:$0xf]
      %v1286 = vld [vmem:[%s1 + $0xf68] sm:$0xf]
      %v1287 = vld [vmem:[%s1 + $0xf6c] sm:$0xf]
      %v1288 = vld [vmem:[%s1 + $0xf70] sm:$0xf]
      %v1289 = vld [vmem:[%s1 + $0xf74] sm:$0xf]
      %v1290 = vld [vmem:[%s1 + $0xf78] sm:$0xf]
      %v1291 = vld [vmem:[%s1 + $0xf7c] sm:$0xf]
      %v1292 = vld [vmem:[%s1 + $0xf80] sm:$0xf]
      %v1293 = vld [vmem:[%s1 + $0xf84] sm:$0xf]
      %v1294 = vld [vmem:[%s1 + $0xf88] sm:$0xf]
      %v1295 = vld [vmem:[%s1 + $0xf8c] sm:$0xf]
      %v1296 = vld [vmem:[%s1 + $0xf90] sm:$0xf]
      %v1297 = vld [vmem:[%s1 + $0xf94] sm:$0xf]
      %v1298 = vld [vmem:[%s1 + $0xf98] sm:$0xf]
      %v1299 = vld [vmem:[%s1 + $0xf9c] sm:$0xf]
      %v1300 = vld [vmem:[%s2] sm:$0x1]
      %v1302 = vlaneseq
      %v1303 = vshrl.u32 %v1302, 7
      %v1304 = vsub.s32 0, %v1303
      %v1305 = vrot.slane %v1300, %v1304
      %v1435 = vunpack.c.l.b16 %v172
      %v1436 = vunpack.c.h.b16 %v172
      %v1437 = vunpack.c.l.b16 %v173
      %v1438 = vunpack.c.h.b16 %v173
      %v1439 = vunpack.c.l.b16 %v174
      %v1440 = vunpack.c.h.b16 %v174
      %v1441 = vunpack.c.l.b16 %v175
      %v1442 = vunpack.c.h.b16 %v175
      %v1443 = vunpack.c.l.b16 %v176
      %v1444 = vunpack.c.h.b16 %v176
      %v1445 = vunpack.c.l.b16 %v177
      %v1446 = vunpack.c.h.b16 %v177
      %v1447 = vunpack.c.l.b16 %v178
      %v1448 = vunpack.c.h.b16 %v178
      %v1449 = vunpack.c.l.b16 %v179
      %v1450 = vunpack.c.h.b16 %v179
      %v1451 = vunpack.c.l.b16 %v180
      %v1452 = vunpack.c.h.b16 %v180
      %v1453 = vunpack.c.l.b16 %v181
      %v1454 = vunpack.c.h.b16 %v181
      %v1455 = vunpack.c.l.b16 %v182
      %v1456 = vunpack.c.h.b16 %v182
      %v1457 = vunpack.c.l.b16 %v183
      %v1458 = vunpack.c.h.b16 %v183
      %v1459 = vunpack.c.l.b16 %v184
      %v1460 = vunpack.c.h.b16 %v184
      %v1461 = vunpack.c.l.b16 %v185
      %v1462 = vunpack.c.h.b16 %v185
      %v1463 = vunpack.c.l.b16 %v186
      %v1464 = vunpack.c.h.b16 %v186
      %v1465 = vunpack.c.l.b16 %v187
      %v1466 = vunpack.c.h.b16 %v187
      %v1467 = vunpack.c.l.b16 %v188
      %v1468 = vunpack.c.h.b16 %v188
      %v1469 = vunpack.c.l.b16 %v189
      %v1470 = vunpack.c.h.b16 %v189
      %v1471 = vunpack.c.l.b16 %v190
      %v1472 = vunpack.c.h.b16 %v190
      %v1473 = vunpack.c.l.b16 %v191
      %v1474 = vunpack.c.h.b16 %v191
      %v1475 = vunpack.c.l.b16 %v192
      %v1476 = vunpack.c.h.b16 %v192
      %v1477 = vunpack.c.l.b16 %v193
      %v1478 = vunpack.c.h.b16 %v193
      %v1479 = vunpack.c.l.b16 %v194
      %v1480 = vunpack.c.h.b16 %v194
      %v1481 = vunpack.c.l.b16 %v195
      %v1482 = vunpack.c.h.b16 %v195
      %v1483 = vunpack.c.l.b16 %v196
      %v1484 = vunpack.c.h.b16 %v196
      %v1485 = vunpack.c.l.b16 %v197
      %v1486 = vunpack.c.h.b16 %v197
      %v1487 = vunpack.c.l.b16 %v198
      %v1488 = vunpack.c.h.b16 %v198
      %v1489 = vunpack.c.l.b16 %v199
      %v1490 = vunpack.c.h.b16 %v199
      %v1491 = vunpack.c.l.b16 %v200
      %v1492 = vunpack.c.h.b16 %v200
      %v1493 = vunpack.c.l.b16 %v201
      %v1494 = vunpack.c.h.b16 %v201
      %v1495 = vunpack.c.l.b16 %v202
      %v1496 = vunpack.c.h.b16 %v202
      %v1497 = vunpack.c.l.b16 %v203
      %v1498 = vunpack.c.l.b16 %v204
      %v1499 = vunpack.c.h.b16 %v204
      %v1500 = vunpack.c.l.b16 %v205
      %v1501 = vunpack.c.h.b16 %v205
      %v1502 = vunpack.c.l.b16 %v206
      %v1503 = vunpack.c.h.b16 %v206
      %v1504 = vunpack.c.l.b16 %v207
      %v1505 = vunpack.c.h.b16 %v207
      %v1506 = vunpack.c.l.b16 %v208
      %v1507 = vunpack.c.h.b16 %v208
      %v1508 = vunpack.c.l.b16 %v209
      %v1509 = vunpack.c.h.b16 %v209
      %v1510 = vunpack.c.l.b16 %v210
      %v1511 = vunpack.c.h.b16 %v210
      %v1512 = vunpack.c.l.b16 %v211
      %v1513 = vunpack.c.h.b16 %v211
      %v1514 = vunpack.c.l.b16 %v212
      %v1515 = vunpack.c.h.b16 %v212
      %v1516 = vunpack.c.l.b16 %v213
      %v1517 = vunpack.c.h.b16 %v213
      %v1518 = vunpack.c.l.b16 %v214
      %v1519 = vunpack.c.h.b16 %v214
      %v1520 = vunpack.c.l.b16 %v215
      %v1521 = vunpack.c.h.b16 %v215
      %v1522 = vunpack.c.l.b16 %v216
      %v1523 = vunpack.c.h.b16 %v216
      %v1524 = vunpack.c.l.b16 %v217
      %v1525 = vunpack.c.h.b16 %v217
      %v1526 = vunpack.c.l.b16 %v218
      %v1527 = vunpack.c.h.b16 %v218
      %v1528 = vunpack.c.l.b16 %v219
      %v1529 = vunpack.c.h.b16 %v219
      %v1530 = vunpack.c.l.b16 %v220
      %v1531 = vunpack.c.h.b16 %v220
      %v1532 = vunpack.c.l.b16 %v221
      %v1533 = vunpack.c.h.b16 %v221
      %v1534 = vunpack.c.l.b16 %v222
      %v1535 = vunpack.c.h.b16 %v222
      %v1536 = vunpack.c.l.b16 %v223
      %v1537 = vunpack.c.h.b16 %v223
      %v1538 = vunpack.c.l.b16 %v224
      %v1539 = vunpack.c.h.b16 %v224
      %v1540 = vunpack.c.l.b16 %v225
      %v1541 = vunpack.c.h.b16 %v225
      %v1542 = vunpack.c.l.b16 %v226
      %v1543 = vunpack.c.h.b16 %v226
      %v1544 = vunpack.c.l.b16 %v227
      %v1545 = vunpack.c.h.b16 %v227
      %v1546 = vunpack.c.l.b16 %v228
      %v1547 = vunpack.c.h.b16 %v228
      %v1548 = vunpack.c.l.b16 %v229
      %v1549 = vunpack.c.h.b16 %v229
      %v1550 = vunpack.c.l.b16 %v230
      %v1551 = vunpack.c.h.b16 %v230
      %v1552 = vunpack.c.l.b16 %v231
      %v1553 = vunpack.c.h.b16 %v231
      %v1554 = vunpack.c.l.b16 %v232
      %v1555 = vunpack.c.h.b16 %v232
      %v1556 = vunpack.c.l.b16 %v233
      %v1557 = vunpack.c.h.b16 %v233
      %v1558 = vunpack.c.l.b16 %v234
      %v1559 = vunpack.c.h.b16 %v234
      %v1560 = vunpack.c.l.b16 %v235
      %v1561 = vunpack.c.l.b16 %v236
      %v1562 = vunpack.c.h.b16 %v236
      %v1563 = vunpack.c.l.b16 %v237
      %v1564 = vunpack.c.h.b16 %v237
      %v1565 = vunpack.c.l.b16 %v238
      %v1566 = vunpack.c.h.b16 %v238
      %v1567 = vunpack.c.l.b16 %v239
      %v1568 = vunpack.c.h.b16 %v239
      %v1569 = vunpack.c.l.b16 %v240
      %v1570 = vunpack.c.h.b16 %v240
      %v1571 = vunpack.c.l.b16 %v241
      %v1572 = vunpack.c.h.b16 %v241
      %v1573 = vunpack.c.l.b16 %v242
      %v1574 = vunpack.c.h.b16 %v242
      %v1575 = vunpack.c.l.b16 %v243
      %v1576 = vunpack.c.h.b16 %v243
      %v1577 = vunpack.c.l.b16 %v244
      %v1578 = vunpack.c.h.b16 %v244
      %v1579 = vunpack.c.l.b16 %v245
      %v1580 = vunpack.c.h.b16 %v245
      %v1581 = vunpack.c.l.b16 %v246
      %v1582 = vunpack.c.h.b16 %v246
      %v1583 = vunpack.c.l.b16 %v247
      %v1584 = vunpack.c.h.b16 %v247
      %v1585 = vunpack.c.l.b16 %v248
      %v1586 = vunpack.c.h.b16 %v248
      %v1587 = vunpack.c.l.b16 %v249
      %v1588 = vunpack.c.h.b16 %v249
      %v1589 = vunpack.c.l.b16 %v250
      %v1590 = vunpack.c.h.b16 %v250
      %v1591 = vunpack.c.l.b16 %v251
      %v1592 = vunpack.c.h.b16 %v251
      %v1593 = vunpack.c.l.b16 %v252
      %v1594 = vunpack.c.h.b16 %v252
      %v1595 = vunpack.c.l.b16 %v253
      %v1596 = vunpack.c.h.b16 %v253
      %v1597 = vunpack.c.l.b16 %v254
      %v1598 = vunpack.c.h.b16 %v254
      %v1599 = vunpack.c.l.b16 %v255
      %v1600 = vunpack.c.h.b16 %v255
      %v1601 = vunpack.c.l.b16 %v256
      %v1602 = vunpack.c.h.b16 %v256
      %v1603 = vunpack.c.l.b16 %v257
      %v1604 = vunpack.c.h.b16 %v257
      %v1605 = vunpack.c.l.b16 %v258
      %v1606 = vunpack.c.h.b16 %v258
      %v1607 = vunpack.c.l.b16 %v259
      %v1608 = vunpack.c.h.b16 %v259
      %v1609 = vunpack.c.l.b16 %v260
      %v1610 = vunpack.c.h.b16 %v260
      %v1611 = vunpack.c.l.b16 %v261
      %v1612 = vunpack.c.h.b16 %v261
      %v1613 = vunpack.c.l.b16 %v262
      %v1614 = vunpack.c.h.b16 %v262
      %v1615 = vunpack.c.l.b16 %v263
      %v1616 = vunpack.c.h.b16 %v263
      %v1617 = vunpack.c.l.b16 %v264
      %v1618 = vunpack.c.h.b16 %v264
      %v1619 = vunpack.c.l.b16 %v265
      %v1620 = vunpack.c.h.b16 %v265
      %v1621 = vunpack.c.l.b16 %v266
      %v1622 = vunpack.c.h.b16 %v266
      %v1623 = vunpack.c.l.b16 %v267
      %v1624 = vunpack.c.l.b16 %v268
      %v1625 = vunpack.c.h.b16 %v268
      %v1626 = vunpack.c.l.b16 %v269
      %v1627 = vunpack.c.h.b16 %v269
      %v1628 = vunpack.c.l.b16 %v270
      %v1629 = vunpack.c.h.b16 %v270
      %v1630 = vunpack.c.l.b16 %v271
      %v1631 = vunpack.c.h.b16 %v271
      %v1632 = vunpack.c.l.b16 %v272
      %v1633 = vunpack.c.h.b16 %v272
      %v1634 = vunpack.c.l.b16 %v273
      %v1635 = vunpack.c.h.b16 %v273
      %v1636 = vunpack.c.l.b16 %v274
      %v1637 = vunpack.c.h.b16 %v274
      %v1638 = vunpack.c.l.b16 %v275
      %v1639 = vunpack.c.h.b16 %v275
      %v1640 = vunpack.c.l.b16 %v276
      %v1641 = vunpack.c.h.b16 %v276
      %v1642 = vunpack.c.l.b16 %v277
      %v1643 = vunpack.c.h.b16 %v277
      %v1644 = vunpack.c.l.b16 %v278
      %v1645 = vunpack.c.h.b16 %v278
      %v1646 = vunpack.c.l.b16 %v279
      %v1647 = vunpack.c.h.b16 %v279
      %v1648 = vunpack.c.l.b16 %v280
      %v1649 = vunpack.c.h.b16 %v280
      %v1650 = vunpack.c.l.b16 %v281
      %v1651 = vunpack.c.h.b16 %v281
      %v1652 = vunpack.c.l.b16 %v282
      %v1653 = vunpack.c.h.b16 %v282
      %v1654 = vunpack.c.l.b16 %v283
      %v1655 = vunpack.c.h.b16 %v283
      %v1656 = vunpack.c.l.b16 %v284
      %v1657 = vunpack.c.h.b16 %v284
      %v1658 = vunpack.c.l.b16 %v285
      %v1659 = vunpack.c.h.b16 %v285
      %v1660 = vunpack.c.l.b16 %v286
      %v1661 = vunpack.c.h.b16 %v286
      %v1662 = vunpack.c.l.b16 %v287
      %v1663 = vunpack.c.h.b16 %v287
      %v1664 = vunpack.c.l.b16 %v288
      %v1665 = vunpack.c.h.b16 %v288
      %v1666 = vunpack.c.l.b16 %v289
      %v1667 = vunpack.c.h.b16 %v289
      %v1668 = vunpack.c.l.b16 %v290
      %v1669 = vunpack.c.h.b16 %v290
      %v1670 = vunpack.c.l.b16 %v291
      %v1671 = vunpack.c.h.b16 %v291
      %v1672 = vunpack.c.l.b16 %v292
      %v1673 = vunpack.c.h.b16 %v292
      %v1674 = vunpack.c.l.b16 %v293
      %v1675 = vunpack.c.h.b16 %v293
      %v1676 = vunpack.c.l.b16 %v294
      %v1677 = vunpack.c.h.b16 %v294
      %v1678 = vunpack.c.l.b16 %v295
      %v1679 = vunpack.c.h.b16 %v295
      %v1680 = vunpack.c.l.b16 %v296
      %v1681 = vunpack.c.h.b16 %v296
      %v1682 = vunpack.c.l.b16 %v297
      %v1683 = vunpack.c.h.b16 %v297
      %v1684 = vunpack.c.l.b16 %v298
      %v1685 = vunpack.c.h.b16 %v298
      %v1686 = vunpack.c.l.b16 %v299
      %v1687 = vpack.c.b16 %v1498, %v1435
      %v1688 = vpack.c.b16 %v1499, %v1436
      %v1689 = vpack.c.b16 %v1500, %v1437
      %v1690 = vpack.c.b16 %v1501, %v1438
      %v1691 = vpack.c.b16 %v1502, %v1439
      %v1692 = vpack.c.b16 %v1503, %v1440
      %v1693 = vpack.c.b16 %v1504, %v1441
      %v1694 = vpack.c.b16 %v1505, %v1442
      %v1695 = vpack.c.b16 %v1506, %v1443
      %v1696 = vpack.c.b16 %v1507, %v1444
      %v1697 = vpack.c.b16 %v1508, %v1445
      %v1698 = vpack.c.b16 %v1509, %v1446
      %v1699 = vpack.c.b16 %v1510, %v1447
      %v1700 = vpack.c.b16 %v1511, %v1448
      %v1701 = vpack.c.b16 %v1512, %v1449
      %v1702 = vpack.c.b16 %v1513, %v1450
      %v1703 = vpack.c.b16 %v1514, %v1451
      %v1704 = vpack.c.b16 %v1515, %v1452
      %v1705 = vpack.c.b16 %v1516, %v1453
      %v1706 = vpack.c.b16 %v1517, %v1454
      %v1707 = vpack.c.b16 %v1518, %v1455
      %v1708 = vpack.c.b16 %v1519, %v1456
      %v1709 = vpack.c.b16 %v1520, %v1457
      %v1710 = vpack.c.b16 %v1521, %v1458
      %v1711 = vpack.c.b16 %v1522, %v1459
      %v1712 = vpack.c.b16 %v1523, %v1460
      %v1713 = vpack.c.b16 %v1524, %v1461
      %v1714 = vpack.c.b16 %v1525, %v1462
      %v1715 = vpack.c.b16 %v1526, %v1463
      %v1716 = vpack.c.b16 %v1527, %v1464
      %v1717 = vpack.c.b16 %v1528, %v1465
      %v1718 = vpack.c.b16 %v1529, %v1466
      %v1719 = vpack.c.b16 %v1530, %v1467
      %v1720 = vpack.c.b16 %v1531, %v1468
      %v1721 = vpack.c.b16 %v1532, %v1469
      %v1722 = vpack.c.b16 %v1533, %v1470
      %v1723 = vpack.c.b16 %v1534, %v1471
      %v1724 = vpack.c.b16 %v1535, %v1472
      %v1725 = vpack.c.b16 %v1536, %v1473
      %v1726 = vpack.c.b16 %v1537, %v1474
      %v1727 = vpack.c.b16 %v1538, %v1475
      %v1728 = vpack.c.b16 %v1539, %v1476
      %v1729 = vpack.c.b16 %v1540, %v1477
      %v1730 = vpack.c.b16 %v1541, %v1478
      %v1731 = vpack.c.b16 %v1542, %v1479
      %v1732 = vpack.c.b16 %v1543, %v1480
      %v1733 = vpack.c.b16 %v1544, %v1481
      %v1734 = vpack.c.b16 %v1545, %v1482
      %v1735 = vpack.c.b16 %v1546, %v1483
      %v1736 = vpack.c.b16 %v1547, %v1484
      %v1737 = vpack.c.b16 %v1548, %v1485
      %v1738 = vpack.c.b16 %v1549, %v1486
      %v1739 = vpack.c.b16 %v1550, %v1487
      %v1740 = vpack.c.b16 %v1551, %v1488
      %v1741 = vpack.c.b16 %v1552, %v1489
      %v1742 = vpack.c.b16 %v1553, %v1490
      %v1743 = vpack.c.b16 %v1554, %v1491
      %v1744 = vpack.c.b16 %v1555, %v1492
      %v1745 = vpack.c.b16 %v1556, %v1493
      %v1746 = vpack.c.b16 %v1557, %v1494
      %v1747 = vpack.c.b16 %v1558, %v1495
      %v1748 = vpack.c.b16 %v1559, %v1496
      %v1749 = vpack.c.b16 %v1560, %v1497
      %v1750 = vpack.c.b16 %v1624, %v1561
      %v1751 = vpack.c.b16 %v1625, %v1562
      %v1752 = vpack.c.b16 %v1626, %v1563
      %v1753 = vpack.c.b16 %v1627, %v1564
      %v1754 = vpack.c.b16 %v1628, %v1565
      %v1755 = vpack.c.b16 %v1629, %v1566
      %v1756 = vpack.c.b16 %v1630, %v1567
      %v1757 = vpack.c.b16 %v1631, %v1568
      %v1758 = vpack.c.b16 %v1632, %v1569
      %v1759 = vpack.c.b16 %v1633, %v1570
      %v1760 = vpack.c.b16 %v1634, %v1571
      %v1761 = vpack.c.b16 %v1635, %v1572
      %v1762 = vpack.c.b16 %v1636, %v1573
      %v1763 = vpack.c.b16 %v1637, %v1574
      %v1764 = vpack.c.b16 %v1638, %v1575
      %v1765 = vpack.c.b16 %v1639, %v1576
      %v1766 = vpack.c.b16 %v1640, %v1577
      %v1767 = vpack.c.b16 %v1641, %v1578
      %v1768 = vpack.c.b16 %v1642, %v1579
      %v1769 = vpack.c.b16 %v1643, %v1580
      %v1770 = vpack.c.b16 %v1644, %v1581
      %v1771 = vpack.c.b16 %v1645, %v1582
      %v1772 = vpack.c.b16 %v1646, %v1583
      %v1773 = vpack.c.b16 %v1647, %v1584
      %v1774 = vpack.c.b16 %v1648, %v1585
      %v1775 = vpack.c.b16 %v1649, %v1586
      %v1776 = vpack.c.b16 %v1650, %v1587
      %v1777 = vpack.c.b16 %v1651, %v1588
      %v1778 = vpack.c.b16 %v1652, %v1589
      %v1779 = vpack.c.b16 %v1653, %v1590
      %v1780 = vpack.c.b16 %v1654, %v1591
      %v1781 = vpack.c.b16 %v1655, %v1592
      %v1782 = vpack.c.b16 %v1656, %v1593
      %v1783 = vpack.c.b16 %v1657, %v1594
      %v1784 = vpack.c.b16 %v1658, %v1595
      %v1785 = vpack.c.b16 %v1659, %v1596
      %v1786 = vpack.c.b16 %v1660, %v1597
      %v1787 = vpack.c.b16 %v1661, %v1598
      %v1788 = vpack.c.b16 %v1662, %v1599
      %v1789 = vpack.c.b16 %v1663, %v1600
      %v1790 = vpack.c.b16 %v1664, %v1601
      %v1791 = vpack.c.b16 %v1665, %v1602
      %v1792 = vpack.c.b16 %v1666, %v1603
      %v1793 = vpack.c.b16 %v1667, %v1604
      %v1794 = vpack.c.b16 %v1668, %v1605
      %v1795 = vpack.c.b16 %v1669, %v1606
      %v1796 = vpack.c.b16 %v1670, %v1607
      %v1797 = vpack.c.b16 %v1671, %v1608
      %v1798 = vpack.c.b16 %v1672, %v1609
      %v1799 = vpack.c.b16 %v1673, %v1610
      %v1800 = vpack.c.b16 %v1674, %v1611
      %v1801 = vpack.c.b16 %v1675, %v1612
      %v1802 = vpack.c.b16 %v1676, %v1613
      %v1803 = vpack.c.b16 %v1677, %v1614
      %v1804 = vpack.c.b16 %v1678, %v1615
      %v1805 = vpack.c.b16 %v1679, %v1616
      %v1806 = vpack.c.b16 %v1680, %v1617
      %v1807 = vpack.c.b16 %v1681, %v1618
      %v1808 = vpack.c.b16 %v1682, %v1619
      %v1809 = vpack.c.b16 %v1683, %v1620
      %v1810 = vpack.c.b16 %v1684, %v1621
      %v1811 = vpack.c.b16 %v1685, %v1622
      %v1812 = vpack.c.b16 %v1686, %v1623
      %v2937 = vunpack.c.l.b16 %v300
      %v2938 = vunpack.c.l.b16 %v301
      %v2939 = vunpack.c.l.b16 %v302
      %v2940 = vunpack.c.l.b16 %v303
      %v2941 = vunpack.c.l.b16 %v304
      %v2942 = vunpack.c.l.b16 %v305
      %v2943 = vunpack.c.l.b16 %v306
      %v2944 = vunpack.c.l.b16 %v307
      %v2945 = vunpack.c.l.b16 %v308
      %v2946 = vunpack.c.l.b16 %v309
      %v2947 = vunpack.c.l.b16 %v310
      %v2948 = vunpack.c.l.b16 %v311
      %v2949 = vunpack.c.l.b16 %v312
      %v2950 = vunpack.c.l.b16 %v313
      %v2951 = vunpack.c.l.b16 %v314
      %v2952 = vunpack.c.l.b16 %v315
      %v2953 = vunpack.c.l.b16 %v316
      %v2954 = vunpack.c.l.b16 %v317
      %v2955 = vunpack.c.l.b16 %v318
      %v2956 = vunpack.c.l.b16 %v319
      %v2957 = vunpack.c.l.b16 %v320
      %v2958 = vunpack.c.l.b16 %v321
      %v2959 = vunpack.c.l.b16 %v322
      %v2960 = vunpack.c.l.b16 %v323
      %v2961 = vunpack.c.l.b16 %v324
      %v2962 = vunpack.c.l.b16 %v325
      %v2963 = vunpack.c.l.b16 %v326
      %v2964 = vunpack.c.l.b16 %v327
      %v2965 = vunpack.c.l.b16 %v328
      %v2966 = vunpack.c.l.b16 %v329
      %v2967 = vunpack.c.l.b16 %v330
      %v2968 = vunpack.c.l.b16 %v331
      %v2969 = vunpack.c.l.b16 %v332
      %v2970 = vunpack.c.l.b16 %v333
      %v2971 = vunpack.c.l.b16 %v334
      %v2972 = vunpack.c.l.b16 %v335
      %v2973 = vunpack.c.l.b16 %v336
      %v2974 = vunpack.c.l.b16 %v337
      %v2975 = vunpack.c.l.b16 %v338
      %v2976 = vunpack.c.l.b16 %v339
      %v2977 = vunpack.c.l.b16 %v340
      %v2978 = vunpack.c.l.b16 %v341
      %v2979 = vunpack.c.l.b16 %v342
      %v2980 = vunpack.c.l.b16 %v343
      %v2981 = vunpack.c.l.b16 %v344
      %v2982 = vunpack.c.l.b16 %v345
      %v2983 = vunpack.c.l.b16 %v346
      %v2984 = vunpack.c.l.b16 %v347
      %v2985 = vunpack.c.l.b16 %v348
      %v2986 = vunpack.c.l.b16 %v349
      %v2987 = vunpack.c.l.b16 %v350
      %v2988 = vunpack.c.l.b16 %v351
      %v2989 = vunpack.c.l.b16 %v352
      %v2990 = vunpack.c.l.b16 %v353
      %v2991 = vunpack.c.l.b16 %v354
      %v2992 = vunpack.c.l.b16 %v355
      %v2993 = vunpack.c.l.b16 %v356
      %v2994 = vunpack.c.l.b16 %v357
      %v2995 = vunpack.c.l.b16 %v358
      %v2996 = vunpack.c.l.b16 %v359
      %v2997 = vunpack.c.l.b16 %v360
      %v2998 = vunpack.c.l.b16 %v361
      %v2999 = vunpack.c.l.b16 %v362
      %v3000 = vunpack.c.l.b16 %v363
      %v3001 = vunpack.c.l.b16 %v364
      %v3002 = vunpack.c.l.b16 %v365
      %v3003 = vunpack.c.l.b16 %v366
      %v3004 = vunpack.c.l.b16 %v367
      %v3005 = vunpack.c.l.b16 %v368
      %v3006 = vunpack.c.l.b16 %v369
      %v3007 = vunpack.c.l.b16 %v370
      %v3008 = vunpack.c.l.b16 %v371
      %v3009 = vunpack.c.l.b16 %v372
      %v3010 = vunpack.c.l.b16 %v373
      %v3011 = vunpack.c.l.b16 %v374
      %v3012 = vunpack.c.l.b16 %v375
      %v3013 = vunpack.c.l.b16 %v376
      %v3014 = vunpack.c.l.b16 %v377
      %v3015 = vunpack.c.l.b16 %v378
      %v3016 = vunpack.c.l.b16 %v379
      %v3017 = vunpack.c.l.b16 %v380
      %v3018 = vunpack.c.l.b16 %v381
      %v3019 = vunpack.c.l.b16 %v382
      %v3020 = vunpack.c.l.b16 %v383
      %v3021 = vunpack.c.l.b16 %v384
      %v3022 = vunpack.c.l.b16 %v385
      %v3023 = vunpack.c.l.b16 %v386
      %v3024 = vunpack.c.l.b16 %v387
      %v3025 = vunpack.c.l.b16 %v388
      %v3026 = vunpack.c.l.b16 %v389
      %v3027 = vunpack.c.l.b16 %v390
      %v3028 = vunpack.c.l.b16 %v391
      %v3029 = vunpack.c.l.b16 %v392
      %v3030 = vunpack.c.l.b16 %v393
      %v3031 = vunpack.c.l.b16 %v394
      %v3032 = vunpack.c.l.b16 %v395
      %v3033 = vunpack.c.l.b16 %v396
      %v3034 = vunpack.c.l.b16 %v397
      %v3035 = vunpack.c.l.b16 %v398
      %v3036 = vunpack.c.l.b16 %v399
      %v3037 = vunpack.c.l.b16 %v400
      %v3038 = vunpack.c.l.b16 %v401
      %v3039 = vunpack.c.l.b16 %v402
      %v3040 = vunpack.c.l.b16 %v403
      %v3041 = vunpack.c.l.b16 %v404
      %v3042 = vunpack.c.l.b16 %v405
      %v3043 = vunpack.c.l.b16 %v406
      %v3044 = vunpack.c.l.b16 %v407
      %v3045 = vunpack.c.l.b16 %v408
      %v3046 = vunpack.c.l.b16 %v409
      %v3047 = vunpack.c.l.b16 %v410
      %v3048 = vunpack.c.l.b16 %v411
      %v3049 = vunpack.c.l.b16 %v412
      %v3050 = vunpack.c.l.b16 %v413
      %v3051 = vunpack.c.l.b16 %v414
      %v3052 = vunpack.c.l.b16 %v415
      %v3053 = vunpack.c.l.b16 %v416
      %v3054 = vunpack.c.l.b16 %v417
      %v3055 = vunpack.c.l.b16 %v418
      %v3056 = vunpack.c.l.b16 %v419
      %v3057 = vunpack.c.l.b16 %v420
      %v3058 = vunpack.c.l.b16 %v421
      %v3059 = vunpack.c.l.b16 %v422
      %v3060 = vunpack.c.l.b16 %v423
      %v3061 = vunpack.c.l.b16 %v424
      %v3062 = vunpack.c.l.b16 %v425
      %v3063 = vunpack.c.l.b16 %v426
      %v3064 = vunpack.c.l.b16 %v427
      %v3065 = vunpack.c.l.b16 %v428
      %v3066 = vunpack.c.l.b16 %v429
      %v3067 = vunpack.c.l.b16 %v430
      %v3068 = vunpack.c.l.b16 %v431
      %v3069 = vunpack.c.l.b16 %v432
      %v3070 = vunpack.c.l.b16 %v433
      %v3071 = vunpack.c.l.b16 %v434
      %v3072 = vunpack.c.l.b16 %v435
      %v3073 = vunpack.c.l.b16 %v436
      %v3074 = vunpack.c.l.b16 %v437
      %v3075 = vunpack.c.l.b16 %v438
      %v3076 = vunpack.c.l.b16 %v439
      %v3077 = vunpack.c.l.b16 %v440
      %v3078 = vunpack.c.l.b16 %v441
      %v3079 = vunpack.c.l.b16 %v442
      %v3080 = vunpack.c.l.b16 %v443
      %v3081 = vunpack.c.l.b16 %v444
      %v3082 = vunpack.c.l.b16 %v445
      %v3083 = vunpack.c.l.b16 %v446
      %v3084 = vunpack.c.l.b16 %v447
      %v3085 = vunpack.c.l.b16 %v448
      %v3086 = vunpack.c.l.b16 %v449
      %v3087 = vunpack.c.l.b16 %v450
      %v3088 = vunpack.c.l.b16 %v451
      %v3089 = vunpack.c.l.b16 %v452
      %v3090 = vunpack.c.l.b16 %v453
      %v3091 = vunpack.c.l.b16 %v454
      %v3092 = vunpack.c.l.b16 %v455
      %v3093 = vunpack.c.l.b16 %v456
      %v3094 = vunpack.c.l.b16 %v457
      %v3095 = vunpack.c.l.b16 %v458
      %v3096 = vunpack.c.l.b16 %v459
      %v3097 = vunpack.c.l.b16 %v460
      %v3098 = vunpack.c.l.b16 %v461
      %v3099 = vunpack.c.l.b16 %v462
      %v3100 = vunpack.c.l.b16 %v463
      %v3101 = vunpack.c.l.b16 %v464
      %v3102 = vunpack.c.l.b16 %v465
      %v3103 = vunpack.c.l.b16 %v466
      %v3104 = vunpack.c.l.b16 %v467
      %v3105 = vunpack.c.l.b16 %v468
      %v3106 = vunpack.c.l.b16 %v469
      %v3107 = vunpack.c.l.b16 %v470
      %v3108 = vunpack.c.l.b16 %v471
      %v3109 = vunpack.c.l.b16 %v472
      %v3110 = vunpack.c.l.b16 %v473
      %v3111 = vunpack.c.l.b16 %v474
      %v3112 = vunpack.c.l.b16 %v475
      %v3113 = vunpack.c.l.b16 %v476
      %v3114 = vunpack.c.l.b16 %v477
      %v3115 = vunpack.c.l.b16 %v478
      %v3116 = vunpack.c.l.b16 %v479
      %v3117 = vunpack.c.l.b16 %v480
      %v3118 = vunpack.c.l.b16 %v481
      %v3119 = vunpack.c.l.b16 %v482
      %v3120 = vunpack.c.l.b16 %v483
      %v3121 = vunpack.c.l.b16 %v484
      %v3122 = vunpack.c.l.b16 %v485
      %v3123 = vunpack.c.l.b16 %v486
      %v3124 = vunpack.c.l.b16 %v487
      %v3125 = vunpack.c.l.b16 %v488
      %v3126 = vunpack.c.l.b16 %v489
      %v3127 = vunpack.c.l.b16 %v490
      %v3128 = vunpack.c.l.b16 %v491
      %v3129 = vunpack.c.l.b16 %v492
      %v3130 = vunpack.c.l.b16 %v493
      %v3131 = vunpack.c.l.b16 %v494
      %v3132 = vunpack.c.l.b16 %v495
      %v3133 = vunpack.c.l.b16 %v496
      %v3134 = vunpack.c.l.b16 %v497
      %v3135 = vunpack.c.l.b16 %v498
      %v3136 = vunpack.c.l.b16 %v499
      %v3137 = vunpack.c.l.b16 %v500
      %v3138 = vunpack.c.l.b16 %v501
      %v3139 = vunpack.c.l.b16 %v502
      %v3140 = vunpack.c.l.b16 %v503
      %v3141 = vunpack.c.l.b16 %v504
      %v3142 = vunpack.c.l.b16 %v505
      %v3143 = vunpack.c.l.b16 %v506
      %v3144 = vunpack.c.l.b16 %v507
      %v3145 = vunpack.c.l.b16 %v508
      %v3146 = vunpack.c.l.b16 %v509
      %v3147 = vunpack.c.l.b16 %v510
      %v3148 = vunpack.c.l.b16 %v511
      %v3149 = vunpack.c.l.b16 %v512
      %v3150 = vunpack.c.l.b16 %v513
      %v3151 = vunpack.c.l.b16 %v514
      %v3152 = vunpack.c.l.b16 %v515
      %v3153 = vunpack.c.l.b16 %v516
      %v3154 = vunpack.c.l.b16 %v517
      %v3155 = vunpack.c.l.b16 %v518
      %v3156 = vunpack.c.l.b16 %v519
      %v3157 = vunpack.c.l.b16 %v520
      %v3158 = vunpack.c.l.b16 %v521
      %v3159 = vunpack.c.l.b16 %v522
      %v3160 = vunpack.c.l.b16 %v523
      %v3161 = vunpack.c.l.b16 %v524
      %v3162 = vunpack.c.l.b16 %v525
      %v3163 = vunpack.c.l.b16 %v526
      %v3164 = vunpack.c.l.b16 %v527
      %v3165 = vunpack.c.l.b16 %v528
      %v3166 = vunpack.c.l.b16 %v529
      %v3167 = vunpack.c.l.b16 %v530
      %v3168 = vunpack.c.l.b16 %v531
      %v3169 = vunpack.c.l.b16 %v532
      %v3170 = vunpack.c.l.b16 %v533
      %v3171 = vunpack.c.l.b16 %v534
      %v3172 = vunpack.c.l.b16 %v535
      %v3173 = vunpack.c.l.b16 %v536
      %v3174 = vunpack.c.l.b16 %v537
      %v3175 = vunpack.c.l.b16 %v538
      %v3176 = vunpack.c.l.b16 %v539
      %v3177 = vunpack.c.l.b16 %v540
      %v3178 = vunpack.c.l.b16 %v541
      %v3179 = vunpack.c.l.b16 %v542
      %v3180 = vunpack.c.l.b16 %v543
      %v3181 = vunpack.c.l.b16 %v544
      %v3182 = vunpack.c.l.b16 %v545
      %v3183 = vunpack.c.l.b16 %v546
      %v3184 = vunpack.c.l.b16 %v547
      %v3185 = vunpack.c.l.b16 %v548
      %v3186 = vunpack.c.l.b16 %v549
      %v3187 = vunpack.c.l.b16 %v550
      %v3188 = vunpack.c.l.b16 %v551
      %v3189 = vunpack.c.l.b16 %v552
      %v3190 = vunpack.c.l.b16 %v553
      %v3191 = vunpack.c.l.b16 %v554
      %v3192 = vunpack.c.l.b16 %v555
      %v3193 = vunpack.c.l.b16 %v556
      %v3194 = vunpack.c.l.b16 %v557
      %v3195 = vunpack.c.l.b16 %v558
      %v3196 = vunpack.c.l.b16 %v559
      %v3197 = vunpack.c.l.b16 %v560
      %v3198 = vunpack.c.l.b16 %v561
      %v3199 = vunpack.c.l.b16 %v562
      %v3200 = vunpack.c.l.b16 %v563
      %v3201 = vunpack.c.l.b16 %v564
      %v3202 = vunpack.c.l.b16 %v565
      %v3203 = vunpack.c.l.b16 %v566
      %v3204 = vunpack.c.l.b16 %v567
      %v3205 = vunpack.c.l.b16 %v568
      %v3206 = vunpack.c.l.b16 %v569
      %v3207 = vunpack.c.l.b16 %v570
      %v3208 = vunpack.c.l.b16 %v571
      %v3209 = vunpack.c.l.b16 %v572
      %v3210 = vunpack.c.l.b16 %v573
      %v3211 = vunpack.c.l.b16 %v574
      %v3212 = vunpack.c.l.b16 %v575
      %v3213 = vunpack.c.l.b16 %v576
      %v3214 = vunpack.c.l.b16 %v577
      %v3215 = vunpack.c.l.b16 %v578
      %v3216 = vunpack.c.l.b16 %v579
      %v3217 = vunpack.c.l.b16 %v580
      %v3218 = vunpack.c.l.b16 %v581
      %v3219 = vunpack.c.l.b16 %v582
      %v3220 = vunpack.c.l.b16 %v583
      %v3221 = vunpack.c.l.b16 %v584
      %v3222 = vunpack.c.l.b16 %v585
      %v3223 = vunpack.c.l.b16 %v586
      %v3224 = vunpack.c.l.b16 %v587
      %v3225 = vunpack.c.l.b16 %v588
      %v3226 = vunpack.c.l.b16 %v589
      %v3227 = vunpack.c.l.b16 %v590
      %v3228 = vunpack.c.l.b16 %v591
      %v3229 = vunpack.c.l.b16 %v592
      %v3230 = vunpack.c.l.b16 %v593
      %v3231 = vunpack.c.l.b16 %v594
      %v3232 = vunpack.c.l.b16 %v595
      %v3233 = vunpack.c.l.b16 %v596
      %v3234 = vunpack.c.l.b16 %v597
      %v3235 = vunpack.c.l.b16 %v598
      %v3236 = vunpack.c.l.b16 %v599
      %v3237 = vunpack.c.l.b16 %v600
      %v3238 = vunpack.c.l.b16 %v601
      %v3239 = vunpack.c.l.b16 %v602
      %v3240 = vunpack.c.l.b16 %v603
      %v3241 = vunpack.c.l.b16 %v604
      %v3242 = vunpack.c.l.b16 %v605
      %v3243 = vunpack.c.l.b16 %v606
      %v3244 = vunpack.c.l.b16 %v607
      %v3245 = vunpack.c.l.b16 %v608
      %v3246 = vunpack.c.l.b16 %v609
      %v3247 = vunpack.c.l.b16 %v610
      %v3248 = vunpack.c.l.b16 %v611
      %v3249 = vunpack.c.l.b16 %v612
      %v3250 = vunpack.c.l.b16 %v613
      %v3251 = vunpack.c.l.b16 %v614
      %v3252 = vunpack.c.l.b16 %v615
      %v3253 = vunpack.c.l.b16 %v616
      %v3254 = vunpack.c.l.b16 %v617
      %v3255 = vunpack.c.l.b16 %v618
      %v3256 = vunpack.c.l.b16 %v619
      %v3257 = vunpack.c.l.b16 %v620
      %v3258 = vunpack.c.l.b16 %v621
      %v3259 = vunpack.c.l.b16 %v622
      %v3260 = vunpack.c.l.b16 %v623
      %v3261 = vunpack.c.l.b16 %v624
      %v3262 = vunpack.c.l.b16 %v625
      %v3263 = vunpack.c.l.b16 %v626
      %v3264 = vunpack.c.l.b16 %v627
      %v3265 = vunpack.c.l.b16 %v628
      %v3266 = vunpack.c.l.b16 %v629
      %v3267 = vunpack.c.l.b16 %v630
      %v3268 = vunpack.c.l.b16 %v631
      %v3269 = vunpack.c.l.b16 %v632
      %v3270 = vunpack.c.l.b16 %v633
      %v3271 = vunpack.c.l.b16 %v634
      %v3272 = vunpack.c.l.b16 %v635
      %v3273 = vunpack.c.l.b16 %v636
      %v3274 = vunpack.c.l.b16 %v637
      %v3275 = vunpack.c.l.b16 %v638
      %v3276 = vunpack.c.l.b16 %v639
      %v3277 = vunpack.c.l.b16 %v640
      %v3278 = vunpack.c.l.b16 %v641
      %v3279 = vunpack.c.l.b16 %v642
      %v3280 = vunpack.c.l.b16 %v643
      %v3281 = vunpack.c.l.b16 %v644
      %v3282 = vunpack.c.l.b16 %v645
      %v3283 = vunpack.c.l.b16 %v646
      %v3284 = vunpack.c.l.b16 %v647
      %v3285 = vunpack.c.l.b16 %v648
      %v3286 = vunpack.c.l.b16 %v649
      %v3287 = vunpack.c.l.b16 %v650
      %v3288 = vunpack.c.l.b16 %v651
      %v3289 = vunpack.c.l.b16 %v652
      %v3290 = vunpack.c.l.b16 %v653
      %v3291 = vunpack.c.l.b16 %v654
      %v3292 = vunpack.c.l.b16 %v655
      %v3293 = vunpack.c.l.b16 %v656
      %v3294 = vunpack.c.l.b16 %v657
      %v3295 = vunpack.c.l.b16 %v658
      %v3296 = vunpack.c.l.b16 %v659
      %v3297 = vunpack.c.l.b16 %v660
      %v3298 = vunpack.c.l.b16 %v661
      %v3299 = vunpack.c.l.b16 %v662
      %v3300 = vunpack.c.l.b16 %v663
      %v3301 = vunpack.c.l.b16 %v664
      %v3302 = vunpack.c.l.b16 %v665
      %v3303 = vunpack.c.l.b16 %v666
      %v3304 = vunpack.c.l.b16 %v667
      %v3305 = vunpack.c.l.b16 %v668
      %v3306 = vunpack.c.l.b16 %v669
      %v3307 = vunpack.c.l.b16 %v670
      %v3308 = vunpack.c.l.b16 %v671
      %v3309 = vunpack.c.l.b16 %v672
      %v3310 = vunpack.c.l.b16 %v673
      %v3311 = vunpack.c.l.b16 %v674
      %v3312 = vunpack.c.l.b16 %v675
      %v3313 = vunpack.c.l.b16 %v676
      %v3314 = vunpack.c.l.b16 %v677
      %v3315 = vunpack.c.l.b16 %v678
      %v3316 = vunpack.c.l.b16 %v679
      %v3317 = vunpack.c.l.b16 %v680
      %v3318 = vunpack.c.l.b16 %v681
      %v3319 = vunpack.c.l.b16 %v682
      %v3320 = vunpack.c.l.b16 %v683
      %v3321 = vunpack.c.l.b16 %v684
      %v3322 = vunpack.c.l.b16 %v685
      %v3323 = vunpack.c.l.b16 %v686
      %v3324 = vunpack.c.l.b16 %v687
      %v3325 = vunpack.c.l.b16 %v688
      %v3326 = vunpack.c.l.b16 %v689
      %v3327 = vunpack.c.l.b16 %v690
      %v3328 = vunpack.c.l.b16 %v691
      %v3329 = vunpack.c.l.b16 %v692
      %v3330 = vunpack.c.l.b16 %v693
      %v3331 = vunpack.c.l.b16 %v694
      %v3332 = vunpack.c.l.b16 %v695
      %v3333 = vunpack.c.l.b16 %v696
      %v3334 = vunpack.c.l.b16 %v697
      %v3335 = vunpack.c.l.b16 %v698
      %v3336 = vunpack.c.l.b16 %v699
      %v3337 = vunpack.c.l.b16 %v700
      %v3338 = vunpack.c.l.b16 %v701
      %v3339 = vunpack.c.l.b16 %v702
      %v3340 = vunpack.c.l.b16 %v703
      %v3341 = vunpack.c.l.b16 %v704
      %v3342 = vunpack.c.l.b16 %v705
      %v3343 = vunpack.c.l.b16 %v706
      %v3344 = vunpack.c.l.b16 %v707
      %v3345 = vunpack.c.l.b16 %v708
      %v3346 = vunpack.c.l.b16 %v709
      %v3347 = vunpack.c.l.b16 %v710
      %v3348 = vunpack.c.l.b16 %v711
      %v3349 = vunpack.c.l.b16 %v712
      %v3350 = vunpack.c.l.b16 %v713
      %v3351 = vunpack.c.l.b16 %v714
      %v3352 = vunpack.c.l.b16 %v715
      %v3353 = vunpack.c.l.b16 %v716
      %v3354 = vunpack.c.l.b16 %v717
      %v3355 = vunpack.c.l.b16 %v718
      %v3356 = vunpack.c.l.b16 %v719
      %v3357 = vunpack.c.l.b16 %v720
      %v3358 = vunpack.c.l.b16 %v721
      %v3359 = vunpack.c.l.b16 %v722
      %v3360 = vunpack.c.l.b16 %v723
      %v3361 = vunpack.c.l.b16 %v724
      %v3362 = vunpack.c.l.b16 %v725
      %v3363 = vunpack.c.l.b16 %v726
      %v3364 = vunpack.c.l.b16 %v727
      %v3365 = vunpack.c.l.b16 %v728
      %v3366 = vunpack.c.l.b16 %v729
      %v3367 = vunpack.c.l.b16 %v730
      %v3368 = vunpack.c.l.b16 %v731
      %v3369 = vunpack.c.l.b16 %v732
      %v3370 = vunpack.c.l.b16 %v733
      %v3371 = vunpack.c.l.b16 %v734
      %v3372 = vunpack.c.l.b16 %v735
      %v3373 = vunpack.c.l.b16 %v736
      %v3374 = vunpack.c.l.b16 %v737
      %v3375 = vunpack.c.l.b16 %v738
      %v3376 = vunpack.c.l.b16 %v739
      %v3377 = vunpack.c.l.b16 %v740
      %v3378 = vunpack.c.l.b16 %v741
      %v3379 = vunpack.c.l.b16 %v742
      %v3380 = vunpack.c.l.b16 %v743
      %v3381 = vunpack.c.l.b16 %v744
      %v3382 = vunpack.c.l.b16 %v745
      %v3383 = vunpack.c.l.b16 %v746
      %v3384 = vunpack.c.l.b16 %v747
      %v3385 = vunpack.c.l.b16 %v748
      %v3386 = vunpack.c.l.b16 %v749
      %v3387 = vunpack.c.l.b16 %v750
      %v3388 = vunpack.c.l.b16 %v751
      %v3389 = vunpack.c.l.b16 %v752
      %v3390 = vunpack.c.l.b16 %v753
      %v3391 = vunpack.c.l.b16 %v754
      %v3392 = vunpack.c.l.b16 %v755
      %v3393 = vunpack.c.l.b16 %v756
      %v3394 = vunpack.c.l.b16 %v757
      %v3395 = vunpack.c.l.b16 %v758
      %v3396 = vunpack.c.l.b16 %v759
      %v3397 = vunpack.c.l.b16 %v760
      %v3398 = vunpack.c.l.b16 %v761
      %v3399 = vunpack.c.l.b16 %v762
      %v3400 = vunpack.c.l.b16 %v763
      %v3401 = vunpack.c.l.b16 %v764
      %v3402 = vunpack.c.l.b16 %v765
      %v3403 = vunpack.c.l.b16 %v766
      %v3404 = vunpack.c.l.b16 %v767
      %v3405 = vunpack.c.l.b16 %v768
      %v3406 = vunpack.c.l.b16 %v769
      %v3407 = vunpack.c.l.b16 %v770
      %v3408 = vunpack.c.l.b16 %v771
      %v3409 = vunpack.c.l.b16 %v772
      %v3410 = vunpack.c.l.b16 %v773
      %v3411 = vunpack.c.l.b16 %v774
      %v3412 = vunpack.c.l.b16 %v775
      %v3413 = vunpack.c.l.b16 %v776
      %v3414 = vunpack.c.l.b16 %v777
      %v3415 = vunpack.c.l.b16 %v778
      %v3416 = vunpack.c.l.b16 %v779
      %v3417 = vunpack.c.l.b16 %v780
      %v3418 = vunpack.c.l.b16 %v781
      %v3419 = vunpack.c.l.b16 %v782
      %v3420 = vunpack.c.l.b16 %v783
      %v3421 = vunpack.c.l.b16 %v784
      %v3422 = vunpack.c.l.b16 %v785
      %v3423 = vunpack.c.l.b16 %v786
      %v3424 = vunpack.c.l.b16 %v787
      %v3425 = vunpack.c.l.b16 %v788
      %v3426 = vunpack.c.l.b16 %v789
      %v3427 = vunpack.c.l.b16 %v790
      %v3428 = vunpack.c.l.b16 %v791
      %v3429 = vunpack.c.l.b16 %v792
      %v3430 = vunpack.c.l.b16 %v793
      %v3431 = vunpack.c.l.b16 %v794
      %v3432 = vunpack.c.l.b16 %v795
      %v3433 = vunpack.c.l.b16 %v796
      %v3434 = vunpack.c.l.b16 %v797
      %v3435 = vunpack.c.l.b16 %v798
      %v3436 = vunpack.c.l.b16 %v799
      %v3437 = vunpack.c.l.b16 %v800
      %v3438 = vunpack.c.l.b16 %v801
      %v3439 = vunpack.c.l.b16 %v802
      %v3440 = vunpack.c.l.b16 %v803
      %v3441 = vunpack.c.l.b16 %v804
      %v3442 = vunpack.c.l.b16 %v805
      %v3443 = vunpack.c.l.b16 %v806
      %v3444 = vunpack.c.l.b16 %v807
      %v3445 = vunpack.c.l.b16 %v808
      %v3446 = vunpack.c.l.b16 %v809
      %v3447 = vunpack.c.l.b16 %v810
      %v3448 = vunpack.c.l.b16 %v811
      %v3449 = vunpack.c.l.b16 %v812
      %v3450 = vunpack.c.l.b16 %v813
      %v3451 = vunpack.c.l.b16 %v814
      %v3452 = vunpack.c.l.b16 %v815
      %v3453 = vunpack.c.l.b16 %v816
      %v3454 = vunpack.c.l.b16 %v817
      %v3455 = vunpack.c.l.b16 %v818
      %v3456 = vunpack.c.l.b16 %v819
      %v3457 = vunpack.c.l.b16 %v820
      %v3458 = vunpack.c.l.b16 %v821
      %v3459 = vunpack.c.l.b16 %v822
      %v3460 = vunpack.c.l.b16 %v823
      %v3461 = vunpack.c.l.b16 %v824
      %v3462 = vunpack.c.l.b16 %v825
      %v3463 = vunpack.c.l.b16 %v826
      %v3464 = vunpack.c.l.b16 %v827
      %v3465 = vunpack.c.l.b16 %v828
      %v3466 = vunpack.c.l.b16 %v829
      %v3467 = vunpack.c.l.b16 %v830
      %v3468 = vunpack.c.l.b16 %v831
      %v3469 = vunpack.c.l.b16 %v832
      %v3470 = vunpack.c.l.b16 %v833
      %v3471 = vunpack.c.l.b16 %v834
      %v3472 = vunpack.c.l.b16 %v835
      %v3473 = vunpack.c.l.b16 %v836
      %v3474 = vunpack.c.l.b16 %v837
      %v3475 = vunpack.c.l.b16 %v838
      %v3476 = vunpack.c.l.b16 %v839
      %v3477 = vunpack.c.l.b16 %v840
      %v3478 = vunpack.c.l.b16 %v841
      %v3479 = vunpack.c.l.b16 %v842
      %v3480 = vunpack.c.l.b16 %v843
      %v3481 = vunpack.c.l.b16 %v844
      %v3482 = vunpack.c.l.b16 %v845
      %v3483 = vunpack.c.l.b16 %v846
      %v3484 = vunpack.c.l.b16 %v847
      %v3485 = vunpack.c.l.b16 %v848
      %v3486 = vunpack.c.l.b16 %v849
      %v3487 = vunpack.c.l.b16 %v850
      %v3488 = vunpack.c.l.b16 %v851
      %v3489 = vunpack.c.l.b16 %v852
      %v3490 = vunpack.c.l.b16 %v853
      %v3491 = vunpack.c.l.b16 %v854
      %v3492 = vunpack.c.l.b16 %v855
      %v3493 = vunpack.c.l.b16 %v856
      %v3494 = vunpack.c.l.b16 %v857
      %v3495 = vunpack.c.l.b16 %v858
      %v3496 = vunpack.c.l.b16 %v859
      %v3497 = vunpack.c.l.b16 %v860
      %v3498 = vunpack.c.l.b16 %v861
      %v3499 = vunpack.c.l.b16 %v862
      %v3500 = vunpack.c.l.b16 %v863
      %v3501 = vunpack.c.l.b16 %v864
      %v3502 = vunpack.c.l.b16 %v865
      %v3503 = vunpack.c.l.b16 %v866
      %v3504 = vunpack.c.l.b16 %v867
      %v3505 = vunpack.c.l.b16 %v868
      %v3506 = vunpack.c.l.b16 %v869
      %v3507 = vunpack.c.l.b16 %v870
      %v3508 = vunpack.c.l.b16 %v871
      %v3509 = vunpack.c.l.b16 %v872
      %v3510 = vunpack.c.l.b16 %v873
      %v3511 = vunpack.c.l.b16 %v874
      %v3512 = vunpack.c.l.b16 %v875
      %v3513 = vunpack.c.l.b16 %v876
      %v3514 = vunpack.c.l.b16 %v877
      %v3515 = vunpack.c.l.b16 %v878
      %v3516 = vunpack.c.l.b16 %v879
      %v3517 = vunpack.c.l.b16 %v880
      %v3518 = vunpack.c.l.b16 %v881
      %v3519 = vunpack.c.l.b16 %v882
      %v3520 = vunpack.c.l.b16 %v883
      %v3521 = vunpack.c.l.b16 %v884
      %v3522 = vunpack.c.l.b16 %v885
      %v3523 = vunpack.c.l.b16 %v886
      %v3524 = vunpack.c.l.b16 %v887
      %v3525 = vunpack.c.l.b16 %v888
      %v3526 = vunpack.c.l.b16 %v889
      %v3527 = vunpack.c.l.b16 %v890
      %v3528 = vunpack.c.l.b16 %v891
      %v3529 = vunpack.c.l.b16 %v892
      %v3530 = vunpack.c.l.b16 %v893
      %v3531 = vunpack.c.l.b16 %v894
      %v3532 = vunpack.c.l.b16 %v895
      %v3533 = vunpack.c.l.b16 %v896
      %v3534 = vunpack.c.l.b16 %v897
      %v3535 = vunpack.c.l.b16 %v898
      %v3536 = vunpack.c.l.b16 %v899
      %v3537 = vunpack.c.l.b16 %v900
      %v3538 = vunpack.c.l.b16 %v901
      %v3539 = vunpack.c.l.b16 %v902
      %v3540 = vunpack.c.l.b16 %v903
      %v3541 = vunpack.c.l.b16 %v904
      %v3542 = vunpack.c.l.b16 %v905
      %v3543 = vunpack.c.l.b16 %v906
      %v3544 = vunpack.c.l.b16 %v907
      %v3545 = vunpack.c.l.b16 %v908
      %v3546 = vunpack.c.l.b16 %v909
      %v3547 = vunpack.c.l.b16 %v910
      %v3548 = vunpack.c.l.b16 %v911
      %v3549 = vunpack.c.l.b16 %v912
      %v3550 = vunpack.c.l.b16 %v913
      %v3551 = vunpack.c.l.b16 %v914
      %v3552 = vunpack.c.l.b16 %v915
      %v3553 = vunpack.c.l.b16 %v916
      %v3554 = vunpack.c.l.b16 %v917
      %v3555 = vunpack.c.l.b16 %v918
      %v3556 = vunpack.c.l.b16 %v919
      %v3557 = vunpack.c.l.b16 %v920
      %v3558 = vunpack.c.l.b16 %v921
      %v3559 = vunpack.c.l.b16 %v922
      %v3560 = vunpack.c.l.b16 %v923
      %v3561 = vunpack.c.l.b16 %v924
      %v3562 = vunpack.c.l.b16 %v925
      %v3563 = vunpack.c.l.b16 %v926
      %v3564 = vunpack.c.l.b16 %v927
      %v3565 = vunpack.c.l.b16 %v928
      %v3566 = vunpack.c.l.b16 %v929
      %v3567 = vunpack.c.l.b16 %v930
      %v3568 = vunpack.c.l.b16 %v931
      %v3569 = vunpack.c.l.b16 %v932
      %v3570 = vunpack.c.l.b16 %v933
      %v3571 = vunpack.c.l.b16 %v934
      %v3572 = vunpack.c.l.b16 %v935
      %v3573 = vunpack.c.l.b16 %v936
      %v3574 = vunpack.c.l.b16 %v937
      %v3575 = vunpack.c.l.b16 %v938
      %v3576 = vunpack.c.l.b16 %v939
      %v3577 = vunpack.c.l.b16 %v940
      %v3578 = vunpack.c.l.b16 %v941
      %v3579 = vunpack.c.l.b16 %v942
      %v3580 = vunpack.c.l.b16 %v943
      %v3581 = vunpack.c.l.b16 %v944
      %v3582 = vunpack.c.l.b16 %v945
      %v3583 = vunpack.c.l.b16 %v946
      %v3584 = vunpack.c.l.b16 %v947
      %v3585 = vunpack.c.l.b16 %v948
      %v3586 = vunpack.c.l.b16 %v949
      %v3587 = vunpack.c.l.b16 %v950
      %v3588 = vunpack.c.l.b16 %v951
      %v3589 = vunpack.c.l.b16 %v952
      %v3590 = vunpack.c.l.b16 %v953
      %v3591 = vunpack.c.l.b16 %v954
      %v3592 = vunpack.c.l.b16 %v955
      %v3593 = vunpack.c.l.b16 %v956
      %v3594 = vunpack.c.l.b16 %v957
      %v3595 = vunpack.c.l.b16 %v958
      %v3596 = vunpack.c.l.b16 %v959
      %v3597 = vunpack.c.l.b16 %v960
      %v3598 = vunpack.c.l.b16 %v961
      %v3599 = vunpack.c.l.b16 %v962
      %v3600 = vunpack.c.l.b16 %v963
      %v3601 = vunpack.c.l.b16 %v964
      %v3602 = vunpack.c.l.b16 %v965
      %v3603 = vunpack.c.l.b16 %v966
      %v3604 = vunpack.c.l.b16 %v967
      %v3605 = vunpack.c.l.b16 %v968
      %v3606 = vunpack.c.l.b16 %v969
      %v3607 = vunpack.c.l.b16 %v970
      %v3608 = vunpack.c.l.b16 %v971
      %v3609 = vunpack.c.l.b16 %v972
      %v3610 = vunpack.c.l.b16 %v973
      %v3611 = vunpack.c.l.b16 %v974
      %v3612 = vunpack.c.l.b16 %v975
      %v3613 = vunpack.c.l.b16 %v976
      %v3614 = vunpack.c.l.b16 %v977
      %v3615 = vunpack.c.l.b16 %v978
      %v3616 = vunpack.c.l.b16 %v979
      %v3617 = vunpack.c.l.b16 %v980
      %v3618 = vunpack.c.l.b16 %v981
      %v3619 = vunpack.c.l.b16 %v982
      %v3620 = vunpack.c.l.b16 %v983
      %v3621 = vunpack.c.l.b16 %v984
      %v3622 = vunpack.c.l.b16 %v985
      %v3623 = vunpack.c.l.b16 %v986
      %v3624 = vunpack.c.l.b16 %v987
      %v3625 = vunpack.c.l.b16 %v988
      %v3626 = vunpack.c.l.b16 %v989
      %v3627 = vunpack.c.l.b16 %v990
      %v3628 = vunpack.c.l.b16 %v991
      %v3629 = vunpack.c.l.b16 %v992
      %v3630 = vunpack.c.l.b16 %v993
      %v3631 = vunpack.c.l.b16 %v994
      %v3632 = vunpack.c.l.b16 %v995
      %v3633 = vunpack.c.l.b16 %v996
      %v3634 = vunpack.c.l.b16 %v997
      %v3635 = vunpack.c.l.b16 %v998
      %v3636 = vunpack.c.l.b16 %v999
      %v3637 = vunpack.c.l.b16 %v1000
      %v3638 = vunpack.c.l.b16 %v1001
      %v3639 = vunpack.c.l.b16 %v1002
      %v3640 = vunpack.c.l.b16 %v1003
      %v3641 = vunpack.c.l.b16 %v1004
      %v3642 = vunpack.c.l.b16 %v1005
      %v3643 = vunpack.c.l.b16 %v1006
      %v3644 = vunpack.c.l.b16 %v1007
      %v3645 = vunpack.c.l.b16 %v1008
      %v3646 = vunpack.c.l.b16 %v1009
      %v3647 = vunpack.c.l.b16 %v1010
      %v3648 = vunpack.c.l.b16 %v1011
      %v3649 = vunpack.c.l.b16 %v1012
      %v3650 = vunpack.c.l.b16 %v1013
      %v3651 = vunpack.c.l.b16 %v1014
      %v3652 = vunpack.c.l.b16 %v1015
      %v3653 = vunpack.c.l.b16 %v1016
      %v3654 = vunpack.c.l.b16 %v1017
      %v3655 = vunpack.c.l.b16 %v1018
      %v3656 = vunpack.c.l.b16 %v1019
      %v3657 = vunpack.c.l.b16 %v1020
      %v3658 = vunpack.c.l.b16 %v1021
      %v3659 = vunpack.c.l.b16 %v1022
      %v3660 = vunpack.c.l.b16 %v1023
      %v3661 = vunpack.c.l.b16 %v1024
      %v3662 = vunpack.c.l.b16 %v1025
      %v3663 = vunpack.c.l.b16 %v1026
      %v3664 = vunpack.c.l.b16 %v1027
      %v3665 = vunpack.c.l.b16 %v1028
      %v3666 = vunpack.c.l.b16 %v1029
      %v3667 = vunpack.c.l.b16 %v1030
      %v3668 = vunpack.c.l.b16 %v1031
      %v3669 = vunpack.c.l.b16 %v1032
      %v3670 = vunpack.c.l.b16 %v1033
      %v3671 = vunpack.c.l.b16 %v1034
      %v3672 = vunpack.c.l.b16 %v1035
      %v3673 = vunpack.c.l.b16 %v1036
      %v3674 = vunpack.c.l.b16 %v1037
      %v3675 = vunpack.c.l.b16 %v1038
      %v3676 = vunpack.c.l.b16 %v1039
      %v3677 = vunpack.c.l.b16 %v1040
      %v3678 = vunpack.c.l.b16 %v1041
      %v3679 = vunpack.c.l.b16 %v1042
      %v3680 = vunpack.c.l.b16 %v1043
      %v3681 = vunpack.c.l.b16 %v1044
      %v3682 = vunpack.c.l.b16 %v1045
      %v3683 = vunpack.c.l.b16 %v1046
      %v3684 = vunpack.c.l.b16 %v1047
      %v3685 = vunpack.c.l.b16 %v1048
      %v3686 = vunpack.c.l.b16 %v1049
      %v3687 = vunpack.c.l.b16 %v1050
      %v3688 = vunpack.c.l.b16 %v1051
      %v3689 = vunpack.c.l.b16 %v1052
      %v3690 = vunpack.c.l.b16 %v1053
      %v3691 = vunpack.c.l.b16 %v1054
      %v3692 = vunpack.c.l.b16 %v1055
      %v3693 = vunpack.c.l.b16 %v1056
      %v3694 = vunpack.c.l.b16 %v1057
      %v3695 = vunpack.c.l.b16 %v1058
      %v3696 = vunpack.c.l.b16 %v1059
      %v3697 = vunpack.c.l.b16 %v1060
      %v3698 = vunpack.c.l.b16 %v1061
      %v3699 = vunpack.c.l.b16 %v1062
      %v3700 = vunpack.c.l.b16 %v1063
      %v3701 = vunpack.c.l.b16 %v1064
      %v3702 = vunpack.c.l.b16 %v1065
      %v3703 = vunpack.c.l.b16 %v1066
      %v3704 = vunpack.c.l.b16 %v1067
      %v3705 = vunpack.c.l.b16 %v1068
      %v3706 = vunpack.c.l.b16 %v1069
      %v3707 = vunpack.c.l.b16 %v1070
      %v3708 = vunpack.c.l.b16 %v1071
      %v3709 = vunpack.c.l.b16 %v1072
      %v3710 = vunpack.c.l.b16 %v1073
      %v3711 = vunpack.c.l.b16 %v1074
      %v3712 = vunpack.c.l.b16 %v1075
      %v3713 = vunpack.c.l.b16 %v1076
      %v3714 = vunpack.c.l.b16 %v1077
      %v3715 = vunpack.c.l.b16 %v1078
      %v3716 = vunpack.c.l.b16 %v1079
      %v3717 = vunpack.c.l.b16 %v1080
      %v3718 = vunpack.c.l.b16 %v1081
      %v3719 = vunpack.c.l.b16 %v1082
      %v3720 = vunpack.c.l.b16 %v1083
      %v3721 = vunpack.c.l.b16 %v1084
      %v3722 = vunpack.c.l.b16 %v1085
      %v3723 = vunpack.c.l.b16 %v1086
      %v3724 = vunpack.c.l.b16 %v1087
      %v3725 = vunpack.c.l.b16 %v1088
      %v3726 = vunpack.c.l.b16 %v1089
      %v3727 = vunpack.c.l.b16 %v1090
      %v3728 = vunpack.c.l.b16 %v1091
      %v3729 = vunpack.c.l.b16 %v1092
      %v3730 = vunpack.c.l.b16 %v1093
      %v3731 = vunpack.c.l.b16 %v1094
      %v3732 = vunpack.c.l.b16 %v1095
      %v3733 = vunpack.c.l.b16 %v1096
      %v3734 = vunpack.c.l.b16 %v1097
      %v3735 = vunpack.c.l.b16 %v1098
      %v3736 = vunpack.c.l.b16 %v1099
      %v3737 = vunpack.c.l.b16 %v1100
      %v3738 = vunpack.c.l.b16 %v1101
      %v3739 = vunpack.c.l.b16 %v1102
      %v3740 = vunpack.c.l.b16 %v1103
      %v3741 = vunpack.c.l.b16 %v1104
      %v3742 = vunpack.c.l.b16 %v1105
      %v3743 = vunpack.c.l.b16 %v1106
      %v3744 = vunpack.c.l.b16 %v1107
      %v3745 = vunpack.c.l.b16 %v1108
      %v3746 = vunpack.c.l.b16 %v1109
      %v3747 = vunpack.c.l.b16 %v1110
      %v3748 = vunpack.c.l.b16 %v1111
      %v3749 = vunpack.c.l.b16 %v1112
      %v3750 = vunpack.c.l.b16 %v1113
      %v3751 = vunpack.c.l.b16 %v1114
      %v3752 = vunpack.c.l.b16 %v1115
      %v3753 = vunpack.c.l.b16 %v1116
      %v3754 = vunpack.c.l.b16 %v1117
      %v3755 = vunpack.c.l.b16 %v1118
      %v3756 = vunpack.c.l.b16 %v1119
      %v3757 = vunpack.c.l.b16 %v1120
      %v3758 = vunpack.c.l.b16 %v1121
      %v3759 = vunpack.c.l.b16 %v1122
      %v3760 = vunpack.c.l.b16 %v1123
      %v3761 = vunpack.c.l.b16 %v1124
      %v3762 = vunpack.c.l.b16 %v1125
      %v3763 = vunpack.c.l.b16 %v1126
      %v3764 = vunpack.c.l.b16 %v1127
      %v3765 = vunpack.c.l.b16 %v1128
      %v3766 = vunpack.c.l.b16 %v1129
      %v3767 = vunpack.c.l.b16 %v1130
      %v3768 = vunpack.c.l.b16 %v1131
      %v3769 = vunpack.c.l.b16 %v1132
      %v3770 = vunpack.c.l.b16 %v1133
      %v3771 = vunpack.c.l.b16 %v1134
      %v3772 = vunpack.c.l.b16 %v1135
      %v3773 = vunpack.c.l.b16 %v1136
      %v3774 = vunpack.c.l.b16 %v1137
      %v3775 = vunpack.c.l.b16 %v1138
      %v3776 = vunpack.c.l.b16 %v1139
      %v3777 = vunpack.c.l.b16 %v1140
      %v3778 = vunpack.c.l.b16 %v1141
      %v3779 = vunpack.c.l.b16 %v1142
      %v3780 = vunpack.c.l.b16 %v1143
      %v3781 = vunpack.c.l.b16 %v1144
      %v3782 = vunpack.c.l.b16 %v1145
      %v3783 = vunpack.c.l.b16 %v1146
      %v3784 = vunpack.c.l.b16 %v1147
      %v3785 = vunpack.c.l.b16 %v1148
      %v3786 = vunpack.c.l.b16 %v1149
      %v3787 = vunpack.c.l.b16 %v1150
      %v3788 = vunpack.c.l.b16 %v1151
      %v3789 = vunpack.c.l.b16 %v1152
      %v3790 = vunpack.c.l.b16 %v1153
      %v3791 = vunpack.c.l.b16 %v1154
      %v3792 = vunpack.c.l.b16 %v1155
      %v3793 = vunpack.c.l.b16 %v1156
      %v3794 = vunpack.c.l.b16 %v1157
      %v3795 = vunpack.c.l.b16 %v1158
      %v3796 = vunpack.c.l.b16 %v1159
      %v3797 = vunpack.c.l.b16 %v1160
      %v3798 = vunpack.c.l.b16 %v1161
      %v3799 = vunpack.c.l.b16 %v1162
      %v3800 = vunpack.c.l.b16 %v1163
      %v3801 = vunpack.c.l.b16 %v1164
      %v3802 = vunpack.c.l.b16 %v1165
      %v3803 = vunpack.c.l.b16 %v1166
      %v3804 = vunpack.c.l.b16 %v1167
      %v3805 = vunpack.c.l.b16 %v1168
      %v3806 = vunpack.c.l.b16 %v1169
      %v3807 = vunpack.c.l.b16 %v1170
      %v3808 = vunpack.c.l.b16 %v1171
      %v3809 = vunpack.c.l.b16 %v1172
      %v3810 = vunpack.c.l.b16 %v1173
      %v3811 = vunpack.c.l.b16 %v1174
      %v3812 = vunpack.c.l.b16 %v1175
      %v3813 = vunpack.c.l.b16 %v1176
      %v3814 = vunpack.c.l.b16 %v1177
      %v3815 = vunpack.c.l.b16 %v1178
      %v3816 = vunpack.c.l.b16 %v1179
      %v3817 = vunpack.c.l.b16 %v1180
      %v3818 = vunpack.c.l.b16 %v1181
      %v3819 = vunpack.c.l.b16 %v1182
      %v3820 = vunpack.c.l.b16 %v1183
      %v3821 = vunpack.c.l.b16 %v1184
      %v3822 = vunpack.c.l.b16 %v1185
      %v3823 = vunpack.c.l.b16 %v1186
      %v3824 = vunpack.c.l.b16 %v1187
      %v3825 = vunpack.c.l.b16 %v1188
      %v3826 = vunpack.c.l.b16 %v1189
      %v3827 = vunpack.c.l.b16 %v1190
      %v3828 = vunpack.c.l.b16 %v1191
      %v3829 = vunpack.c.l.b16 %v1192
      %v3830 = vunpack.c.l.b16 %v1193
      %v3831 = vunpack.c.l.b16 %v1194
      %v3832 = vunpack.c.l.b16 %v1195
      %v3833 = vunpack.c.l.b16 %v1196
      %v3834 = vunpack.c.l.b16 %v1197
      %v3835 = vunpack.c.l.b16 %v1198
      %v3836 = vunpack.c.l.b16 %v1199
      %v3837 = vunpack.c.l.b16 %v1200
      %v3838 = vunpack.c.l.b16 %v1201
      %v3839 = vunpack.c.l.b16 %v1202
      %v3840 = vunpack.c.l.b16 %v1203
      %v3841 = vunpack.c.l.b16 %v1204
      %v3842 = vunpack.c.l.b16 %v1205
      %v3843 = vunpack.c.l.b16 %v1206
      %v3844 = vunpack.c.l.b16 %v1207
      %v3845 = vunpack.c.l.b16 %v1208
      %v3846 = vunpack.c.l.b16 %v1209
      %v3847 = vunpack.c.l.b16 %v1210
      %v3848 = vunpack.c.l.b16 %v1211
      %v3849 = vunpack.c.l.b16 %v1212
      %v3850 = vunpack.c.l.b16 %v1213
      %v3851 = vunpack.c.l.b16 %v1214
      %v3852 = vunpack.c.l.b16 %v1215
      %v3853 = vunpack.c.l.b16 %v1216
      %v3854 = vunpack.c.l.b16 %v1217
      %v3855 = vunpack.c.l.b16 %v1218
      %v3856 = vunpack.c.l.b16 %v1219
      %v3857 = vunpack.c.l.b16 %v1220
      %v3858 = vunpack.c.l.b16 %v1221
      %v3859 = vunpack.c.l.b16 %v1222
      %v3860 = vunpack.c.l.b16 %v1223
      %v3861 = vunpack.c.l.b16 %v1224
      %v3862 = vunpack.c.l.b16 %v1225
      %v3863 = vunpack.c.l.b16 %v1226
      %v3864 = vunpack.c.l.b16 %v1227
      %v3865 = vunpack.c.l.b16 %v1228
      %v3866 = vunpack.c.l.b16 %v1229
      %v3867 = vunpack.c.l.b16 %v1230
      %v3868 = vunpack.c.l.b16 %v1231
      %v3869 = vunpack.c.l.b16 %v1232
      %v3870 = vunpack.c.l.b16 %v1233
      %v3871 = vunpack.c.l.b16 %v1234
      %v3872 = vunpack.c.l.b16 %v1235
      %v3873 = vunpack.c.l.b16 %v1236
      %v3874 = vunpack.c.l.b16 %v1237
      %v3875 = vunpack.c.l.b16 %v1238
      %v3876 = vunpack.c.l.b16 %v1239
      %v3877 = vunpack.c.l.b16 %v1240
      %v3878 = vunpack.c.l.b16 %v1241
      %v3879 = vunpack.c.l.b16 %v1242
      %v3880 = vunpack.c.l.b16 %v1243
      %v3881 = vunpack.c.l.b16 %v1244
      %v3882 = vunpack.c.l.b16 %v1245
      %v3883 = vunpack.c.l.b16 %v1246
      %v3884 = vunpack.c.l.b16 %v1247
      %v3885 = vunpack.c.l.b16 %v1248
      %v3886 = vunpack.c.l.b16 %v1249
      %v3887 = vunpack.c.l.b16 %v1250
      %v3888 = vunpack.c.l.b16 %v1251
      %v3889 = vunpack.c.l.b16 %v1252
      %v3890 = vunpack.c.l.b16 %v1253
      %v3891 = vunpack.c.l.b16 %v1254
      %v3892 = vunpack.c.l.b16 %v1255
      %v3893 = vunpack.c.l.b16 %v1256
      %v3894 = vunpack.c.l.b16 %v1257
      %v3895 = vunpack.c.l.b16 %v1258
      %v3896 = vunpack.c.l.b16 %v1259
      %v3897 = vunpack.c.l.b16 %v1260
      %v3898 = vunpack.c.l.b16 %v1261
      %v3899 = vunpack.c.l.b16 %v1262
      %v3900 = vunpack.c.l.b16 %v1263
      %v3901 = vunpack.c.l.b16 %v1264
      %v3902 = vunpack.c.l.b16 %v1265
      %v3903 = vunpack.c.l.b16 %v1266
      %v3904 = vunpack.c.l.b16 %v1267
      %v3905 = vunpack.c.l.b16 %v1268
      %v3906 = vunpack.c.l.b16 %v1269
      %v3907 = vunpack.c.l.b16 %v1270
      %v3908 = vunpack.c.l.b16 %v1271
      %v3909 = vunpack.c.l.b16 %v1272
      %v3910 = vunpack.c.l.b16 %v1273
      %v3911 = vunpack.c.l.b16 %v1274
      %v3912 = vunpack.c.l.b16 %v1275
      %v3913 = vunpack.c.l.b16 %v1276
      %v3914 = vunpack.c.l.b16 %v1277
      %v3915 = vunpack.c.l.b16 %v1278
      %v3916 = vunpack.c.l.b16 %v1279
      %v3917 = vunpack.c.l.b16 %v1280
      %v3918 = vunpack.c.l.b16 %v1281
      %v3919 = vunpack.c.l.b16 %v1282
      %v3920 = vunpack.c.l.b16 %v1283
      %v3921 = vunpack.c.l.b16 %v1284
      %v3922 = vunpack.c.l.b16 %v1285
      %v3923 = vunpack.c.l.b16 %v1286
      %v3924 = vunpack.c.l.b16 %v1287
      %v3925 = vunpack.c.l.b16 %v1288
      %v3926 = vunpack.c.l.b16 %v1289
      %v3927 = vunpack.c.l.b16 %v1290
      %v3928 = vunpack.c.l.b16 %v1291
      %v3929 = vunpack.c.l.b16 %v1292
      %v3930 = vunpack.c.l.b16 %v1293
      %v3931 = vunpack.c.l.b16 %v1294
      %v3932 = vunpack.c.l.b16 %v1295
      %v3933 = vunpack.c.l.b16 %v1296
      %v3934 = vunpack.c.l.b16 %v1297
      %v3935 = vunpack.c.l.b16 %v1298
      %v3936 = vunpack.c.l.b16 %v1299
      %v3937 = vpack.c.b16 %v2938, %v2937
      %v3938 = vpack.c.b16 %v2940, %v2939
      %v3939 = vpack.c.b16 %v2942, %v2941
      %v3940 = vpack.c.b16 %v2944, %v2943
      %v3941 = vpack.c.b16 %v2946, %v2945
      %v3942 = vpack.c.b16 %v2948, %v2947
      %v3943 = vpack.c.b16 %v2950, %v2949
      %v3944 = vpack.c.b16 %v2952, %v2951
      %v3945 = vpack.c.b16 %v2954, %v2953
      %v3946 = vpack.c.b16 %v2956, %v2955
      %v3947 = vpack.c.b16 %v2958, %v2957
      %v3948 = vpack.c.b16 %v2960, %v2959
      %v3949 = vpack.c.b16 %v2962, %v2961
      %v3950 = vpack.c.b16 %v2964, %v2963
      %v3951 = vpack.c.b16 %v2966, %v2965
      %v3952 = vpack.c.b16 %v2968, %v2967
      %v3953 = vpack.c.b16 %v2970, %v2969
      %v3954 = vpack.c.b16 %v2972, %v2971
      %v3955 = vpack.c.b16 %v2974, %v2973
      %v3956 = vpack.c.b16 %v2976, %v2975
      %v3957 = vpack.c.b16 %v2978, %v2977
      %v3958 = vpack.c.b16 %v2980, %v2979
      %v3959 = vpack.c.b16 %v2982, %v2981
      %v3960 = vpack.c.b16 %v2984, %v2983
      %v3961 = vpack.c.b16 %v2986, %v2985
      %v3962 = vpack.c.b16 %v2988, %v2987
      %v3963 = vpack.c.b16 %v2990, %v2989
      %v3964 = vpack.c.b16 %v2992, %v2991
      %v3965 = vpack.c.b16 %v2994, %v2993
      %v3966 = vpack.c.b16 %v2996, %v2995
      %v3967 = vpack.c.b16 %v2998, %v2997
      %v3968 = vpack.c.b16 %v3000, %v2999
      %v3969 = vpack.c.b16 %v3002, %v3001
      %v3970 = vpack.c.b16 %v3004, %v3003
      %v3971 = vpack.c.b16 %v3006, %v3005
      %v3972 = vpack.c.b16 %v3008, %v3007
      %v3973 = vpack.c.b16 %v3010, %v3009
      %v3974 = vpack.c.b16 %v3012, %v3011
      %v3975 = vpack.c.b16 %v3014, %v3013
      %v3976 = vpack.c.b16 %v3016, %v3015
      %v3977 = vpack.c.b16 %v3018, %v3017
      %v3978 = vpack.c.b16 %v3020, %v3019
      %v3979 = vpack.c.b16 %v3022, %v3021
      %v3980 = vpack.c.b16 %v3024, %v3023
      %v3981 = vpack.c.b16 %v3026, %v3025
      %v3982 = vpack.c.b16 %v3028, %v3027
      %v3983 = vpack.c.b16 %v3030, %v3029
      %v3984 = vpack.c.b16 %v3032, %v3031
      %v3985 = vpack.c.b16 %v3034, %v3033
      %v3986 = vpack.c.b16 %v3036, %v3035
      %v3987 = vpack.c.b16 %v3038, %v3037
      %v3988 = vpack.c.b16 %v3040, %v3039
      %v3989 = vpack.c.b16 %v3042, %v3041
      %v3990 = vpack.c.b16 %v3044, %v3043
      %v3991 = vpack.c.b16 %v3046, %v3045
      %v3992 = vpack.c.b16 %v3048, %v3047
      %v3993 = vpack.c.b16 %v3050, %v3049
      %v3994 = vpack.c.b16 %v3052, %v3051
      %v3995 = vpack.c.b16 %v3054, %v3053
      %v3996 = vpack.c.b16 %v3056, %v3055
      %v3997 = vpack.c.b16 %v3058, %v3057
      %v3998 = vpack.c.b16 %v3060, %v3059
      %v3999 = vpack.c.b16 %v3062, %v3061
      %v4000 = vpack.c.b16 %v3064, %v3063
      %v4001 = vpack.c.b16 %v3066, %v3065
      %v4002 = vpack.c.b16 %v3068, %v3067
      %v4003 = vpack.c.b16 %v3070, %v3069
      %v4004 = vpack.c.b16 %v3072, %v3071
      %v4005 = vpack.c.b16 %v3074, %v3073
      %v4006 = vpack.c.b16 %v3076, %v3075
      %v4007 = vpack.c.b16 %v3078, %v3077
      %v4008 = vpack.c.b16 %v3080, %v3079
      %v4009 = vpack.c.b16 %v3082, %v3081
      %v4010 = vpack.c.b16 %v3084, %v3083
      %v4011 = vpack.c.b16 %v3086, %v3085
      %v4012 = vpack.c.b16 %v3088, %v3087
      %v4013 = vpack.c.b16 %v3090, %v3089
      %v4014 = vpack.c.b16 %v3092, %v3091
      %v4015 = vpack.c.b16 %v3094, %v3093
      %v4016 = vpack.c.b16 %v3096, %v3095
      %v4017 = vpack.c.b16 %v3098, %v3097
      %v4018 = vpack.c.b16 %v3100, %v3099
      %v4019 = vpack.c.b16 %v3102, %v3101
      %v4020 = vpack.c.b16 %v3104, %v3103
      %v4021 = vpack.c.b16 %v3106, %v3105
      %v4022 = vpack.c.b16 %v3108, %v3107
      %v4023 = vpack.c.b16 %v3110, %v3109
      %v4024 = vpack.c.b16 %v3112, %v3111
      %v4025 = vpack.c.b16 %v3114, %v3113
      %v4026 = vpack.c.b16 %v3116, %v3115
      %v4027 = vpack.c.b16 %v3118, %v3117
      %v4028 = vpack.c.b16 %v3120, %v3119
      %v4029 = vpack.c.b16 %v3122, %v3121
      %v4030 = vpack.c.b16 %v3124, %v3123
      %v4031 = vpack.c.b16 %v3126, %v3125
      %v4032 = vpack.c.b16 %v3128, %v3127
      %v4033 = vpack.c.b16 %v3130, %v3129
      %v4034 = vpack.c.b16 %v3132, %v3131
      %v4035 = vpack.c.b16 %v3134, %v3133
      %v4036 = vpack.c.b16 %v3136, %v3135
      %v4037 = vpack.c.b16 %v3138, %v3137
      %v4038 = vpack.c.b16 %v3140, %v3139
      %v4039 = vpack.c.b16 %v3142, %v3141
      %v4040 = vpack.c.b16 %v3144, %v3143
      %v4041 = vpack.c.b16 %v3146, %v3145
      %v4042 = vpack.c.b16 %v3148, %v3147
      %v4043 = vpack.c.b16 %v3150, %v3149
      %v4044 = vpack.c.b16 %v3152, %v3151
      %v4045 = vpack.c.b16 %v3154, %v3153
      %v4046 = vpack.c.b16 %v3156, %v3155
      %v4047 = vpack.c.b16 %v3158, %v3157
      %v4048 = vpack.c.b16 %v3160, %v3159
      %v4049 = vpack.c.b16 %v3162, %v3161
      %v4050 = vpack.c.b16 %v3164, %v3163
      %v4051 = vpack.c.b16 %v3166, %v3165
      %v4052 = vpack.c.b16 %v3168, %v3167
      %v4053 = vpack.c.b16 %v3170, %v3169
      %v4054 = vpack.c.b16 %v3172, %v3171
      %v4055 = vpack.c.b16 %v3174, %v3173
      %v4056 = vpack.c.b16 %v3176, %v3175
      %v4057 = vpack.c.b16 %v3178, %v3177
      %v4058 = vpack.c.b16 %v3180, %v3179
      %v4059 = vpack.c.b16 %v3182, %v3181
      %v4060 = vpack.c.b16 %v3184, %v3183
      %v4061 = vpack.c.b16 %v3186, %v3185
      %v4062 = vpack.c.b16 %v3188, %v3187
      %v4063 = vpack.c.b16 %v3190, %v3189
      %v4064 = vpack.c.b16 %v3192, %v3191
      %v4065 = vpack.c.b16 %v3194, %v3193
      %v4066 = vpack.c.b16 %v3196, %v3195
      %v4067 = vpack.c.b16 %v3198, %v3197
      %v4068 = vpack.c.b16 %v3200, %v3199
      %v4069 = vpack.c.b16 %v3202, %v3201
      %v4070 = vpack.c.b16 %v3204, %v3203
      %v4071 = vpack.c.b16 %v3206, %v3205
      %v4072 = vpack.c.b16 %v3208, %v3207
      %v4073 = vpack.c.b16 %v3210, %v3209
      %v4074 = vpack.c.b16 %v3212, %v3211
      %v4075 = vpack.c.b16 %v3214, %v3213
      %v4076 = vpack.c.b16 %v3216, %v3215
      %v4077 = vpack.c.b16 %v3218, %v3217
      %v4078 = vpack.c.b16 %v3220, %v3219
      %v4079 = vpack.c.b16 %v3222, %v3221
      %v4080 = vpack.c.b16 %v3224, %v3223
      %v4081 = vpack.c.b16 %v3226, %v3225
      %v4082 = vpack.c.b16 %v3228, %v3227
      %v4083 = vpack.c.b16 %v3230, %v3229
      %v4084 = vpack.c.b16 %v3232, %v3231
      %v4085 = vpack.c.b16 %v3234, %v3233
      %v4086 = vpack.c.b16 %v3236, %v3235
      %v4087 = vpack.c.b16 %v3238, %v3237
      %v4088 = vpack.c.b16 %v3240, %v3239
      %v4089 = vpack.c.b16 %v3242, %v3241
      %v4090 = vpack.c.b16 %v3244, %v3243
      %v4091 = vpack.c.b16 %v3246, %v3245
      %v4092 = vpack.c.b16 %v3248, %v3247
      %v4093 = vpack.c.b16 %v3250, %v3249
      %v4094 = vpack.c.b16 %v3252, %v3251
      %v4095 = vpack.c.b16 %v3254, %v3253
      %v4096 = vpack.c.b16 %v3256, %v3255
      %v4097 = vpack.c.b16 %v3258, %v3257
      %v4098 = vpack.c.b16 %v3260, %v3259
      %v4099 = vpack.c.b16 %v3262, %v3261
      %v4100 = vpack.c.b16 %v3264, %v3263
      %v4101 = vpack.c.b16 %v3266, %v3265
      %v4102 = vpack.c.b16 %v3268, %v3267
      %v4103 = vpack.c.b16 %v3270, %v3269
      %v4104 = vpack.c.b16 %v3272, %v3271
      %v4105 = vpack.c.b16 %v3274, %v3273
      %v4106 = vpack.c.b16 %v3276, %v3275
      %v4107 = vpack.c.b16 %v3278, %v3277
      %v4108 = vpack.c.b16 %v3280, %v3279
      %v4109 = vpack.c.b16 %v3282, %v3281
      %v4110 = vpack.c.b16 %v3284, %v3283
      %v4111 = vpack.c.b16 %v3286, %v3285
      %v4112 = vpack.c.b16 %v3288, %v3287
      %v4113 = vpack.c.b16 %v3290, %v3289
      %v4114 = vpack.c.b16 %v3292, %v3291
      %v4115 = vpack.c.b16 %v3294, %v3293
      %v4116 = vpack.c.b16 %v3296, %v3295
      %v4117 = vpack.c.b16 %v3298, %v3297
      %v4118 = vpack.c.b16 %v3300, %v3299
      %v4119 = vpack.c.b16 %v3302, %v3301
      %v4120 = vpack.c.b16 %v3304, %v3303
      %v4121 = vpack.c.b16 %v3306, %v3305
      %v4122 = vpack.c.b16 %v3308, %v3307
      %v4123 = vpack.c.b16 %v3310, %v3309
      %v4124 = vpack.c.b16 %v3312, %v3311
      %v4125 = vpack.c.b16 %v3314, %v3313
      %v4126 = vpack.c.b16 %v3316, %v3315
      %v4127 = vpack.c.b16 %v3318, %v3317
      %v4128 = vpack.c.b16 %v3320, %v3319
      %v4129 = vpack.c.b16 %v3322, %v3321
      %v4130 = vpack.c.b16 %v3324, %v3323
      %v4131 = vpack.c.b16 %v3326, %v3325
      %v4132 = vpack.c.b16 %v3328, %v3327
      %v4133 = vpack.c.b16 %v3330, %v3329
      %v4134 = vpack.c.b16 %v3332, %v3331
      %v4135 = vpack.c.b16 %v3334, %v3333
      %v4136 = vpack.c.b16 %v3336, %v3335
      %v4137 = vpack.c.b16 %v3338, %v3337
      %v4138 = vpack.c.b16 %v3340, %v3339
      %v4139 = vpack.c.b16 %v3342, %v3341
      %v4140 = vpack.c.b16 %v3344, %v3343
      %v4141 = vpack.c.b16 %v3346, %v3345
      %v4142 = vpack.c.b16 %v3348, %v3347
      %v4143 = vpack.c.b16 %v3350, %v3349
      %v4144 = vpack.c.b16 %v3352, %v3351
      %v4145 = vpack.c.b16 %v3354, %v3353
      %v4146 = vpack.c.b16 %v3356, %v3355
      %v4147 = vpack.c.b16 %v3358, %v3357
      %v4148 = vpack.c.b16 %v3360, %v3359
      %v4149 = vpack.c.b16 %v3362, %v3361
      %v4150 = vpack.c.b16 %v3364, %v3363
      %v4151 = vpack.c.b16 %v3366, %v3365
      %v4152 = vpack.c.b16 %v3368, %v3367
      %v4153 = vpack.c.b16 %v3370, %v3369
      %v4154 = vpack.c.b16 %v3372, %v3371
      %v4155 = vpack.c.b16 %v3374, %v3373
      %v4156 = vpack.c.b16 %v3376, %v3375
      %v4157 = vpack.c.b16 %v3378, %v3377
      %v4158 = vpack.c.b16 %v3380, %v3379
      %v4159 = vpack.c.b16 %v3382, %v3381
      %v4160 = vpack.c.b16 %v3384, %v3383
      %v4161 = vpack.c.b16 %v3386, %v3385
      %v4162 = vpack.c.b16 %v3388, %v3387
      %v4163 = vpack.c.b16 %v3390, %v3389
      %v4164 = vpack.c.b16 %v3392, %v3391
      %v4165 = vpack.c.b16 %v3394, %v3393
      %v4166 = vpack.c.b16 %v3396, %v3395
      %v4167 = vpack.c.b16 %v3398, %v3397
      %v4168 = vpack.c.b16 %v3400, %v3399
      %v4169 = vpack.c.b16 %v3402, %v3401
      %v4170 = vpack.c.b16 %v3404, %v3403
      %v4171 = vpack.c.b16 %v3406, %v3405
      %v4172 = vpack.c.b16 %v3408, %v3407
      %v4173 = vpack.c.b16 %v3410, %v3409
      %v4174 = vpack.c.b16 %v3412, %v3411
      %v4175 = vpack.c.b16 %v3414, %v3413
      %v4176 = vpack.c.b16 %v3416, %v3415
      %v4177 = vpack.c.b16 %v3418, %v3417
      %v4178 = vpack.c.b16 %v3420, %v3419
      %v4179 = vpack.c.b16 %v3422, %v3421
      %v4180 = vpack.c.b16 %v3424, %v3423
      %v4181 = vpack.c.b16 %v3426, %v3425
      %v4182 = vpack.c.b16 %v3428, %v3427
      %v4183 = vpack.c.b16 %v3430, %v3429
      %v4184 = vpack.c.b16 %v3432, %v3431
      %v4185 = vpack.c.b16 %v3434, %v3433
      %v4186 = vpack.c.b16 %v3436, %v3435
      %v4187 = vpack.c.b16 %v3438, %v3437
      %v4188 = vpack.c.b16 %v3440, %v3439
      %v4189 = vpack.c.b16 %v3442, %v3441
      %v4190 = vpack.c.b16 %v3444, %v3443
      %v4191 = vpack.c.b16 %v3446, %v3445
      %v4192 = vpack.c.b16 %v3448, %v3447
      %v4193 = vpack.c.b16 %v3450, %v3449
      %v4194 = vpack.c.b16 %v3452, %v3451
      %v4195 = vpack.c.b16 %v3454, %v3453
      %v4196 = vpack.c.b16 %v3456, %v3455
      %v4197 = vpack.c.b16 %v3458, %v3457
      %v4198 = vpack.c.b16 %v3460, %v3459
      %v4199 = vpack.c.b16 %v3462, %v3461
      %v4200 = vpack.c.b16 %v3464, %v3463
      %v4201 = vpack.c.b16 %v3466, %v3465
      %v4202 = vpack.c.b16 %v3468, %v3467
      %v4203 = vpack.c.b16 %v3470, %v3469
      %v4204 = vpack.c.b16 %v3472, %v3471
      %v4205 = vpack.c.b16 %v3474, %v3473
      %v4206 = vpack.c.b16 %v3476, %v3475
      %v4207 = vpack.c.b16 %v3478, %v3477
      %v4208 = vpack.c.b16 %v3480, %v3479
      %v4209 = vpack.c.b16 %v3482, %v3481
      %v4210 = vpack.c.b16 %v3484, %v3483
      %v4211 = vpack.c.b16 %v3486, %v3485
      %v4212 = vpack.c.b16 %v3488, %v3487
      %v4213 = vpack.c.b16 %v3490, %v3489
      %v4214 = vpack.c.b16 %v3492, %v3491
      %v4215 = vpack.c.b16 %v3494, %v3493
      %v4216 = vpack.c.b16 %v3496, %v3495
      %v4217 = vpack.c.b16 %v3498, %v3497
      %v4218 = vpack.c.b16 %v3500, %v3499
      %v4219 = vpack.c.b16 %v3502, %v3501
      %v4220 = vpack.c.b16 %v3504, %v3503
      %v4221 = vpack.c.b16 %v3506, %v3505
      %v4222 = vpack.c.b16 %v3508, %v3507
      %v4223 = vpack.c.b16 %v3510, %v3509
      %v4224 = vpack.c.b16 %v3512, %v3511
      %v4225 = vpack.c.b16 %v3514, %v3513
      %v4226 = vpack.c.b16 %v3516, %v3515
      %v4227 = vpack.c.b16 %v3518, %v3517
      %v4228 = vpack.c.b16 %v3520, %v3519
      %v4229 = vpack.c.b16 %v3522, %v3521
      %v4230 = vpack.c.b16 %v3524, %v3523
      %v4231 = vpack.c.b16 %v3526, %v3525
      %v4232 = vpack.c.b16 %v3528, %v3527
      %v4233 = vpack.c.b16 %v3530, %v3529
      %v4234 = vpack.c.b16 %v3532, %v3531
      %v4235 = vpack.c.b16 %v3534, %v3533
      %v4236 = vpack.c.b16 %v3536, %v3535
      %v4237 = vpack.c.b16 %v3538, %v3537
      %v4238 = vpack.c.b16 %v3540, %v3539
      %v4239 = vpack.c.b16 %v3542, %v3541
      %v4240 = vpack.c.b16 %v3544, %v3543
      %v4241 = vpack.c.b16 %v3546, %v3545
      %v4242 = vpack.c.b16 %v3548, %v3547
      %v4243 = vpack.c.b16 %v3550, %v3549
      %v4244 = vpack.c.b16 %v3552, %v3551
      %v4245 = vpack.c.b16 %v3554, %v3553
      %v4246 = vpack.c.b16 %v3556, %v3555
      %v4247 = vpack.c.b16 %v3558, %v3557
      %v4248 = vpack.c.b16 %v3560, %v3559
      %v4249 = vpack.c.b16 %v3562, %v3561
      %v4250 = vpack.c.b16 %v3564, %v3563
      %v4251 = vpack.c.b16 %v3566, %v3565
      %v4252 = vpack.c.b16 %v3568, %v3567
      %v4253 = vpack.c.b16 %v3570, %v3569
      %v4254 = vpack.c.b16 %v3572, %v3571
      %v4255 = vpack.c.b16 %v3574, %v3573
      %v4256 = vpack.c.b16 %v3576, %v3575
      %v4257 = vpack.c.b16 %v3578, %v3577
      %v4258 = vpack.c.b16 %v3580, %v3579
      %v4259 = vpack.c.b16 %v3582, %v3581
      %v4260 = vpack.c.b16 %v3584, %v3583
      %v4261 = vpack.c.b16 %v3586, %v3585
      %v4262 = vpack.c.b16 %v3588, %v3587
      %v4263 = vpack.c.b16 %v3590, %v3589
      %v4264 = vpack.c.b16 %v3592, %v3591
      %v4265 = vpack.c.b16 %v3594, %v3593
      %v4266 = vpack.c.b16 %v3596, %v3595
      %v4267 = vpack.c.b16 %v3598, %v3597
      %v4268 = vpack.c.b16 %v3600, %v3599
      %v4269 = vpack.c.b16 %v3602, %v3601
      %v4270 = vpack.c.b16 %v3604, %v3603
      %v4271 = vpack.c.b16 %v3606, %v3605
      %v4272 = vpack.c.b16 %v3608, %v3607
      %v4273 = vpack.c.b16 %v3610, %v3609
      %v4274 = vpack.c.b16 %v3612, %v3611
      %v4275 = vpack.c.b16 %v3614, %v3613
      %v4276 = vpack.c.b16 %v3616, %v3615
      %v4277 = vpack.c.b16 %v3618, %v3617
      %v4278 = vpack.c.b16 %v3620, %v3619
      %v4279 = vpack.c.b16 %v3622, %v3621
      %v4280 = vpack.c.b16 %v3624, %v3623
      %v4281 = vpack.c.b16 %v3626, %v3625
      %v4282 = vpack.c.b16 %v3628, %v3627
      %v4283 = vpack.c.b16 %v3630, %v3629
      %v4284 = vpack.c.b16 %v3632, %v3631
      %v4285 = vpack.c.b16 %v3634, %v3633
      %v4286 = vpack.c.b16 %v3636, %v3635
      %v4287 = vpack.c.b16 %v3638, %v3637
      %v4288 = vpack.c.b16 %v3640, %v3639
      %v4289 = vpack.c.b16 %v3642, %v3641
      %v4290 = vpack.c.b16 %v3644, %v3643
      %v4291 = vpack.c.b16 %v3646, %v3645
      %v4292 = vpack.c.b16 %v3648, %v3647
      %v4293 = vpack.c.b16 %v3650, %v3649
      %v4294 = vpack.c.b16 %v3652, %v3651
      %v4295 = vpack.c.b16 %v3654, %v3653
      %v4296 = vpack.c.b16 %v3656, %v3655
      %v4297 = vpack.c.b16 %v3658, %v3657
      %v4298 = vpack.c.b16 %v3660, %v3659
      %v4299 = vpack.c.b16 %v3662, %v3661
      %v4300 = vpack.c.b16 %v3664, %v3663
      %v4301 = vpack.c.b16 %v3666, %v3665
      %v4302 = vpack.c.b16 %v3668, %v3667
      %v4303 = vpack.c.b16 %v3670, %v3669
      %v4304 = vpack.c.b16 %v3672, %v3671
      %v4305 = vpack.c.b16 %v3674, %v3673
      %v4306 = vpack.c.b16 %v3676, %v3675
      %v4307 = vpack.c.b16 %v3678, %v3677
      %v4308 = vpack.c.b16 %v3680, %v3679
      %v4309 = vpack.c.b16 %v3682, %v3681
      %v4310 = vpack.c.b16 %v3684, %v3683
      %v4311 = vpack.c.b16 %v3686, %v3685
      %v4312 = vpack.c.b16 %v3688, %v3687
      %v4313 = vpack.c.b16 %v3690, %v3689
      %v4314 = vpack.c.b16 %v3692, %v3691
      %v4315 = vpack.c.b16 %v3694, %v3693
      %v4316 = vpack.c.b16 %v3696, %v3695
      %v4317 = vpack.c.b16 %v3698, %v3697
      %v4318 = vpack.c.b16 %v3700, %v3699
      %v4319 = vpack.c.b16 %v3702, %v3701
      %v4320 = vpack.c.b16 %v3704, %v3703
      %v4321 = vpack.c.b16 %v3706, %v3705
      %v4322 = vpack.c.b16 %v3708, %v3707
      %v4323 = vpack.c.b16 %v3710, %v3709
      %v4324 = vpack.c.b16 %v3712, %v3711
      %v4325 = vpack.c.b16 %v3714, %v3713
      %v4326 = vpack.c.b16 %v3716, %v3715
      %v4327 = vpack.c.b16 %v3718, %v3717
      %v4328 = vpack.c.b16 %v3720, %v3719
      %v4329 = vpack.c.b16 %v3722, %v3721
      %v4330 = vpack.c.b16 %v3724, %v3723
      %v4331 = vpack.c.b16 %v3726, %v3725
      %v4332 = vpack.c.b16 %v3728, %v3727
      %v4333 = vpack.c.b16 %v3730, %v3729
      %v4334 = vpack.c.b16 %v3732, %v3731
      %v4335 = vpack.c.b16 %v3734, %v3733
      %v4336 = vpack.c.b16 %v3736, %v3735
      %v4337 = vpack.c.b16 %v3738, %v3737
      %v4338 = vpack.c.b16 %v3740, %v3739
      %v4339 = vpack.c.b16 %v3742, %v3741
      %v4340 = vpack.c.b16 %v3744, %v3743
      %v4341 = vpack.c.b16 %v3746, %v3745
      %v4342 = vpack.c.b16 %v3748, %v3747
      %v4343 = vpack.c.b16 %v3750, %v3749
      %v4344 = vpack.c.b16 %v3752, %v3751
      %v4345 = vpack.c.b16 %v3754, %v3753
      %v4346 = vpack.c.b16 %v3756, %v3755
      %v4347 = vpack.c.b16 %v3758, %v3757
      %v4348 = vpack.c.b16 %v3760, %v3759
      %v4349 = vpack.c.b16 %v3762, %v3761
      %v4350 = vpack.c.b16 %v3764, %v3763
      %v4351 = vpack.c.b16 %v3766, %v3765
      %v4352 = vpack.c.b16 %v3768, %v3767
      %v4353 = vpack.c.b16 %v3770, %v3769
      %v4354 = vpack.c.b16 %v3772, %v3771
      %v4355 = vpack.c.b16 %v3774, %v3773
      %v4356 = vpack.c.b16 %v3776, %v3775
      %v4357 = vpack.c.b16 %v3778, %v3777
      %v4358 = vpack.c.b16 %v3780, %v3779
      %v4359 = vpack.c.b16 %v3782, %v3781
      %v4360 = vpack.c.b16 %v3784, %v3783
      %v4361 = vpack.c.b16 %v3786, %v3785
      %v4362 = vpack.c.b16 %v3788, %v3787
      %v4363 = vpack.c.b16 %v3790, %v3789
      %v4364 = vpack.c.b16 %v3792, %v3791
      %v4365 = vpack.c.b16 %v3794, %v3793
      %v4366 = vpack.c.b16 %v3796, %v3795
      %v4367 = vpack.c.b16 %v3798, %v3797
      %v4368 = vpack.c.b16 %v3800, %v3799
      %v4369 = vpack.c.b16 %v3802, %v3801
      %v4370 = vpack.c.b16 %v3804, %v3803
      %v4371 = vpack.c.b16 %v3806, %v3805
      %v4372 = vpack.c.b16 %v3808, %v3807
      %v4373 = vpack.c.b16 %v3810, %v3809
      %v4374 = vpack.c.b16 %v3812, %v3811
      %v4375 = vpack.c.b16 %v3814, %v3813
      %v4376 = vpack.c.b16 %v3816, %v3815
      %v4377 = vpack.c.b16 %v3818, %v3817
      %v4378 = vpack.c.b16 %v3820, %v3819
      %v4379 = vpack.c.b16 %v3822, %v3821
      %v4380 = vpack.c.b16 %v3824, %v3823
      %v4381 = vpack.c.b16 %v3826, %v3825
      %v4382 = vpack.c.b16 %v3828, %v3827
      %v4383 = vpack.c.b16 %v3830, %v3829
      %v4384 = vpack.c.b16 %v3832, %v3831
      %v4385 = vpack.c.b16 %v3834, %v3833
      %v4386 = vpack.c.b16 %v3836, %v3835
      %v4387 = vpack.c.b16 %v3838, %v3837
      %v4388 = vpack.c.b16 %v3840, %v3839
      %v4389 = vpack.c.b16 %v3842, %v3841
      %v4390 = vpack.c.b16 %v3844, %v3843
      %v4391 = vpack.c.b16 %v3846, %v3845
      %v4392 = vpack.c.b16 %v3848, %v3847
      %v4393 = vpack.c.b16 %v3850, %v3849
      %v4394 = vpack.c.b16 %v3852, %v3851
      %v4395 = vpack.c.b16 %v3854, %v3853
      %v4396 = vpack.c.b16 %v3856, %v3855
      %v4397 = vpack.c.b16 %v3858, %v3857
      %v4398 = vpack.c.b16 %v3860, %v3859
      %v4399 = vpack.c.b16 %v3862, %v3861
      %v4400 = vpack.c.b16 %v3864, %v3863
      %v4401 = vpack.c.b16 %v3866, %v3865
      %v4402 = vpack.c.b16 %v3868, %v3867
      %v4403 = vpack.c.b16 %v3870, %v3869
      %v4404 = vpack.c.b16 %v3872, %v3871
      %v4405 = vpack.c.b16 %v3874, %v3873
      %v4406 = vpack.c.b16 %v3876, %v3875
      %v4407 = vpack.c.b16 %v3878, %v3877
      %v4408 = vpack.c.b16 %v3880, %v3879
      %v4409 = vpack.c.b16 %v3882, %v3881
      %v4410 = vpack.c.b16 %v3884, %v3883
      %v4411 = vpack.c.b16 %v3886, %v3885
      %v4412 = vpack.c.b16 %v3888, %v3887
      %v4413 = vpack.c.b16 %v3890, %v3889
      %v4414 = vpack.c.b16 %v3892, %v3891
      %v4415 = vpack.c.b16 %v3894, %v3893
      %v4416 = vpack.c.b16 %v3896, %v3895
      %v4417 = vpack.c.b16 %v3898, %v3897
      %v4418 = vpack.c.b16 %v3900, %v3899
      %v4419 = vpack.c.b16 %v3902, %v3901
      %v4420 = vpack.c.b16 %v3904, %v3903
      %v4421 = vpack.c.b16 %v3906, %v3905
      %v4422 = vpack.c.b16 %v3908, %v3907
      %v4423 = vpack.c.b16 %v3910, %v3909
      %v4424 = vpack.c.b16 %v3912, %v3911
      %v4425 = vpack.c.b16 %v3914, %v3913
      %v4426 = vpack.c.b16 %v3916, %v3915
      %v4427 = vpack.c.b16 %v3918, %v3917
      %v4428 = vpack.c.b16 %v3920, %v3919
      %v4429 = vpack.c.b16 %v3922, %v3921
      %v4430 = vpack.c.b16 %v3924, %v3923
      %v4431 = vpack.c.b16 %v3926, %v3925
      %v4432 = vpack.c.b16 %v3928, %v3927
      %v4433 = vpack.c.b16 %v3930, %v3929
      %v4434 = vpack.c.b16 %v3932, %v3931
      %v4435 = vpack.c.b16 %v3934, %v3933
      %v4436 = vpack.c.b16 %v3936, %v3935
      %vm4937 = vcmask 523264
      %v4939 = vsel %vm4937, %v1749, 0
      %v4942 = vsel %vm4937, %v1812, 0
      %4944 = vmatprep.subr.bf16.mxu0 0
      %4945 = vmatpush1.bf16.msra.mxu0 %v3937
      %4946 = vmatprep.subr.bf16.mxu0 0
      %4947 = vmatpush1.bf16.msra.mxu0 %v3938
      %4948 = vmatprep.subr.bf16.mxu0 0
      %4949 = vmatpush1.bf16.msra.mxu0 %v3939
      %4950 = vmatprep.subr.bf16.mxu0 0
      %4951 = vmatpush1.bf16.msra.mxu0 %v3940
      %4952 = vmatprep.subr.bf16.mxu0 0
      %4953 = vmatpush1.bf16.msra.mxu0 %v3941
      %4954 = vmatprep.subr.bf16.mxu0 0
      %4955 = vmatpush1.bf16.msra.mxu0 %v3942
      %4956 = vmatprep.subr.bf16.mxu0 0
      %4957 = vmatpush1.bf16.msra.mxu0 %v3943
      %4958 = vmatprep.subr.bf16.mxu0 0
      %4959 = vmatpush1.bf16.msra.mxu0 %v3944
      %4960 = vmatprep.subr.bf16.mxu0 0
      %4961 = vmatpush1.bf16.msra.mxu0 %v3945
      %4962 = vmatprep.subr.bf16.mxu0 0
      %4963 = vmatpush1.bf16.msra.mxu0 %v3946
      %4964 = vmatprep.subr.bf16.mxu0 0
      %4965 = vmatpush1.bf16.msra.mxu0 %v3947
      %4966 = vmatprep.subr.bf16.mxu0 0
      %4967 = vmatpush1.bf16.msra.mxu0 %v3948
      %4968 = vmatprep.subr.bf16.mxu0 0
      %4969 = vmatpush1.bf16.msra.mxu0 %v3949
      %4970 = vmatprep.subr.bf16.mxu0 0
      %4971 = vmatpush1.bf16.msra.mxu0 %v3950
      %4972 = vmatprep.subr.bf16.mxu0 0
      %4973 = vmatpush1.bf16.msra.mxu0 %v3951
      %4974 = vmatprep.subr.bf16.mxu0 0
      %4975 = vmatpush1.bf16.msra.mxu0 %v3952
      %4976 = vmatprep.mubr.bf16.mxu0 %v1688
      %4977 = vmatmul.mubr.bf16.gmra.mrb[0].mxu0 %v1687
      %v4978 = vpop.f32.mrb[0].mxu0
      %v4979 = vadd.f32 %v1305, %v4978
      %v4980 = vpop.f32.mrb[0].mxu0
      %v4981 = vpop.f32.mrb[0].mxu0
      %v4982 = vadd.f32 %v1305, %v4981
      %v4983 = vpop.f32.mrb[0].mxu0
      %4984 = vmatprep.mubr.bf16.mxu0 %v1751
      %4985 = vmatmul.mubr.bf16.gmra.mrb[0].mxu0 %v1750
      %v4986 = vpop.f32.mrb[0].mxu0
      %v4987 = vadd.f32 %v1305, %v4986
      %v4988 = vpop.f32.mrb[0].mxu0
      %v4989 = vpop.f32.mrb[0].mxu0
      %v4990 = vadd.f32 %v1305, %v4989
      %v4991 = vpop.f32.mrb[0].mxu0
      %4992 = vdwg.mxu0
      %4993 = vmatprep.subr.bf16.mxu0 0
      %4994 = vmatpush1.bf16.msra.mxu0 %v3953
      %4995 = vmatprep.subr.bf16.mxu0 0
      %4996 = vmatpush1.bf16.msra.mxu0 %v3954
      %4997 = vmatprep.subr.bf16.mxu0 0
      %4998 = vmatpush1.bf16.msra.mxu0 %v3955
      %4999 = vmatprep.subr.bf16.mxu0 0
      %5000 = vmatpush1.bf16.msra.mxu0 %v3956
      %5001 = vmatprep.subr.bf16.mxu0 0
      %5002 = vmatpush1.bf16.msra.mxu0 %v3957
      %5003 = vmatprep.subr.bf16.mxu0 0
      %5004 = vmatpush1.bf16.msra.mxu0 %v3958
      %5005 = vmatprep.subr.bf16.mxu0 0
      %5006 = vmatpush1.bf16.msra.mxu0 %v3959
      %5007 = vmatprep.subr.bf16.mxu0 0
      %5008 = vmatpush1.bf16.msra.mxu0 %v3960
      %5009 = vmatprep.subr.bf16.mxu0 0
      %5010 = vmatpush1.bf16.msra.mxu0 %v3961
      %5011 = vmatprep.subr.bf16.mxu0 0
      %5012 = vmatpush1.bf16.msra.mxu0 %v3962
      %5013 = vmatprep.subr.bf16.mxu0 0
      %5014 = vmatpush1.bf16.msra.mxu0 %v3963
      %5015 = vmatprep.subr.bf16.mxu0 0
      %5016 = vmatpush1.bf16.msra.mxu0 %v3964
      %5017 = vmatprep.subr.bf16.mxu0 0
      %5018 = vmatpush1.bf16.msra.mxu0 %v3965
      %5019 = vmatprep.subr.bf16.mxu0 0
      %5020 = vmatpush1.bf16.msra.mxu0 %v3966
      %5021 = vmatprep.subr.bf16.mxu0 0
      %5022 = vmatpush1.bf16.msra.mxu0 %v3967
      %5023 = vmatprep.subr.bf16.mxu0 0
      %5024 = vmatpush1.bf16.msra.mxu0 %v3968
      %5025 = vmatprep.mubr.bf16.mxu0 %v1690
      %5026 = vmatmul.mubr.bf16.gmra.mrb[0].mxu0 %v1689
      %v5027 = vpop.f32.mrb[0].mxu0
      %v5028 = vadd.f32 %v4979, %v5027
      %v5029 = vpop.f32.mrb[0].mxu0
      %v5030 = vpop.f32.mrb[0].mxu0
      %v5031 = vadd.f32 %v4982, %v5030
      %v5032 = vpop.f32.mrb[0].mxu0
      %5033 = vmatprep.mubr.bf16.mxu0 %v1753
      %5034 = vmatmul.mubr.bf16.gmra.mrb[0].mxu0 %v1752
      %v5035 = vpop.f32.mrb[0].mxu0
      %v5036 = vadd.f32 %v4987, %v5035
      %v5037 = vpop.f32.mrb[0].mxu0
      %v5038 = vpop.f32.mrb[0].mxu0
      %v5039 = vadd.f32 %v4990, %v5038
      %v5040 = vpop.f32.mrb[0].mxu0
      %5041 = vdwg.mxu0
      %5042 = vmatprep.subr.bf16.mxu0 0
      %5043 = vmatpush1.bf16.msra.mxu0 %v3969
      %5044 = vmatprep.subr.bf16.mxu0 0
      %5045 = vmatpush1.bf16.msra.mxu0 %v3970
      %5046 = vmatprep.subr.bf16.mxu0 0
      %5047 = vmatpush1.bf16.msra.mxu0 %v3971
      %5048 = vmatprep.subr.bf16.mxu0 0
      %5049 = vmatpush1.bf16.msra.mxu0 %v3972
      %5050 = vmatprep.subr.bf16.mxu0 0
      %5051 = vmatpush1.bf16.msra.mxu0 %v3973
      %5052 = vmatprep.subr.bf16.mxu0 0
      %5053 = vmatpush1.bf16.msra.mxu0 %v3974
      %5054 = vmatprep.subr.bf16.mxu0 0
      %5055 = vmatpush1.bf16.msra.mxu0 %v3975
      %5056 = vmatprep.subr.bf16.mxu0 0
      %5057 = vmatpush1.bf16.msra.mxu0 %v3976
      %5058 = vmatprep.subr.bf16.mxu0 0
      %5059 = vmatpush1.bf16.msra.mxu0 %v3977
      %5060 = vmatprep.subr.bf16.mxu0 0
      %5061 = vmatpush1.bf16.msra.mxu0 %v3978
      %5062 = vmatprep.subr.bf16.mxu0 0
      %5063 = vmatpush1.bf16.msra.mxu0 %v3979
      %5064 = vmatprep.subr.bf16.mxu0 0
      %5065 = vmatpush1.bf16.msra.mxu0 %v3980
      %5066 = vmatprep.subr.bf16.mxu0 0
      %5067 = vmatpush1.bf16.msra.mxu0 %v3981
      %5068 = vmatprep.subr.bf16.mxu0 0
      %5069 = vmatpush1.bf16.msra.mxu0 %v3982
      %5070 = vmatprep.subr.bf16.mxu0 0
      %5071 = vmatpush1.bf16.msra.mxu0 %v3983
      %5072 = vmatprep.subr.bf16.mxu0 0
      %5073 = vmatpush1.bf16.msra.mxu0 %v3984
      %5074 = vmatprep.mubr.bf16.mxu0 %v1692
      %5075 = vmatmul.mubr.bf16.gmra.mrb[0].mxu0 %v1691
      %v5076 = vpop.f32.mrb[0].mxu0
      %v5077 = vadd.f32 %v5028, %v5076
      %v5078 = vpop.f32.mrb[0].mxu0
      %v5079 = vpop.f32.mrb[0].mxu0
      %v5080 = vadd.f32 %v5031, %v5079
      %v5081 = vpop.f32.mrb[0].mxu0
      %5082 = vmatprep.mubr.bf16.mxu0 %v1755
      %5083 = vmatmul.mubr.bf16.gmra.mrb[0].mxu0 %v1754
      %v5084 = vpop.f32.mrb[0].mxu0
      %v5085 = vadd.f32 %v5036, %v5084
      %v5086 = vpop.f32.mrb[0].mxu0
      %v5087 = vpop.f32.mrb[0].mxu0
      %v5088 = vadd.f32 %v5039, %v5087
      %v5089 = vpop.f32.mrb[0].mxu0
      %5090 = vdwg.mxu0
      %5091 = vmatprep.subr.bf16.mxu0 0
      %5092 = vmatpush1.bf16.msra.mxu0 %v3985
      %5093 = vmatprep.subr.bf16.mxu0 0
      %5094 = vmatpush1.bf16.msra.mxu0 %v3986
      %5095 = vmatprep.subr.bf16.mxu0 0
      %5096 = vmatpush1.bf16.msra.mxu0 %v3987
      %5097 = vmatprep.subr.bf16.mxu0 0
      %5098 = vmatpush1.bf16.msra.mxu0 %v3988
      %5099 = vmatprep.subr.bf16.mxu0 0
      %5100 = vmatpush1.bf16.msra.mxu0 %v3989
      %5101 = vmatprep.subr.bf16.mxu0 0
      %5102 = vmatpush1.bf16.msra.mxu0 %v3990
      %5103 = vmatprep.subr.bf16.mxu0 0
      %5104 = vmatpush1.bf16.msra.mxu0 %v3991
      %5105 = vmatprep.subr.bf16.mxu0 0
      %5106 = vmatpush1.bf16.msra.mxu0 %v3992
      %5107 = vmatprep.subr.bf16.mxu0 0
      %5108 = vmatpush1.bf16.msra.mxu0 %v3993
      %5109 = vmatprep.subr.bf16.mxu0 0
      %5110 = vmatpush1.bf16.msra.mxu0 %v3994
      %5111 = vmatprep.subr.bf16.mxu0 0
      %5112 = vmatpush1.bf16.msra.mxu0 %v3995
      %5113 = vmatprep.subr.bf16.mxu0 0
      %5114 = vmatpush1.bf16.msra.mxu0 %v3996
      %5115 = vmatprep.subr.bf16.mxu0 0
      %5116 = vmatpush1.bf16.msra.mxu0 %v3997
      %5117 = vmatprep.subr.bf16.mxu0 0
      %5118 = vmatpush1.bf16.msra.mxu0 %v3998
      %5119 = vmatprep.subr.bf16.mxu0 0
      %5120 = vmatpush1.bf16.msra.mxu0 %v3999
      %5121 = vmatprep.subr.bf16.mxu0 0
      %5122 = vmatpush1.bf16.msra.mxu0 %v4000
      %5123 = vmatprep.mubr.bf16.mxu0 %v1694
      %5124 = vmatmul.mubr.bf16.gmra.mrb[0].mxu0 %v1693
      %v5125 = vpop.f32.mrb[0].mxu0
      %v5126 = vadd.f32 %v5077, %v5125
      %v5127 = vpop.f32.mrb[0].mxu0
      %v5128 = vpop.f32.mrb[0].mxu0
      %v5129 = vadd.f32 %v5080, %v5128
      %v5130 = vpop.f32.mrb[0].mxu0
      %5131 = vmatprep.mubr.bf16.mxu0 %v1757
      %5132 = vmatmul.mubr.bf16.gmra.mrb[0].mxu0 %v1756
      %v5133 = vpop.f32.mrb[0].mxu0
      %v5134 = vadd.f32 %v5085, %v5133
      %v5135 = vpop.f32.mrb[0].mxu0
      %v5136 = vpop.f32.mrb[0].mxu0
      %v5137 = vadd.f32 %v5088, %v5136
      %v5138 = vpop.f32.mrb[0].mxu0
      %5139 = vdwg.mxu0
      %5140 = vmatprep.subr.bf16.mxu0 0
      %5141 = vmatpush1.bf16.msra.mxu0 %v4001
      %5142 = vmatprep.subr.bf16.mxu0 0
      %5143 = vmatpush1.bf16.msra.mxu0 %v4002
      %5144 = vmatprep.subr.bf16.mxu0 0
      %5145 = vmatpush1.bf16.msra.mxu0 %v4003
      %5146 = vmatprep.subr.bf16.mxu0 0
      %5147 = vmatpush1.bf16.msra.mxu0 %v4004
      %5148 = vmatprep.subr.bf16.mxu0 0
      %5149 = vmatpush1.bf16.msra.mxu0 %v4005
      %5150 = vmatprep.subr.bf16.mxu0 0
      %5151 = vmatpush1.bf16.msra.mxu0 %v4006
      %5152 = vmatprep.subr.bf16.mxu0 0
      %5153 = vmatpush1.bf16.msra.mxu0 %v4007
      %5154 = vmatprep.subr.bf16.mxu0 0
      %5155 = vmatpush1.bf16.msra.mxu0 %v4008
      %5156 = vmatprep.subr.bf16.mxu0 0
      %5157 = vmatpush1.bf16.msra.mxu0 %v4009
      %5158 = vmatprep.subr.bf16.mxu0 0
      %5159 = vmatpush1.bf16.msra.mxu0 %v4010
      %5160 = vmatprep.subr.bf16.mxu0 0
      %5161 = vmatpush1.bf16.msra.mxu0 %v4011
      %5162 = vmatprep.subr.bf16.mxu0 0
      %5163 = vmatpush1.bf16.msra.mxu0 %v4012
      %5164 = vmatprep.subr.bf16.mxu0 0
      %5165 = vmatpush1.bf16.msra.mxu0 %v4013
      %5166 = vmatprep.subr.bf16.mxu0 0
      %5167 = vmatpush1.bf16.msra.mxu0 %v4014
      %5168 = vmatprep.subr.bf16.mxu0 0
      %5169 = vmatpush1.bf16.msra.mxu0 %v4015
      %5170 = vmatprep.subr.bf16.mxu0 0
      %5171 = vmatpush1.bf16.msra.mxu0 %v4016
      %5172 = vmatprep.mubr.bf16.mxu0 %v1696
      %5173 = vmatmul.mubr.bf16.gmra.mrb[0].mxu0 %v1695
      %v5174 = vpop.f32.mrb[0].mxu0
      %v5175 = vadd.f32 %v5126, %v5174
      %v5176 = vpop.f32.mrb[0].mxu0
      %v5177 = vpop.f32.mrb[0].mxu0
      %v5178 = vadd.f32 %v5129, %v5177
      %v5179 = vpop.f32.mrb[0].mxu0
      %5180 = vmatprep.mubr.bf16.mxu0 %v1759
      %5181 = vmatmul.mubr.bf16.gmra.mrb[0].mxu0 %v1758
      %v5182 = vpop.f32.mrb[0].mxu0
      %v5183 = vadd.f32 %v5134, %v5182
      %v5184 = vpop.f32.mrb[0].mxu0
      %v5185 = vpop.f32.mrb[0].mxu0
      %v5186 = vadd.f32 %v5137, %v5185
      %v5187 = vpop.f32.mrb[0].mxu0
      %5188 = vdwg.mxu0
      %5189 = vmatprep.subr.bf16.mxu0 0
      %5190 = vmatpush1.bf16.msra.mxu0 %v4017
      %5191 = vmatprep.subr.bf16.mxu0 0
      %5192 = vmatpush1.bf16.msra.mxu0 %v4018
      %5193 = vmatprep.subr.bf16.mxu0 0
      %5194 = vmatpush1.bf16.msra.mxu0 %v4019
      %5195 = vmatprep.subr.bf16.mxu0 0
      %5196 = vmatpush1.bf16.msra.mxu0 %v4020
      %5197 = vmatprep.subr.bf16.mxu0 0
      %5198 = vmatpush1.bf16.msra.mxu0 %v4021
      %5199 = vmatprep.subr.bf16.mxu0 0
      %5200 = vmatpush1.bf16.msra.mxu0 %v4022
      %5201 = vmatprep.subr.bf16.mxu0 0
      %5202 = vmatpush1.bf16.msra.mxu0 %v4023
      %5203 = vmatprep.subr.bf16.mxu0 0
      %5204 = vmatpush1.bf16.msra.mxu0 %v4024
      %5205 = vmatprep.subr.bf16.mxu0 0
      %5206 = vmatpush1.bf16.msra.mxu0 %v4025
      %5207 = vmatprep.subr.bf16.mxu0 0
      %5208 = vmatpush1.bf16.msra.mxu0 %v4026
      %5209 = vmatprep.subr.bf16.mxu0 0
      %5210 = vmatpush1.bf16.msra.mxu0 %v4027
      %5211 = vmatprep.subr.bf16.mxu0 0
      %5212 = vmatpush1.bf16.msra.mxu0 %v4028
      %5213 = vmatprep.subr.bf16.mxu0 0
      %5214 = vmatpush1.bf16.msra.mxu0 %v4029
      %5215 = vmatprep.subr.bf16.mxu0 0
      %5216 = vmatpush1.bf16.msra.mxu0 %v4030
      %5217 = vmatprep.subr.bf16.mxu0 0
      %5218 = vmatpush1.bf16.msra.mxu0 %v4031
      %5219 = vmatprep.subr.bf16.mxu0 0
      %5220 = vmatpush1.bf16.msra.mxu0 %v4032
      %5221 = vmatprep.mubr.bf16.mxu0 %v1698
      %5222 = vmatmul.mubr.bf16.gmra.mrb[0].mxu0 %v1697
      %v5223 = vpop.f32.mrb[0].mxu0
      %v5224 = vadd.f32 %v5175, %v5223
      %v5225 = vpop.f32.mrb[0].mxu0
      %v5226 = vpop.f32.mrb[0].mxu0
      %v5227 = vadd.f32 %v5178, %v5226
      %v5228 = vpop.f32.mrb[0].mxu0
      %5229 = vmatprep.mubr.bf16.mxu0 %v1761
      %5230 = vmatmul.mubr.bf16.gmra.mrb[0].mxu0 %v1760
      %v5231 = vpop.f32.mrb[0].mxu0
      %v5232 = vadd.f32 %v5183, %v5231
      %v5233 = vpop.f32.mrb[0].mxu0
      %v5234 = vpop.f32.mrb[0].mxu0
      %v5235 = vadd.f32 %v5186, %v5234
      %v5236 = vpop.f32.mrb[0].mxu0
      %5237 = vdwg.mxu0
      %5238 = vmatprep.subr.bf16.mxu0 0
      %5239 = vmatpush1.bf16.msra.mxu0 %v4033
      %5240 = vmatprep.subr.bf16.mxu0 0
      %5241 = vmatpush1.bf16.msra.mxu0 %v4034
      %5242 = vmatprep.subr.bf16.mxu0 0
      %5243 = vmatpush1.bf16.msra.mxu0 %v4035
      %5244 = vmatprep.subr.bf16.mxu0 0
      %5245 = vmatpush1.bf16.msra.mxu0 %v4036
      %5246 = vmatprep.subr.bf16.mxu0 0
      %5247 = vmatpush1.bf16.msra.mxu0 %v4037
      %5248 = vmatprep.subr.bf16.mxu0 0
      %5249 = vmatpush1.bf16.msra.mxu0 %v4038
      %5250 = vmatprep.subr.bf16.mxu0 0
      %5251 = vmatpush1.bf16.msra.mxu0 %v4039
      %5252 = vmatprep.subr.bf16.mxu0 0
      %5253 = vmatpush1.bf16.msra.mxu0 %v4040
      %5254 = vmatprep.subr.bf16.mxu0 0
      %5255 = vmatpush1.bf16.msra.mxu0 %v4041
      %5256 = vmatprep.subr.bf16.mxu0 0
      %5257 = vmatpush1.bf16.msra.mxu0 %v4042
      %5258 = vmatprep.subr.bf16.mxu0 0
      %5259 = vmatpush1.bf16.msra.mxu0 %v4043
      %5260 = vmatprep.subr.bf16.mxu0 0
      %5261 = vmatpush1.bf16.msra.mxu0 %v4044
      %5262 = vmatprep.subr.bf16.mxu0 0
      %5263 = vmatpush1.bf16.msra.mxu0 %v4045
      %5264 = vmatprep.subr.bf16.mxu0 0
      %5265 = vmatpush1.bf16.msra.mxu0 %v4046
      %5266 = vmatprep.subr.bf16.mxu0 0
      %5267 = vmatpush1.bf16.msra.mxu0 %v4047
      %5268 = vmatprep.subr.bf16.mxu0 0
      %5269 = vmatpush1.bf16.msra.mxu0 %v4048
      %5270 = vmatprep.mubr.bf16.mxu0 %v1700
      %5271 = vmatmul.mubr.bf16.gmra.mrb[0].mxu0 %v1699
      %v5272 = vpop.f32.mrb[0].mxu0
      %v5273 = vadd.f32 %v5224, %v5272
      %v5274 = vpop.f32.mrb[0].mxu0
      %v5275 = vpop.f32.mrb[0].mxu0
      %v5276 = vadd.f32 %v5227, %v5275
      %v5277 = vpop.f32.mrb[0].mxu0
      %5278 = vmatprep.mubr.bf16.mxu0 %v1763
      %5279 = vmatmul.mubr.bf16.gmra.mrb[0].mxu0 %v1762
      %v5280 = vpop.f32.mrb[0].mxu0
      %v5281 = vadd.f32 %v5232, %v5280
      %v5282 = vpop.f32.mrb[0].mxu0
      %v5283 = vpop.f32.mrb[0].mxu0
      %v5284 = vadd.f32 %v5235, %v5283
      %v5285 = vpop.f32.mrb[0].mxu0
      %5286 = vdwg.mxu0
      %5287 = vmatprep.subr.bf16.mxu0 0
      %5288 = vmatpush1.bf16.msra.mxu0 %v4049
      %5289 = vmatprep.subr.bf16.mxu0 0
      %5290 = vmatpush1.bf16.msra.mxu0 %v4050
      %5291 = vmatprep.subr.bf16.mxu0 0
      %5292 = vmatpush1.bf16.msra.mxu0 %v4051
      %5293 = vmatprep.subr.bf16.mxu0 0
      %5294 = vmatpush1.bf16.msra.mxu0 %v4052
      %5295 = vmatprep.subr.bf16.mxu0 0
      %5296 = vmatpush1.bf16.msra.mxu0 %v4053
      %5297 = vmatprep.subr.bf16.mxu0 0
      %5298 = vmatpush1.bf16.msra.mxu0 %v4054
      %5299 = vmatprep.subr.bf16.mxu0 0
      %5300 = vmatpush1.bf16.msra.mxu0 %v4055
      %5301 = vmatprep.subr.bf16.mxu0 0
      %5302 = vmatpush1.bf16.msra.mxu0 %v4056
      %5303 = vmatprep.subr.bf16.mxu0 0
      %5304 = vmatpush1.bf16.msra.mxu0 %v4057
      %5305 = vmatprep.subr.bf16.mxu0 0
      %5306 = vmatpush1.bf16.msra.mxu0 %v4058
      %5307 = vmatprep.subr.bf16.mxu0 0
      %5308 = vmatpush1.bf16.msra.mxu0 %v4059
      %5309 = vmatprep.subr.bf16.mxu0 0
      %5310 = vmatpush1.bf16.msra.mxu0 %v4060
      %5311 = vmatprep.subr.bf16.mxu0 0
      %5312 = vmatpush1.bf16.msra.mxu0 %v4061
      %5313 = vmatprep.subr.bf16.mxu0 0
      %5314 = vmatpush1.bf16.msra.mxu0 %v4062
      %5315 = vmatprep.subr.bf16.mxu0 0
      %5316 = vmatpush1.bf16.msra.mxu0 %v4063
      %5317 = vmatprep.subr.bf16.mxu0 0
      %5318 = vmatpush1.bf16.msra.mxu0 %v4064
      %5319 = vmatprep.mubr.bf16.mxu0 %v1702
      %5320 = vmatmul.mubr.bf16.gmra.mrb[0].mxu0 %v1701
      %v5321 = vpop.f32.mrb[0].mxu0
      %v5322 = vadd.f32 %v5273, %v5321
      %v5323 = vpop.f32.mrb[0].mxu0
      %v5324 = vpop.f32.mrb[0].mxu0
      %v5325 = vadd.f32 %v5276, %v5324
      %v5326 = vpop.f32.mrb[0].mxu0
      %5327 = vmatprep.mubr.bf16.mxu0 %v1765
      %5328 = vmatmul.mubr.bf16.gmra.mrb[0].mxu0 %v1764
      %v5329 = vpop.f32.mrb[0].mxu0
      %v5330 = vadd.f32 %v5281, %v5329
      %v5331 = vpop.f32.mrb[0].mxu0
      %v5332 = vpop.f32.mrb[0].mxu0
      %v5333 = vadd.f32 %v5284, %v5332
      %v5334 = vpop.f32.mrb[0].mxu0
      %5335 = vdwg.mxu0
      %5336 = vmatprep.subr.bf16.mxu0 0
      %5337 = vmatpush1.bf16.msra.mxu0 %v4065
      %5338 = vmatprep.subr.bf16.mxu0 0
      %5339 = vmatpush1.bf16.msra.mxu0 %v4066
      %5340 = vmatprep.subr.bf16.mxu0 0
      %5341 = vmatpush1.bf16.msra.mxu0 %v4067
      %5342 = vmatprep.subr.bf16.mxu0 0
      %5343 = vmatpush1.bf16.msra.mxu0 %v4068
      %5344 = vmatprep.subr.bf16.mxu0 0
      %5345 = vmatpush1.bf16.msra.mxu0 %v4069
      %5346 = vmatprep.subr.bf16.mxu0 0
      %5347 = vmatpush1.bf16.msra.mxu0 %v4070
      %5348 = vmatprep.subr.bf16.mxu0 0
      %5349 = vmatpush1.bf16.msra.mxu0 %v4071
      %5350 = vmatprep.subr.bf16.mxu0 0
      %5351 = vmatpush1.bf16.msra.mxu0 %v4072
      %5352 = vmatprep.subr.bf16.mxu0 0
      %5353 = vmatpush1.bf16.msra.mxu0 %v4073
      %5354 = vmatprep.subr.bf16.mxu0 0
      %5355 = vmatpush1.bf16.msra.mxu0 %v4074
      %5356 = vmatprep.subr.bf16.mxu0 0
      %5357 = vmatpush1.bf16.msra.mxu0 %v4075
      %5358 = vmatprep.subr.bf16.mxu0 0
      %5359 = vmatpush1.bf16.msra.mxu0 %v4076
      %5360 = vmatprep.subr.bf16.mxu0 0
      %5361 = vmatpush1.bf16.msra.mxu0 %v4077
      %5362 = vmatprep.subr.bf16.mxu0 0
      %5363 = vmatpush1.bf16.msra.mxu0 %v4078
      %5364 = vmatprep.subr.bf16.mxu0 0
      %5365 = vmatpush1.bf16.msra.mxu0 %v4079
      %5366 = vmatprep.subr.bf16.mxu0 0
      %5367 = vmatpush1.bf16.msra.mxu0 %v4080
      %5368 = vmatprep.mubr.bf16.mxu0 %v1704
      %5369 = vmatmul.mubr.bf16.gmra.mrb[0].mxu0 %v1703
      %v5370 = vpop.f32.mrb[0].mxu0
      %v5371 = vadd.f32 %v5322, %v5370
      %v5372 = vpop.f32.mrb[0].mxu0
      %v5373 = vpop.f32.mrb[0].mxu0
      %v5374 = vadd.f32 %v5325, %v5373
      %v5375 = vpop.f32.mrb[0].mxu0
      %5376 = vmatprep.mubr.bf16.mxu0 %v1767
      %5377 = vmatmul.mubr.bf16.gmra.mrb[0].mxu0 %v1766
      %v5378 = vpop.f32.mrb[0].mxu0
      %v5379 = vadd.f32 %v5330, %v5378
      %v5380 = vpop.f32.mrb[0].mxu0
      %v5381 = vpop.f32.mrb[0].mxu0
      %v5382 = vadd.f32 %v5333, %v5381
      %v5383 = vpop.f32.mrb[0].mxu0
      %5384 = vdwg.mxu0
      %5385 = vmatprep.subr.bf16.mxu0 0
      %5386 = vmatpush1.bf16.msra.mxu0 %v4081
      %5387 = vmatprep.subr.bf16.mxu0 0
      %5388 = vmatpush1.bf16.msra.mxu0 %v4082
      %5389 = vmatprep.subr.bf16.mxu0 0
      %5390 = vmatpush1.bf16.msra.mxu0 %v4083
      %5391 = vmatprep.subr.bf16.mxu0 0
      %5392 = vmatpush1.bf16.msra.mxu0 %v4084
      %5393 = vmatprep.subr.bf16.mxu0 0
      %5394 = vmatpush1.bf16.msra.mxu0 %v4085
      %5395 = vmatprep.subr.bf16.mxu0 0
      %5396 = vmatpush1.bf16.msra.mxu0 %v4086
      %5397 = vmatprep.subr.bf16.mxu0 0
      %5398 = vmatpush1.bf16.msra.mxu0 %v4087
      %5399 = vmatprep.subr.bf16.mxu0 0
      %5400 = vmatpush1.bf16.msra.mxu0 %v4088
      %5401 = vmatprep.subr.bf16.mxu0 0
      %5402 = vmatpush1.bf16.msra.mxu0 %v4089
      %5403 = vmatprep.subr.bf16.mxu0 0
      %5404 = vmatpush1.bf16.msra.mxu0 %v4090
      %5405 = vmatprep.subr.bf16.mxu0 0
      %5406 = vmatpush1.bf16.msra.mxu0 %v4091
      %5407 = vmatprep.subr.bf16.mxu0 0
      %5408 = vmatpush1.bf16.msra.mxu0 %v4092
      %5409 = vmatprep.subr.bf16.mxu0 0
      %5410 = vmatpush1.bf16.msra.mxu0 %v4093
      %5411 = vmatprep.subr.bf16.mxu0 0
      %5412 = vmatpush1.bf16.msra.mxu0 %v4094
      %5413 = vmatprep.subr.bf16.mxu0 0
      %5414 = vmatpush1.bf16.msra.mxu0 %v4095
      %5415 = vmatprep.subr.bf16.mxu0 0
      %5416 = vmatpush1.bf16.msra.mxu0 %v4096
      %5417 = vmatprep.mubr.bf16.mxu0 %v1706
      %5418 = vmatmul.mubr.bf16.gmra.mrb[0].mxu0 %v1705
      %v5419 = vpop.f32.mrb[0].mxu0
      %v5420 = vadd.f32 %v5371, %v5419
      %v5421 = vpop.f32.mrb[0].mxu0
      %v5422 = vpop.f32.mrb[0].mxu0
      %v5423 = vadd.f32 %v5374, %v5422
      %v5424 = vpop.f32.mrb[0].mxu0
      %5425 = vmatprep.mubr.bf16.mxu0 %v1769
      %5426 = vmatmul.mubr.bf16.gmra.mrb[0].mxu0 %v1768
      %v5427 = vpop.f32.mrb[0].mxu0
      %v5428 = vadd.f32 %v5379, %v5427
      %v5429 = vpop.f32.mrb[0].mxu0
      %v5430 = vpop.f32.mrb[0].mxu0
      %v5431 = vadd.f32 %v5382, %v5430
      %v5432 = vpop.f32.mrb[0].mxu0
      %5433 = vdwg.mxu0
      %5434 = vmatprep.subr.bf16.mxu0 0
      %5435 = vmatpush1.bf16.msra.mxu0 %v4097
      %5436 = vmatprep.subr.bf16.mxu0 0
      %5437 = vmatpush1.bf16.msra.mxu0 %v4098
      %5438 = vmatprep.subr.bf16.mxu0 0
      %5439 = vmatpush1.bf16.msra.mxu0 %v4099
      %5440 = vmatprep.subr.bf16.mxu0 0
      %5441 = vmatpush1.bf16.msra.mxu0 %v4100
      %5442 = vmatprep.subr.bf16.mxu0 0
      %5443 = vmatpush1.bf16.msra.mxu0 %v4101
      %5444 = vmatprep.subr.bf16.mxu0 0
      %5445 = vmatpush1.bf16.msra.mxu0 %v4102
      %5446 = vmatprep.subr.bf16.mxu0 0
      %5447 = vmatpush1.bf16.msra.mxu0 %v4103
      %5448 = vmatprep.subr.bf16.mxu0 0
      %5449 = vmatpush1.bf16.msra.mxu0 %v4104
      %5450 = vmatprep.subr.bf16.mxu0 0
      %5451 = vmatpush1.bf16.msra.mxu0 %v4105
      %5452 = vmatprep.subr.bf16.mxu0 0
      %5453 = vmatpush1.bf16.msra.mxu0 %v4106
      %5454 = vmatprep.subr.bf16.mxu0 0
      %5455 = vmatpush1.bf16.msra.mxu0 %v4107
      %5456 = vmatprep.subr.bf16.mxu0 0
      %5457 = vmatpush1.bf16.msra.mxu0 %v4108
      %5458 = vmatprep.subr.bf16.mxu0 0
      %5459 = vmatpush1.bf16.msra.mxu0 %v4109
      %5460 = vmatprep.subr.bf16.mxu0 0
      %5461 = vmatpush1.bf16.msra.mxu0 %v4110
      %5462 = vmatprep.subr.bf16.mxu0 0
      %5463 = vmatpush1.bf16.msra.mxu0 %v4111
      %5464 = vmatprep.subr.bf16.mxu0 0
      %5465 = vmatpush1.bf16.msra.mxu0 %v4112
      %5466 = vmatprep.mubr.bf16.mxu0 %v1708
      %5467 = vmatmul.mubr.bf16.gmra.mrb[0].mxu0 %v1707
      %v5468 = vpop.f32.mrb[0].mxu0
      %v5469 = vadd.f32 %v5420, %v5468
      %v5470 = vpop.f32.mrb[0].mxu0
      %v5471 = vpop.f32.mrb[0].mxu0
      %v5472 = vadd.f32 %v5423, %v5471
      %v5473 = vpop.f32.mrb[0].mxu0
      %5474 = vmatprep.mubr.bf16.mxu0 %v1771
      %5475 = vmatmul.mubr.bf16.gmra.mrb[0].mxu0 %v1770
      %v5476 = vpop.f32.mrb[0].mxu0
      %v5477 = vadd.f32 %v5428, %v5476
      %v5478 = vpop.f32.mrb[0].mxu0
      %v5479 = vpop.f32.mrb[0].mxu0
      %v5480 = vadd.f32 %v5431, %v5479
      %v5481 = vpop.f32.mrb[0].mxu0
      %5482 = vdwg.mxu0
      %5483 = vmatprep.subr.bf16.mxu0 0
      %5484 = vmatpush1.bf16.msra.mxu0 %v4113
      %5485 = vmatprep.subr.bf16.mxu0 0
      %5486 = vmatpush1.bf16.msra.mxu0 %v4114
      %5487 = vmatprep.subr.bf16.mxu0 0
      %5488 = vmatpush1.bf16.msra.mxu0 %v4115
      %5489 = vmatprep.subr.bf16.mxu0 0
      %5490 = vmatpush1.bf16.msra.mxu0 %v4116
      %5491 = vmatprep.subr.bf16.mxu0 0
      %5492 = vmatpush1.bf16.msra.mxu0 %v4117
      %5493 = vmatprep.subr.bf16.mxu0 0
      %5494 = vmatpush1.bf16.msra.mxu0 %v4118
      %5495 = vmatprep.subr.bf16.mxu0 0
      %5496 = vmatpush1.bf16.msra.mxu0 %v4119
      %5497 = vmatprep.subr.bf16.mxu0 0
      %5498 = vmatpush1.bf16.msra.mxu0 %v4120
      %5499 = vmatprep.subr.bf16.mxu0 0
      %5500 = vmatpush1.bf16.msra.mxu0 %v4121
      %5501 = vmatprep.subr.bf16.mxu0 0
      %5502 = vmatpush1.bf16.msra.mxu0 %v4122
      %5503 = vmatprep.subr.bf16.mxu0 0
      %5504 = vmatpush1.bf16.msra.mxu0 %v4123
      %5505 = vmatprep.subr.bf16.mxu0 0
      %5506 = vmatpush1.bf16.msra.mxu0 %v4124
      %5507 = vmatprep.subr.bf16.mxu0 0
      %5508 = vmatpush1.bf16.msra.mxu0 %v4125
      %5509 = vmatprep.subr.bf16.mxu0 0
      %5510 = vmatpush1.bf16.msra.mxu0 %v4126
      %5511 = vmatprep.subr.bf16.mxu0 0
      %5512 = vmatpush1.bf16.msra.mxu0 %v4127
      %5513 = vmatprep.subr.bf16.mxu0 0
      %5514 = vmatpush1.bf16.msra.mxu0 %v4128
      %5515 = vmatprep.mubr.bf16.mxu0 %v1710
      %5516 = vmatmul.mubr.bf16.gmra.mrb[0].mxu0 %v1709
      %v5517 = vpop.f32.mrb[0].mxu0
      %v5518 = vadd.f32 %v5469, %v5517
      %v5519 = vpop.f32.mrb[0].mxu0
      %v5520 = vpop.f32.mrb[0].mxu0
      %v5521 = vadd.f32 %v5472, %v5520
      %v5522 = vpop.f32.mrb[0].mxu0
      %5523 = vmatprep.mubr.bf16.mxu0 %v1773
      %5524 = vmatmul.mubr.bf16.gmra.mrb[0].mxu0 %v1772
      %v5525 = vpop.f32.mrb[0].mxu0
      %v5526 = vadd.f32 %v5477, %v5525
      %v5527 = vpop.f32.mrb[0].mxu0
      %v5528 = vpop.f32.mrb[0].mxu0
      %v5529 = vadd.f32 %v5480, %v5528
      %v5530 = vpop.f32.mrb[0].mxu0
      %5531 = vdwg.mxu0
      %5532 = vmatprep.subr.bf16.mxu0 0
      %5533 = vmatpush1.bf16.msra.mxu0 %v4129
      %5534 = vmatprep.subr.bf16.mxu0 0
      %5535 = vmatpush1.bf16.msra.mxu0 %v4130
      %5536 = vmatprep.subr.bf16.mxu0 0
      %5537 = vmatpush1.bf16.msra.mxu0 %v4131
      %5538 = vmatprep.subr.bf16.mxu0 0
      %5539 = vmatpush1.bf16.msra.mxu0 %v4132
      %5540 = vmatprep.subr.bf16.mxu0 0
      %5541 = vmatpush1.bf16.msra.mxu0 %v4133
      %5542 = vmatprep.subr.bf16.mxu0 0
      %5543 = vmatpush1.bf16.msra.mxu0 %v4134
      %5544 = vmatprep.subr.bf16.mxu0 0
      %5545 = vmatpush1.bf16.msra.mxu0 %v4135
      %5546 = vmatprep.subr.bf16.mxu0 0
      %5547 = vmatpush1.bf16.msra.mxu0 %v4136
      %5548 = vmatprep.subr.bf16.mxu0 0
      %5549 = vmatpush1.bf16.msra.mxu0 %v4137
      %5550 = vmatprep.subr.bf16.mxu0 0
      %5551 = vmatpush1.bf16.msra.mxu0 %v4138
      %5552 = vmatprep.subr.bf16.mxu0 0
      %5553 = vmatpush1.bf16.msra.mxu0 %v4139
      %5554 = vmatprep.subr.bf16.mxu0 0
      %5555 = vmatpush1.bf16.msra.mxu0 %v4140
      %5556 = vmatprep.subr.bf16.mxu0 0
      %5557 = vmatpush1.bf16.msra.mxu0 %v4141
      %5558 = vmatprep.subr.bf16.mxu0 0
      %5559 = vmatpush1.bf16.msra.mxu0 %v4142
      %5560 = vmatprep.subr.bf16.mxu0 0
      %5561 = vmatpush1.bf16.msra.mxu0 %v4143
      %5562 = vmatprep.subr.bf16.mxu0 0
      %5563 = vmatpush1.bf16.msra.mxu0 %v4144
      %5564 = vmatprep.mubr.bf16.mxu0 %v1712
      %5565 = vmatmul.mubr.bf16.gmra.mrb[0].mxu0 %v1711
      %v5566 = vpop.f32.mrb[0].mxu0
      %v5567 = vadd.f32 %v5518, %v5566
      %v5568 = vpop.f32.mrb[0].mxu0
      %v5569 = vpop.f32.mrb[0].mxu0
      %v5570 = vadd.f32 %v5521, %v5569
      %v5571 = vpop.f32.mrb[0].mxu0
      %5572 = vmatprep.mubr.bf16.mxu0 %v1775
      %5573 = vmatmul.mubr.bf16.gmra.mrb[0].mxu0 %v1774
      %v5574 = vpop.f32.mrb[0].mxu0
      %v5575 = vadd.f32 %v5526, %v5574
      %v5576 = vpop.f32.mrb[0].mxu0
      %v5577 = vpop.f32.mrb[0].mxu0
      %v5578 = vadd.f32 %v5529, %v5577
      %v5579 = vpop.f32.mrb[0].mxu0
      %5580 = vdwg.mxu0
      %5581 = vmatprep.subr.bf16.mxu0 0
      %5582 = vmatpush1.bf16.msra.mxu0 %v4145
      %5583 = vmatprep.subr.bf16.mxu0 0
      %5584 = vmatpush1.bf16.msra.mxu0 %v4146
      %5585 = vmatprep.subr.bf16.mxu0 0
      %5586 = vmatpush1.bf16.msra.mxu0 %v4147
      %5587 = vmatprep.subr.bf16.mxu0 0
      %5588 = vmatpush1.bf16.msra.mxu0 %v4148
      %5589 = vmatprep.subr.bf16.mxu0 0
      %5590 = vmatpush1.bf16.msra.mxu0 %v4149
      %5591 = vmatprep.subr.bf16.mxu0 0
      %5592 = vmatpush1.bf16.msra.mxu0 %v4150
      %5593 = vmatprep.subr.bf16.mxu0 0
      %5594 = vmatpush1.bf16.msra.mxu0 %v4151
      %5595 = vmatprep.subr.bf16.mxu0 0
      %5596 = vmatpush1.bf16.msra.mxu0 %v4152
      %5597 = vmatprep.subr.bf16.mxu0 0
      %5598 = vmatpush1.bf16.msra.mxu0 %v4153
      %5599 = vmatprep.subr.bf16.mxu0 0
      %5600 = vmatpush1.bf16.msra.mxu0 %v4154
      %5601 = vmatprep.subr.bf16.mxu0 0
      %5602 = vmatpush1.bf16.msra.mxu0 %v4155
      %5603 = vmatprep.subr.bf16.mxu0 0
      %5604 = vmatpush1.bf16.msra.mxu0 %v4156
      %5605 = vmatprep.subr.bf16.mxu0 0
      %5606 = vmatpush1.bf16.msra.mxu0 %v4157
      %5607 = vmatprep.subr.bf16.mxu0 0
      %5608 = vmatpush1.bf16.msra.mxu0 %v4158
      %5609 = vmatprep.subr.bf16.mxu0 0
      %5610 = vmatpush1.bf16.msra.mxu0 %v4159
      %5611 = vmatprep.subr.bf16.mxu0 0
      %5612 = vmatpush1.bf16.msra.mxu0 %v4160
      %5613 = vmatprep.mubr.bf16.mxu0 %v1714
      %5614 = vmatmul.mubr.bf16.gmra.mrb[0].mxu0 %v1713
      %v5615 = vpop.f32.mrb[0].mxu0
      %v5616 = vadd.f32 %v5567, %v5615
      %v5617 = vpop.f32.mrb[0].mxu0
      %v5618 = vpop.f32.mrb[0].mxu0
      %v5619 = vadd.f32 %v5570, %v5618
      %v5620 = vpop.f32.mrb[0].mxu0
      %5621 = vmatprep.mubr.bf16.mxu0 %v1777
      %5622 = vmatmul.mubr.bf16.gmra.mrb[0].mxu0 %v1776
      %v5623 = vpop.f32.mrb[0].mxu0
      %v5624 = vadd.f32 %v5575, %v5623
      %v5625 = vpop.f32.mrb[0].mxu0
      %v5626 = vpop.f32.mrb[0].mxu0
      %v5627 = vadd.f32 %v5578, %v5626
      %v5628 = vpop.f32.mrb[0].mxu0
      %5629 = vdwg.mxu0
      %5630 = vmatprep.subr.bf16.mxu0 0
      %5631 = vmatpush1.bf16.msra.mxu0 %v4161
      %5632 = vmatprep.subr.bf16.mxu0 0
      %5633 = vmatpush1.bf16.msra.mxu0 %v4162
      %5634 = vmatprep.subr.bf16.mxu0 0
      %5635 = vmatpush1.bf16.msra.mxu0 %v4163
      %5636 = vmatprep.subr.bf16.mxu0 0
      %5637 = vmatpush1.bf16.msra.mxu0 %v4164
      %5638 = vmatprep.subr.bf16.mxu0 0
      %5639 = vmatpush1.bf16.msra.mxu0 %v4165
      %5640 = vmatprep.subr.bf16.mxu0 0
      %5641 = vmatpush1.bf16.msra.mxu0 %v4166
      %5642 = vmatprep.subr.bf16.mxu0 0
      %5643 = vmatpush1.bf16.msra.mxu0 %v4167
      %5644 = vmatprep.subr.bf16.mxu0 0
      %5645 = vmatpush1.bf16.msra.mxu0 %v4168
      %5646 = vmatprep.subr.bf16.mxu0 0
      %5647 = vmatpush1.bf16.msra.mxu0 %v4169
      %5648 = vmatprep.subr.bf16.mxu0 0
      %5649 = vmatpush1.bf16.msra.mxu0 %v4170
      %5650 = vmatprep.subr.bf16.mxu0 0
      %5651 = vmatpush1.bf16.msra.mxu0 %v4171
      %5652 = vmatprep.subr.bf16.mxu0 0
      %5653 = vmatpush1.bf16.msra.mxu0 %v4172
      %5654 = vmatprep.subr.bf16.mxu0 0
      %5655 = vmatpush1.bf16.msra.mxu0 %v4173
      %5656 = vmatprep.subr.bf16.mxu0 0
      %5657 = vmatpush1.bf16.msra.mxu0 %v4174
      %5658 = vmatprep.subr.bf16.mxu0 0
      %5659 = vmatpush1.bf16.msra.mxu0 %v4175
      %5660 = vmatprep.subr.bf16.mxu0 0
      %5661 = vmatpush1.bf16.msra.mxu0 %v4176
      %5662 = vmatprep.mubr.bf16.mxu0 %v1716
      %5663 = vmatmul.mubr.bf16.gmra.mrb[0].mxu0 %v1715
      %v5664 = vpop.f32.mrb[0].mxu0
      %v5665 = vadd.f32 %v5616, %v5664
      %v5666 = vpop.f32.mrb[0].mxu0
      %v5667 = vpop.f32.mrb[0].mxu0
      %v5668 = vadd.f32 %v5619, %v5667
      %v5669 = vpop.f32.mrb[0].mxu0
      %5670 = vmatprep.mubr.bf16.mxu0 %v1779
      %5671 = vmatmul.mubr.bf16.gmra.mrb[0].mxu0 %v1778
      %v5672 = vpop.f32.mrb[0].mxu0
      %v5673 = vadd.f32 %v5624, %v5672
      %v5674 = vpop.f32.mrb[0].mxu0
      %v5675 = vpop.f32.mrb[0].mxu0
      %v5676 = vadd.f32 %v5627, %v5675
      %v5677 = vpop.f32.mrb[0].mxu0
      %5678 = vdwg.mxu0
      %5679 = vmatprep.subr.bf16.mxu0 0
      %5680 = vmatpush1.bf16.msra.mxu0 %v4177
      %5681 = vmatprep.subr.bf16.mxu0 0
      %5682 = vmatpush1.bf16.msra.mxu0 %v4178
      %5683 = vmatprep.subr.bf16.mxu0 0
      %5684 = vmatpush1.bf16.msra.mxu0 %v4179
      %5685 = vmatprep.subr.bf16.mxu0 0
      %5686 = vmatpush1.bf16.msra.mxu0 %v4180
      %5687 = vmatprep.subr.bf16.mxu0 0
      %5688 = vmatpush1.bf16.msra.mxu0 %v4181
      %5689 = vmatprep.subr.bf16.mxu0 0
      %5690 = vmatpush1.bf16.msra.mxu0 %v4182
      %5691 = vmatprep.subr.bf16.mxu0 0
      %5692 = vmatpush1.bf16.msra.mxu0 %v4183
      %5693 = vmatprep.subr.bf16.mxu0 0
      %5694 = vmatpush1.bf16.msra.mxu0 %v4184
      %5695 = vmatprep.subr.bf16.mxu0 0
      %5696 = vmatpush1.bf16.msra.mxu0 %v4185
      %5697 = vmatprep.subr.bf16.mxu0 0
      %5698 = vmatpush1.bf16.msra.mxu0 %v4186
      %5699 = vmatprep.subr.bf16.mxu0 0
      %5700 = vmatpush1.bf16.msra.mxu0 %v4187
      %5701 = vmatprep.subr.bf16.mxu0 0
      %5702 = vmatpush1.bf16.msra.mxu0 %v4188
      %5703 = vmatprep.subr.bf16.mxu0 0
      %5704 = vmatpush1.bf16.msra.mxu0 %v4189
      %5705 = vmatprep.subr.bf16.mxu0 0
      %5706 = vmatpush1.bf16.msra.mxu0 %v4190
      %5707 = vmatprep.subr.bf16.mxu0 0
      %5708 = vmatpush1.bf16.msra.mxu0 %v4191
      %5709 = vmatprep.subr.bf16.mxu0 0
      %5710 = vmatpush1.bf16.msra.mxu0 %v4192
      %5711 = vmatprep.mubr.bf16.mxu0 %v1718
      %5712 = vmatmul.mubr.bf16.gmra.mrb[0].mxu0 %v1717
      %v5713 = vpop.f32.mrb[0].mxu0
      %v5714 = vadd.f32 %v5665, %v5713
      %v5715 = vpop.f32.mrb[0].mxu0
      %v5716 = vpop.f32.mrb[0].mxu0
      %v5717 = vadd.f32 %v5668, %v5716
      %v5718 = vpop.f32.mrb[0].mxu0
      %5719 = vmatprep.mubr.bf16.mxu0 %v1781
      %5720 = vmatmul.mubr.bf16.gmra.mrb[0].mxu0 %v1780
      %v5721 = vpop.f32.mrb[0].mxu0
      %v5722 = vadd.f32 %v5673, %v5721
      %v5723 = vpop.f32.mrb[0].mxu0
      %v5724 = vpop.f32.mrb[0].mxu0
      %v5725 = vadd.f32 %v5676, %v5724
      %v5726 = vpop.f32.mrb[0].mxu0
      %5727 = vdwg.mxu0
      %5728 = vmatprep.subr.bf16.mxu0 0
      %5729 = vmatpush1.bf16.msra.mxu0 %v4193
      %5730 = vmatprep.subr.bf16.mxu0 0
      %5731 = vmatpush1.bf16.msra.mxu0 %v4194
      %5732 = vmatprep.subr.bf16.mxu0 0
      %5733 = vmatpush1.bf16.msra.mxu0 %v4195
      %5734 = vmatprep.subr.bf16.mxu0 0
      %5735 = vmatpush1.bf16.msra.mxu0 %v4196
      %5736 = vmatprep.subr.bf16.mxu0 0
      %5737 = vmatpush1.bf16.msra.mxu0 %v4197
      %5738 = vmatprep.subr.bf16.mxu0 0
      %5739 = vmatpush1.bf16.msra.mxu0 %v4198
      %5740 = vmatprep.subr.bf16.mxu0 0
      %5741 = vmatpush1.bf16.msra.mxu0 %v4199
      %5742 = vmatprep.subr.bf16.mxu0 0
      %5743 = vmatpush1.bf16.msra.mxu0 %v4200
      %5744 = vmatprep.subr.bf16.mxu0 0
      %5745 = vmatpush1.bf16.msra.mxu0 %v4201
      %5746 = vmatprep.subr.bf16.mxu0 0
      %5747 = vmatpush1.bf16.msra.mxu0 %v4202
      %5748 = vmatprep.subr.bf16.mxu0 0
      %5749 = vmatpush1.bf16.msra.mxu0 %v4203
      %5750 = vmatprep.subr.bf16.mxu0 0
      %5751 = vmatpush1.bf16.msra.mxu0 %v4204
      %5752 = vmatprep.subr.bf16.mxu0 0
      %5753 = vmatpush1.bf16.msra.mxu0 %v4205
      %5754 = vmatprep.subr.bf16.mxu0 0
      %5755 = vmatpush1.bf16.msra.mxu0 %v4206
      %5756 = vmatprep.subr.bf16.mxu0 0
      %5757 = vmatpush1.bf16.msra.mxu0 %v4207
      %5758 = vmatprep.subr.bf16.mxu0 0
      %5759 = vmatpush1.bf16.msra.mxu0 %v4208
      %5760 = vmatprep.mubr.bf16.mxu0 %v1720
      %5761 = vmatmul.mubr.bf16.gmra.mrb[0].mxu0 %v1719
      %v5762 = vpop.f32.mrb[0].mxu0
      %v5763 = vadd.f32 %v5714, %v5762
      %v5764 = vpop.f32.mrb[0].mxu0
      %v5765 = vpop.f32.mrb[0].mxu0
      %v5766 = vadd.f32 %v5717, %v5765
      %v5767 = vpop.f32.mrb[0].mxu0
      %5768 = vmatprep.mubr.bf16.mxu0 %v1783
      %5769 = vmatmul.mubr.bf16.gmra.mrb[0].mxu0 %v1782
      %v5770 = vpop.f32.mrb[0].mxu0
      %v5771 = vadd.f32 %v5722, %v5770
      %v5772 = vpop.f32.mrb[0].mxu0
      %v5773 = vpop.f32.mrb[0].mxu0
      %v5774 = vadd.f32 %v5725, %v5773
      %v5775 = vpop.f32.mrb[0].mxu0
      %5776 = vdwg.mxu0
      %5777 = vmatprep.subr.bf16.mxu0 0
      %5778 = vmatpush1.bf16.msra.mxu0 %v4209
      %5779 = vmatprep.subr.bf16.mxu0 0
      %5780 = vmatpush1.bf16.msra.mxu0 %v4210
      %5781 = vmatprep.subr.bf16.mxu0 0
      %5782 = vmatpush1.bf16.msra.mxu0 %v4211
      %5783 = vmatprep.subr.bf16.mxu0 0
      %5784 = vmatpush1.bf16.msra.mxu0 %v4212
      %5785 = vmatprep.subr.bf16.mxu0 0
      %5786 = vmatpush1.bf16.msra.mxu0 %v4213
      %5787 = vmatprep.subr.bf16.mxu0 0
      %5788 = vmatpush1.bf16.msra.mxu0 %v4214
      %5789 = vmatprep.subr.bf16.mxu0 0
      %5790 = vmatpush1.bf16.msra.mxu0 %v4215
      %5791 = vmatprep.subr.bf16.mxu0 0
      %5792 = vmatpush1.bf16.msra.mxu0 %v4216
      %5793 = vmatprep.subr.bf16.mxu0 0
      %5794 = vmatpush1.bf16.msra.mxu0 %v4217
      %5795 = vmatprep.subr.bf16.mxu0 0
      %5796 = vmatpush1.bf16.msra.mxu0 %v4218
      %5797 = vmatprep.subr.bf16.mxu0 0
      %5798 = vmatpush1.bf16.msra.mxu0 %v4219
      %5799 = vmatprep.subr.bf16.mxu0 0
      %5800 = vmatpush1.bf16.msra.mxu0 %v4220
      %5801 = vmatprep.subr.bf16.mxu0 0
      %5802 = vmatpush1.bf16.msra.mxu0 %v4221
      %5803 = vmatprep.subr.bf16.mxu0 0
      %5804 = vmatpush1.bf16.msra.mxu0 %v4222
      %5805 = vmatprep.subr.bf16.mxu0 0
      %5806 = vmatpush1.bf16.msra.mxu0 %v4223
      %5807 = vmatprep.subr.bf16.mxu0 0
      %5808 = vmatpush1.bf16.msra.mxu0 %v4224
      %5809 = vmatprep.mubr.bf16.mxu0 %v1722
      %5810 = vmatmul.mubr.bf16.gmra.mrb[0].mxu0 %v1721
      %v5811 = vpop.f32.mrb[0].mxu0
      %v5812 = vadd.f32 %v5763, %v5811
      %v5813 = vpop.f32.mrb[0].mxu0
      %v5814 = vpop.f32.mrb[0].mxu0
      %v5815 = vadd.f32 %v5766, %v5814
      %v5816 = vpop.f32.mrb[0].mxu0
      %5817 = vmatprep.mubr.bf16.mxu0 %v1785
      %5818 = vmatmul.mubr.bf16.gmra.mrb[0].mxu0 %v1784
      %v5819 = vpop.f32.mrb[0].mxu0
      %v5820 = vadd.f32 %v5771, %v5819
      %v5821 = vpop.f32.mrb[0].mxu0
      %v5822 = vpop.f32.mrb[0].mxu0
      %v5823 = vadd.f32 %v5774, %v5822
      %v5824 = vpop.f32.mrb[0].mxu0
      %5825 = vdwg.mxu0
      %5826 = vmatprep.subr.bf16.mxu0 0
      %5827 = vmatpush1.bf16.msra.mxu0 %v4225
      %5828 = vmatprep.subr.bf16.mxu0 0
      %5829 = vmatpush1.bf16.msra.mxu0 %v4226
      %5830 = vmatprep.subr.bf16.mxu0 0
      %5831 = vmatpush1.bf16.msra.mxu0 %v4227
      %5832 = vmatprep.subr.bf16.mxu0 0
      %5833 = vmatpush1.bf16.msra.mxu0 %v4228
      %5834 = vmatprep.subr.bf16.mxu0 0
      %5835 = vmatpush1.bf16.msra.mxu0 %v4229
      %5836 = vmatprep.subr.bf16.mxu0 0
      %5837 = vmatpush1.bf16.msra.mxu0 %v4230
      %5838 = vmatprep.subr.bf16.mxu0 0
      %5839 = vmatpush1.bf16.msra.mxu0 %v4231
      %5840 = vmatprep.subr.bf16.mxu0 0
      %5841 = vmatpush1.bf16.msra.mxu0 %v4232
      %5842 = vmatprep.subr.bf16.mxu0 0
      %5843 = vmatpush1.bf16.msra.mxu0 %v4233
      %5844 = vmatprep.subr.bf16.mxu0 0
      %5845 = vmatpush1.bf16.msra.mxu0 %v4234
      %5846 = vmatprep.subr.bf16.mxu0 0
      %5847 = vmatpush1.bf16.msra.mxu0 %v4235
      %5848 = vmatprep.subr.bf16.mxu0 0
      %5849 = vmatpush1.bf16.msra.mxu0 %v4236
      %5850 = vmatprep.subr.bf16.mxu0 0
      %5851 = vmatpush1.bf16.msra.mxu0 %v4237
      %5852 = vmatprep.subr.bf16.mxu0 0
      %5853 = vmatpush1.bf16.msra.mxu0 %v4238
      %5854 = vmatprep.subr.bf16.mxu0 0
      %5855 = vmatpush1.bf16.msra.mxu0 %v4239
      %5856 = vmatprep.subr.bf16.mxu0 0
      %5857 = vmatpush1.bf16.msra.mxu0 %v4240
      %5858 = vmatprep.mubr.bf16.mxu0 %v1724
      %5859 = vmatmul.mubr.bf16.gmra.mrb[0].mxu0 %v1723
      %v5860 = vpop.f32.mrb[0].mxu0
      %v5861 = vadd.f32 %v5812, %v5860
      %v5862 = vpop.f32.mrb[0].mxu0
      %v5863 = vpop.f32.mrb[0].mxu0
      %v5864 = vadd.f32 %v5815, %v5863
      %v5865 = vpop.f32.mrb[0].mxu0
      %5866 = vmatprep.mubr.bf16.mxu0 %v1787
      %5867 = vmatmul.mubr.bf16.gmra.mrb[0].mxu0 %v1786
      %v5868 = vpop.f32.mrb[0].mxu0
      %v5869 = vadd.f32 %v5820, %v5868
      %v5870 = vpop.f32.mrb[0].mxu0
      %v5871 = vpop.f32.mrb[0].mxu0
      %v5872 = vadd.f32 %v5823, %v5871
      %v5873 = vpop.f32.mrb[0].mxu0
      %5874 = vdwg.mxu0
      %5875 = vmatprep.subr.bf16.mxu0 0
      %5876 = vmatpush1.bf16.msra.mxu0 %v4241
      %5877 = vmatprep.subr.bf16.mxu0 0
      %5878 = vmatpush1.bf16.msra.mxu0 %v4242
      %5879 = vmatprep.subr.bf16.mxu0 0
      %5880 = vmatpush1.bf16.msra.mxu0 %v4243
      %5881 = vmatprep.subr.bf16.mxu0 0
      %5882 = vmatpush1.bf16.msra.mxu0 %v4244
      %5883 = vmatprep.subr.bf16.mxu0 0
      %5884 = vmatpush1.bf16.msra.mxu0 %v4245
      %5885 = vmatprep.subr.bf16.mxu0 0
      %5886 = vmatpush1.bf16.msra.mxu0 %v4246
      %5887 = vmatprep.subr.bf16.mxu0 0
      %5888 = vmatpush1.bf16.msra.mxu0 %v4247
      %5889 = vmatprep.subr.bf16.mxu0 0
      %5890 = vmatpush1.bf16.msra.mxu0 %v4248
      %5891 = vmatprep.subr.bf16.mxu0 0
      %5892 = vmatpush1.bf16.msra.mxu0 %v4249
      %5893 = vmatprep.subr.bf16.mxu0 0
      %5894 = vmatpush1.bf16.msra.mxu0 %v4250
      %5895 = vmatprep.subr.bf16.mxu0 0
      %5896 = vmatpush1.bf16.msra.mxu0 %v4251
      %5897 = vmatprep.subr.bf16.mxu0 0
      %5898 = vmatpush1.bf16.msra.mxu0 %v4252
      %5899 = vmatprep.subr.bf16.mxu0 0
      %5900 = vmatpush1.bf16.msra.mxu0 %v4253
      %5901 = vmatprep.subr.bf16.mxu0 0
      %5902 = vmatpush1.bf16.msra.mxu0 %v4254
      %5903 = vmatprep.subr.bf16.mxu0 0
      %5904 = vmatpush1.bf16.msra.mxu0 %v4255
      %5905 = vmatprep.subr.bf16.mxu0 0
      %5906 = vmatpush1.bf16.msra.mxu0 %v4256
      %5907 = vmatprep.mubr.bf16.mxu0 %v1726
      %5908 = vmatmul.mubr.bf16.gmra.mrb[0].mxu0 %v1725
      %v5909 = vpop.f32.mrb[0].mxu0
      %v5910 = vadd.f32 %v5861, %v5909
      %v5911 = vpop.f32.mrb[0].mxu0
      %v5912 = vpop.f32.mrb[0].mxu0
      %v5913 = vadd.f32 %v5864, %v5912
      %v5914 = vpop.f32.mrb[0].mxu0
      %5915 = vmatprep.mubr.bf16.mxu0 %v1789
      %5916 = vmatmul.mubr.bf16.gmra.mrb[0].mxu0 %v1788
      %v5917 = vpop.f32.mrb[0].mxu0
      %v5918 = vadd.f32 %v5869, %v5917
      %v5919 = vpop.f32.mrb[0].mxu0
      %v5920 = vpop.f32.mrb[0].mxu0
      %v5921 = vadd.f32 %v5872, %v5920
      %v5922 = vpop.f32.mrb[0].mxu0
      %5923 = vdwg.mxu0
      %5924 = vmatprep.subr.bf16.mxu0 0
      %5925 = vmatpush1.bf16.msra.mxu0 %v4257
      %5926 = vmatprep.subr.bf16.mxu0 0
      %5927 = vmatpush1.bf16.msra.mxu0 %v4258
      %5928 = vmatprep.subr.bf16.mxu0 0
      %5929 = vmatpush1.bf16.msra.mxu0 %v4259
      %5930 = vmatprep.subr.bf16.mxu0 0
      %5931 = vmatpush1.bf16.msra.mxu0 %v4260
      %5932 = vmatprep.subr.bf16.mxu0 0
      %5933 = vmatpush1.bf16.msra.mxu0 %v4261
      %5934 = vmatprep.subr.bf16.mxu0 0
      %5935 = vmatpush1.bf16.msra.mxu0 %v4262
      %5936 = vmatprep.subr.bf16.mxu0 0
      %5937 = vmatpush1.bf16.msra.mxu0 %v4263
      %5938 = vmatprep.subr.bf16.mxu0 0
      %5939 = vmatpush1.bf16.msra.mxu0 %v4264
      %5940 = vmatprep.subr.bf16.mxu0 0
      %5941 = vmatpush1.bf16.msra.mxu0 %v4265
      %5942 = vmatprep.subr.bf16.mxu0 0
      %5943 = vmatpush1.bf16.msra.mxu0 %v4266
      %5944 = vmatprep.subr.bf16.mxu0 0
      %5945 = vmatpush1.bf16.msra.mxu0 %v4267
      %5946 = vmatprep.subr.bf16.mxu0 0
      %5947 = vmatpush1.bf16.msra.mxu0 %v4268
      %5948 = vmatprep.subr.bf16.mxu0 0
      %5949 = vmatpush1.bf16.msra.mxu0 %v4269
      %5950 = vmatprep.subr.bf16.mxu0 0
      %5951 = vmatpush1.bf16.msra.mxu0 %v4270
      %5952 = vmatprep.subr.bf16.mxu0 0
      %5953 = vmatpush1.bf16.msra.mxu0 %v4271
      %5954 = vmatprep.subr.bf16.mxu0 0
      %5955 = vmatpush1.bf16.msra.mxu0 %v4272
      %5956 = vmatprep.mubr.bf16.mxu0 %v1728
      %5957 = vmatmul.mubr.bf16.gmra.mrb[0].mxu0 %v1727
      %v5958 = vpop.f32.mrb[0].mxu0
      %v5959 = vadd.f32 %v5910, %v5958
      %v5960 = vpop.f32.mrb[0].mxu0
      %v5961 = vpop.f32.mrb[0].mxu0
      %v5962 = vadd.f32 %v5913, %v5961
      %v5963 = vpop.f32.mrb[0].mxu0
      %5964 = vmatprep.mubr.bf16.mxu0 %v1791
      %5965 = vmatmul.mubr.bf16.gmra.mrb[0].mxu0 %v1790
      %v5966 = vpop.f32.mrb[0].mxu0
      %v5967 = vadd.f32 %v5918, %v5966
      %v5968 = vpop.f32.mrb[0].mxu0
      %v5969 = vpop.f32.mrb[0].mxu0
      %v5970 = vadd.f32 %v5921, %v5969
      %v5971 = vpop.f32.mrb[0].mxu0
      %5972 = vdwg.mxu0
      %5973 = vmatprep.subr.bf16.mxu0 0
      %5974 = vmatpush1.bf16.msra.mxu0 %v4273
      %5975 = vmatprep.subr.bf16.mxu0 0
      %5976 = vmatpush1.bf16.msra.mxu0 %v4274
      %5977 = vmatprep.subr.bf16.mxu0 0
      %5978 = vmatpush1.bf16.msra.mxu0 %v4275
      %5979 = vmatprep.subr.bf16.mxu0 0
      %5980 = vmatpush1.bf16.msra.mxu0 %v4276
      %5981 = vmatprep.subr.bf16.mxu0 0
      %5982 = vmatpush1.bf16.msra.mxu0 %v4277
      %5983 = vmatprep.subr.bf16.mxu0 0
      %5984 = vmatpush1.bf16.msra.mxu0 %v4278
      %5985 = vmatprep.subr.bf16.mxu0 0
      %5986 = vmatpush1.bf16.msra.mxu0 %v4279
      %5987 = vmatprep.subr.bf16.mxu0 0
      %5988 = vmatpush1.bf16.msra.mxu0 %v4280
      %5989 = vmatprep.subr.bf16.mxu0 0
      %5990 = vmatpush1.bf16.msra.mxu0 %v4281
      %5991 = vmatprep.subr.bf16.mxu0 0
      %5992 = vmatpush1.bf16.msra.mxu0 %v4282
      %5993 = vmatprep.subr.bf16.mxu0 0
      %5994 = vmatpush1.bf16.msra.mxu0 %v4283
      %5995 = vmatprep.subr.bf16.mxu0 0
      %5996 = vmatpush1.bf16.msra.mxu0 %v4284
      %5997 = vmatprep.subr.bf16.mxu0 0
      %5998 = vmatpush1.bf16.msra.mxu0 %v4285
      %5999 = vmatprep.subr.bf16.mxu0 0
      %6000 = vmatpush1.bf16.msra.mxu0 %v4286
      %6001 = vmatprep.subr.bf16.mxu0 0
      %6002 = vmatpush1.bf16.msra.mxu0 %v4287
      %6003 = vmatprep.subr.bf16.mxu0 0
      %6004 = vmatpush1.bf16.msra.mxu0 %v4288
      %6005 = vmatprep.mubr.bf16.mxu0 %v1730
      %6006 = vmatmul.mubr.bf16.gmra.mrb[0].mxu0 %v1729
      %v6007 = vpop.f32.mrb[0].mxu0
      %v6008 = vadd.f32 %v5959, %v6007
      %v6009 = vpop.f32.mrb[0].mxu0
      %v6010 = vpop.f32.mrb[0].mxu0
      %v6011 = vadd.f32 %v5962, %v6010
      %v6012 = vpop.f32.mrb[0].mxu0
      %6013 = vmatprep.mubr.bf16.mxu0 %v1793
      %6014 = vmatmul.mubr.bf16.gmra.mrb[0].mxu0 %v1792
      %v6015 = vpop.f32.mrb[0].mxu0
      %v6016 = vadd.f32 %v5967, %v6015
      %v6017 = vpop.f32.mrb[0].mxu0
      %v6018 = vpop.f32.mrb[0].mxu0
      %v6019 = vadd.f32 %v5970, %v6018
      %v6020 = vpop.f32.mrb[0].mxu0
      %6021 = vdwg.mxu0
      %6022 = vmatprep.subr.bf16.mxu0 0
      %6023 = vmatpush1.bf16.msra.mxu0 %v4289
      %6024 = vmatprep.subr.bf16.mxu0 0
      %6025 = vmatpush1.bf16.msra.mxu0 %v4290
      %6026 = vmatprep.subr.bf16.mxu0 0
      %6027 = vmatpush1.bf16.msra.mxu0 %v4291
      %6028 = vmatprep.subr.bf16.mxu0 0
      %6029 = vmatpush1.bf16.msra.mxu0 %v4292
      %6030 = vmatprep.subr.bf16.mxu0 0
      %6031 = vmatpush1.bf16.msra.mxu0 %v4293
      %6032 = vmatprep.subr.bf16.mxu0 0
      %6033 = vmatpush1.bf16.msra.mxu0 %v4294
      %6034 = vmatprep.subr.bf16.mxu0 0
      %6035 = vmatpush1.bf16.msra.mxu0 %v4295
      %6036 = vmatprep.subr.bf16.mxu0 0
      %6037 = vmatpush1.bf16.msra.mxu0 %v4296
      %6038 = vmatprep.subr.bf16.mxu0 0
      %6039 = vmatpush1.bf16.msra.mxu0 %v4297
      %6040 = vmatprep.subr.bf16.mxu0 0
      %6041 = vmatpush1.bf16.msra.mxu0 %v4298
      %6042 = vmatprep.subr.bf16.mxu0 0
      %6043 = vmatpush1.bf16.msra.mxu0 %v4299
      %6044 = vmatprep.subr.bf16.mxu0 0
      %6045 = vmatpush1.bf16.msra.mxu0 %v4300
      %6046 = vmatprep.subr.bf16.mxu0 0
      %6047 = vmatpush1.bf16.msra.mxu0 %v4301
      %6048 = vmatprep.subr.bf16.mxu0 0
      %6049 = vmatpush1.bf16.msra.mxu0 %v4302
      %6050 = vmatprep.subr.bf16.mxu0 0
      %6051 = vmatpush1.bf16.msra.mxu0 %v4303
      %6052 = vmatprep.subr.bf16.mxu0 0
      %6053 = vmatpush1.bf16.msra.mxu0 %v4304
      %6054 = vmatprep.mubr.bf16.mxu0 %v1732
      %6055 = vmatmul.mubr.bf16.gmra.mrb[0].mxu0 %v1731
      %v6056 = vpop.f32.mrb[0].mxu0
      %v6057 = vadd.f32 %v6008, %v6056
      %v6058 = vpop.f32.mrb[0].mxu0
      %v6059 = vpop.f32.mrb[0].mxu0
      %v6060 = vadd.f32 %v6011, %v6059
      %v6061 = vpop.f32.mrb[0].mxu0
      %6062 = vmatprep.mubr.bf16.mxu0 %v1795
      %6063 = vmatmul.mubr.bf16.gmra.mrb[0].mxu0 %v1794
      %v6064 = vpop.f32.mrb[0].mxu0
      %v6065 = vadd.f32 %v6016, %v6064
      %v6066 = vpop.f32.mrb[0].mxu0
      %v6067 = vpop.f32.mrb[0].mxu0
      %v6068 = vadd.f32 %v6019, %v6067
      %v6069 = vpop.f32.mrb[0].mxu0
      %6070 = vdwg.mxu0
      %6071 = vmatprep.subr.bf16.mxu0 0
      %6072 = vmatpush1.bf16.msra.mxu0 %v4305
      %6073 = vmatprep.subr.bf16.mxu0 0
      %6074 = vmatpush1.bf16.msra.mxu0 %v4306
      %6075 = vmatprep.subr.bf16.mxu0 0
      %6076 = vmatpush1.bf16.msra.mxu0 %v4307
      %6077 = vmatprep.subr.bf16.mxu0 0
      %6078 = vmatpush1.bf16.msra.mxu0 %v4308
      %6079 = vmatprep.subr.bf16.mxu0 0
      %6080 = vmatpush1.bf16.msra.mxu0 %v4309
      %6081 = vmatprep.subr.bf16.mxu0 0
      %6082 = vmatpush1.bf16.msra.mxu0 %v4310
      %6083 = vmatprep.subr.bf16.mxu0 0
      %6084 = vmatpush1.bf16.msra.mxu0 %v4311
      %6085 = vmatprep.subr.bf16.mxu0 0
      %6086 = vmatpush1.bf16.msra.mxu0 %v4312
      %6087 = vmatprep.subr.bf16.mxu0 0
      %6088 = vmatpush1.bf16.msra.mxu0 %v4313
      %6089 = vmatprep.subr.bf16.mxu0 0
      %6090 = vmatpush1.bf16.msra.mxu0 %v4314
      %6091 = vmatprep.subr.bf16.mxu0 0
      %6092 = vmatpush1.bf16.msra.mxu0 %v4315
      %6093 = vmatprep.subr.bf16.mxu0 0
      %6094 = vmatpush1.bf16.msra.mxu0 %v4316
      %6095 = vmatprep.subr.bf16.mxu0 0
      %6096 = vmatpush1.bf16.msra.mxu0 %v4317
      %6097 = vmatprep.subr.bf16.mxu0 0
      %6098 = vmatpush1.bf16.msra.mxu0 %v4318
      %6099 = vmatprep.subr.bf16.mxu0 0
      %6100 = vmatpush1.bf16.msra.mxu0 %v4319
      %6101 = vmatprep.subr.bf16.mxu0 0
      %6102 = vmatpush1.bf16.msra.mxu0 %v4320
      %6103 = vmatprep.mubr.bf16.mxu0 %v1734
      %6104 = vmatmul.mubr.bf16.gmra.mrb[0].mxu0 %v1733
      %v6105 = vpop.f32.mrb[0].mxu0
      %v6106 = vadd.f32 %v6057, %v6105
      %v6107 = vpop.f32.mrb[0].mxu0
      %v6108 = vpop.f32.mrb[0].mxu0
      %v6109 = vadd.f32 %v6060, %v6108
      %v6110 = vpop.f32.mrb[0].mxu0
      %6111 = vmatprep.mubr.bf16.mxu0 %v1797
      %6112 = vmatmul.mubr.bf16.gmra.mrb[0].mxu0 %v1796
      %v6113 = vpop.f32.mrb[0].mxu0
      %v6114 = vadd.f32 %v6065, %v6113
      %v6115 = vpop.f32.mrb[0].mxu0
      %v6116 = vpop.f32.mrb[0].mxu0
      %v6117 = vadd.f32 %v6068, %v6116
      %v6118 = vpop.f32.mrb[0].mxu0
      %6119 = vdwg.mxu0
      %6120 = vmatprep.subr.bf16.mxu0 0
      %6121 = vmatpush1.bf16.msra.mxu0 %v4321
      %6122 = vmatprep.subr.bf16.mxu0 0
      %6123 = vmatpush1.bf16.msra.mxu0 %v4322
      %6124 = vmatprep.subr.bf16.mxu0 0
      %6125 = vmatpush1.bf16.msra.mxu0 %v4323
      %6126 = vmatprep.subr.bf16.mxu0 0
      %6127 = vmatpush1.bf16.msra.mxu0 %v4324
      %6128 = vmatprep.subr.bf16.mxu0 0
      %6129 = vmatpush1.bf16.msra.mxu0 %v4325
      %6130 = vmatprep.subr.bf16.mxu0 0
      %6131 = vmatpush1.bf16.msra.mxu0 %v4326
      %6132 = vmatprep.subr.bf16.mxu0 0
      %6133 = vmatpush1.bf16.msra.mxu0 %v4327
      %6134 = vmatprep.subr.bf16.mxu0 0
      %6135 = vmatpush1.bf16.msra.mxu0 %v4328
      %6136 = vmatprep.subr.bf16.mxu0 0
      %6137 = vmatpush1.bf16.msra.mxu0 %v4329
      %6138 = vmatprep.subr.bf16.mxu0 0
      %6139 = vmatpush1.bf16.msra.mxu0 %v4330
      %6140 = vmatprep.subr.bf16.mxu0 0
      %6141 = vmatpush1.bf16.msra.mxu0 %v4331
      %6142 = vmatprep.subr.bf16.mxu0 0
      %6143 = vmatpush1.bf16.msra.mxu0 %v4332
      %6144 = vmatprep.subr.bf16.mxu0 0
      %6145 = vmatpush1.bf16.msra.mxu0 %v4333
      %6146 = vmatprep.subr.bf16.mxu0 0
      %6147 = vmatpush1.bf16.msra.mxu0 %v4334
      %6148 = vmatprep.subr.bf16.mxu0 0
      %6149 = vmatpush1.bf16.msra.mxu0 %v4335
      %6150 = vmatprep.subr.bf16.mxu0 0
      %6151 = vmatpush1.bf16.msra.mxu0 %v4336
      %6152 = vmatprep.mubr.bf16.mxu0 %v1736
      %6153 = vmatmul.mubr.bf16.gmra.mrb[0].mxu0 %v1735
      %v6154 = vpop.f32.mrb[0].mxu0
      %v6155 = vadd.f32 %v6106, %v6154
      %v6156 = vpop.f32.mrb[0].mxu0
      %v6157 = vpop.f32.mrb[0].mxu0
      %v6158 = vadd.f32 %v6109, %v6157
      %v6159 = vpop.f32.mrb[0].mxu0
      %6160 = vmatprep.mubr.bf16.mxu0 %v1799
      %6161 = vmatmul.mubr.bf16.gmra.mrb[0].mxu0 %v1798
      %v6162 = vpop.f32.mrb[0].mxu0
      %v6163 = vadd.f32 %v6114, %v6162
      %v6164 = vpop.f32.mrb[0].mxu0
      %v6165 = vpop.f32.mrb[0].mxu0
      %v6166 = vadd.f32 %v6117, %v6165
      %v6167 = vpop.f32.mrb[0].mxu0
      %6168 = vdwg.mxu0
      %6169 = vmatprep.subr.bf16.mxu0 0
      %6170 = vmatpush1.bf16.msra.mxu0 %v4337
      %6171 = vmatprep.subr.bf16.mxu0 0
      %6172 = vmatpush1.bf16.msra.mxu0 %v4338
      %6173 = vmatprep.subr.bf16.mxu0 0
      %6174 = vmatpush1.bf16.msra.mxu0 %v4339
      %6175 = vmatprep.subr.bf16.mxu0 0
      %6176 = vmatpush1.bf16.msra.mxu0 %v4340
      %6177 = vmatprep.subr.bf16.mxu0 0
      %6178 = vmatpush1.bf16.msra.mxu0 %v4341
      %6179 = vmatprep.subr.bf16.mxu0 0
      %6180 = vmatpush1.bf16.msra.mxu0 %v4342
      %6181 = vmatprep.subr.bf16.mxu0 0
      %6182 = vmatpush1.bf16.msra.mxu0 %v4343
      %6183 = vmatprep.subr.bf16.mxu0 0
      %6184 = vmatpush1.bf16.msra.mxu0 %v4344
      %6185 = vmatprep.subr.bf16.mxu0 0
      %6186 = vmatpush1.bf16.msra.mxu0 %v4345
      %6187 = vmatprep.subr.bf16.mxu0 0
      %6188 = vmatpush1.bf16.msra.mxu0 %v4346
      %6189 = vmatprep.subr.bf16.mxu0 0
      %6190 = vmatpush1.bf16.msra.mxu0 %v4347
      %6191 = vmatprep.subr.bf16.mxu0 0
      %6192 = vmatpush1.bf16.msra.mxu0 %v4348
      %6193 = vmatprep.subr.bf16.mxu0 0
      %6194 = vmatpush1.bf16.msra.mxu0 %v4349
      %6195 = vmatprep.subr.bf16.mxu0 0
      %6196 = vmatpush1.bf16.msra.mxu0 %v4350
      %6197 = vmatprep.subr.bf16.mxu0 0
      %6198 = vmatpush1.bf16.msra.mxu0 %v4351
      %6199 = vmatprep.subr.bf16.mxu0 0
      %6200 = vmatpush1.bf16.msra.mxu0 %v4352
      %6201 = vmatprep.mubr.bf16.mxu0 %v1738
      %6202 = vmatmul.mubr.bf16.gmra.mrb[0].mxu0 %v1737
      %v6203 = vpop.f32.mrb[0].mxu0
      %v6204 = vadd.f32 %v6155, %v6203
      %v6205 = vpop.f32.mrb[0].mxu0
      %v6206 = vpop.f32.mrb[0].mxu0
      %v6207 = vadd.f32 %v6158, %v6206
      %v6208 = vpop.f32.mrb[0].mxu0
      %6209 = vmatprep.mubr.bf16.mxu0 %v1801
      %6210 = vmatmul.mubr.bf16.gmra.mrb[0].mxu0 %v1800
      %v6211 = vpop.f32.mrb[0].mxu0
      %v6212 = vadd.f32 %v6163, %v6211
      %v6213 = vpop.f32.mrb[0].mxu0
      %v6214 = vpop.f32.mrb[0].mxu0
      %v6215 = vadd.f32 %v6166, %v6214
      %v6216 = vpop.f32.mrb[0].mxu0
      %6217 = vdwg.mxu0
      %6218 = vmatprep.subr.bf16.mxu0 0
      %6219 = vmatpush1.bf16.msra.mxu0 %v4353
      %6220 = vmatprep.subr.bf16.mxu0 0
      %6221 = vmatpush1.bf16.msra.mxu0 %v4354
      %6222 = vmatprep.subr.bf16.mxu0 0
      %6223 = vmatpush1.bf16.msra.mxu0 %v4355
      %6224 = vmatprep.subr.bf16.mxu0 0
      %6225 = vmatpush1.bf16.msra.mxu0 %v4356
      %6226 = vmatprep.subr.bf16.mxu0 0
      %6227 = vmatpush1.bf16.msra.mxu0 %v4357
      %6228 = vmatprep.subr.bf16.mxu0 0
      %6229 = vmatpush1.bf16.msra.mxu0 %v4358
      %6230 = vmatprep.subr.bf16.mxu0 0
      %6231 = vmatpush1.bf16.msra.mxu0 %v4359
      %6232 = vmatprep.subr.bf16.mxu0 0
      %6233 = vmatpush1.bf16.msra.mxu0 %v4360
      %6234 = vmatprep.subr.bf16.mxu0 0
      %6235 = vmatpush1.bf16.msra.mxu0 %v4361
      %6236 = vmatprep.subr.bf16.mxu0 0
      %6237 = vmatpush1.bf16.msra.mxu0 %v4362
      %6238 = vmatprep.subr.bf16.mxu0 0
      %6239 = vmatpush1.bf16.msra.mxu0 %v4363
      %6240 = vmatprep.subr.bf16.mxu0 0
      %6241 = vmatpush1.bf16.msra.mxu0 %v4364
      %6242 = vmatprep.subr.bf16.mxu0 0
      %6243 = vmatpush1.bf16.msra.mxu0 %v4365
      %6244 = vmatprep.subr.bf16.mxu0 0
      %6245 = vmatpush1.bf16.msra.mxu0 %v4366
      %6246 = vmatprep.subr.bf16.mxu0 0
      %6247 = vmatpush1.bf16.msra.mxu0 %v4367
      %6248 = vmatprep.subr.bf16.mxu0 0
      %6249 = vmatpush1.bf16.msra.mxu0 %v4368
      %6250 = vmatprep.mubr.bf16.mxu0 %v1740
      %6251 = vmatmul.mubr.bf16.gmra.mrb[0].mxu0 %v1739
      %v6252 = vpop.f32.mrb[0].mxu0
      %v6253 = vadd.f32 %v6204, %v6252
      %v6254 = vpop.f32.mrb[0].mxu0
      %v6255 = vpop.f32.mrb[0].mxu0
      %v6256 = vadd.f32 %v6207, %v6255
      %v6257 = vpop.f32.mrb[0].mxu0
      %6258 = vmatprep.mubr.bf16.mxu0 %v1803
      %6259 = vmatmul.mubr.bf16.gmra.mrb[0].mxu0 %v1802
      %v6260 = vpop.f32.mrb[0].mxu0
      %v6261 = vadd.f32 %v6212, %v6260
      %v6262 = vpop.f32.mrb[0].mxu0
      %v6263 = vpop.f32.mrb[0].mxu0
      %v6264 = vadd.f32 %v6215, %v6263
      %v6265 = vpop.f32.mrb[0].mxu0
      %6266 = vdwg.mxu0
      %6267 = vmatprep.subr.bf16.mxu0 0
      %6268 = vmatpush1.bf16.msra.mxu0 %v4369
      %6269 = vmatprep.subr.bf16.mxu0 0
      %6270 = vmatpush1.bf16.msra.mxu0 %v4370
      %6271 = vmatprep.subr.bf16.mxu0 0
      %6272 = vmatpush1.bf16.msra.mxu0 %v4371
      %6273 = vmatprep.subr.bf16.mxu0 0
      %6274 = vmatpush1.bf16.msra.mxu0 %v4372
      %6275 = vmatprep.subr.bf16.mxu0 0
      %6276 = vmatpush1.bf16.msra.mxu0 %v4373
      %6277 = vmatprep.subr.bf16.mxu0 0
      %6278 = vmatpush1.bf16.msra.mxu0 %v4374
      %6279 = vmatprep.subr.bf16.mxu0 0
      %6280 = vmatpush1.bf16.msra.mxu0 %v4375
      %6281 = vmatprep.subr.bf16.mxu0 0
      %6282 = vmatpush1.bf16.msra.mxu0 %v4376
      %6283 = vmatprep.subr.bf16.mxu0 0
      %6284 = vmatpush1.bf16.msra.mxu0 %v4377
      %6285 = vmatprep.subr.bf16.mxu0 0
      %6286 = vmatpush1.bf16.msra.mxu0 %v4378
      %6287 = vmatprep.subr.bf16.mxu0 0
      %6288 = vmatpush1.bf16.msra.mxu0 %v4379
      %6289 = vmatprep.subr.bf16.mxu0 0
      %6290 = vmatpush1.bf16.msra.mxu0 %v4380
      %6291 = vmatprep.subr.bf16.mxu0 0
      %6292 = vmatpush1.bf16.msra.mxu0 %v4381
      %6293 = vmatprep.subr.bf16.mxu0 0
      %6294 = vmatpush1.bf16.msra.mxu0 %v4382
      %6295 = vmatprep.subr.bf16.mxu0 0
      %6296 = vmatpush1.bf16.msra.mxu0 %v4383
      %6297 = vmatprep.subr.bf16.mxu0 0
      %6298 = vmatpush1.bf16.msra.mxu0 %v4384
      %6299 = vmatprep.mubr.bf16.mxu0 %v1742
      %6300 = vmatmul.mubr.bf16.gmra.mrb[0].mxu0 %v1741
      %v6301 = vpop.f32.mrb[0].mxu0
      %v6302 = vadd.f32 %v6253, %v6301
      %v6303 = vpop.f32.mrb[0].mxu0
      %v6304 = vpop.f32.mrb[0].mxu0
      %v6305 = vadd.f32 %v6256, %v6304
      %v6306 = vpop.f32.mrb[0].mxu0
      %6307 = vmatprep.mubr.bf16.mxu0 %v1805
      %6308 = vmatmul.mubr.bf16.gmra.mrb[0].mxu0 %v1804
      %v6309 = vpop.f32.mrb[0].mxu0
      %v6310 = vadd.f32 %v6261, %v6309
      %v6311 = vpop.f32.mrb[0].mxu0
      %v6312 = vpop.f32.mrb[0].mxu0
      %v6313 = vadd.f32 %v6264, %v6312
      %v6314 = vpop.f32.mrb[0].mxu0
      %6315 = vdwg.mxu0
      %6316 = vmatprep.subr.bf16.mxu0 0
      %6317 = vmatpush1.bf16.msra.mxu0 %v4385
      %6318 = vmatprep.subr.bf16.mxu0 0
      %6319 = vmatpush1.bf16.msra.mxu0 %v4386
      %6320 = vmatprep.subr.bf16.mxu0 0
      %6321 = vmatpush1.bf16.msra.mxu0 %v4387
      %6322 = vmatprep.subr.bf16.mxu0 0
      %6323 = vmatpush1.bf16.msra.mxu0 %v4388
      %6324 = vmatprep.subr.bf16.mxu0 0
      %6325 = vmatpush1.bf16.msra.mxu0 %v4389
      %6326 = vmatprep.subr.bf16.mxu0 0
      %6327 = vmatpush1.bf16.msra.mxu0 %v4390
      %6328 = vmatprep.subr.bf16.mxu0 0
      %6329 = vmatpush1.bf16.msra.mxu0 %v4391
      %6330 = vmatprep.subr.bf16.mxu0 0
      %6331 = vmatpush1.bf16.msra.mxu0 %v4392
      %6332 = vmatprep.subr.bf16.mxu0 0
      %6333 = vmatpush1.bf16.msra.mxu0 %v4393
      %6334 = vmatprep.subr.bf16.mxu0 0
      %6335 = vmatpush1.bf16.msra.mxu0 %v4394
      %6336 = vmatprep.subr.bf16.mxu0 0
      %6337 = vmatpush1.bf16.msra.mxu0 %v4395
      %6338 = vmatprep.subr.bf16.mxu0 0
      %6339 = vmatpush1.bf16.msra.mxu0 %v4396
      %6340 = vmatprep.subr.bf16.mxu0 0
      %6341 = vmatpush1.bf16.msra.mxu0 %v4397
      %6342 = vmatprep.subr.bf16.mxu0 0
      %6343 = vmatpush1.bf16.msra.mxu0 %v4398
      %6344 = vmatprep.subr.bf16.mxu0 0
      %6345 = vmatpush1.bf16.msra.mxu0 %v4399
      %6346 = vmatprep.subr.bf16.mxu0 0
      %6347 = vmatpush1.bf16.msra.mxu0 %v4400
      %6348 = vmatprep.mubr.bf16.mxu0 %v1744
      %6349 = vmatmul.mubr.bf16.gmra.mrb[0].mxu0 %v1743
      %v6350 = vpop.f32.mrb[0].mxu0
      %v6351 = vadd.f32 %v6302, %v6350
      %v6352 = vpop.f32.mrb[0].mxu0
      %v6353 = vpop.f32.mrb[0].mxu0
      %v6354 = vadd.f32 %v6305, %v6353
      %v6355 = vpop.f32.mrb[0].mxu0
      %6356 = vmatprep.mubr.bf16.mxu0 %v1807
      %6357 = vmatmul.mubr.bf16.gmra.mrb[0].mxu0 %v1806
      %v6358 = vpop.f32.mrb[0].mxu0
      %v6359 = vadd.f32 %v6310, %v6358
      %v6360 = vpop.f32.mrb[0].mxu0
      %v6361 = vpop.f32.mrb[0].mxu0
      %v6362 = vadd.f32 %v6313, %v6361
      %v6363 = vpop.f32.mrb[0].mxu0
      %6364 = vdwg.mxu0
      %6365 = vmatprep.subr.bf16.mxu0 0
      %6366 = vmatpush1.bf16.msra.mxu0 %v4401
      %6367 = vmatprep.subr.bf16.mxu0 0
      %6368 = vmatpush1.bf16.msra.mxu0 %v4402
      %6369 = vmatprep.subr.bf16.mxu0 0
      %6370 = vmatpush1.bf16.msra.mxu0 %v4403
      %6371 = vmatprep.subr.bf16.mxu0 0
      %6372 = vmatpush1.bf16.msra.mxu0 %v4404
      %6373 = vmatprep.subr.bf16.mxu0 0
      %6374 = vmatpush1.bf16.msra.mxu0 %v4405
      %6375 = vmatprep.subr.bf16.mxu0 0
      %6376 = vmatpush1.bf16.msra.mxu0 %v4406
      %6377 = vmatprep.subr.bf16.mxu0 0
      %6378 = vmatpush1.bf16.msra.mxu0 %v4407
      %6379 = vmatprep.subr.bf16.mxu0 0
      %6380 = vmatpush1.bf16.msra.mxu0 %v4408
      %6381 = vmatprep.subr.bf16.mxu0 0
      %6382 = vmatpush1.bf16.msra.mxu0 %v4409
      %6383 = vmatprep.subr.bf16.mxu0 0
      %6384 = vmatpush1.bf16.msra.mxu0 %v4410
      %6385 = vmatprep.subr.bf16.mxu0 0
      %6386 = vmatpush1.bf16.msra.mxu0 %v4411
      %6387 = vmatprep.subr.bf16.mxu0 0
      %6388 = vmatpush1.bf16.msra.mxu0 %v4412
      %6389 = vmatprep.subr.bf16.mxu0 0
      %6390 = vmatpush1.bf16.msra.mxu0 %v4413
      %6391 = vmatprep.subr.bf16.mxu0 0
      %6392 = vmatpush1.bf16.msra.mxu0 %v4414
      %6393 = vmatprep.subr.bf16.mxu0 0
      %6394 = vmatpush1.bf16.msra.mxu0 %v4415
      %6395 = vmatprep.subr.bf16.mxu0 0
      %6396 = vmatpush1.bf16.msra.mxu0 %v4416
      %6397 = vmatprep.mubr.bf16.mxu0 %v1746
      %6398 = vmatmul.mubr.bf16.gmra.mrb[0].mxu0 %v1745
      %v6399 = vpop.f32.mrb[0].mxu0
      %v6400 = vadd.f32 %v6351, %v6399
      %v6401 = vpop.f32.mrb[0].mxu0
      %v6402 = vpop.f32.mrb[0].mxu0
      %v6403 = vadd.f32 %v6354, %v6402
      %v6404 = vpop.f32.mrb[0].mxu0
      %6405 = vmatprep.mubr.bf16.mxu0 %v1809
      %6406 = vmatmul.mubr.bf16.gmra.mrb[0].mxu0 %v1808
      %v6407 = vpop.f32.mrb[0].mxu0
      %v6408 = vadd.f32 %v6359, %v6407
      %v6409 = vpop.f32.mrb[0].mxu0
      %v6410 = vpop.f32.mrb[0].mxu0
      %v6411 = vadd.f32 %v6362, %v6410
      %v6412 = vpop.f32.mrb[0].mxu0
      %6413 = vdwg.mxu0
      %6414 = vmatprep.subr.bf16.mxu0 0
      %6415 = vmatpush1.bf16.msra.mxu0 %v4417
      %6416 = vmatprep.subr.bf16.mxu0 0
      %6417 = vmatpush1.bf16.msra.mxu0 %v4418
      %6418 = vmatprep.subr.bf16.mxu0 0
      %6419 = vmatpush1.bf16.msra.mxu0 %v4419
      %6420 = vmatprep.subr.bf16.mxu0 0
      %6421 = vmatpush1.bf16.msra.mxu0 %v4420
      %6422 = vmatprep.subr.bf16.mxu0 0
      %6423 = vmatpush1.bf16.msra.mxu0 %v4421
      %6424 = vmatprep.subr.bf16.mxu0 0
      %6425 = vmatpush1.bf16.msra.mxu0 %v4422
      %6426 = vmatprep.subr.bf16.mxu0 0
      %6427 = vmatpush1.bf16.msra.mxu0 %v4423
      %6428 = vmatprep.subr.bf16.mxu0 0
      %6429 = vmatpush1.bf16.msra.mxu0 %v4424
      %6430 = vmatprep.subr.bf16.mxu0 0
      %6431 = vmatpush1.bf16.msra.mxu0 %v4425
      %6432 = vmatprep.subr.bf16.mxu0 0
      %6433 = vmatpush1.bf16.msra.mxu0 %v4426
      %6434 = vmatprep.subr.bf16.mxu0 0
      %6435 = vmatpush1.bf16.msra.mxu0 %v4427
      %6436 = vmatprep.subr.bf16.mxu0 0
      %6437 = vmatpush1.bf16.msra.mxu0 %v4428
      %6438 = vmatprep.subr.bf16.mxu0 0
      %6439 = vmatpush1.bf16.msra.mxu0 %v4429
      %6440 = vmatprep.subr.bf16.mxu0 0
      %6441 = vmatpush1.bf16.msra.mxu0 %v4430
      %6442 = vmatprep.subr.bf16.mxu0 0
      %6443 = vmatpush1.bf16.msra.mxu0 %v4431
      %6444 = vmatprep.subr.bf16.mxu0 0
      %6445 = vmatpush1.bf16.msra.mxu0 %v4432
      %6446 = vmatprep.mubr.bf16.mxu0 %v1748
      %6447 = vmatmul.mubr.bf16.gmra.mrb[0].mxu0 %v1747
      %v6448 = vpop.f32.mrb[0].mxu0
      %v6449 = vadd.f32 %v6400, %v6448
      %v6450 = vpop.f32.mrb[0].mxu0
      %v6451 = vpop.f32.mrb[0].mxu0
      %v6452 = vadd.f32 %v6403, %v6451
      %v6453 = vpop.f32.mrb[0].mxu0
      %6454 = vmatprep.mubr.bf16.mxu0 %v1811
      %6455 = vmatmul.mubr.bf16.gmra.mrb[0].mxu0 %v1810
      %v6456 = vpop.f32.mrb[0].mxu0
      %v6457 = vadd.f32 %v6408, %v6456
      %v6458 = vpop.f32.mrb[0].mxu0
      %v6459 = vpop.f32.mrb[0].mxu0
      %v6460 = vadd.f32 %v6411, %v6459
      %v6461 = vpop.f32.mrb[0].mxu0
      %6462 = vdwg.mxu0
      %6463 = vmatprep.subr.bf16.mxu0 0
      %6464 = vmatpush1.bf16.msra.mxu0 %v4433
      %6465 = vmatprep.subr.bf16.mxu0 0
      %6466 = vmatpush1.bf16.msra.mxu0 %v4434
      %6467 = vmatprep.subr.bf16.mxu0 0
      %6468 = vmatpush1.bf16.msra.mxu0 %v4435
      %6469 = vmatprep.subr.bf16.mxu0 0
      %6470 = vmatpush1.bf16.msra.mxu0 %v4436
      %6471 = vmatprep.subr.bf16.mxu0 0
      %6472 = vmatpush1.bf16.msra.mxu0 0
      %6473 = vmatprep.subr.bf16.mxu0 0
      %6474 = vmatpush1.bf16.msra.mxu0 0
      %6475 = vmatprep.subr.bf16.mxu0 0
      %6476 = vmatpush1.bf16.msra.mxu0 0
      %6477 = vmatprep.subr.bf16.mxu0 0
      %6478 = vmatpush1.bf16.msra.mxu0 0
      %6479 = vmatprep.subr.bf16.mxu0 0
      %6480 = vmatpush1.bf16.msra.mxu0 0
      %6481 = vmatprep.subr.bf16.mxu0 0
      %6482 = vmatpush1.bf16.msra.mxu0 0
      %6483 = vmatprep.subr.bf16.mxu0 0
      %6484 = vmatpush1.bf16.msra.mxu0 0
      %6485 = vmatprep.subr.bf16.mxu0 0
      %6486 = vmatpush1.bf16.msra.mxu0 0
      %6487 = vmatprep.subr.bf16.mxu0 0
      %6488 = vmatpush1.bf16.msra.mxu0 0
      %6489 = vmatprep.subr.bf16.mxu0 0
      %6490 = vmatpush1.bf16.msra.mxu0 0
      %6491 = vmatprep.subr.bf16.mxu0 0
      %6492 = vmatpush1.bf16.msra.mxu0 0
      %6493 = vmatprep.subr.bf16.mxu0 0
      %6494 = vmatpush1.bf16.msra.mxu0 0
      %6495 = vmatprep.mubr.bf16.mxu0 0
      %6496 = vmatmul.mubr.bf16.gmra.mrb[0].mxu0 %v4939
      %v6497 = vpop.f32.mrb[0].mxu0
      %v6498 = vadd.f32 %v6449, %v6497
      %v6499 = vpop.f32.mrb[0].mxu0
      %v6500 = vpop.f32.mrb[0].mxu0
      %v6501 = vadd.f32 %v6452, %v6500
      %v6502 = vpop.f32.mrb[0].mxu0
      %6503 = vmatprep.mubr.bf16.mxu0 0
      %6504 = vmatmul.mubr.bf16.gmra.mrb[0].mxu0 %v4942
      %v6505 = vpop.f32.mrb[0].mxu0
      %v6506 = vadd.f32 %v6457, %v6505
      %v6507 = vpop.f32.mrb[0].mxu0
      %v6508 = vpop.f32.mrb[0].mxu0
      %v6509 = vadd.f32 %v6460, %v6508
      %v6510 = vpop.f32.mrb[0].mxu0
      %6511 = vdwg.mxu0
      %v6512 = vadd.f32 %v6498, %v6501
      %v6513 = vadd.f32 %v6512, %v6506
      %vm6514 = vcmask 1042432
      %v6515 = vsel %vm6514, %v6509, 0.0
      %v6516 = vadd.f32 %v6513, %v6515
      %v6517 = vrot.slane %v6516, 4
      %v6518 = vadd.f32 %v6516, %v6517
      %v6519 = vrot.slane %v6518, 2
      %v6520 = vadd.f32 %v6518, %v6519
      %v6521 = vrot.slane %v6520, 1
      %v6522 = vadd.f32 %v6520, %v6521
      %v6523 = vrcp.pop 27.0
      %v6524 = vmul.f32 %v6522, %v6523
      %v6525 = vsub.f32 %v6498, %v6524
      %v6526 = vsub.f32 %v6501, %v6524
      %v6527 = vsub.f32 %v6506, %v6524
      %v6528 = vsub.f32 %v6509, %v6524
      %v6529 = vmul.f32 %v6525, %v6525
      %v6530 = vmul.f32 %v6526, %v6526
      %v6531 = vmul.f32 %v6527, %v6527
      %v6532 = vmul.f32 %v6528, %v6528
      %v6533 = vadd.f32 %v6529, %v6530
      %v6534 = vadd.f32 %v6533, %v6531
      %v6535 = vsel %vm6514, %v6532, 0.0
      %v6536 = vadd.f32 %v6534, %v6535
      %v6537 = vrot.slane %v6536, 4
      %v6538 = vadd.f32 %v6536, %v6537
      %v6539 = vrot.slane %v6538, 2
      %v6540 = vadd.f32 %v6538, %v6539
      %v6541 = vrot.slane %v6540, 1
      %v6542 = vadd.f32 %v6540, %v6541
      %v6543 = vmul.f32 %v6542, %v6523
      %v6544 = vadd.f32 %v6543, 1e-05
      %v6545 = vrsqrt.pop %v6544
      %v6546 = vmul.f32 %v6525, %v6545
      %v6547 = vmul.f32 %v6526, %v6545
      %v6548 = vmul.f32 %v6527, %v6545
      %v6549 = vmul.f32 %v6528, %v6545
      %vm6550 = vcmp.ge.f32.partialorder %v6546, 0.0
      %vm6551 = vcmp.ge.f32.partialorder %v6547, 0.0
      %vm6552 = vcmp.ge.f32.partialorder %v6548, 0.0
      %vm6553 = vcmp.ge.f32.partialorder %v6549, 0.0
      %v6554 = vmul.f32 %v6546, 0.2
      %v6555 = vmul.f32 %v6547, 0.2
      %v6556 = vmul.f32 %v6548, 0.2
      %v6557 = vmul.f32 %v6549, 0.2
      %v6558 = vsel %vm6550, %v6546, %v6554
      %v6559 = vsel %vm6551, %v6547, %v6555
      %v6560 = vsel %vm6552, %v6548, %v6556
      %v6561 = vsel %vm6553, %v6549, %v6557
      %6562 = vst [vmem:[%s170] sm:$0xff] %v6558
      %6563 = vst [vmem:[%s170 + $0x8] sm:$0xff] %v6559
      %6564 = vst [vmem:[%s170 + $0x10] sm:$0xff] %v6560
      %6565 = vst [vmem:[%s170 + $0x18] sm:$0x7] %v6561
      %p6566 = scmp.lt.s32.totalorder %s14, 1
      %s6567 = scalar_select %p6566, %s14, 1
      %s6568 = smul.addr %s6567, 4
      %s6569 = smul.addr %s6568, 8
      %s6570 = scalar_lea.vmem %s3, %s6569
      // Predicated region
      $region33: #{discriminator_forward.4} parent=31 // pred_check
        %p6571 = pneg %p100
      $region34: #{discriminator_forward.4} parent=31 // pred_check_branch
        %6573 = sbr.rel (%p6571) target = $region36
      $region35: #{discriminator_forward.4} parent=31 // pred_region
        _
      $region36: #{discriminator_forward.4} parent=31 // pred_fallthru
        _
    $region32: #{discriminator_forward.4} parent=5 // pred_fallthru
      _
    %p6574 = scmp.le.s32.totalorder 2, %s9
    // Predicated region
    $region37: #{discriminator_forward.4} parent=5 // pred_check
      %p6575 = pneg %p6574
    $region38: #{discriminator_forward.4} parent=5 // pred_check_branch
      %6577 = sbr.rel (%p6575) target = $region40
    $region39: #{discriminator_forward.4} parent=5 // pred_region
      %s6578 = ssub.s32 %s9, 2
      // Predicated region
      $region41: #{discriminator_forward.4} parent=39 // pred_check
        %p6579 = pneg %p106
      $region42: #{discriminator_forward.4} parent=39 // pred_check_branch
        %6581 = sbr.rel (%p6579) target = $region44
      $region43: #{discriminator_forward.4} parent=39 // pred_region
        %p6582 = scmp.lt.s32.totalorder %s15, 1
        %s6583 = scalar_select %p6582, %s15, 1
        %s6584 = smul.addr %s6583, 4
        %s6585 = smul.addr %s6584, 8
        %s6586 = scalar_lea.vmem %s3, %s6585
      $region44: #{discriminator_forward.4} parent=39 // pred_fallthru
        _
    $region40: #{discriminator_forward.4} parent=5 // pred_fallthru
      _
  $region6: #{discriminator_forward.4} parent=0 // loop_footer
    %s13 = sadd.s32 1, %s9
  $region7: #{discriminator_forward.4} parent=0 // loop_footer_branch
    %8 = sbr.rel target = $region3
  $region8: #{discriminator_forward.4} parent=0 // loop_exit
    _

// kernel: discriminator_forward.5
$region0: #{discriminator_forward.5}
  #allocation0 [shape = 'u32[]', space=smem, size = 0x4, offset = 0x4, fixed_abs, tag = 'smem constant byte address 0x4 - core index']
  #allocation1 [shape = 'u32[144,128]{1,0:T(1,128)}', space=vmem, size = 0x12000, scoped, tag = 'internal scratch']
  %s0 = inlined_call_operand.vmem [shape: f32[4,15360], index: 0, kind: input, shape index: {}]
  %s1 = inlined_call_operand.vmem [shape: f32[1,15360], index: 1, kind: input, shape index: {}]
  %s2 = inlined_call_operand.vmem [shape: f32[4,1], index: 2, kind: output, shape index: {}]
  %s3 = sld [smem:[#allocation0]]
  $region18: #{discriminator_forward.5} parent=0
    _
  %s5 = ssub.s32 1, %s3
  %s6 = scalar_select 0, %s5, %s3
  // Predicated region
  $region2: #{discriminator_forward.5} parent=0 // pred_check
    _
  $region3: #{discriminator_forward.5} parent=0 // pred_check_branch
    %8 = sbr.rel (0) target = $region5
  $region4: #{discriminator_forward.5} parent=0 // pred_region
    _
  $region5: #{discriminator_forward.5} parent=0 // pred_fallthru
    _
  // Predicated region
  $region6: #{discriminator_forward.5} parent=0 // pred_check
    _
  $region7: #{discriminator_forward.5} parent=0 // pred_check_branch
    %10 = sbr.rel (0) target = $region9
  $region8: #{discriminator_forward.5} parent=0 // pred_region
    _
  $region9: #{discriminator_forward.5} parent=0 // pred_fallthru
    _
  %v11 = vld [vmem:[%s0] sm:$0xff]
  %v12 = vld [vmem:[%s0 + $0x8] sm:$0xff]
  %v13 = vld [vmem:[%s0 + $0x10] sm:$0xff]
  %v14 = vld [vmem:[%s0 + $0x18] sm:$0xff]
  %v15 = vld [vmem:[%s0 + $0x20] sm:$0xff]
  %v16 = vld [vmem:[%s0 + $0x28] sm:$0xff]
  %v17 = vld [vmem:[%s0 + $0x30] sm:$0xff]
  %v18 = vld [vmem:[%s0 + $0x38] sm:$0xff]
  %v19 = vld [vmem:[%s0 + $0x40] sm:$0xff]
  %v20 = vld [vmem:[%s0 + $0x48] sm:$0xff]
  %v21 = vld [vmem:[%s0 + $0x50] sm:$0xff]
  %v22 = vld [vmem:[%s0 + $0x58] sm:$0xff]
  %v23 = vld [vmem:[%s0 + $0x60] sm:$0xff]
  %v24 = vld [vmem:[%s0 + $0x68] sm:$0xff]
  %v25 = vld [vmem:[%s0 + $0x70] sm:$0xff]
  %v26 = vld [vmem:[%s0 + $0x78] sm:$0xff]
  %v27 = vld [vmem:[%s0 + $0x80] sm:$0xff]
  %v28 = vld [vmem:[%s0 + $0x88] sm:$0xff]
  %v29 = vld [vmem:[%s0 + $0x90] sm:$0xff]
  %v30 = vld [vmem:[%s0 + $0x98] sm:$0xff]
  %v31 = vld [vmem:[%s0 + $0xa0] sm:$0xff]
  %v32 = vld [vmem:[%s0 + $0xa8] sm:$0xff]
  %v33 = vld [vmem:[%s0 + $0xb0] sm:$0xff]
  %v34 = vld [vmem:[%s0 + $0xb8] sm:$0xff]
  %v35 = vld [vmem:[%s0 + $0xc0] sm:$0xff]
  %v36 = vld [vmem:[%s0 + $0xc8] sm:$0xff]
  %v37 = vld [vmem:[%s0 + $0xd0] sm:$0xff]
  %v38 = vld [vmem:[%s0 + $0xd8] sm:$0xff]
  %v39 = vld [vmem:[%s0 + $0xe0] sm:$0xff]
  %v40 = vld [vmem:[%s0 + $0xe8] sm:$0xff]
  %v41 = vld [vmem:[%s0 + $0xf0] sm:$0xff]
  %v42 = vld [vmem:[%s0 + $0xf8] sm:$0xff]
  %v43 = vld [vmem:[%s0 + $0x100] sm:$0xff]
  %v44 = vld [vmem:[%s0 + $0x108] sm:$0xff]
  %v45 = vld [vmem:[%s0 + $0x110] sm:$0xff]
  %v46 = vld [vmem:[%s0 + $0x118] sm:$0xff]
  %v47 = vld [vmem:[%s0 + $0x120] sm:$0xff]
  %v48 = vld [vmem:[%s0 + $0x128] sm:$0xff]
  %v49 = vld [vmem:[%s0 + $0x130] sm:$0xff]
  %v50 = vld [vmem:[%s0 + $0x138] sm:$0xff]
  %v51 = vld [vmem:[%s0 + $0x140] sm:$0xff]
  %v52 = vld [vmem:[%s0 + $0x148] sm:$0xff]
  %v53 = vld [vmem:[%s0 + $0x150] sm:$0xff]
  %v54 = vld [vmem:[%s0 + $0x158] sm:$0xff]
  %v55 = vld [vmem:[%s0 + $0x160] sm:$0xff]
  %v56 = vld [vmem:[%s0 + $0x168] sm:$0xff]
  %v57 = vld [vmem:[%s0 + $0x170] sm:$0xff]
  %v58 = vld [vmem:[%s0 + $0x178] sm:$0xff]
  %v59 = vld [vmem:[%s0 + $0x180] sm:$0xff]
  %v60 = vld [vmem:[%s0 + $0x188] sm:$0xff]
  %v61 = vld [vmem:[%s0 + $0x190] sm:$0xff]
  %v62 = vld [vmem:[%s0 + $0x198] sm:$0xff]
  %v63 = vld [vmem:[%s0 + $0x1a0] sm:$0xff]
  %v64 = vld [vmem:[%s0 + $0x1a8] sm:$0xff]
  %v65 = vld [vmem:[%s0 + $0x1b0] sm:$0xff]
  %v66 = vld [vmem:[%s0 + $0x1b8] sm:$0xff]
  %v67 = vld [vmem:[%s0 + $0x1c0] sm:$0xff]
  %v68 = vld [vmem:[%s0 + $0x1c8] sm:$0xff]
  %v69 = vld [vmem:[%s0 + $0x1d0] sm:$0xff]
  %v70 = vld [vmem:[%s0 + $0x1d8] sm:$0xff]
  %v71 = vld [vmem:[%s1] sm:$0xff]
  %v72 = vld [vmem:[%s1 + $0x8] sm:$0xff]
  %v73 = vld [vmem:[%s1 + $0x10] sm:$0xff]
  %v74 = vld [vmem:[%s1 + $0x18] sm:$0xff]
  %v75 = vld [vmem:[%s1 + $0x20] sm:$0xff]
  %v76 = vld [vmem:[%s1 + $0x28] sm:$0xff]
  %v77 = vld [vmem:[%s1 + $0x30] sm:$0xff]
  %v78 = vld [vmem:[%s1 + $0x38] sm:$0xff]
  %v79 = vld [vmem:[%s1 + $0x40] sm:$0xff]
  %v80 = vld [vmem:[%s1 + $0x48] sm:$0xff]
  %v81 = vld [vmem:[%s1 + $0x50] sm:$0xff]
  %v82 = vld [vmem:[%s1 + $0x58] sm:$0xff]
  %v83 = vld [vmem:[%s1 + $0x60] sm:$0xff]
  %v84 = vld [vmem:[%s1 + $0x68] sm:$0xff]
  %v85 = vld [vmem:[%s1 + $0x70] sm:$0xff]
  %v101 = vlaneseq
  %v102 = vshrl.u32 %v101, 7
  %v103 = vsub.s32 0, %v102
  %v104 = vrot.slane %v71, %v103
  %v105 = vlaneseq
  %v106 = vshrl.u32 %v105, 7
  %v107 = vsub.s32 1, %v106
  %v108 = vrot.slane %v71, %v107
  %v109 = vlaneseq
  %v110 = vshrl.u32 %v109, 7
  %v111 = vsub.s32 2, %v110
  %v112 = vrot.slane %v71, %v111
  %v113 = vlaneseq
  %v114 = vshrl.u32 %v113, 7
  %v115 = vsub.s32 3, %v114
  %v116 = vrot.slane %v71, %v115
  %v117 = vlaneseq
  %v118 = vshrl.u32 %v117, 7
  %v119 = vsub.s32 4, %v118
  %v120 = vrot.slane %v71, %v119
  %v121 = vlaneseq
  %v122 = vshrl.u32 %v121, 7
  %v123 = vsub.s32 5, %v122
  %v124 = vrot.slane %v71, %v123
  %v125 = vlaneseq
  %v126 = vshrl.u32 %v125, 7
  %v127 = vsub.s32 6, %v126
  %v128 = vrot.slane %v71, %v127
  %v129 = vlaneseq
  %v130 = vshrl.u32 %v129, 7
  %v131 = vsub.s32 7, %v130
  %v132 = vrot.slane %v71, %v131
  %v133 = vlaneseq
  %v134 = vshrl.u32 %v133, 7
  %v135 = vsub.s32 0, %v134
  %v136 = vrot.slane %v72, %v135
  %v137 = vlaneseq
  %v138 = vshrl.u32 %v137, 7
  %v139 = vsub.s32 1, %v138
  %v140 = vrot.slane %v72, %v139
  %v141 = vlaneseq
  %v142 = vshrl.u32 %v141, 7
  %v143 = vsub.s32 2, %v142
  %v144 = vrot.slane %v72, %v143
  %v145 = vlaneseq
  %v146 = vshrl.u32 %v145, 7
  %v147 = vsub.s32 3, %v146
  %v148 = vrot.slane %v72, %v147
  %v149 = vlaneseq
  %v150 = vshrl.u32 %v149, 7
  %v151 = vsub.s32 4, %v150
  %v152 = vrot.slane %v72, %v151
  %v153 = vlaneseq
  %v154 = vshrl.u32 %v153, 7
  %v155 = vsub.s32 5, %v154
  %v156 = vrot.slane %v72, %v155
  %v157 = vlaneseq
  %v158 = vshrl.u32 %v157, 7
  %v159 = vsub.s32 6, %v158
  %v160 = vrot.slane %v72, %v159
  %v161 = vlaneseq
  %v162 = vshrl.u32 %v161, 7
  %v163 = vsub.s32 7, %v162
  %v164 = vrot.slane %v72, %v163
  %v165 = vlaneseq
  %v166 = vshrl.u32 %v165, 7
  %v167 = vsub.s32 0, %v166
  %v168 = vrot.slane %v73, %v167
  %v169 = vlaneseq
  %v170 = vshrl.u32 %v169, 7
  %v171 = vsub.s32 1, %v170
  %v172 = vrot.slane %v73, %v171
  %v173 = vlaneseq
  %v174 = vshrl.u32 %v173, 7
  %v175 = vsub.s32 2, %v174
  %v176 = vrot.slane %v73, %v175
  %v177 = vlaneseq
  %v178 = vshrl.u32 %v177, 7
  %v179 = vsub.s32 3, %v178
  %v180 = vrot.slane %v73, %v179
  %v181 = vlaneseq
  %v182 = vshrl.u32 %v181, 7
  %v183 = vsub.s32 4, %v182
  %v184 = vrot.slane %v73, %v183
  %v185 = vlaneseq
  %v186 = vshrl.u32 %v185, 7
  %v187 = vsub.s32 5, %v186
  %v188 = vrot.slane %v73, %v187
  %v189 = vlaneseq
  %v190 = vshrl.u32 %v189, 7
  %v191 = vsub.s32 6, %v190
  %v192 = vrot.slane %v73, %v191
  %v193 = vlaneseq
  %v194 = vshrl.u32 %v193, 7
  %v195 = vsub.s32 7, %v194
  %v196 = vrot.slane %v73, %v195
  %v197 = vlaneseq
  %v198 = vshrl.u32 %v197, 7
  %v199 = vsub.s32 0, %v198
  %v200 = vrot.slane %v74, %v199
  %v201 = vlaneseq
  %v202 = vshrl.u32 %v201, 7
  %v203 = vsub.s32 1, %v202
  %v204 = vrot.slane %v74, %v203
  %v205 = vlaneseq
  %v206 = vshrl.u32 %v205, 7
  %v207 = vsub.s32 2, %v206
  %v208 = vrot.slane %v74, %v207
  %v209 = vlaneseq
  %v210 = vshrl.u32 %v209, 7
  %v211 = vsub.s32 3, %v210
  %v212 = vrot.slane %v74, %v211
  %v213 = vlaneseq
  %v214 = vshrl.u32 %v213, 7
  %v215 = vsub.s32 4, %v214
  %v216 = vrot.slane %v74, %v215
  %v217 = vlaneseq
  %v218 = vshrl.u32 %v217, 7
  %v219 = vsub.s32 5, %v218
  %v220 = vrot.slane %v74, %v219
  %v221 = vlaneseq
  %v222 = vshrl.u32 %v221, 7
  %v223 = vsub.s32 6, %v222
  %v224 = vrot.slane %v74, %v223
  %v225 = vlaneseq
  %v226 = vshrl.u32 %v225, 7
  %v227 = vsub.s32 7, %v226
  %v228 = vrot.slane %v74, %v227
  %v229 = vlaneseq
  %v230 = vshrl.u32 %v229, 7
  %v231 = vsub.s32 0, %v230
  %v232 = vrot.slane %v75, %v231
  %v233 = vlaneseq
  %v234 = vshrl.u32 %v233, 7
  %v235 = vsub.s32 1, %v234
  %v236 = vrot.slane %v75, %v235
  %v237 = vlaneseq
  %v238 = vshrl.u32 %v237, 7
  %v239 = vsub.s32 2, %v238
  %v240 = vrot.slane %v75, %v239
  %v241 = vlaneseq
  %v242 = vshrl.u32 %v241, 7
  %v243 = vsub.s32 3, %v242
  %v244 = vrot.slane %v75, %v243
  %v245 = vlaneseq
  %v246 = vshrl.u32 %v245, 7
  %v247 = vsub.s32 4, %v246
  %v248 = vrot.slane %v75, %v247
  %v249 = vlaneseq
  %v250 = vshrl.u32 %v249, 7
  %v251 = vsub.s32 5, %v250
  %v252 = vrot.slane %v75, %v251
  %v253 = vlaneseq
  %v254 = vshrl.u32 %v253, 7
  %v255 = vsub.s32 6, %v254
  %v256 = vrot.slane %v75, %v255
  %v257 = vlaneseq
  %v258 = vshrl.u32 %v257, 7
  %v259 = vsub.s32 7, %v258
  %v260 = vrot.slane %v75, %v259
  %v261 = vlaneseq
  %v262 = vshrl.u32 %v261, 7
  %v263 = vsub.s32 0, %v262
  %v264 = vrot.slane %v76, %v263
  %v265 = vlaneseq
  %v266 = vshrl.u32 %v265, 7
  %v267 = vsub.s32 1, %v266
  %v268 = vrot.slane %v76, %v267
  %v269 = vlaneseq
  %v270 = vshrl.u32 %v269, 7
  %v271 = vsub.s32 2, %v270
  %v272 = vrot.slane %v76, %v271
  %v273 = vlaneseq
  %v274 = vshrl.u32 %v273, 7
  %v275 = vsub.s32 3, %v274
  %v276 = vrot.slane %v76, %v275
  %v277 = vlaneseq
  %v278 = vshrl.u32 %v277, 7
  %v279 = vsub.s32 4, %v278
  %v280 = vrot.slane %v76, %v279
  %v281 = vlaneseq
  %v282 = vshrl.u32 %v281, 7
  %v283 = vsub.s32 5, %v282
  %v284 = vrot.slane %v76, %v283
  %v285 = vlaneseq
  %v286 = vshrl.u32 %v285, 7
  %v287 = vsub.s32 6, %v286
  %v288 = vrot.slane %v76, %v287
  %v289 = vlaneseq
  %v290 = vshrl.u32 %v289, 7
  %v291 = vsub.s32 7, %v290
  %v292 = vrot.slane %v76, %v291
  %v293 = vlaneseq
  %v294 = vshrl.u32 %v293, 7
  %v295 = vsub.s32 0, %v294
  %v296 = vrot.slane %v77, %v295
  %v297 = vlaneseq
  %v298 = vshrl.u32 %v297, 7
  %v299 = vsub.s32 1, %v298
  %v300 = vrot.slane %v77, %v299
  %v301 = vlaneseq
  %v302 = vshrl.u32 %v301, 7
  %v303 = vsub.s32 2, %v302
  %v304 = vrot.slane %v77, %v303
  %v305 = vlaneseq
  %v306 = vshrl.u32 %v305, 7
  %v307 = vsub.s32 3, %v306
  %v308 = vrot.slane %v77, %v307
  %v309 = vlaneseq
  %v310 = vshrl.u32 %v309, 7
  %v311 = vsub.s32 4, %v310
  %v312 = vrot.slane %v77, %v311
  %v313 = vlaneseq
  %v314 = vshrl.u32 %v313, 7
  %v315 = vsub.s32 5, %v314
  %v316 = vrot.slane %v77, %v315
  %v317 = vlaneseq
  %v318 = vshrl.u32 %v317, 7
  %v319 = vsub.s32 6, %v318
  %v320 = vrot.slane %v77, %v319
  %v321 = vlaneseq
  %v322 = vshrl.u32 %v321, 7
  %v323 = vsub.s32 7, %v322
  %v324 = vrot.slane %v77, %v323
  %v325 = vlaneseq
  %v326 = vshrl.u32 %v325, 7
  %v327 = vsub.s32 0, %v326
  %v328 = vrot.slane %v78, %v327
  %v329 = vlaneseq
  %v330 = vshrl.u32 %v329, 7
  %v331 = vsub.s32 1, %v330
  %v332 = vrot.slane %v78, %v331
  %v333 = vlaneseq
  %v334 = vshrl.u32 %v333, 7
  %v335 = vsub.s32 2, %v334
  %v336 = vrot.slane %v78, %v335
  %v337 = vlaneseq
  %v338 = vshrl.u32 %v337, 7
  %v339 = vsub.s32 3, %v338
  %v340 = vrot.slane %v78, %v339
  %v341 = vlaneseq
  %v342 = vshrl.u32 %v341, 7
  %v343 = vsub.s32 4, %v342
  %v344 = vrot.slane %v78, %v343
  %v345 = vlaneseq
  %v346 = vshrl.u32 %v345, 7
  %v347 = vsub.s32 5, %v346
  %v348 = vrot.slane %v78, %v347
  %v349 = vlaneseq
  %v350 = vshrl.u32 %v349, 7
  %v351 = vsub.s32 6, %v350
  %v352 = vrot.slane %v78, %v351
  %v353 = vlaneseq
  %v354 = vshrl.u32 %v353, 7
  %v355 = vsub.s32 7, %v354
  %v356 = vrot.slane %v78, %v355
  %v357 = vlaneseq
  %v358 = vshrl.u32 %v357, 7
  %v359 = vsub.s32 0, %v358
  %v360 = vrot.slane %v79, %v359
  %v361 = vlaneseq
  %v362 = vshrl.u32 %v361, 7
  %v363 = vsub.s32 1, %v362
  %v364 = vrot.slane %v79, %v363
  %v365 = vlaneseq
  %v366 = vshrl.u32 %v365, 7
  %v367 = vsub.s32 2, %v366
  %v368 = vrot.slane %v79, %v367
  %v369 = vlaneseq
  %v370 = vshrl.u32 %v369, 7
  %v371 = vsub.s32 3, %v370
  %v372 = vrot.slane %v79, %v371
  %v373 = vlaneseq
  %v374 = vshrl.u32 %v373, 7
  %v375 = vsub.s32 4, %v374
  %v376 = vrot.slane %v79, %v375
  %v377 = vlaneseq
  %v378 = vshrl.u32 %v377, 7
  %v379 = vsub.s32 5, %v378
  %v380 = vrot.slane %v79, %v379
  %v381 = vlaneseq
  %v382 = vshrl.u32 %v381, 7
  %v383 = vsub.s32 6, %v382
  %v384 = vrot.slane %v79, %v383
  %v385 = vlaneseq
  %v386 = vshrl.u32 %v385, 7
  %v387 = vsub.s32 7, %v386
  %v388 = vrot.slane %v79, %v387
  %v389 = vlaneseq
  %v390 = vshrl.u32 %v389, 7
  %v391 = vsub.s32 0, %v390
  %v392 = vrot.slane %v80, %v391
  %v393 = vlaneseq
  %v394 = vshrl.u32 %v393, 7
  %v395 = vsub.s32 1, %v394
  %v396 = vrot.slane %v80, %v395
  %v397 = vlaneseq
  %v398 = vshrl.u32 %v397, 7
  %v399 = vsub.s32 2, %v398
  %v400 = vrot.slane %v80, %v399
  %v401 = vlaneseq
  %v402 = vshrl.u32 %v401, 7
  %v403 = vsub.s32 3, %v402
  %v404 = vrot.slane %v80, %v403
  %v405 = vlaneseq
  %v406 = vshrl.u32 %v405, 7
  %v407 = vsub.s32 4, %v406
  %v408 = vrot.slane %v80, %v407
  %v409 = vlaneseq
  %v410 = vshrl.u32 %v409, 7
  %v411 = vsub.s32 5, %v410
  %v412 = vrot.slane %v80, %v411
  %v413 = vlaneseq
  %v414 = vshrl.u32 %v413, 7
  %v415 = vsub.s32 6, %v414
  %v416 = vrot.slane %v80, %v415
  %v417 = vlaneseq
  %v418 = vshrl.u32 %v417, 7
  %v419 = vsub.s32 7, %v418
  %v420 = vrot.slane %v80, %v419
  %v421 = vlaneseq
  %v422 = vshrl.u32 %v421, 7
  %v423 = vsub.s32 0, %v422
  %v424 = vrot.slane %v81, %v423
  %v425 = vlaneseq
  %v426 = vshrl.u32 %v425, 7
  %v427 = vsub.s32 1, %v426
  %v428 = vrot.slane %v81, %v427
  %v429 = vlaneseq
  %v430 = vshrl.u32 %v429, 7
  %v431 = vsub.s32 2, %v430
  %v432 = vrot.slane %v81, %v431
  %v433 = vlaneseq
  %v434 = vshrl.u32 %v433, 7
  %v435 = vsub.s32 3, %v434
  %v436 = vrot.slane %v81, %v435
  %v437 = vlaneseq
  %v438 = vshrl.u32 %v437, 7
  %v439 = vsub.s32 4, %v438
  %v440 = vrot.slane %v81, %v439
  %v441 = vlaneseq
  %v442 = vshrl.u32 %v441, 7
  %v443 = vsub.s32 5, %v442
  %v444 = vrot.slane %v81, %v443
  %v445 = vlaneseq
  %v446 = vshrl.u32 %v445, 7
  %v447 = vsub.s32 6, %v446
  %v448 = vrot.slane %v81, %v447
  %v449 = vlaneseq
  %v450 = vshrl.u32 %v449, 7
  %v451 = vsub.s32 7, %v450
  %v452 = vrot.slane %v81, %v451
  %v453 = vlaneseq
  %v454 = vshrl.u32 %v453, 7
  %v455 = vsub.s32 0, %v454
  %v456 = vrot.slane %v82, %v455
  %v457 = vlaneseq
  %v458 = vshrl.u32 %v457, 7
  %v459 = vsub.s32 1, %v458
  %v460 = vrot.slane %v82, %v459
  %v461 = vlaneseq
  %v462 = vshrl.u32 %v461, 7
  %v463 = vsub.s32 2, %v462
  %v464 = vrot.slane %v82, %v463
  %v465 = vlaneseq
  %v466 = vshrl.u32 %v465, 7
  %v467 = vsub.s32 3, %v466
  %v468 = vrot.slane %v82, %v467
  %v469 = vlaneseq
  %v470 = vshrl.u32 %v469, 7
  %v471 = vsub.s32 4, %v470
  %v472 = vrot.slane %v82, %v471
  %v473 = vlaneseq
  %v474 = vshrl.u32 %v473, 7
  %v475 = vsub.s32 5, %v474
  %v476 = vrot.slane %v82, %v475
  %v477 = vlaneseq
  %v478 = vshrl.u32 %v477, 7
  %v479 = vsub.s32 6, %v478
  %v480 = vrot.slane %v82, %v479
  %v481 = vlaneseq
  %v482 = vshrl.u32 %v481, 7
  %v483 = vsub.s32 7, %v482
  %v484 = vrot.slane %v82, %v483
  %v485 = vlaneseq
  %v486 = vshrl.u32 %v485, 7
  %v487 = vsub.s32 0, %v486
  %v488 = vrot.slane %v83, %v487
  %v489 = vlaneseq
  %v490 = vshrl.u32 %v489, 7
  %v491 = vsub.s32 1, %v490
  %v492 = vrot.slane %v83, %v491
  %v493 = vlaneseq
  %v494 = vshrl.u32 %v493, 7
  %v495 = vsub.s32 2, %v494
  %v496 = vrot.slane %v83, %v495
  %v497 = vlaneseq
  %v498 = vshrl.u32 %v497, 7
  %v499 = vsub.s32 3, %v498
  %v500 = vrot.slane %v83, %v499
  %v501 = vlaneseq
  %v502 = vshrl.u32 %v501, 7
  %v503 = vsub.s32 4, %v502
  %v504 = vrot.slane %v83, %v503
  %v505 = vlaneseq
  %v506 = vshrl.u32 %v505, 7
  %v507 = vsub.s32 5, %v506
  %v508 = vrot.slane %v83, %v507
  %v509 = vlaneseq
  %v510 = vshrl.u32 %v509, 7
  %v511 = vsub.s32 6, %v510
  %v512 = vrot.slane %v83, %v511
  %v513 = vlaneseq
  %v514 = vshrl.u32 %v513, 7
  %v515 = vsub.s32 7, %v514
  %v516 = vrot.slane %v83, %v515
  %v517 = vlaneseq
  %v518 = vshrl.u32 %v517, 7
  %v519 = vsub.s32 0, %v518
  %v520 = vrot.slane %v84, %v519
  %v521 = vlaneseq
  %v522 = vshrl.u32 %v521, 7
  %v523 = vsub.s32 1, %v522
  %v524 = vrot.slane %v84, %v523
  %v525 = vlaneseq
  %v526 = vshrl.u32 %v525, 7
  %v527 = vsub.s32 2, %v526
  %v528 = vrot.slane %v84, %v527
  %v529 = vlaneseq
  %v530 = vshrl.u32 %v529, 7
  %v531 = vsub.s32 3, %v530
  %v532 = vrot.slane %v84, %v531
  %v533 = vlaneseq
  %v534 = vshrl.u32 %v533, 7
  %v535 = vsub.s32 4, %v534
  %v536 = vrot.slane %v84, %v535
  %v537 = vlaneseq
  %v538 = vshrl.u32 %v537, 7
  %v539 = vsub.s32 5, %v538
  %v540 = vrot.slane %v84, %v539
  %v541 = vlaneseq
  %v542 = vshrl.u32 %v541, 7
  %v543 = vsub.s32 6, %v542
  %v544 = vrot.slane %v84, %v543
  %v545 = vlaneseq
  %v546 = vshrl.u32 %v545, 7
  %v547 = vsub.s32 7, %v546
  %v548 = vrot.slane %v84, %v547
  %v549 = vlaneseq
  %v550 = vshrl.u32 %v549, 7
  %v551 = vsub.s32 0, %v550
  %v552 = vrot.slane %v85, %v551
  %v553 = vlaneseq
  %v554 = vshrl.u32 %v553, 7
  %v555 = vsub.s32 1, %v554
  %v556 = vrot.slane %v85, %v555
  %v557 = vlaneseq
  %v558 = vshrl.u32 %v557, 7
  %v559 = vsub.s32 2, %v558
  %v560 = vrot.slane %v85, %v559
  %v561 = vlaneseq
  %v562 = vshrl.u32 %v561, 7
  %v563 = vsub.s32 3, %v562
  %v564 = vrot.slane %v85, %v563
  %v565 = vlaneseq
  %v566 = vshrl.u32 %v565, 7
  %v567 = vsub.s32 4, %v566
  %v568 = vrot.slane %v85, %v567
  %v569 = vlaneseq
  %v570 = vshrl.u32 %v569, 7
  %v571 = vsub.s32 5, %v570
  %v572 = vrot.slane %v85, %v571
  %v573 = vlaneseq
  %v574 = vshrl.u32 %v573, 7
  %v575 = vsub.s32 6, %v574
  %v576 = vrot.slane %v85, %v575
  %v577 = vlaneseq
  %v578 = vshrl.u32 %v577, 7
  %v579 = vsub.s32 7, %v578
  %v580 = vrot.slane %v85, %v579
  %v581 = vcombine.low %v104, %v108
  %v582 = vcombine.low %v112, %v116
  %v583 = vcombine.low %v120, %v124
  %v584 = vcombine.low %v128, %v132
  %v585 = vcombine.low %v136, %v140
  %v586 = vcombine.low %v144, %v148
  %v587 = vcombine.low %v152, %v156
  %v588 = vcombine.low %v160, %v164
  %v589 = vcombine.low %v168, %v172
  %v590 = vcombine.low %v176, %v180
  %v591 = vcombine.low %v184, %v188
  %v592 = vcombine.low %v192, %v196
  %v593 = vcombine.low %v200, %v204
  %v594 = vcombine.low %v208, %v212
  %v595 = vcombine.low %v216, %v220
  %v596 = vcombine.low %v224, %v228
  %v597 = vcombine.low %v232, %v236
  %v598 = vcombine.low %v240, %v244
  %v599 = vcombine.low %v248, %v252
  %v600 = vcombine.low %v256, %v260
  %v601 = vcombine.low %v264, %v268
  %v602 = vcombine.low %v272, %v276
  %v603 = vcombine.low %v280, %v284
  %v604 = vcombine.low %v288, %v292
  %v605 = vcombine.low %v296, %v300
  %v606 = vcombine.low %v304, %v308
  %v607 = vcombine.low %v312, %v316
  %v608 = vcombine.low %v320, %v324
  %v609 = vcombine.low %v328, %v332
  %v610 = vcombine.low %v336, %v340
  %v611 = vcombine.low %v344, %v348
  %v612 = vcombine.low %v352, %v356
  %v613 = vcombine.low %v360, %v364
  %v614 = vcombine.low %v368, %v372
  %v615 = vcombine.low %v376, %v380
  %v616 = vcombine.low %v384, %v388
  %v617 = vcombine.low %v392, %v396
  %v618 = vcombine.low %v400, %v404
  %v619 = vcombine.low %v408, %v412
  %v620 = vcombine.low %v416, %v420
  %v621 = vcombine.low %v424, %v428
  %v622 = vcombine.low %v432, %v436
  %v623 = vcombine.low %v440, %v444
  %v624 = vcombine.low %v448, %v452
  %v625 = vcombine.low %v456, %v460
  %v626 = vcombine.low %v464, %v468
  %v627 = vcombine.low %v472, %v476
  %v628 = vcombine.low %v480, %v484
  %v629 = vcombine.low %v488, %v492
  %v630 = vcombine.low %v496, %v500
  %v631 = vcombine.low %v504, %v508
  %v632 = vcombine.low %v512, %v516
  %v633 = vcombine.low %v520, %v524
  %v634 = vcombine.low %v528, %v532
  %v635 = vcombine.low %v536, %v540
  %v636 = vcombine.low %v544, %v548
  %v637 = vcombine.low %v552, %v556
  %v638 = vcombine.low %v560, %v564
  %v639 = vcombine.low %v568, %v572
  %v640 = vcombine.low %v576, %v580
  %v701 = vmul.f32 %v11, %v581
  %v702 = vmul.f32 %v12, %v582
  %v703 = vmul.f32 %v13, %v583
  %v704 = vmul.f32 %v14, %v584
  %v705 = vmul.f32 %v15, %v585
  %v706 = vmul.f32 %v16, %v586
  %v707 = vmul.f32 %v17, %v587
  %v708 = vmul.f32 %v18, %v588
  %v709 = vmul.f32 %v19, %v589
  %v710 = vmul.f32 %v20, %v590
  %v711 = vmul.f32 %v21, %v591
  %v712 = vmul.f32 %v22, %v592
  %v713 = vmul.f32 %v23, %v593
  %v714 = vmul.f32 %v24, %v594
  %v715 = vmul.f32 %v25, %v595
  %v716 = vmul.f32 %v26, %v596
  %v717 = vmul.f32 %v27, %v597
  %v718 = vmul.f32 %v28, %v598
  %v719 = vmul.f32 %v29, %v599
  %v720 = vmul.f32 %v30, %v600
  %v721 = vmul.f32 %v31, %v601
  %v722 = vmul.f32 %v32, %v602
  %v723 = vmul.f32 %v33, %v603
  %v724 = vmul.f32 %v34, %v604
  %v725 = vmul.f32 %v35, %v605
  %v726 = vmul.f32 %v36, %v606
  %v727 = vmul.f32 %v37, %v607
  %v728 = vmul.f32 %v38, %v608
  %v729 = vmul.f32 %v39, %v609
  %v730 = vmul.f32 %v40, %v610
  %v731 = vmul.f32 %v41, %v611
  %v732 = vmul.f32 %v42, %v612
  %v733 = vmul.f32 %v43, %v613
  %v734 = vmul.f32 %v44, %v614
  %v735 = vmul.f32 %v45, %v615
  %v736 = vmul.f32 %v46, %v616
  %v737 = vmul.f32 %v47, %v617
  %v738 = vmul.f32 %v48, %v618
  %v739 = vmul.f32 %v49, %v619
  %v740 = vmul.f32 %v50, %v620
  %v741 = vmul.f32 %v51, %v621
  %v742 = vmul.f32 %v52, %v622
  %v743 = vmul.f32 %v53, %v623
  %v744 = vmul.f32 %v54, %v624
  %v745 = vmul.f32 %v55, %v625
  %v746 = vmul.f32 %v56, %v626
  %v747 = vmul.f32 %v57, %v627
  %v748 = vmul.f32 %v58, %v628
  %v749 = vmul.f32 %v59, %v629
  %v750 = vmul.f32 %v60, %v630
  %v751 = vmul.f32 %v61, %v631
  %v752 = vmul.f32 %v62, %v632
  %v753 = vmul.f32 %v63, %v633
  %v754 = vmul.f32 %v64, %v634
  %v755 = vmul.f32 %v65, %v635
  %v756 = vmul.f32 %v66, %v636
  %v757 = vmul.f32 %v67, %v637
  %v758 = vmul.f32 %v68, %v638
  %v759 = vmul.f32 %v69, %v639
  %v760 = vmul.f32 %v70, %v640
  %v821 = vcombine.high %v701, %v701
  %v822 = vcombine.high %v702, %v702
  %v823 = vcombine.high %v703, %v703
  %v824 = vcombine.high %v704, %v704
  %v825 = vcombine.high %v705, %v705
  %v826 = vcombine.high %v706, %v706
  %v827 = vcombine.high %v707, %v707
  %v828 = vcombine.high %v708, %v708
  %v829 = vcombine.high %v709, %v709
  %v830 = vcombine.high %v710, %v710
  %v831 = vcombine.high %v711, %v711
  %v832 = vcombine.high %v712, %v712
  %v833 = vcombine.high %v713, %v713
  %v834 = vcombine.high %v714, %v714
  %v835 = vcombine.high %v715, %v715
  %v836 = vcombine.high %v716, %v716
  %v837 = vcombine.high %v717, %v717
  %v838 = vcombine.high %v718, %v718
  %v839 = vcombine.high %v719, %v719
  %v840 = vcombine.high %v720, %v720
  %v841 = vcombine.high %v721, %v721
  %v842 = vcombine.high %v722, %v722
  %v843 = vcombine.high %v723, %v723
  %v844 = vcombine.high %v724, %v724
  %v845 = vcombine.high %v725, %v725
  %v846 = vcombine.high %v726, %v726
  %v847 = vcombine.high %v727, %v727
  %v848 = vcombine.high %v728, %v728
  %v849 = vcombine.high %v729, %v729
  %v850 = vcombine.high %v730, %v730
  %v851 = vcombine.high %v731, %v731
  %v852 = vcombine.high %v732, %v732
  %v853 = vcombine.high %v733, %v733
  %v854 = vcombine.high %v734, %v734
  %v855 = vcombine.high %v735, %v735
  %v856 = vcombine.high %v736, %v736
  %v857 = vcombine.high %v737, %v737
  %v858 = vcombine.high %v738, %v738
  %v859 = vcombine.high %v739, %v739
  %v860 = vcombine.high %v740, %v740
  %v861 = vcombine.high %v741, %v741
  %v862 = vcombine.high %v742, %v742
  %v863 = vcombine.high %v743, %v743
  %v864 = vcombine.high %v744, %v744
  %v865 = vcombine.high %v745, %v745
  %v866 = vcombine.high %v746, %v746
  %v867 = vcombine.high %v747, %v747
  %v868 = vcombine.high %v748, %v748
  %v869 = vcombine.high %v749, %v749
  %v870 = vcombine.high %v750, %v750
  %v871 = vcombine.high %v751, %v751
  %v872 = vcombine.high %v752, %v752
  %v873 = vcombine.high %v753, %v753
  %v874 = vcombine.high %v754, %v754
  %v875 = vcombine.high %v755, %v755
  %v876 = vcombine.high %v756, %v756
  %v877 = vcombine.high %v757, %v757
  %v878 = vcombine.high %v758, %v758
  %v879 = vcombine.high %v759, %v759
  %v880 = vcombine.high %v760, %v760
  %vm941 = vcmask 1043456
  %v942 = vsel %vm941, %v701, 0.0
  %v943 = vsel %vm941, %v821, 0.0
  %v944 = vadd.f32 %v942, %v943
  %v945 = vsel %vm941, %v702, 0.0
  %v946 = vadd.f32 %v944, %v945
  %v947 = vsel %vm941, %v822, 0.0
  %v948 = vadd.f32 %v946, %v947
  %v949 = vsel %vm941, %v703, 0.0
  %v950 = vadd.f32 %v948, %v949
  %v951 = vsel %vm941, %v823, 0.0
  %v952 = vadd.f32 %v950, %v951
  %v953 = vsel %vm941, %v704, 0.0
  %v954 = vadd.f32 %v952, %v953
  %v955 = vsel %vm941, %v824, 0.0
  %v956 = vadd.f32 %v954, %v955
  %v957 = vsel %vm941, %v705, 0.0
  %v958 = vadd.f32 %v956, %v957
  %v959 = vsel %vm941, %v825, 0.0
  %v960 = vadd.f32 %v958, %v959
  %v961 = vsel %vm941, %v706, 0.0
  %v962 = vadd.f32 %v960, %v961
  %v963 = vsel %vm941, %v826, 0.0
  %v964 = vadd.f32 %v962, %v963
  %v965 = vsel %vm941, %v707, 0.0
  %v966 = vadd.f32 %v964, %v965
  %v967 = vsel %vm941, %v827, 0.0
  %v968 = vadd.f32 %v966, %v967
  %v969 = vsel %vm941, %v708, 0.0
  %v970 = vadd.f32 %v968, %v969
  %v971 = vsel %vm941, %v828, 0.0
  %v972 = vadd.f32 %v970, %v971
  %v973 = vsel %vm941, %v709, 0.0
  %v974 = vadd.f32 %v972, %v973
  %v975 = vsel %vm941, %v829, 0.0
  %v976 = vadd.f32 %v974, %v975
  %v977 = vsel %vm941, %v710, 0.0
  %v978 = vadd.f32 %v976, %v977
  %v979 = vsel %vm941, %v830, 0.0
  %v980 = vadd.f32 %v978, %v979
  %v981 = vsel %vm941, %v711, 0.0
  %v982 = vadd.f32 %v980, %v981
  %v983 = vsel %vm941, %v831, 0.0
  %v984 = vadd.f32 %v982, %v983
  %v985 = vsel %vm941, %v712, 0.0
  %v986 = vadd.f32 %v984, %v985
  %v987 = vsel %vm941, %v832, 0.0
  %v988 = vadd.f32 %v986, %v987
  %v989 = vsel %vm941, %v713, 0.0
  %v990 = vadd.f32 %v988, %v989
  %v991 = vsel %vm941, %v833, 0.0
  %v992 = vadd.f32 %v990, %v991
  %v993 = vsel %vm941, %v714, 0.0
  %v994 = vadd.f32 %v992, %v993
  %v995 = vsel %vm941, %v834, 0.0
  %v996 = vadd.f32 %v994, %v995
  %v997 = vsel %vm941, %v715, 0.0
  %v998 = vadd.f32 %v996, %v997
  %v999 = vsel %vm941, %v835, 0.0
  %v1000 = vadd.f32 %v998, %v999
  %v1001 = vsel %vm941, %v716, 0.0
  %v1002 = vadd.f32 %v1000, %v1001
  %v1003 = vsel %vm941, %v836, 0.0
  %v1004 = vadd.f32 %v1002, %v1003
  %v1005 = vsel %vm941, %v717, 0.0
  %v1006 = vadd.f32 %v1004, %v1005
  %v1007 = vsel %vm941, %v837, 0.0
  %v1008 = vadd.f32 %v1006, %v1007
  %v1009 = vsel %vm941, %v718, 0.0
  %v1010 = vadd.f32 %v1008, %v1009
  %v1011 = vsel %vm941, %v838, 0.0
  %v1012 = vadd.f32 %v1010, %v1011
  %v1013 = vsel %vm941, %v719, 0.0
  %v1014 = vadd.f32 %v1012, %v1013
  %v1015 = vsel %vm941, %v839, 0.0
  %v1016 = vadd.f32 %v1014, %v1015
  %v1017 = vsel %vm941, %v720, 0.0
  %v1018 = vadd.f32 %v1016, %v1017
  %v1019 = vsel %vm941, %v840, 0.0
  %v1020 = vadd.f32 %v1018, %v1019
  %v1021 = vsel %vm941, %v721, 0.0
  %v1022 = vadd.f32 %v1020, %v1021
  %v1023 = vsel %vm941, %v841, 0.0
  %v1024 = vadd.f32 %v1022, %v1023
  %v1025 = vsel %vm941, %v722, 0.0
  %v1026 = vadd.f32 %v1024, %v1025
  %v1027 = vsel %vm941, %v842, 0.0
  %v1028 = vadd.f32 %v1026, %v1027
  %v1029 = vsel %vm941, %v723, 0.0
  %v1030 = vadd.f32 %v1028, %v1029
  %v1031 = vsel %vm941, %v843, 0.0
  %v1032 = vadd.f32 %v1030, %v1031
  %v1033 = vsel %vm941, %v724, 0.0
  %v1034 = vadd.f32 %v1032, %v1033
  %v1035 = vsel %vm941, %v844, 0.0
  %v1036 = vadd.f32 %v1034, %v1035
  %v1037 = vsel %vm941, %v725, 0.0
  %v1038 = vadd.f32 %v1036, %v1037
  %v1039 = vsel %vm941, %v845, 0.0
  %v1040 = vadd.f32 %v1038, %v1039
  %v1041 = vsel %vm941, %v726, 0.0
  %v1042 = vadd.f32 %v1040, %v1041
  %v1043 = vsel %vm941, %v846, 0.0
  %v1044 = vadd.f32 %v1042, %v1043
  %v1045 = vsel %vm941, %v727, 0.0
  %v1046 = vadd.f32 %v1044, %v1045
  %v1047 = vsel %vm941, %v847, 0.0
  %v1048 = vadd.f32 %v1046, %v1047
  %v1049 = vsel %vm941, %v728, 0.0
  %v1050 = vadd.f32 %v1048, %v1049
  %v1051 = vsel %vm941, %v848, 0.0
  %v1052 = vadd.f32 %v1050, %v1051
  %v1053 = vsel %vm941, %v729, 0.0
  %v1054 = vadd.f32 %v1052, %v1053
  %v1055 = vsel %vm941, %v849, 0.0
  %v1056 = vadd.f32 %v1054, %v1055
  %v1057 = vsel %vm941, %v730, 0.0
  %v1058 = vadd.f32 %v1056, %v1057
  %v1059 = vsel %vm941, %v850, 0.0
  %v1060 = vadd.f32 %v1058, %v1059
  %v1061 = vsel %vm941, %v731, 0.0
  %v1062 = vadd.f32 %v1060, %v1061
  %v1063 = vsel %vm941, %v851, 0.0
  %v1064 = vadd.f32 %v1062, %v1063
  %v1065 = vsel %vm941, %v732, 0.0
  %v1066 = vadd.f32 %v1064, %v1065
  %v1067 = vsel %vm941, %v852, 0.0
  %v1068 = vadd.f32 %v1066, %v1067
  %v1069 = vsel %vm941, %v733, 0.0
  %v1070 = vadd.f32 %v1068, %v1069
  %v1071 = vsel %vm941, %v853, 0.0
  %v1072 = vadd.f32 %v1070, %v1071
  %v1073 = vsel %vm941, %v734, 0.0
  %v1074 = vadd.f32 %v1072, %v1073
  %v1075 = vsel %vm941, %v854, 0.0
  %v1076 = vadd.f32 %v1074, %v1075
  %v1077 = vsel %vm941, %v735, 0.0
  %v1078 = vadd.f32 %v1076, %v1077
  %v1079 = vsel %vm941, %v855, 0.0
  %v1080 = vadd.f32 %v1078, %v1079
  %v1081 = vsel %vm941, %v736, 0.0
  %v1082 = vadd.f32 %v1080, %v1081
  %v1083 = vsel %vm941, %v856, 0.0
  %v1084 = vadd.f32 %v1082, %v1083
  %v1085 = vsel %vm941, %v737, 0.0
  %v1086 = vadd.f32 %v1084, %v1085
  %v1087 = vsel %vm941, %v857, 0.0
  %v1088 = vadd.f32 %v1086, %v1087
  %v1089 = vsel %vm941, %v738, 0.0
  %v1090 = vadd.f32 %v1088, %v1089
  %v1091 = vsel %vm941, %v858, 0.0
  %v1092 = vadd.f32 %v1090, %v1091
  %v1093 = vsel %vm941, %v739, 0.0
  %v1094 = vadd.f32 %v1092, %v1093
  %v1095 = vsel %vm941, %v859, 0.0
  %v1096 = vadd.f32 %v1094, %v1095
  %v1097 = vsel %vm941, %v740, 0.0
  %v1098 = vadd.f32 %v1096, %v1097
  %v1099 = vsel %vm941, %v860, 0.0
  %v1100 = vadd.f32 %v1098, %v1099
  %v1101 = vsel %vm941, %v741, 0.0
  %v1102 = vadd.f32 %v1100, %v1101
  %v1103 = vsel %vm941, %v861, 0.0
  %v1104 = vadd.f32 %v1102, %v1103
  %v1105 = vsel %vm941, %v742, 0.0
  %v1106 = vadd.f32 %v1104, %v1105
  %v1107 = vsel %vm941, %v862, 0.0
  %v1108 = vadd.f32 %v1106, %v1107
  %v1109 = vsel %vm941, %v743, 0.0
  %v1110 = vadd.f32 %v1108, %v1109
  %v1111 = vsel %vm941, %v863, 0.0
  %v1112 = vadd.f32 %v1110, %v1111
  %v1113 = vsel %vm941, %v744, 0.0
  %v1114 = vadd.f32 %v1112, %v1113
  %v1115 = vsel %vm941, %v864, 0.0
  %v1116 = vadd.f32 %v1114, %v1115
  %v1117 = vsel %vm941, %v745, 0.0
  %v1118 = vadd.f32 %v1116, %v1117
  %v1119 = vsel %vm941, %v865, 0.0
  %v1120 = vadd.f32 %v1118, %v1119
  %v1121 = vsel %vm941, %v746, 0.0
  %v1122 = vadd.f32 %v1120, %v1121
  %v1123 = vsel %vm941, %v866, 0.0
  %v1124 = vadd.f32 %v1122, %v1123
  %v1125 = vsel %vm941, %v747, 0.0
  %v1126 = vadd.f32 %v1124, %v1125
  %v1127 = vsel %vm941, %v867, 0.0
  %v1128 = vadd.f32 %v1126, %v1127
  %v1129 = vsel %vm941, %v748, 0.0
  %v1130 = vadd.f32 %v1128, %v1129
  %v1131 = vsel %vm941, %v868, 0.0
  %v1132 = vadd.f32 %v1130, %v1131
  %v1133 = vsel %vm941, %v749, 0.0
  %v1134 = vadd.f32 %v1132, %v1133
  %v1135 = vsel %vm941, %v869, 0.0
  %v1136 = vadd.f32 %v1134, %v1135
  %v1137 = vsel %vm941, %v750, 0.0
  %v1138 = vadd.f32 %v1136, %v1137
  %v1139 = vsel %vm941, %v870, 0.0
  %v1140 = vadd.f32 %v1138, %v1139
  %v1141 = vsel %vm941, %v751, 0.0
  %v1142 = vadd.f32 %v1140, %v1141
  %v1143 = vsel %vm941, %v871, 0.0
  %v1144 = vadd.f32 %v1142, %v1143
  %v1145 = vsel %vm941, %v752, 0.0
  %v1146 = vadd.f32 %v1144, %v1145
  %v1147 = vsel %vm941, %v872, 0.0
  %v1148 = vadd.f32 %v1146, %v1147
  %v1149 = vsel %vm941, %v753, 0.0
  %v1150 = vadd.f32 %v1148, %v1149
  %v1151 = vsel %vm941, %v873, 0.0
  %v1152 = vadd.f32 %v1150, %v1151
  %v1153 = vsel %vm941, %v754, 0.0
  %v1154 = vadd.f32 %v1152, %v1153
  %v1155 = vsel %vm941, %v874, 0.0
  %v1156 = vadd.f32 %v1154, %v1155
  %v1157 = vsel %vm941, %v755, 0.0
  %v1158 = vadd.f32 %v1156, %v1157
  %v1159 = vsel %vm941, %v875, 0.0
  %v1160 = vadd.f32 %v1158, %v1159
  %v1161 = vsel %vm941, %v756, 0.0
  %v1162 = vadd.f32 %v1160, %v1161
  %v1163 = vsel %vm941, %v876, 0.0
  %v1164 = vadd.f32 %v1162, %v1163
  %v1165 = vsel %vm941, %v757, 0.0
  %v1166 = vadd.f32 %v1164, %v1165
  %v1167 = vsel %vm941, %v877, 0.0
  %v1168 = vadd.f32 %v1166, %v1167
  %v1169 = vsel %vm941, %v758, 0.0
  %v1170 = vadd.f32 %v1168, %v1169
  %v1171 = vsel %vm941, %v878, 0.0
  %v1172 = vadd.f32 %v1170, %v1171
  %v1173 = vsel %vm941, %v759, 0.0
  %v1174 = vadd.f32 %v1172, %v1173
  %v1175 = vsel %vm941, %v879, 0.0
  %v1176 = vadd.f32 %v1174, %v1175
  %v1177 = vsel %vm941, %v760, 0.0
  %v1178 = vadd.f32 %v1176, %v1177
  %v1179 = vsel %vm941, %v880, 0.0
  %v1180 = vadd.f32 %v1178, %v1179
  %1181 = vadd.xlane.f32.xlu0 %v1180
  %v1182 = vpop.xlane.xlu0 %1181
  %v1183 = vsub.f32 0.0, %v1182
  %v1184 = vmul.f32 %v1183, 1.442695
  %v1185 = vpow.pop %v1184
  %v1186 = vadd.f32 %v1185, 1.0
  %v1187 = vrcp.pop %v1186
  %vm1188 = vcmask 3072
  %1189 = vst.msk [vmem:[%s2] sm:$0xf] %vm1188, %v1187
  // Predicated region
  $region10: #{discriminator_forward.5} parent=0 // pred_check
    _
  $region11: #{discriminator_forward.5} parent=0 // pred_check_branch
    %1191 = sbr.rel (0) target = $region13
  $region12: #{discriminator_forward.5} parent=0 // pred_region
    _
  $region13: #{discriminator_forward.5} parent=0 // pred_fallthru
    _
  // Predicated region
  $region14: #{discriminator_forward.5} parent=0 // pred_check
    _
  $region15: #{discriminator_forward.5} parent=0 // pred_check_branch
    %1193 = sbr.rel (0) target = $region17
  $region16: #{discriminator_forward.5} parent=0 // pred_region
    _
  $region17: #{discriminator_forward.5} parent=0 // pred_fallthru
    _

</llo_original>
